<compile_context>
chip_gen: v5e
topology: v5e:2x2
jax: 0.10.0
libtpu: 0.0.40
codegen_flags: <defaults>
</compile_context>

<pallas_src>
import functools

import jax
import jax.numpy as jnp
from jax.experimental import pallas as pl
from jax.experimental.pallas import tpu as pltpu


def _round_up(n, m=128):
    return ((n + m - 1) // m) * m


def _pose_mlp_kernel(*refs, relu_flags):
    """Fused MLP with per-layer weight streaming from HBM.

    refs = (x_ref, shifts_ref, w_hbm_0..w_hbm_{n-1},      # inputs
            o_ref,                                        # output
            wbuf_0..wbuf_{n-1}, sems)                     # scratch

    x_ref      : (B, Fin0_p) f32, VMEM
    shifts_ref : (1, sum Fout_p) f32, VMEM (all folded shifts concatenated)
    w_hbm_i    : (Fin_p, Fout_p) bf16, HBM (BN scale folded in, zero padded)
    wbuf_i     : VMEM scratch of the same shape as w_hbm_i
    sems       : DMA semaphore array, one slot per layer
    """
    n = len(relu_flags)
    x_ref = refs[0]
    shifts_ref = refs[1]
    w_hbm = refs[2:2 + n]
    o_ref = refs[2 + n]
    wbufs = refs[3 + n:3 + 2 * n]
    sems = refs[3 + 2 * n]

    # Issue all weight DMAs up front, in layer order: layer 0's small weight arrives
    # first and its matmul runs while the later (bigger) weights are still in flight.
    for li in range(n):
        pltpu.make_async_copy(w_hbm[li], wbufs[li], sems.at[li]).start()

    h = x_ref[...]
    off = 0
    for li in range(n):
        # Wait only for this layer's weight; later layers keep streaming in.
        pltpu.make_async_copy(w_hbm[li], wbufs[li], sems.at[li]).wait()
        w = wbufs[li][...]                          # (Fin_p, Fout_p) bf16
        fout_p = w.shape[1]
        shift = shifts_ref[:, off:off + fout_p]     # (1, Fout_p) f32, static slice
        off += fout_p
        y = jnp.dot(h.astype(w.dtype), w, preferred_element_type=jnp.float32)
        y = y + shift                               # broadcast over batch
        if relu_flags[li]:
            y = jnp.maximum(y, 0.0)
        h = y
    o_ref[...] = h.astype(o_ref.dtype)


def pose_classification_forward(x, params):
    """x: (B, x_features) f32 -> (B, num_moves) f32, eval-mode forward."""
    B = x.shape[0]
    weights = params["weights"]
    shifts_cat = params["shifts_cat"]
    relu_flags = params["relu_flags"]
    num_moves = params["num_moves"]

    n = len(weights)
    fin0_p = weights[0].shape[0]
    fout_last_p = weights[-1].shape[1]

    # Zero-pad input features once (exact: the padded W rows are zero).
    x_p = jnp.zeros((B, fin0_p), jnp.float32).at[:, : x.shape[1]].set(x)

    flops = 2 * B * sum(int(w.shape[0]) * int(w.shape[1]) for w in weights)
    bytes_accessed = (sum(int(w.size) * w.dtype.itemsize for w in weights)
                      + int(shifts_cat.size) * 4
                      + int(x_p.size) * 4
                      + B * fout_last_p * 4)

    kernel = functools.partial(_pose_mlp_kernel, relu_flags=relu_flags)

    out_p = pl.pallas_call(
        kernel,
        out_shape=jax.ShapeDtypeStruct((B, fout_last_p), jnp.float32),
        in_specs=(
            [pl.BlockSpec(memory_space=pltpu.MemorySpace.VMEM),      # x (tiny)
             pl.BlockSpec(memory_space=pltpu.MemorySpace.VMEM)]      # fused shifts
            + [pl.BlockSpec(memory_space=pl.ANY) for _ in weights]   # weights: stay in HBM
        ),
        out_specs=pl.BlockSpec(memory_space=pltpu.MemorySpace.VMEM),
        scratch_shapes=(
            [pltpu.VMEM(w.shape, w.dtype) for w in weights]          # per-layer weight buffers
            + [pltpu.SemaphoreType.DMA((n,))]                        # one DMA sem per layer
        ),
        cost_estimate=pl.CostEstimate(flops=flops, transcendentals=0,
                                      bytes_accessed=bytes_accessed),
    )(x_p, shifts_cat, *weights)

    return out_p[:, :num_moves]


def init_params(key, x_features, num_moves, eps=1e-5):
    """Deterministic synthetic parameters matching the PyTorch module's shapes.

    One-time preprocessing (not per call): BN fold into W, zero-padding to multiples
    of 128, bf16 weight cast, shift concatenation.
    """
    dims = [x_features, 500, 1000, 1000, 500, 200, 50, num_moves]
    weights, shift_chunks, relu_flags = [], [], []
    for li in range(len(dims) - 1):
        fin, fout = dims[li], dims[li + 1]
        key, kw, kb, kg, kbeta, km, kv = jax.random.split(key, 7)
        bound = 1.0 / (fin ** 0.5)
        w = jax.random.uniform(kw, (fin, fout), jnp.float32, -bound, bound)
        b = jax.random.uniform(kb, (fout,), jnp.float32, -bound, bound)
        has_bn = li < len(dims) - 2  # every block except the final Linear has BN+ReLU
        if has_bn:
            gamma = 1.0 + 0.1 * jax.random.normal(kg, (fout,), jnp.float32)
            beta = 0.1 * jax.random.normal(kbeta, (fout,), jnp.float32)
            r_mean = 0.1 * jax.random.normal(km, (fout,), jnp.float32)
            r_var = jax.random.uniform(kv, (fout,), jnp.float32, 0.5, 1.5)
            scale = gamma / jnp.sqrt(r_var + eps)
            shift = (b - r_mean) * scale + beta
        else:
            scale = jnp.ones((fout,), jnp.float32)
            shift = b

        # Fold the per-column BN scale into the weight (exact), then zero-pad to 128s.
        w_folded = w * scale[None, :]
        fin_p, fout_p = _round_up(fin), _round_up(fout)
        w_p = jnp.zeros((fin_p, fout_p), jnp.float32).at[:fin, :fout].set(w_folded)
        s_p = jnp.zeros((1, fout_p), jnp.float32).at[0, :fout].set(shift)

        weights.append(w_p.astype(jnp.bfloat16))   # bf16 weights: halve HBM traffic
        shift_chunks.append(s_p)                    # f32 shift, added to f32 accumulator
        relu_flags.append(has_bn)

    shifts_cat = jnp.concatenate(shift_chunks, axis=1)  # (1, sum Fout_p) -> one DMA
    return dict(weights=weights, shifts_cat=shifts_cat,
                relu_flags=tuple(relu_flags), num_moves=num_moves)


def reference_forward(x, params):
    """Pure-JAX reference doing the same (bf16-weight, f32-accumulate) math."""
    B = x.shape[0]
    fin0_p = params["weights"][0].shape[0]
    h = jnp.zeros((B, fin0_p), jnp.float32).at[:, : x.shape[1]].set(x)
    off = 0
    for w, relu in zip(params["weights"], params["relu_flags"]):
        fout_p = w.shape[1]
        s = params["shifts_cat"][:, off:off + fout_p]
        off += fout_p
        y = jnp.dot(h.astype(w.dtype), w, preferred_element_type=jnp.float32) + s
        if relu:
            y = jnp.maximum(y, 0.0)
        h = y
    return h[:, : params["num_moves"]]


if __name__ == "__main__":
    x_features = 64
    num_moves = 10
    batch = 8

    key = jax.random.PRNGKey(0)
    kx, kp = jax.random.split(key)
    x = jax.random.normal(kx, (batch, x_features), jnp.float32)
    params = init_params(kp, x_features, num_moves)

    out = jax.block_until_ready(pose_classification_forward(x, params))
    ref = jax.block_until_ready(reference_forward(x, params))

    assert out.shape == (batch, num_moves), out.shape
    assert jnp.allclose(out, ref, atol=1e-2, rtol=1e-2), "mismatch vs reference"
    print("KERNEL_OK")
</pallas_src>

<mosaic_0001>
module attributes {stable_mosaic.version = 11 : i64} {
  func.func @_pose_mlp_kernel(%arg0: memref<8x128xf32, #tpu.memory_space<vmem>>, %arg1: memref<1x3584xf32, #tpu.memory_space<vmem>>, %arg2: memref<128x512xbf16, #tpu.memory_space<any>>, %arg3: memref<512x1024xbf16, #tpu.memory_space<any>>, %arg4: memref<1024x1024xbf16, #tpu.memory_space<any>>, %arg5: memref<1024x512xbf16, #tpu.memory_space<any>>, %arg6: memref<512x256xbf16, #tpu.memory_space<any>>, %arg7: memref<256x128xbf16, #tpu.memory_space<any>>, %arg8: memref<128x128xbf16, #tpu.memory_space<any>>, %arg9: memref<8x128xf32, #tpu.memory_space<vmem>>, %arg10: memref<128x512xbf16, #tpu.memory_space<vmem>>, %arg11: memref<512x1024xbf16, #tpu.memory_space<vmem>>, %arg12: memref<1024x1024xbf16, #tpu.memory_space<vmem>>, %arg13: memref<1024x512xbf16, #tpu.memory_space<vmem>>, %arg14: memref<512x256xbf16, #tpu.memory_space<vmem>>, %arg15: memref<256x128xbf16, #tpu.memory_space<vmem>>, %arg16: memref<128x128xbf16, #tpu.memory_space<vmem>>, %arg17: memref<7x!tpu.dma_semaphore, #tpu.memory_space<semaphore_mem>>) attributes {dimension_semantics = [], scalar_prefetch = 0 : i64, scratch_operands = 8 : i64, tpu.core_type = #tpu.core_type<tc>} {
    %c0_i32 = arith.constant 0 : i32
    %0 = tpu.memref_slice %arg17[%c0_i32] : memref<7x!tpu.dma_semaphore, #tpu.memory_space<semaphore_mem>> -> memref<1x!tpu.dma_semaphore, #tpu.memory_space<semaphore_mem>>
    %1 = tpu.memref_squeeze %0 : memref<1x!tpu.dma_semaphore, #tpu.memory_space<semaphore_mem>> -> memref<!tpu.dma_semaphore, #tpu.memory_space<semaphore_mem>>
    tpu.enqueue_dma source(%arg2 : memref<128x512xbf16, #tpu.memory_space<any>>) target(%arg10 : memref<128x512xbf16, #tpu.memory_space<vmem>>) target_semaphore(%1 : memref<!tpu.dma_semaphore, #tpu.memory_space<semaphore_mem>>)
    %c1_i32 = arith.constant 1 : i32
    %2 = tpu.memref_slice %arg17[%c1_i32] : memref<7x!tpu.dma_semaphore, #tpu.memory_space<semaphore_mem>> -> memref<1x!tpu.dma_semaphore, #tpu.memory_space<semaphore_mem>>
    %3 = tpu.memref_squeeze %2 : memref<1x!tpu.dma_semaphore, #tpu.memory_space<semaphore_mem>> -> memref<!tpu.dma_semaphore, #tpu.memory_space<semaphore_mem>>
    tpu.enqueue_dma source(%arg3 : memref<512x1024xbf16, #tpu.memory_space<any>>) target(%arg11 : memref<512x1024xbf16, #tpu.memory_space<vmem>>) target_semaphore(%3 : memref<!tpu.dma_semaphore, #tpu.memory_space<semaphore_mem>>)
    %c2_i32 = arith.constant 2 : i32
    %4 = tpu.memref_slice %arg17[%c2_i32] : memref<7x!tpu.dma_semaphore, #tpu.memory_space<semaphore_mem>> -> memref<1x!tpu.dma_semaphore, #tpu.memory_space<semaphore_mem>>
    %5 = tpu.memref_squeeze %4 : memref<1x!tpu.dma_semaphore, #tpu.memory_space<semaphore_mem>> -> memref<!tpu.dma_semaphore, #tpu.memory_space<semaphore_mem>>
    tpu.enqueue_dma source(%arg4 : memref<1024x1024xbf16, #tpu.memory_space<any>>) target(%arg12 : memref<1024x1024xbf16, #tpu.memory_space<vmem>>) target_semaphore(%5 : memref<!tpu.dma_semaphore, #tpu.memory_space<semaphore_mem>>)
    %c3_i32 = arith.constant 3 : i32
    %6 = tpu.memref_slice %arg17[%c3_i32] : memref<7x!tpu.dma_semaphore, #tpu.memory_space<semaphore_mem>> -> memref<1x!tpu.dma_semaphore, #tpu.memory_space<semaphore_mem>>
    %7 = tpu.memref_squeeze %6 : memref<1x!tpu.dma_semaphore, #tpu.memory_space<semaphore_mem>> -> memref<!tpu.dma_semaphore, #tpu.memory_space<semaphore_mem>>
    tpu.enqueue_dma source(%arg5 : memref<1024x512xbf16, #tpu.memory_space<any>>) target(%arg13 : memref<1024x512xbf16, #tpu.memory_space<vmem>>) target_semaphore(%7 : memref<!tpu.dma_semaphore, #tpu.memory_space<semaphore_mem>>)
    %c4_i32 = arith.constant 4 : i32
    %8 = tpu.memref_slice %arg17[%c4_i32] : memref<7x!tpu.dma_semaphore, #tpu.memory_space<semaphore_mem>> -> memref<1x!tpu.dma_semaphore, #tpu.memory_space<semaphore_mem>>
    %9 = tpu.memref_squeeze %8 : memref<1x!tpu.dma_semaphore, #tpu.memory_space<semaphore_mem>> -> memref<!tpu.dma_semaphore, #tpu.memory_space<semaphore_mem>>
    tpu.enqueue_dma source(%arg6 : memref<512x256xbf16, #tpu.memory_space<any>>) target(%arg14 : memref<512x256xbf16, #tpu.memory_space<vmem>>) target_semaphore(%9 : memref<!tpu.dma_semaphore, #tpu.memory_space<semaphore_mem>>)
    %c5_i32 = arith.constant 5 : i32
    %10 = tpu.memref_slice %arg17[%c5_i32] : memref<7x!tpu.dma_semaphore, #tpu.memory_space<semaphore_mem>> -> memref<1x!tpu.dma_semaphore, #tpu.memory_space<semaphore_mem>>
    %11 = tpu.memref_squeeze %10 : memref<1x!tpu.dma_semaphore, #tpu.memory_space<semaphore_mem>> -> memref<!tpu.dma_semaphore, #tpu.memory_space<semaphore_mem>>
    tpu.enqueue_dma source(%arg7 : memref<256x128xbf16, #tpu.memory_space<any>>) target(%arg15 : memref<256x128xbf16, #tpu.memory_space<vmem>>) target_semaphore(%11 : memref<!tpu.dma_semaphore, #tpu.memory_space<semaphore_mem>>)
    %c6_i32 = arith.constant 6 : i32
    %12 = tpu.memref_slice %arg17[%c6_i32] : memref<7x!tpu.dma_semaphore, #tpu.memory_space<semaphore_mem>> -> memref<1x!tpu.dma_semaphore, #tpu.memory_space<semaphore_mem>>
    %13 = tpu.memref_squeeze %12 : memref<1x!tpu.dma_semaphore, #tpu.memory_space<semaphore_mem>> -> memref<!tpu.dma_semaphore, #tpu.memory_space<semaphore_mem>>
    tpu.enqueue_dma source(%arg8 : memref<128x128xbf16, #tpu.memory_space<any>>) target(%arg16 : memref<128x128xbf16, #tpu.memory_space<vmem>>) target_semaphore(%13 : memref<!tpu.dma_semaphore, #tpu.memory_space<semaphore_mem>>)
    %c0 = arith.constant 0 : index
    %c0_0 = arith.constant 0 : index
    %14 = vector.load %arg0[%c0, %c0_0] : memref<8x128xf32, #tpu.memory_space<vmem>>, vector<8x128xf32>
    %c0_i32_1 = arith.constant 0 : i32
    %15 = tpu.memref_slice %arg17[%c0_i32_1] : memref<7x!tpu.dma_semaphore, #tpu.memory_space<semaphore_mem>> -> memref<1x!tpu.dma_semaphore, #tpu.memory_space<semaphore_mem>>
    %16 = tpu.memref_squeeze %15 : memref<1x!tpu.dma_semaphore, #tpu.memory_space<semaphore_mem>> -> memref<!tpu.dma_semaphore, #tpu.memory_space<semaphore_mem>>
    tpu.wait_dma2 semaphore(%16 : memref<!tpu.dma_semaphore, #tpu.memory_space<semaphore_mem>>) src(%arg2 : memref<128x512xbf16, #tpu.memory_space<any>>) dst(%arg10 : memref<128x512xbf16, #tpu.memory_space<vmem>>)
    %c0_2 = arith.constant 0 : index
    %c0_3 = arith.constant 0 : index
    %17 = vector.load %arg10[%c0_2, %c0_3] : memref<128x512xbf16, #tpu.memory_space<vmem>>, vector<128x512xbf16>
    %c0_4 = arith.constant 0 : index
    %c0_5 = arith.constant 0 : index
    %18 = vector.load %arg1[%c0_4, %c0_5] : memref<1x3584xf32, #tpu.memory_space<vmem>>, vector<1x512xf32>
    %19 = arith.truncf %14 : vector<8x128xf32> to vector<8x128xbf16>
    %cst = arith.constant dense<0.000000e+00> : vector<8x512xf32>
    %20 = tpu.matmul %19, %17, %cst {dimension_numbers = #tpu.dot_dimension_numbers<[1], [0], [0], [1], [0, 0, 1, 1], [], []>} : vector<8x128xbf16>, vector<128x512xbf16>, vector<8x512xf32> -> vector<8x512xf32>
    %21 = vector.broadcast %18 : vector<1x512xf32> to vector<8x512xf32>
    %22 = arith.addf %20, %21 : vector<8x512xf32>
    %cst_6 = arith.constant 0.000000e+00 : f32
    %23 = vector.broadcast %cst_6 : f32 to vector<8x512xf32>
    %24 = arith.maximumf %22, %23 : vector<8x512xf32>
    %c1_i32_7 = arith.constant 1 : i32
    %25 = tpu.memref_slice %arg17[%c1_i32_7] : memref<7x!tpu.dma_semaphore, #tpu.memory_space<semaphore_mem>> -> memref<1x!tpu.dma_semaphore, #tpu.memory_space<semaphore_mem>>
    %26 = tpu.memref_squeeze %25 : memref<1x!tpu.dma_semaphore, #tpu.memory_space<semaphore_mem>> -> memref<!tpu.dma_semaphore, #tpu.memory_space<semaphore_mem>>
    tpu.wait_dma2 semaphore(%26 : memref<!tpu.dma_semaphore, #tpu.memory_space<semaphore_mem>>) src(%arg3 : memref<512x1024xbf16, #tpu.memory_space<any>>) dst(%arg11 : memref<512x1024xbf16, #tpu.memory_space<vmem>>)
    %c0_8 = arith.constant 0 : index
    %c0_9 = arith.constant 0 : index
    %27 = vector.load %arg11[%c0_8, %c0_9] : memref<512x1024xbf16, #tpu.memory_space<vmem>>, vector<512x1024xbf16>
    %c0_10 = arith.constant 0 : index
    %c512 = arith.constant 512 : index
    %28 = vector.load %arg1[%c0_10, %c512] : memref<1x3584xf32, #tpu.memory_space<vmem>>, vector<1x1024xf32>
    %29 = arith.truncf %24 : vector<8x512xf32> to vector<8x512xbf16>
    %cst_11 = arith.constant dense<0.000000e+00> : vector<8x1024xf32>
    %30 = tpu.matmul %29, %27, %cst_11 {dimension_numbers = #tpu.dot_dimension_numbers<[1], [0], [0], [1], [0, 0, 1, 1], [], []>} : vector<8x512xbf16>, vector<512x1024xbf16>, vector<8x1024xf32> -> vector<8x1024xf32>
    %31 = vector.broadcast %28 : vector<1x1024xf32> to vector<8x1024xf32>
    %32 = arith.addf %30, %31 : vector<8x1024xf32>
    %cst_12 = arith.constant 0.000000e+00 : f32
    %33 = vector.broadcast %cst_12 : f32 to vector<8x1024xf32>
    %34 = arith.maximumf %32, %33 : vector<8x1024xf32>
    %c2_i32_13 = arith.constant 2 : i32
    %35 = tpu.memref_slice %arg17[%c2_i32_13] : memref<7x!tpu.dma_semaphore, #tpu.memory_space<semaphore_mem>> -> memref<1x!tpu.dma_semaphore, #tpu.memory_space<semaphore_mem>>
    %36 = tpu.memref_squeeze %35 : memref<1x!tpu.dma_semaphore, #tpu.memory_space<semaphore_mem>> -> memref<!tpu.dma_semaphore, #tpu.memory_space<semaphore_mem>>
    tpu.wait_dma2 semaphore(%36 : memref<!tpu.dma_semaphore, #tpu.memory_space<semaphore_mem>>) src(%arg4 : memref<1024x1024xbf16, #tpu.memory_space<any>>) dst(%arg12 : memref<1024x1024xbf16, #tpu.memory_space<vmem>>)
    %c0_14 = arith.constant 0 : index
    %c0_15 = arith.constant 0 : index
    %37 = vector.load %arg12[%c0_14, %c0_15] : memref<1024x1024xbf16, #tpu.memory_space<vmem>>, vector<1024x1024xbf16>
    %c0_16 = arith.constant 0 : index
    %c1536 = arith.constant 1536 : index
    %38 = vector.load %arg1[%c0_16, %c1536] : memref<1x3584xf32, #tpu.memory_space<vmem>>, vector<1x1024xf32>
    %39 = arith.truncf %34 : vector<8x1024xf32> to vector<8x1024xbf16>
    %cst_17 = arith.constant dense<0.000000e+00> : vector<8x1024xf32>
    %40 = tpu.matmul %39, %37, %cst_17 {dimension_numbers = #tpu.dot_dimension_numbers<[1], [0], [0], [1], [0, 0, 1, 1], [], []>} : vector<8x1024xbf16>, vector<1024x1024xbf16>, vector<8x1024xf32> -> vector<8x1024xf32>
    %41 = vector.broadcast %38 : vector<1x1024xf32> to vector<8x1024xf32>
    %42 = arith.addf %40, %41 : vector<8x1024xf32>
    %cst_18 = arith.constant 0.000000e+00 : f32
    %43 = vector.broadcast %cst_18 : f32 to vector<8x1024xf32>
    %44 = arith.maximumf %42, %43 : vector<8x1024xf32>
    %c3_i32_19 = arith.constant 3 : i32
    %45 = tpu.memref_slice %arg17[%c3_i32_19] : memref<7x!tpu.dma_semaphore, #tpu.memory_space<semaphore_mem>> -> memref<1x!tpu.dma_semaphore, #tpu.memory_space<semaphore_mem>>
    %46 = tpu.memref_squeeze %45 : memref<1x!tpu.dma_semaphore, #tpu.memory_space<semaphore_mem>> -> memref<!tpu.dma_semaphore, #tpu.memory_space<semaphore_mem>>
    tpu.wait_dma2 semaphore(%46 : memref<!tpu.dma_semaphore, #tpu.memory_space<semaphore_mem>>) src(%arg5 : memref<1024x512xbf16, #tpu.memory_space<any>>) dst(%arg13 : memref<1024x512xbf16, #tpu.memory_space<vmem>>)
    %c0_20 = arith.constant 0 : index
    %c0_21 = arith.constant 0 : index
    %47 = vector.load %arg13[%c0_20, %c0_21] : memref<1024x512xbf16, #tpu.memory_space<vmem>>, vector<1024x512xbf16>
    %c0_22 = arith.constant 0 : index
    %c2560 = arith.constant 2560 : index
    %48 = vector.load %arg1[%c0_22, %c2560] : memref<1x3584xf32, #tpu.memory_space<vmem>>, vector<1x512xf32>
    %49 = arith.truncf %44 : vector<8x1024xf32> to vector<8x1024xbf16>
    %cst_23 = arith.constant dense<0.000000e+00> : vector<8x512xf32>
    %50 = tpu.matmul %49, %47, %cst_23 {dimension_numbers = #tpu.dot_dimension_numbers<[1], [0], [0], [1], [0, 0, 1, 1], [], []>} : vector<8x1024xbf16>, vector<1024x512xbf16>, vector<8x512xf32> -> vector<8x512xf32>
    %51 = vector.broadcast %48 : vector<1x512xf32> to vector<8x512xf32>
    %52 = arith.addf %50, %51 : vector<8x512xf32>
    %cst_24 = arith.constant 0.000000e+00 : f32
    %53 = vector.broadcast %cst_24 : f32 to vector<8x512xf32>
    %54 = arith.maximumf %52, %53 : vector<8x512xf32>
    %c4_i32_25 = arith.constant 4 : i32
    %55 = tpu.memref_slice %arg17[%c4_i32_25] : memref<7x!tpu.dma_semaphore, #tpu.memory_space<semaphore_mem>> -> memref<1x!tpu.dma_semaphore, #tpu.memory_space<semaphore_mem>>
    %56 = tpu.memref_squeeze %55 : memref<1x!tpu.dma_semaphore, #tpu.memory_space<semaphore_mem>> -> memref<!tpu.dma_semaphore, #tpu.memory_space<semaphore_mem>>
    tpu.wait_dma2 semaphore(%56 : memref<!tpu.dma_semaphore, #tpu.memory_space<semaphore_mem>>) src(%arg6 : memref<512x256xbf16, #tpu.memory_space<any>>) dst(%arg14 : memref<512x256xbf16, #tpu.memory_space<vmem>>)
    %c0_26 = arith.constant 0 : index
    %c0_27 = arith.constant 0 : index
    %57 = vector.load %arg14[%c0_26, %c0_27] : memref<512x256xbf16, #tpu.memory_space<vmem>>, vector<512x256xbf16>
    %c0_28 = arith.constant 0 : index
    %c3072 = arith.constant 3072 : index
    %58 = vector.load %arg1[%c0_28, %c3072] : memref<1x3584xf32, #tpu.memory_space<vmem>>, vector<1x256xf32>
    %59 = arith.truncf %54 : vector<8x512xf32> to vector<8x512xbf16>
    %cst_29 = arith.constant dense<0.000000e+00> : vector<8x256xf32>
    %60 = tpu.matmul %59, %57, %cst_29 {dimension_numbers = #tpu.dot_dimension_numbers<[1], [0], [0], [1], [0, 0, 1, 1], [], []>} : vector<8x512xbf16>, vector<512x256xbf16>, vector<8x256xf32> -> vector<8x256xf32>
    %61 = vector.broadcast %58 : vector<1x256xf32> to vector<8x256xf32>
    %62 = arith.addf %60, %61 : vector<8x256xf32>
    %cst_30 = arith.constant 0.000000e+00 : f32
    %63 = vector.broadcast %cst_30 : f32 to vector<8x256xf32>
    %64 = arith.maximumf %62, %63 : vector<8x256xf32>
    %c5_i32_31 = arith.constant 5 : i32
    %65 = tpu.memref_slice %arg17[%c5_i32_31] : memref<7x!tpu.dma_semaphore, #tpu.memory_space<semaphore_mem>> -> memref<1x!tpu.dma_semaphore, #tpu.memory_space<semaphore_mem>>
    %66 = tpu.memref_squeeze %65 : memref<1x!tpu.dma_semaphore, #tpu.memory_space<semaphore_mem>> -> memref<!tpu.dma_semaphore, #tpu.memory_space<semaphore_mem>>
    tpu.wait_dma2 semaphore(%66 : memref<!tpu.dma_semaphore, #tpu.memory_space<semaphore_mem>>) src(%arg7 : memref<256x128xbf16, #tpu.memory_space<any>>) dst(%arg15 : memref<256x128xbf16, #tpu.memory_space<vmem>>)
    %c0_32 = arith.constant 0 : index
    %c0_33 = arith.constant 0 : index
    %67 = vector.load %arg15[%c0_32, %c0_33] : memref<256x128xbf16, #tpu.memory_space<vmem>>, vector<256x128xbf16>
    %c0_34 = arith.constant 0 : index
    %c3328 = arith.constant 3328 : index
    %68 = vector.load %arg1[%c0_34, %c3328] : memref<1x3584xf32, #tpu.memory_space<vmem>>, vector<1x128xf32>
    %69 = arith.truncf %64 : vector<8x256xf32> to vector<8x256xbf16>
    %cst_35 = arith.constant dense<0.000000e+00> : vector<8x128xf32>
    %70 = tpu.matmul %69, %67, %cst_35 {dimension_numbers = #tpu.dot_dimension_numbers<[1], [0], [0], [1], [0, 0, 1, 1], [], []>} : vector<8x256xbf16>, vector<256x128xbf16>, vector<8x128xf32> -> vector<8x128xf32>
    %71 = vector.broadcast %68 : vector<1x128xf32> to vector<8x128xf32>
    %72 = arith.addf %70, %71 : vector<8x128xf32>
    %cst_36 = arith.constant 0.000000e+00 : f32
    %73 = vector.broadcast %cst_36 : f32 to vector<8x128xf32>
    %74 = arith.maximumf %72, %73 : vector<8x128xf32>
    %c6_i32_37 = arith.constant 6 : i32
    %75 = tpu.memref_slice %arg17[%c6_i32_37] : memref<7x!tpu.dma_semaphore, #tpu.memory_space<semaphore_mem>> -> memref<1x!tpu.dma_semaphore, #tpu.memory_space<semaphore_mem>>
    %76 = tpu.memref_squeeze %75 : memref<1x!tpu.dma_semaphore, #tpu.memory_space<semaphore_mem>> -> memref<!tpu.dma_semaphore, #tpu.memory_space<semaphore_mem>>
    tpu.wait_dma2 semaphore(%76 : memref<!tpu.dma_semaphore, #tpu.memory_space<semaphore_mem>>) src(%arg8 : memref<128x128xbf16, #tpu.memory_space<any>>) dst(%arg16 : memref<128x128xbf16, #tpu.memory_space<vmem>>)
    %c0_38 = arith.constant 0 : index
    %c0_39 = arith.constant 0 : index
    %77 = vector.load %arg16[%c0_38, %c0_39] : memref<128x128xbf16, #tpu.memory_space<vmem>>, vector<128x128xbf16>
    %c0_40 = arith.constant 0 : index
    %c3456 = arith.constant 3456 : index
    %78 = vector.load %arg1[%c0_40, %c3456] : memref<1x3584xf32, #tpu.memory_space<vmem>>, vector<1x128xf32>
    %79 = arith.truncf %74 : vector<8x128xf32> to vector<8x128xbf16>
    %cst_41 = arith.constant dense<0.000000e+00> : vector<8x128xf32>
    %80 = tpu.matmul %79, %77, %cst_41 {dimension_numbers = #tpu.dot_dimension_numbers<[1], [0], [0], [1], [0, 0, 1, 1], [], []>} : vector<8x128xbf16>, vector<128x128xbf16>, vector<8x128xf32> -> vector<8x128xf32>
    %81 = vector.broadcast %78 : vector<1x128xf32> to vector<8x128xf32>
    %82 = arith.addf %80, %81 : vector<8x128xf32>
    %c0_42 = arith.constant 0 : index
    %c0_43 = arith.constant 0 : index
    %83 = vector.load %arg9[%c0_42, %c0_43] : memref<8x128xf32, #tpu.memory_space<vmem>>, vector<8x128xf32>
    tpu.vector_store %arg9[%c0_42, %c0_43], %82 {strides = array<i32>} : memref<8x128xf32, #tpu.memory_space<vmem>>, vector<8x128xf32>,
    return
  }
}

</mosaic_0001>

<llo_original>
// kernel: tpu_custom_call.1
$region0: #{tpu_custom_call.1}
  #allocation0 [shape = 'u32[]', space=smem, size = 0x4, offset = 0x4, fixed_abs, tag = 'smem constant byte address 0x4 - core index']
  #allocation1 [shape = 'u32[72,128]{1,0:T(1,128)}', space=vmem, size = 0x9000, scoped, tag = 'internal scratch']
  #allocation2 [shape = 'bf16[128,512]{1,0:T(8,128)(2,1)}', space=vmem, size = 0x20000, scoped, tag = 'scratch operand']
  #allocation3 [shape = 'bf16[512,1024]{1,0:T(8,128)(2,1)}', space=vmem, size = 0x100000, scoped, tag = 'scratch operand']
  #allocation4 [shape = 'bf16[1024,1024]{1,0:T(8,128)(2,1)}', space=vmem, size = 0x200000, scoped, tag = 'scratch operand']
  #allocation5 [shape = 'bf16[1024,512]{1,0:T(8,128)(2,1)}', space=vmem, size = 0x100000, scoped, tag = 'scratch operand']
  #allocation6 [shape = 'bf16[512,256]{1,0:T(8,128)(2,1)}', space=vmem, size = 0x40000, scoped, tag = 'scratch operand']
  #allocation7 [shape = 'bf16[256,128]{1,0:T(8,128)(2,1)}', space=vmem, size = 0x10000, scoped, tag = 'scratch operand']
  #allocation8 [shape = 'bf16[128,128]{1,0:T(8,128)(2,1)}', space=vmem, size = 0x8000, scoped, tag = 'scratch operand']
  #allocation9 [shape = 's32[7]{0}', space=sflag, size = 0x1c, scoped, tag = 'scratch operand']
  #allocation16 [shape = 's32[]', space=sflag, size = 0x4, offset = 0, fixed_abs, tag = 'sflag constant byte address 0x0 - dummy sync flag']
  #allocation17 [shape = 's32[]', space=sflag, size = 0x4, offset = 0, fixed_abs, tag = 'sflag constant byte address 0x0 - dummy sync flag']
  #allocation18 [shape = 'u32[]', space=smem, size = 0x4, offset = 0x44, fixed_abs, tag = 'smem constant byte address 0x44 - assertion arg 0']
  #allocation19 [shape = 'u32[]', space=smem, size = 0x4, offset = 0x48, fixed_abs, tag = 'smem constant byte address 0x48 - assertion arg 1']
  #allocation20 [shape = 's32[]', space=sflag, size = 0x4, offset = 0, fixed_abs, tag = 'sflag constant byte address 0x0 - dummy sync flag']
  #allocation21 [shape = 's32[]', space=sflag, size = 0x4, offset = 0, fixed_abs, tag = 'sflag constant byte address 0x0 - dummy sync flag']
  #allocation22 [shape = 's32[]', space=sflag, size = 0x4, offset = 0, fixed_abs, tag = 'sflag constant byte address 0x0 - dummy sync flag']
  #allocation23 [shape = 's32[]', space=sflag, size = 0x4, offset = 0, fixed_abs, tag = 'sflag constant byte address 0x0 - dummy sync flag']
  #allocation24 [shape = 's32[]', space=sflag, size = 0x4, offset = 0, fixed_abs, tag = 'sflag constant byte address 0x0 - dummy sync flag']
  #allocation25 [shape = 's32[]', space=sflag, size = 0x4, offset = 0, fixed_abs, tag = 'sflag constant byte address 0x0 - dummy sync flag']
  #allocation26 [shape = 's32[]', space=sflag, size = 0x4, offset = 0, fixed_abs, tag = 'sflag constant byte address 0x0 - dummy sync flag']
  #allocation27 [shape = 's32[]', space=sflag, size = 0x4, offset = 0, fixed_abs, tag = 'sflag constant byte address 0x0 - dummy sync flag']
  #allocation28 [shape = 's32[]', space=sflag, size = 0x4, offset = 0, fixed_abs, tag = 'sflag constant byte address 0x0 - dummy sync flag']
  #allocation29 [shape = 's32[]', space=sflag, size = 0x4, offset = 0, fixed_abs, tag = 'sflag constant byte address 0x0 - dummy sync flag']
  #allocation30 [shape = 's32[]', space=sflag, size = 0x4, offset = 0, fixed_abs, tag = 'sflag constant byte address 0x0 - dummy sync flag']
  #allocation31 [shape = 's32[]', space=sflag, size = 0x4, offset = 0, fixed_abs, tag = 'sflag constant byte address 0x0 - dummy sync flag']
  %s0 = inlined_call_operand.hbm [shape: f32[8,128], index: 0, kind: input, shape index: {}]
  %s1 = inlined_call_operand.hbm [shape: f32[1,3584], index: 1, kind: input, shape index: {}]
  %s2 = inlined_call_operand.hbm [shape: bf16[128,512], index: 2, kind: input, shape index: {}]
  %s3 = inlined_call_operand.hbm [shape: bf16[512,1024], index: 3, kind: input, shape index: {}]
  %s4 = inlined_call_operand.hbm [shape: bf16[1024,1024], index: 4, kind: input, shape index: {}]
  %s5 = inlined_call_operand.hbm [shape: bf16[1024,512], index: 5, kind: input, shape index: {}]
  %s6 = inlined_call_operand.hbm [shape: bf16[512,256], index: 6, kind: input, shape index: {}]
  %s7 = inlined_call_operand.hbm [shape: bf16[256,128], index: 7, kind: input, shape index: {}]
  %s8 = inlined_call_operand.hbm [shape: bf16[128,128], index: 8, kind: input, shape index: {}]
  %s9 = inlined_call_operand.hbm [shape: f32[8,128], index: 9, kind: output, shape index: {}]
  %s10 = sld [smem:[#allocation0]]
  $region54: #{tpu_custom_call.1} parent=0
    _
  %s12 = ssub.s32 1, %s10
  %s13 = scalar_select 0, %s12, %s10
  $region1: #{tpu_custom_call.1} parent=0
    #allocation10 [shape = 'u8[4096]{0}', space=vmem, size = 0x1000, scoped, tag = 'input window, operand 0, single buffered']
    #allocation11 [shape = 's32[1]{0}', space=sflag, size = 0x4, scoped, tag = 'scoped memory for tpu_custom_call.1']
    #allocation12 [shape = 's32[1]{0}', space=sflag, size = 0x4, scoped, tag = 'scoped memory for tpu_custom_call.1']
    #allocation13 [shape = 'u8[14336]{0}', space=vmem, size = 0x3800, scoped, tag = 'input window, operand 1, single buffered']
    #allocation14 [shape = 's32[1]{0}', space=sflag, size = 0x4, scoped, tag = 'scoped memory for tpu_custom_call.1']
    #allocation15 [shape = 'u8[4096]{0}', space=vmem, size = 0x1000, scoped, tag = 'output window, operand 0, single buffered']
    %14 = vsyncpa [#allocation11], 0
    %15 = vsyncpa [#allocation14], 0
    %16 = vsyncpa [#allocation12], 0
    // Predicated region
    $region2: #{tpu_custom_call.1} parent=1 // pred_check
      _
    $region3: #{tpu_custom_call.1} parent=1 // pred_check_branch
      %18 = sbr.rel (0) target = $region5
    $region4: #{tpu_custom_call.1} parent=1 // pred_region
      %20 = vsyncadd [#allocation11], 0
      %s22 = sshll.u32 %s0, 4
      %s23 = int_to_ptr.hbm [resolvable:$true] %s22
      %s24 = sshll.u32 [#allocation10], 4
      %s25 = int_to_ptr.vmem [resolvable:$true] %s24
      %27 = dma.hbm_to_vmem [thread:$0]  %s23, 128, %s25, [#allocation11]
    $region5: #{tpu_custom_call.1} parent=1 // pred_fallthru
      _
    // Predicated region
    $region6: #{tpu_custom_call.1} parent=1 // pred_check
      _
    $region7: #{tpu_custom_call.1} parent=1 // pred_check_branch
      %29 = sbr.rel (0) target = $region9
    $region8: #{tpu_custom_call.1} parent=1 // pred_region
      %31 = vsyncadd [#allocation14], 0
      %s33 = sshll.u32 %s1, 4
      %s34 = int_to_ptr.hbm [resolvable:$true] %s33
      %s35 = sshll.u32 [#allocation13], 4
      %s36 = int_to_ptr.vmem [resolvable:$true] %s35
      %38 = dma.hbm_to_vmem [thread:$0]  %s34, 448, %s36, [#allocation14]
    $region9: #{tpu_custom_call.1} parent=1 // pred_fallthru
      _
    // Predicated region
    $region10: #{tpu_custom_call.1} parent=1 // pred_check
      _
    $region11: #{tpu_custom_call.1} parent=1 // pred_check_branch
      %40 = sbr.rel (0) target = $region13
    $region12: #{tpu_custom_call.1} parent=1 // pred_region
      %42 = dma.done [#allocation11], 128
    $region13: #{tpu_custom_call.1} parent=1 // pred_fallthru
      _
    // Predicated region
    $region14: #{tpu_custom_call.1} parent=1 // pred_check
      _
    $region15: #{tpu_custom_call.1} parent=1 // pred_check_branch
      %44 = sbr.rel (0) target = $region17
    $region16: #{tpu_custom_call.1} parent=1 // pred_region
      %46 = dma.done [#allocation14], 448
    $region17: #{tpu_custom_call.1} parent=1 // pred_fallthru
      _
    // Predicated region
    $region18: #{tpu_custom_call.1} parent=1 // pred_check
      _
    $region19: #{tpu_custom_call.1} parent=1 // pred_check_branch
      %48 = sbr.rel target = $region21
    $region20: #{tpu_custom_call.1} parent=1 // pred_region
      %49 = sst [smem:[#allocation18]] [#allocation17]
      %50 = sst [smem:[#allocation19]] [#allocation16]
    $region21: #{tpu_custom_call.1} parent=1 // pred_fallthru
      _
    %52 = shalt.err (0)
    %s54 = sshll.u32 %s2, 4
    %s55 = int_to_ptr.hbm [resolvable:$true] %s54
    %s56 = sshll.u32 [#allocation2], 4
    %s57 = int_to_ptr.vmem [resolvable:$true] %s56
    %59 = dma.hbm_to_vmem [thread:$0]  %s55, 4096, %s57, [#allocation9]
    %s60 = scalar_lea.sflag [#allocation9], 1
    // Predicated region
    $region22: #{tpu_custom_call.1} parent=1 // pred_check
      _
    $region23: #{tpu_custom_call.1} parent=1 // pred_check_branch
      %62 = sbr.rel target = $region25
    $region24: #{tpu_custom_call.1} parent=1 // pred_region
      %63 = sst [smem:[#allocation18]] [#allocation21]
      %64 = sst [smem:[#allocation19]] [#allocation20]
    $region25: #{tpu_custom_call.1} parent=1 // pred_fallthru
      _
    %66 = shalt.err (0)
    %s68 = sshll.u32 %s3, 4
    %s69 = int_to_ptr.hbm [resolvable:$true] %s68
    %s70 = sshll.u32 [#allocation3], 4
    %s71 = int_to_ptr.vmem [resolvable:$true] %s70
    %73 = dma.hbm_to_vmem [thread:$0]  %s69, 32768, %s71, %s60
    %s74 = scalar_lea.sflag [#allocation9], 2
    // Predicated region
    $region26: #{tpu_custom_call.1} parent=1 // pred_check
      _
    $region27: #{tpu_custom_call.1} parent=1 // pred_check_branch
      %76 = sbr.rel target = $region29
    $region28: #{tpu_custom_call.1} parent=1 // pred_region
      %77 = sst [smem:[#allocation18]] [#allocation23]
      %78 = sst [smem:[#allocation19]] [#allocation22]
    $region29: #{tpu_custom_call.1} parent=1 // pred_fallthru
      _
    %80 = shalt.err (0)
    %s82 = sshll.u32 %s4, 4
    %s83 = int_to_ptr.hbm [resolvable:$true] %s82
    %s84 = sshll.u32 [#allocation4], 4
    %s85 = int_to_ptr.vmem [resolvable:$true] %s84
    %87 = dma.hbm_to_vmem [thread:$0]  %s83, 65536, %s85, %s74
    %s88 = scalar_lea.sflag [#allocation9], 3
    // Predicated region
    $region30: #{tpu_custom_call.1} parent=1 // pred_check
      _
    $region31: #{tpu_custom_call.1} parent=1 // pred_check_branch
      %90 = sbr.rel target = $region33
    $region32: #{tpu_custom_call.1} parent=1 // pred_region
      %91 = sst [smem:[#allocation18]] [#allocation25]
      %92 = sst [smem:[#allocation19]] [#allocation24]
    $region33: #{tpu_custom_call.1} parent=1 // pred_fallthru
      _
    %94 = shalt.err (0)
    %s96 = sshll.u32 %s5, 4
    %s97 = int_to_ptr.hbm [resolvable:$true] %s96
    %s98 = sshll.u32 [#allocation5], 4
    %s99 = int_to_ptr.vmem [resolvable:$true] %s98
    %101 = dma.hbm_to_vmem [thread:$0]  %s97, 32768, %s99, %s88
    %s102 = scalar_lea.sflag [#allocation9], 4
    // Predicated region
    $region34: #{tpu_custom_call.1} parent=1 // pred_check
      _
    $region35: #{tpu_custom_call.1} parent=1 // pred_check_branch
      %104 = sbr.rel target = $region37
    $region36: #{tpu_custom_call.1} parent=1 // pred_region
      %105 = sst [smem:[#allocation18]] [#allocation27]
      %106 = sst [smem:[#allocation19]] [#allocation26]
    $region37: #{tpu_custom_call.1} parent=1 // pred_fallthru
      _
    %108 = shalt.err (0)
    %s110 = sshll.u32 %s6, 4
    %s111 = int_to_ptr.hbm [resolvable:$true] %s110
    %s112 = sshll.u32 [#allocation6], 4
    %s113 = int_to_ptr.vmem [resolvable:$true] %s112
    %115 = dma.hbm_to_vmem [thread:$0]  %s111, 8192, %s113, %s102
    %s116 = scalar_lea.sflag [#allocation9], 5
    // Predicated region
    $region38: #{tpu_custom_call.1} parent=1 // pred_check
      _
    $region39: #{tpu_custom_call.1} parent=1 // pred_check_branch
      %118 = sbr.rel target = $region41
    $region40: #{tpu_custom_call.1} parent=1 // pred_region
      %119 = sst [smem:[#allocation18]] [#allocation29]
      %120 = sst [smem:[#allocation19]] [#allocation28]
    $region41: #{tpu_custom_call.1} parent=1 // pred_fallthru
      _
    %122 = shalt.err (0)
    %s124 = sshll.u32 %s7, 4
    %s125 = int_to_ptr.hbm [resolvable:$true] %s124
    %s126 = sshll.u32 [#allocation7], 4
    %s127 = int_to_ptr.vmem [resolvable:$true] %s126
    %129 = dma.hbm_to_vmem [thread:$0]  %s125, 2048, %s127, %s116
    %s130 = scalar_lea.sflag [#allocation9], 6
    // Predicated region
    $region42: #{tpu_custom_call.1} parent=1 // pred_check
      _
    $region43: #{tpu_custom_call.1} parent=1 // pred_check_branch
      %132 = sbr.rel target = $region45
    $region44: #{tpu_custom_call.1} parent=1 // pred_region
      %133 = sst [smem:[#allocation18]] [#allocation31]
      %134 = sst [smem:[#allocation19]] [#allocation30]
    $region45: #{tpu_custom_call.1} parent=1 // pred_fallthru
      _
    %136 = shalt.err (0)
    %s138 = sshll.u32 %s8, 4
    %s139 = int_to_ptr.hbm [resolvable:$true] %s138
    %s140 = sshll.u32 [#allocation8], 4
    %s141 = int_to_ptr.vmem [resolvable:$true] %s140
    %143 = dma.hbm_to_vmem [thread:$0]  %s139, 1024, %s141, %s130
    %v144 = vld [vmem:[#allocation10] sm:$0xff]
    %s145 = smul.u32 4, 16
    %s146 = smul.u32 %s145, 4
    %s147 = sshll.u32 %s146, 4
    %148 = dma.done [#allocation9], %s147
    %v149 = vld [vmem:[#allocation2] sm:$0xff]
    %v150 = vld [vmem:[#allocation2 + $0x8] sm:$0xff]
    %v151 = vld [vmem:[#allocation2 + $0x10] sm:$0xff]
    %v152 = vld [vmem:[#allocation2 + $0x18] sm:$0xff]
    %v153 = vld [vmem:[#allocation2 + $0x20] sm:$0xff]
    %v154 = vld [vmem:[#allocation2 + $0x28] sm:$0xff]
    %v155 = vld [vmem:[#allocation2 + $0x30] sm:$0xff]
    %v156 = vld [vmem:[#allocation2 + $0x38] sm:$0xff]
    %v157 = vld [vmem:[#allocation2 + $0x40] sm:$0xff]
    %v158 = vld [vmem:[#allocation2 + $0x48] sm:$0xff]
    %v159 = vld [vmem:[#allocation2 + $0x50] sm:$0xff]
    %v160 = vld [vmem:[#allocation2 + $0x58] sm:$0xff]
    %v161 = vld [vmem:[#allocation2 + $0x60] sm:$0xff]
    %v162 = vld [vmem:[#allocation2 + $0x68] sm:$0xff]
    %v163 = vld [vmem:[#allocation2 + $0x70] sm:$0xff]
    %v164 = vld [vmem:[#allocation2 + $0x78] sm:$0xff]
    %v165 = vld [vmem:[#allocation2 + $0x80] sm:$0xff]
    %v166 = vld [vmem:[#allocation2 + $0x88] sm:$0xff]
    %v167 = vld [vmem:[#allocation2 + $0x90] sm:$0xff]
    %v168 = vld [vmem:[#allocation2 + $0x98] sm:$0xff]
    %v169 = vld [vmem:[#allocation2 + $0xa0] sm:$0xff]
    %v170 = vld [vmem:[#allocation2 + $0xa8] sm:$0xff]
    %v171 = vld [vmem:[#allocation2 + $0xb0] sm:$0xff]
    %v172 = vld [vmem:[#allocation2 + $0xb8] sm:$0xff]
    %v173 = vld [vmem:[#allocation2 + $0xc0] sm:$0xff]
    %v174 = vld [vmem:[#allocation2 + $0xc8] sm:$0xff]
    %v175 = vld [vmem:[#allocation2 + $0xd0] sm:$0xff]
    %v176 = vld [vmem:[#allocation2 + $0xd8] sm:$0xff]
    %v177 = vld [vmem:[#allocation2 + $0xe0] sm:$0xff]
    %v178 = vld [vmem:[#allocation2 + $0xe8] sm:$0xff]
    %v179 = vld [vmem:[#allocation2 + $0xf0] sm:$0xff]
    %v180 = vld [vmem:[#allocation2 + $0xf8] sm:$0xff]
    %v181 = vld [vmem:[#allocation13] sm:$0xf]
    %v182 = vpack.c.bf16 %v144, %v144
    %v184 = vperm.slane %v181, 0
    %v185 = vperm.slane %v181, 1
    %v186 = vperm.slane %v181, 2
    %v187 = vperm.slane %v181, 3
    %v224 = vunpack.c.l.b16 %v149
    %v225 = vunpack.c.h.b16 %v149
    %v226 = vunpack.c.l.b16 %v150
    %v227 = vunpack.c.h.b16 %v150
    %v228 = vunpack.c.l.b16 %v151
    %v229 = vunpack.c.h.b16 %v151
    %v230 = vunpack.c.l.b16 %v152
    %v231 = vunpack.c.h.b16 %v152
    %v232 = vunpack.c.l.b16 %v153
    %v233 = vunpack.c.h.b16 %v153
    %v234 = vunpack.c.l.b16 %v154
    %v235 = vunpack.c.h.b16 %v154
    %v236 = vunpack.c.l.b16 %v155
    %v237 = vunpack.c.h.b16 %v155
    %v238 = vunpack.c.l.b16 %v156
    %v239 = vunpack.c.h.b16 %v156
    %v240 = vunpack.c.l.b16 %v157
    %v241 = vunpack.c.h.b16 %v157
    %v242 = vunpack.c.l.b16 %v158
    %v243 = vunpack.c.h.b16 %v158
    %v244 = vunpack.c.l.b16 %v159
    %v245 = vunpack.c.h.b16 %v159
    %v246 = vunpack.c.l.b16 %v160
    %v247 = vunpack.c.h.b16 %v160
    %v248 = vunpack.c.l.b16 %v161
    %v249 = vunpack.c.h.b16 %v161
    %v250 = vunpack.c.l.b16 %v162
    %v251 = vunpack.c.h.b16 %v162
    %v252 = vunpack.c.l.b16 %v163
    %v253 = vunpack.c.h.b16 %v163
    %v254 = vunpack.c.l.b16 %v164
    %v255 = vunpack.c.h.b16 %v164
    %v256 = vunpack.c.l.b16 %v165
    %v257 = vunpack.c.h.b16 %v165
    %v258 = vunpack.c.l.b16 %v166
    %v259 = vunpack.c.h.b16 %v166
    %v260 = vunpack.c.l.b16 %v167
    %v261 = vunpack.c.h.b16 %v167
    %v262 = vunpack.c.l.b16 %v168
    %v263 = vunpack.c.h.b16 %v168
    %v264 = vunpack.c.l.b16 %v169
    %v265 = vunpack.c.h.b16 %v169
    %v266 = vunpack.c.l.b16 %v170
    %v267 = vunpack.c.h.b16 %v170
    %v268 = vunpack.c.l.b16 %v171
    %v269 = vunpack.c.h.b16 %v171
    %v270 = vunpack.c.l.b16 %v172
    %v271 = vunpack.c.h.b16 %v172
    %v272 = vunpack.c.l.b16 %v173
    %v273 = vunpack.c.h.b16 %v173
    %v274 = vunpack.c.l.b16 %v174
    %v275 = vunpack.c.h.b16 %v174
    %v276 = vunpack.c.l.b16 %v175
    %v277 = vunpack.c.h.b16 %v175
    %v278 = vunpack.c.l.b16 %v176
    %v279 = vunpack.c.h.b16 %v176
    %v280 = vunpack.c.l.b16 %v177
    %v281 = vunpack.c.h.b16 %v177
    %v282 = vunpack.c.l.b16 %v178
    %v283 = vunpack.c.h.b16 %v178
    %v284 = vunpack.c.l.b16 %v179
    %v285 = vunpack.c.h.b16 %v179
    %v286 = vunpack.c.l.b16 %v180
    %v287 = vunpack.c.h.b16 %v180
    %v288 = vpack.c.b16 %v228, %v224
    %v289 = vpack.c.b16 %v229, %v225
    %v290 = vpack.c.b16 %v230, %v226
    %v291 = vpack.c.b16 %v231, %v227
    %v292 = vpack.c.b16 %v236, %v232
    %v293 = vpack.c.b16 %v237, %v233
    %v294 = vpack.c.b16 %v238, %v234
    %v295 = vpack.c.b16 %v239, %v235
    %v296 = vpack.c.b16 %v244, %v240
    %v297 = vpack.c.b16 %v245, %v241
    %v298 = vpack.c.b16 %v246, %v242
    %v299 = vpack.c.b16 %v247, %v243
    %v300 = vpack.c.b16 %v252, %v248
    %v301 = vpack.c.b16 %v253, %v249
    %v302 = vpack.c.b16 %v254, %v250
    %v303 = vpack.c.b16 %v255, %v251
    %v304 = vpack.c.b16 %v260, %v256
    %v305 = vpack.c.b16 %v261, %v257
    %v306 = vpack.c.b16 %v262, %v258
    %v307 = vpack.c.b16 %v263, %v259
    %v308 = vpack.c.b16 %v268, %v264
    %v309 = vpack.c.b16 %v269, %v265
    %v310 = vpack.c.b16 %v270, %v266
    %v311 = vpack.c.b16 %v271, %v267
    %v312 = vpack.c.b16 %v276, %v272
    %v313 = vpack.c.b16 %v277, %v273
    %v314 = vpack.c.b16 %v278, %v274
    %v315 = vpack.c.b16 %v279, %v275
    %v316 = vpack.c.b16 %v284, %v280
    %v317 = vpack.c.b16 %v285, %v281
    %v318 = vpack.c.b16 %v286, %v282
    %v319 = vpack.c.b16 %v287, %v283
    %352 = vmatpush.bf16.msra.mxu0 %v316
    %353 = vmatpush.bf16.msra.mxu0 %v312
    %354 = vmatpush.bf16.msra.mxu0 %v308
    %355 = vmatpush.bf16.msra.mxu0 %v304
    %356 = vmatpush.bf16.msra.mxu0 %v300
    %357 = vmatpush.bf16.msra.mxu0 %v296
    %358 = vmatpush.bf16.msra.mxu0 %v292
    %359 = vmatpush.bf16.msra.mxu0 %v288
    %360 = vmatmul.bf16.gmra.mxu0 %v182
    %v361 = vpop.f32.mrf.mxu0
    %v362 = vadd.f32 %v184, %v361
    %v363 = vpop.f32.mrf.mxu0
    %364 = vdwg.mxu0
    %365 = vmatpush.bf16.msra.mxu0 %v317
    %366 = vmatpush.bf16.msra.mxu0 %v313
    %367 = vmatpush.bf16.msra.mxu0 %v309
    %368 = vmatpush.bf16.msra.mxu0 %v305
    %369 = vmatpush.bf16.msra.mxu0 %v301
    %370 = vmatpush.bf16.msra.mxu0 %v297
    %371 = vmatpush.bf16.msra.mxu0 %v293
    %372 = vmatpush.bf16.msra.mxu0 %v289
    %373 = vmatmul.bf16.gmra.mxu0 %v182
    %v374 = vpop.f32.mrf.mxu0
    %v375 = vadd.f32 %v185, %v374
    %v376 = vpop.f32.mrf.mxu0
    %377 = vdwg.mxu0
    %378 = vmatpush.bf16.msra.mxu0 %v318
    %379 = vmatpush.bf16.msra.mxu0 %v314
    %380 = vmatpush.bf16.msra.mxu0 %v310
    %381 = vmatpush.bf16.msra.mxu0 %v306
    %382 = vmatpush.bf16.msra.mxu0 %v302
    %383 = vmatpush.bf16.msra.mxu0 %v298
    %384 = vmatpush.bf16.msra.mxu0 %v294
    %385 = vmatpush.bf16.msra.mxu0 %v290
    %386 = vmatmul.bf16.gmra.mxu0 %v182
    %v387 = vpop.f32.mrf.mxu0
    %v388 = vadd.f32 %v186, %v387
    %v389 = vpop.f32.mrf.mxu0
    %390 = vdwg.mxu0
    %391 = vmatpush.bf16.msra.mxu0 %v319
    %392 = vmatpush.bf16.msra.mxu0 %v315
    %393 = vmatpush.bf16.msra.mxu0 %v311
    %394 = vmatpush.bf16.msra.mxu0 %v307
    %395 = vmatpush.bf16.msra.mxu0 %v303
    %396 = vmatpush.bf16.msra.mxu0 %v299
    %397 = vmatpush.bf16.msra.mxu0 %v295
    %398 = vmatpush.bf16.msra.mxu0 %v291
    %399 = vmatmul.bf16.gmra.mxu0 %v182
    %v400 = vpop.f32.mrf.mxu0
    %v401 = vadd.f32 %v187, %v400
    %v402 = vpop.f32.mrf.mxu0
    %403 = vdwg.mxu0
    %v404 = vmax.f32 %v362, 0.0
    %v405 = vmax.f32 %v375, 0.0
    %v406 = vmax.f32 %v388, 0.0
    %v407 = vmax.f32 %v401, 0.0
    %s408 = smul.u32 4, 64
    %s409 = smul.u32 %s408, 8
    %s410 = sshll.u32 %s409, 4
    %411 = dma.done %s60, %s410
    %v412 = vld [vmem:[#allocation3] sm:$0xff]
    %v413 = vld [vmem:[#allocation3 + $0x8] sm:$0xff]
    %v414 = vld [vmem:[#allocation3 + $0x10] sm:$0xff]
    %v415 = vld [vmem:[#allocation3 + $0x18] sm:$0xff]
    %v416 = vld [vmem:[#allocation3 + $0x20] sm:$0xff]
    %v417 = vld [vmem:[#allocation3 + $0x28] sm:$0xff]
    %v418 = vld [vmem:[#allocation3 + $0x30] sm:$0xff]
    %v419 = vld [vmem:[#allocation3 + $0x38] sm:$0xff]
    %v420 = vld [vmem:[#allocation3 + $0x40] sm:$0xff]
    %v421 = vld [vmem:[#allocation3 + $0x48] sm:$0xff]
    %v422 = vld [vmem:[#allocation3 + $0x50] sm:$0xff]
    %v423 = vld [vmem:[#allocation3 + $0x58] sm:$0xff]
    %v424 = vld [vmem:[#allocation3 + $0x60] sm:$0xff]
    %v425 = vld [vmem:[#allocation3 + $0x68] sm:$0xff]
    %v426 = vld [vmem:[#allocation3 + $0x70] sm:$0xff]
    %v427 = vld [vmem:[#allocation3 + $0x78] sm:$0xff]
    %v428 = vld [vmem:[#allocation3 + $0x80] sm:$0xff]
    %v429 = vld [vmem:[#allocation3 + $0x88] sm:$0xff]
    %v430 = vld [vmem:[#allocation3 + $0x90] sm:$0xff]
    %v431 = vld [vmem:[#allocation3 + $0x98] sm:$0xff]
    %v432 = vld [vmem:[#allocation3 + $0xa0] sm:$0xff]
    %v433 = vld [vmem:[#allocation3 + $0xa8] sm:$0xff]
    %v434 = vld [vmem:[#allocation3 + $0xb0] sm:$0xff]
    %v435 = vld [vmem:[#allocation3 + $0xb8] sm:$0xff]
    %v436 = vld [vmem:[#allocation3 + $0xc0] sm:$0xff]
    %v437 = vld [vmem:[#allocation3 + $0xc8] sm:$0xff]
    %v438 = vld [vmem:[#allocation3 + $0xd0] sm:$0xff]
    %v439 = vld [vmem:[#allocation3 + $0xd8] sm:$0xff]
    %v440 = vld [vmem:[#allocation3 + $0xe0] sm:$0xff]
    %v441 = vld [vmem:[#allocation3 + $0xe8] sm:$0xff]
    %v442 = vld [vmem:[#allocation3 + $0xf0] sm:$0xff]
    %v443 = vld [vmem:[#allocation3 + $0xf8] sm:$0xff]
    %v444 = vld [vmem:[#allocation3 + $0x100] sm:$0xff]
    %v445 = vld [vmem:[#allocation3 + $0x108] sm:$0xff]
    %v446 = vld [vmem:[#allocation3 + $0x110] sm:$0xff]
    %v447 = vld [vmem:[#allocation3 + $0x118] sm:$0xff]
    %v448 = vld [vmem:[#allocation3 + $0x120] sm:$0xff]
    %v449 = vld [vmem:[#allocation3 + $0x128] sm:$0xff]
    %v450 = vld [vmem:[#allocation3 + $0x130] sm:$0xff]
    %v451 = vld [vmem:[#allocation3 + $0x138] sm:$0xff]
    %v452 = vld [vmem:[#allocation3 + $0x140] sm:$0xff]
    %v453 = vld [vmem:[#allocation3 + $0x148] sm:$0xff]
    %v454 = vld [vmem:[#allocation3 + $0x150] sm:$0xff]
    %v455 = vld [vmem:[#allocation3 + $0x158] sm:$0xff]
    %v456 = vld [vmem:[#allocation3 + $0x160] sm:$0xff]
    %v457 = vld [vmem:[#allocation3 + $0x168] sm:$0xff]
    %v458 = vld [vmem:[#allocation3 + $0x170] sm:$0xff]
    %v459 = vld [vmem:[#allocation3 + $0x178] sm:$0xff]
    %v460 = vld [vmem:[#allocation3 + $0x180] sm:$0xff]
    %v461 = vld [vmem:[#allocation3 + $0x188] sm:$0xff]
    %v462 = vld [vmem:[#allocation3 + $0x190] sm:$0xff]
    %v463 = vld [vmem:[#allocation3 + $0x198] sm:$0xff]
    %v464 = vld [vmem:[#allocation3 + $0x1a0] sm:$0xff]
    %v465 = vld [vmem:[#allocation3 + $0x1a8] sm:$0xff]
    %v466 = vld [vmem:[#allocation3 + $0x1b0] sm:$0xff]
    %v467 = vld [vmem:[#allocation3 + $0x1b8] sm:$0xff]
    %v468 = vld [vmem:[#allocation3 + $0x1c0] sm:$0xff]
    %v469 = vld [vmem:[#allocation3 + $0x1c8] sm:$0xff]
    %v470 = vld [vmem:[#allocation3 + $0x1d0] sm:$0xff]
    %v471 = vld [vmem:[#allocation3 + $0x1d8] sm:$0xff]
    %v472 = vld [vmem:[#allocation3 + $0x1e0] sm:$0xff]
    %v473 = vld [vmem:[#allocation3 + $0x1e8] sm:$0xff]
    %v474 = vld [vmem:[#allocation3 + $0x1f0] sm:$0xff]
    %v475 = vld [vmem:[#allocation3 + $0x1f8] sm:$0xff]
    %v476 = vld [vmem:[#allocation3 + $0x200] sm:$0xff]
    %v477 = vld [vmem:[#allocation3 + $0x208] sm:$0xff]
    %v478 = vld [vmem:[#allocation3 + $0x210] sm:$0xff]
    %v479 = vld [vmem:[#allocation3 + $0x218] sm:$0xff]
    %v480 = vld [vmem:[#allocation3 + $0x220] sm:$0xff]
    %v481 = vld [vmem:[#allocation3 + $0x228] sm:$0xff]
    %v482 = vld [vmem:[#allocation3 + $0x230] sm:$0xff]
    %v483 = vld [vmem:[#allocation3 + $0x238] sm:$0xff]
    %v484 = vld [vmem:[#allocation3 + $0x240] sm:$0xff]
    %v485 = vld [vmem:[#allocation3 + $0x248] sm:$0xff]
    %v486 = vld [vmem:[#allocation3 + $0x250] sm:$0xff]
    %v487 = vld [vmem:[#allocation3 + $0x258] sm:$0xff]
    %v488 = vld [vmem:[#allocation3 + $0x260] sm:$0xff]
    %v489 = vld [vmem:[#allocation3 + $0x268] sm:$0xff]
    %v490 = vld [vmem:[#allocation3 + $0x270] sm:$0xff]
    %v491 = vld [vmem:[#allocation3 + $0x278] sm:$0xff]
    %v492 = vld [vmem:[#allocation3 + $0x280] sm:$0xff]
    %v493 = vld [vmem:[#allocation3 + $0x288] sm:$0xff]
    %v494 = vld [vmem:[#allocation3 + $0x290] sm:$0xff]
    %v495 = vld [vmem:[#allocation3 + $0x298] sm:$0xff]
    %v496 = vld [vmem:[#allocation3 + $0x2a0] sm:$0xff]
    %v497 = vld [vmem:[#allocation3 + $0x2a8] sm:$0xff]
    %v498 = vld [vmem:[#allocation3 + $0x2b0] sm:$0xff]
    %v499 = vld [vmem:[#allocation3 + $0x2b8] sm:$0xff]
    %v500 = vld [vmem:[#allocation3 + $0x2c0] sm:$0xff]
    %v501 = vld [vmem:[#allocation3 + $0x2c8] sm:$0xff]
    %v502 = vld [vmem:[#allocation3 + $0x2d0] sm:$0xff]
    %v503 = vld [vmem:[#allocation3 + $0x2d8] sm:$0xff]
    %v504 = vld [vmem:[#allocation3 + $0x2e0] sm:$0xff]
    %v505 = vld [vmem:[#allocation3 + $0x2e8] sm:$0xff]
    %v506 = vld [vmem:[#allocation3 + $0x2f0] sm:$0xff]
    %v507 = vld [vmem:[#allocation3 + $0x2f8] sm:$0xff]
    %v508 = vld [vmem:[#allocation3 + $0x300] sm:$0xff]
    %v509 = vld [vmem:[#allocation3 + $0x308] sm:$0xff]
    %v510 = vld [vmem:[#allocation3 + $0x310] sm:$0xff]
    %v511 = vld [vmem:[#allocation3 + $0x318] sm:$0xff]
    %v512 = vld [vmem:[#allocation3 + $0x320] sm:$0xff]
    %v513 = vld [vmem:[#allocation3 + $0x328] sm:$0xff]
    %v514 = vld [vmem:[#allocation3 + $0x330] sm:$0xff]
    %v515 = vld [vmem:[#allocation3 + $0x338] sm:$0xff]
    %v516 = vld [vmem:[#allocation3 + $0x340] sm:$0xff]
    %v517 = vld [vmem:[#allocation3 + $0x348] sm:$0xff]
    %v518 = vld [vmem:[#allocation3 + $0x350] sm:$0xff]
    %v519 = vld [vmem:[#allocation3 + $0x358] sm:$0xff]
    %v520 = vld [vmem:[#allocation3 + $0x360] sm:$0xff]
    %v521 = vld [vmem:[#allocation3 + $0x368] sm:$0xff]
    %v522 = vld [vmem:[#allocation3 + $0x370] sm:$0xff]
    %v523 = vld [vmem:[#allocation3 + $0x378] sm:$0xff]
    %v524 = vld [vmem:[#allocation3 + $0x380] sm:$0xff]
    %v525 = vld [vmem:[#allocation3 + $0x388] sm:$0xff]
    %v526 = vld [vmem:[#allocation3 + $0x390] sm:$0xff]
    %v527 = vld [vmem:[#allocation3 + $0x398] sm:$0xff]
    %v528 = vld [vmem:[#allocation3 + $0x3a0] sm:$0xff]
    %v529 = vld [vmem:[#allocation3 + $0x3a8] sm:$0xff]
    %v530 = vld [vmem:[#allocation3 + $0x3b0] sm:$0xff]
    %v531 = vld [vmem:[#allocation3 + $0x3b8] sm:$0xff]
    %v532 = vld [vmem:[#allocation3 + $0x3c0] sm:$0xff]
    %v533 = vld [vmem:[#allocation3 + $0x3c8] sm:$0xff]
    %v534 = vld [vmem:[#allocation3 + $0x3d0] sm:$0xff]
    %v535 = vld [vmem:[#allocation3 + $0x3d8] sm:$0xff]
    %v536 = vld [vmem:[#allocation3 + $0x3e0] sm:$0xff]
    %v537 = vld [vmem:[#allocation3 + $0x3e8] sm:$0xff]
    %v538 = vld [vmem:[#allocation3 + $0x3f0] sm:$0xff]
    %v539 = vld [vmem:[#allocation3 + $0x3f8] sm:$0xff]
    %v540 = vld [vmem:[#allocation3 + $0x400] sm:$0xff]
    %v541 = vld [vmem:[#allocation3 + $0x408] sm:$0xff]
    %v542 = vld [vmem:[#allocation3 + $0x410] sm:$0xff]
    %v543 = vld [vmem:[#allocation3 + $0x418] sm:$0xff]
    %v544 = vld [vmem:[#allocation3 + $0x420] sm:$0xff]
    %v545 = vld [vmem:[#allocation3 + $0x428] sm:$0xff]
    %v546 = vld [vmem:[#allocation3 + $0x430] sm:$0xff]
    %v547 = vld [vmem:[#allocation3 + $0x438] sm:$0xff]
    %v548 = vld [vmem:[#allocation3 + $0x440] sm:$0xff]
    %v549 = vld [vmem:[#allocation3 + $0x448] sm:$0xff]
    %v550 = vld [vmem:[#allocation3 + $0x450] sm:$0xff]
    %v551 = vld [vmem:[#allocation3 + $0x458] sm:$0xff]
    %v552 = vld [vmem:[#allocation3 + $0x460] sm:$0xff]
    %v553 = vld [vmem:[#allocation3 + $0x468] sm:$0xff]
    %v554 = vld [vmem:[#allocation3 + $0x470] sm:$0xff]
    %v555 = vld [vmem:[#allocation3 + $0x478] sm:$0xff]
    %v556 = vld [vmem:[#allocation3 + $0x480] sm:$0xff]
    %v557 = vld [vmem:[#allocation3 + $0x488] sm:$0xff]
    %v558 = vld [vmem:[#allocation3 + $0x490] sm:$0xff]
    %v559 = vld [vmem:[#allocation3 + $0x498] sm:$0xff]
    %v560 = vld [vmem:[#allocation3 + $0x4a0] sm:$0xff]
    %v561 = vld [vmem:[#allocation3 + $0x4a8] sm:$0xff]
    %v562 = vld [vmem:[#allocation3 + $0x4b0] sm:$0xff]
    %v563 = vld [vmem:[#allocation3 + $0x4b8] sm:$0xff]
    %v564 = vld [vmem:[#allocation3 + $0x4c0] sm:$0xff]
    %v565 = vld [vmem:[#allocation3 + $0x4c8] sm:$0xff]
    %v566 = vld [vmem:[#allocation3 + $0x4d0] sm:$0xff]
    %v567 = vld [vmem:[#allocation3 + $0x4d8] sm:$0xff]
    %v568 = vld [vmem:[#allocation3 + $0x4e0] sm:$0xff]
    %v569 = vld [vmem:[#allocation3 + $0x4e8] sm:$0xff]
    %v570 = vld [vmem:[#allocation3 + $0x4f0] sm:$0xff]
    %v571 = vld [vmem:[#allocation3 + $0x4f8] sm:$0xff]
    %v572 = vld [vmem:[#allocation3 + $0x500] sm:$0xff]
    %v573 = vld [vmem:[#allocation3 + $0x508] sm:$0xff]
    %v574 = vld [vmem:[#allocation3 + $0x510] sm:$0xff]
    %v575 = vld [vmem:[#allocation3 + $0x518] sm:$0xff]
    %v576 = vld [vmem:[#allocation3 + $0x520] sm:$0xff]
    %v577 = vld [vmem:[#allocation3 + $0x528] sm:$0xff]
    %v578 = vld [vmem:[#allocation3 + $0x530] sm:$0xff]
    %v579 = vld [vmem:[#allocation3 + $0x538] sm:$0xff]
    %v580 = vld [vmem:[#allocation3 + $0x540] sm:$0xff]
    %v581 = vld [vmem:[#allocation3 + $0x548] sm:$0xff]
    %v582 = vld [vmem:[#allocation3 + $0x550] sm:$0xff]
    %v583 = vld [vmem:[#allocation3 + $0x558] sm:$0xff]
    %v584 = vld [vmem:[#allocation3 + $0x560] sm:$0xff]
    %v585 = vld [vmem:[#allocation3 + $0x568] sm:$0xff]
    %v586 = vld [vmem:[#allocation3 + $0x570] sm:$0xff]
    %v587 = vld [vmem:[#allocation3 + $0x578] sm:$0xff]
    %v588 = vld [vmem:[#allocation3 + $0x580] sm:$0xff]
    %v589 = vld [vmem:[#allocation3 + $0x588] sm:$0xff]
    %v590 = vld [vmem:[#allocation3 + $0x590] sm:$0xff]
    %v591 = vld [vmem:[#allocation3 + $0x598] sm:$0xff]
    %v592 = vld [vmem:[#allocation3 + $0x5a0] sm:$0xff]
    %v593 = vld [vmem:[#allocation3 + $0x5a8] sm:$0xff]
    %v594 = vld [vmem:[#allocation3 + $0x5b0] sm:$0xff]
    %v595 = vld [vmem:[#allocation3 + $0x5b8] sm:$0xff]
    %v596 = vld [vmem:[#allocation3 + $0x5c0] sm:$0xff]
    %v597 = vld [vmem:[#allocation3 + $0x5c8] sm:$0xff]
    %v598 = vld [vmem:[#allocation3 + $0x5d0] sm:$0xff]
    %v599 = vld [vmem:[#allocation3 + $0x5d8] sm:$0xff]
    %v600 = vld [vmem:[#allocation3 + $0x5e0] sm:$0xff]
    %v601 = vld [vmem:[#allocation3 + $0x5e8] sm:$0xff]
    %v602 = vld [vmem:[#allocation3 + $0x5f0] sm:$0xff]
    %v603 = vld [vmem:[#allocation3 + $0x5f8] sm:$0xff]
    %v604 = vld [vmem:[#allocation3 + $0x600] sm:$0xff]
    %v605 = vld [vmem:[#allocation3 + $0x608] sm:$0xff]
    %v606 = vld [vmem:[#allocation3 + $0x610] sm:$0xff]
    %v607 = vld [vmem:[#allocation3 + $0x618] sm:$0xff]
    %v608 = vld [vmem:[#allocation3 + $0x620] sm:$0xff]
    %v609 = vld [vmem:[#allocation3 + $0x628] sm:$0xff]
    %v610 = vld [vmem:[#allocation3 + $0x630] sm:$0xff]
    %v611 = vld [vmem:[#allocation3 + $0x638] sm:$0xff]
    %v612 = vld [vmem:[#allocation3 + $0x640] sm:$0xff]
    %v613 = vld [vmem:[#allocation3 + $0x648] sm:$0xff]
    %v614 = vld [vmem:[#allocation3 + $0x650] sm:$0xff]
    %v615 = vld [vmem:[#allocation3 + $0x658] sm:$0xff]
    %v616 = vld [vmem:[#allocation3 + $0x660] sm:$0xff]
    %v617 = vld [vmem:[#allocation3 + $0x668] sm:$0xff]
    %v618 = vld [vmem:[#allocation3 + $0x670] sm:$0xff]
    %v619 = vld [vmem:[#allocation3 + $0x678] sm:$0xff]
    %v620 = vld [vmem:[#allocation3 + $0x680] sm:$0xff]
    %v621 = vld [vmem:[#allocation3 + $0x688] sm:$0xff]
    %v622 = vld [vmem:[#allocation3 + $0x690] sm:$0xff]
    %v623 = vld [vmem:[#allocation3 + $0x698] sm:$0xff]
    %v624 = vld [vmem:[#allocation3 + $0x6a0] sm:$0xff]
    %v625 = vld [vmem:[#allocation3 + $0x6a8] sm:$0xff]
    %v626 = vld [vmem:[#allocation3 + $0x6b0] sm:$0xff]
    %v627 = vld [vmem:[#allocation3 + $0x6b8] sm:$0xff]
    %v628 = vld [vmem:[#allocation3 + $0x6c0] sm:$0xff]
    %v629 = vld [vmem:[#allocation3 + $0x6c8] sm:$0xff]
    %v630 = vld [vmem:[#allocation3 + $0x6d0] sm:$0xff]
    %v631 = vld [vmem:[#allocation3 + $0x6d8] sm:$0xff]
    %v632 = vld [vmem:[#allocation3 + $0x6e0] sm:$0xff]
    %v633 = vld [vmem:[#allocation3 + $0x6e8] sm:$0xff]
    %v634 = vld [vmem:[#allocation3 + $0x6f0] sm:$0xff]
    %v635 = vld [vmem:[#allocation3 + $0x6f8] sm:$0xff]
    %v636 = vld [vmem:[#allocation3 + $0x700] sm:$0xff]
    %v637 = vld [vmem:[#allocation3 + $0x708] sm:$0xff]
    %v638 = vld [vmem:[#allocation3 + $0x710] sm:$0xff]
    %v639 = vld [vmem:[#allocation3 + $0x718] sm:$0xff]
    %v640 = vld [vmem:[#allocation3 + $0x720] sm:$0xff]
    %v641 = vld [vmem:[#allocation3 + $0x728] sm:$0xff]
    %v642 = vld [vmem:[#allocation3 + $0x730] sm:$0xff]
    %v643 = vld [vmem:[#allocation3 + $0x738] sm:$0xff]
    %v644 = vld [vmem:[#allocation3 + $0x740] sm:$0xff]
    %v645 = vld [vmem:[#allocation3 + $0x748] sm:$0xff]
    %v646 = vld [vmem:[#allocation3 + $0x750] sm:$0xff]
    %v647 = vld [vmem:[#allocation3 + $0x758] sm:$0xff]
    %v648 = vld [vmem:[#allocation3 + $0x760] sm:$0xff]
    %v649 = vld [vmem:[#allocation3 + $0x768] sm:$0xff]
    %v650 = vld [vmem:[#allocation3 + $0x770] sm:$0xff]
    %v651 = vld [vmem:[#allocation3 + $0x778] sm:$0xff]
    %v652 = vld [vmem:[#allocation3 + $0x780] sm:$0xff]
    %v653 = vld [vmem:[#allocation3 + $0x788] sm:$0xff]
    %v654 = vld [vmem:[#allocation3 + $0x790] sm:$0xff]
    %v655 = vld [vmem:[#allocation3 + $0x798] sm:$0xff]
    %v656 = vld [vmem:[#allocation3 + $0x7a0] sm:$0xff]
    %v657 = vld [vmem:[#allocation3 + $0x7a8] sm:$0xff]
    %v658 = vld [vmem:[#allocation3 + $0x7b0] sm:$0xff]
    %v659 = vld [vmem:[#allocation3 + $0x7b8] sm:$0xff]
    %v660 = vld [vmem:[#allocation3 + $0x7c0] sm:$0xff]
    %v661 = vld [vmem:[#allocation3 + $0x7c8] sm:$0xff]
    %v662 = vld [vmem:[#allocation3 + $0x7d0] sm:$0xff]
    %v663 = vld [vmem:[#allocation3 + $0x7d8] sm:$0xff]
    %v664 = vld [vmem:[#allocation3 + $0x7e0] sm:$0xff]
    %v665 = vld [vmem:[#allocation3 + $0x7e8] sm:$0xff]
    %v666 = vld [vmem:[#allocation3 + $0x7f0] sm:$0xff]
    %v667 = vld [vmem:[#allocation3 + $0x7f8] sm:$0xff]
    %v668 = vld [vmem:[#allocation13 + $0x4] sm:$0xff]
    %v669 = vpack.c.bf16 %v404, %v404
    %v670 = vpack.c.bf16 %v405, %v405
    %v671 = vpack.c.bf16 %v406, %v406
    %v672 = vpack.c.bf16 %v407, %v407
    %v674 = vperm.slane %v668, 0
    %v675 = vperm.slane %v668, 1
    %v676 = vperm.slane %v668, 2
    %v677 = vperm.slane %v668, 3
    %v678 = vperm.slane %v668, 4
    %v679 = vperm.slane %v668, 5
    %v680 = vperm.slane %v668, 6
    %v681 = vperm.slane %v668, 7
    %v946 = vunpack.c.l.b16 %v412
    %v947 = vunpack.c.h.b16 %v412
    %v948 = vunpack.c.l.b16 %v413
    %v949 = vunpack.c.h.b16 %v413
    %v950 = vunpack.c.l.b16 %v414
    %v951 = vunpack.c.h.b16 %v414
    %v952 = vunpack.c.l.b16 %v415
    %v953 = vunpack.c.h.b16 %v415
    %v954 = vunpack.c.l.b16 %v416
    %v955 = vunpack.c.h.b16 %v416
    %v956 = vunpack.c.l.b16 %v417
    %v957 = vunpack.c.h.b16 %v417
    %v958 = vunpack.c.l.b16 %v418
    %v959 = vunpack.c.h.b16 %v418
    %v960 = vunpack.c.l.b16 %v419
    %v961 = vunpack.c.h.b16 %v419
    %v962 = vunpack.c.l.b16 %v420
    %v963 = vunpack.c.h.b16 %v420
    %v964 = vunpack.c.l.b16 %v421
    %v965 = vunpack.c.h.b16 %v421
    %v966 = vunpack.c.l.b16 %v422
    %v967 = vunpack.c.h.b16 %v422
    %v968 = vunpack.c.l.b16 %v423
    %v969 = vunpack.c.h.b16 %v423
    %v970 = vunpack.c.l.b16 %v424
    %v971 = vunpack.c.h.b16 %v424
    %v972 = vunpack.c.l.b16 %v425
    %v973 = vunpack.c.h.b16 %v425
    %v974 = vunpack.c.l.b16 %v426
    %v975 = vunpack.c.h.b16 %v426
    %v976 = vunpack.c.l.b16 %v427
    %v977 = vunpack.c.h.b16 %v427
    %v978 = vunpack.c.l.b16 %v428
    %v979 = vunpack.c.h.b16 %v428
    %v980 = vunpack.c.l.b16 %v429
    %v981 = vunpack.c.h.b16 %v429
    %v982 = vunpack.c.l.b16 %v430
    %v983 = vunpack.c.h.b16 %v430
    %v984 = vunpack.c.l.b16 %v431
    %v985 = vunpack.c.h.b16 %v431
    %v986 = vunpack.c.l.b16 %v432
    %v987 = vunpack.c.h.b16 %v432
    %v988 = vunpack.c.l.b16 %v433
    %v989 = vunpack.c.h.b16 %v433
    %v990 = vunpack.c.l.b16 %v434
    %v991 = vunpack.c.h.b16 %v434
    %v992 = vunpack.c.l.b16 %v435
    %v993 = vunpack.c.h.b16 %v435
    %v994 = vunpack.c.l.b16 %v436
    %v995 = vunpack.c.h.b16 %v436
    %v996 = vunpack.c.l.b16 %v437
    %v997 = vunpack.c.h.b16 %v437
    %v998 = vunpack.c.l.b16 %v438
    %v999 = vunpack.c.h.b16 %v438
    %v1000 = vunpack.c.l.b16 %v439
    %v1001 = vunpack.c.h.b16 %v439
    %v1002 = vunpack.c.l.b16 %v440
    %v1003 = vunpack.c.h.b16 %v440
    %v1004 = vunpack.c.l.b16 %v441
    %v1005 = vunpack.c.h.b16 %v441
    %v1006 = vunpack.c.l.b16 %v442
    %v1007 = vunpack.c.h.b16 %v442
    %v1008 = vunpack.c.l.b16 %v443
    %v1009 = vunpack.c.h.b16 %v443
    %v1010 = vunpack.c.l.b16 %v444
    %v1011 = vunpack.c.h.b16 %v444
    %v1012 = vunpack.c.l.b16 %v445
    %v1013 = vunpack.c.h.b16 %v445
    %v1014 = vunpack.c.l.b16 %v446
    %v1015 = vunpack.c.h.b16 %v446
    %v1016 = vunpack.c.l.b16 %v447
    %v1017 = vunpack.c.h.b16 %v447
    %v1018 = vunpack.c.l.b16 %v448
    %v1019 = vunpack.c.h.b16 %v448
    %v1020 = vunpack.c.l.b16 %v449
    %v1021 = vunpack.c.h.b16 %v449
    %v1022 = vunpack.c.l.b16 %v450
    %v1023 = vunpack.c.h.b16 %v450
    %v1024 = vunpack.c.l.b16 %v451
    %v1025 = vunpack.c.h.b16 %v451
    %v1026 = vunpack.c.l.b16 %v452
    %v1027 = vunpack.c.h.b16 %v452
    %v1028 = vunpack.c.l.b16 %v453
    %v1029 = vunpack.c.h.b16 %v453
    %v1030 = vunpack.c.l.b16 %v454
    %v1031 = vunpack.c.h.b16 %v454
    %v1032 = vunpack.c.l.b16 %v455
    %v1033 = vunpack.c.h.b16 %v455
    %v1034 = vunpack.c.l.b16 %v456
    %v1035 = vunpack.c.h.b16 %v456
    %v1036 = vunpack.c.l.b16 %v457
    %v1037 = vunpack.c.h.b16 %v457
    %v1038 = vunpack.c.l.b16 %v458
    %v1039 = vunpack.c.h.b16 %v458
    %v1040 = vunpack.c.l.b16 %v459
    %v1041 = vunpack.c.h.b16 %v459
    %v1042 = vunpack.c.l.b16 %v460
    %v1043 = vunpack.c.h.b16 %v460
    %v1044 = vunpack.c.l.b16 %v461
    %v1045 = vunpack.c.h.b16 %v461
    %v1046 = vunpack.c.l.b16 %v462
    %v1047 = vunpack.c.h.b16 %v462
    %v1048 = vunpack.c.l.b16 %v463
    %v1049 = vunpack.c.h.b16 %v463
    %v1050 = vunpack.c.l.b16 %v464
    %v1051 = vunpack.c.h.b16 %v464
    %v1052 = vunpack.c.l.b16 %v465
    %v1053 = vunpack.c.h.b16 %v465
    %v1054 = vunpack.c.l.b16 %v466
    %v1055 = vunpack.c.h.b16 %v466
    %v1056 = vunpack.c.l.b16 %v467
    %v1057 = vunpack.c.h.b16 %v467
    %v1058 = vunpack.c.l.b16 %v468
    %v1059 = vunpack.c.h.b16 %v468
    %v1060 = vunpack.c.l.b16 %v469
    %v1061 = vunpack.c.h.b16 %v469
    %v1062 = vunpack.c.l.b16 %v470
    %v1063 = vunpack.c.h.b16 %v470
    %v1064 = vunpack.c.l.b16 %v471
    %v1065 = vunpack.c.h.b16 %v471
    %v1066 = vunpack.c.l.b16 %v472
    %v1067 = vunpack.c.h.b16 %v472
    %v1068 = vunpack.c.l.b16 %v473
    %v1069 = vunpack.c.h.b16 %v473
    %v1070 = vunpack.c.l.b16 %v474
    %v1071 = vunpack.c.h.b16 %v474
    %v1072 = vunpack.c.l.b16 %v475
    %v1073 = vunpack.c.h.b16 %v475
    %v1074 = vunpack.c.l.b16 %v476
    %v1075 = vunpack.c.h.b16 %v476
    %v1076 = vunpack.c.l.b16 %v477
    %v1077 = vunpack.c.h.b16 %v477
    %v1078 = vunpack.c.l.b16 %v478
    %v1079 = vunpack.c.h.b16 %v478
    %v1080 = vunpack.c.l.b16 %v479
    %v1081 = vunpack.c.h.b16 %v479
    %v1082 = vunpack.c.l.b16 %v480
    %v1083 = vunpack.c.h.b16 %v480
    %v1084 = vunpack.c.l.b16 %v481
    %v1085 = vunpack.c.h.b16 %v481
    %v1086 = vunpack.c.l.b16 %v482
    %v1087 = vunpack.c.h.b16 %v482
    %v1088 = vunpack.c.l.b16 %v483
    %v1089 = vunpack.c.h.b16 %v483
    %v1090 = vunpack.c.l.b16 %v484
    %v1091 = vunpack.c.h.b16 %v484
    %v1092 = vunpack.c.l.b16 %v485
    %v1093 = vunpack.c.h.b16 %v485
    %v1094 = vunpack.c.l.b16 %v486
    %v1095 = vunpack.c.h.b16 %v486
    %v1096 = vunpack.c.l.b16 %v487
    %v1097 = vunpack.c.h.b16 %v487
    %v1098 = vunpack.c.l.b16 %v488
    %v1099 = vunpack.c.h.b16 %v488
    %v1100 = vunpack.c.l.b16 %v489
    %v1101 = vunpack.c.h.b16 %v489
    %v1102 = vunpack.c.l.b16 %v490
    %v1103 = vunpack.c.h.b16 %v490
    %v1104 = vunpack.c.l.b16 %v491
    %v1105 = vunpack.c.h.b16 %v491
    %v1106 = vunpack.c.l.b16 %v492
    %v1107 = vunpack.c.h.b16 %v492
    %v1108 = vunpack.c.l.b16 %v493
    %v1109 = vunpack.c.h.b16 %v493
    %v1110 = vunpack.c.l.b16 %v494
    %v1111 = vunpack.c.h.b16 %v494
    %v1112 = vunpack.c.l.b16 %v495
    %v1113 = vunpack.c.h.b16 %v495
    %v1114 = vunpack.c.l.b16 %v496
    %v1115 = vunpack.c.h.b16 %v496
    %v1116 = vunpack.c.l.b16 %v497
    %v1117 = vunpack.c.h.b16 %v497
    %v1118 = vunpack.c.l.b16 %v498
    %v1119 = vunpack.c.h.b16 %v498
    %v1120 = vunpack.c.l.b16 %v499
    %v1121 = vunpack.c.h.b16 %v499
    %v1122 = vunpack.c.l.b16 %v500
    %v1123 = vunpack.c.h.b16 %v500
    %v1124 = vunpack.c.l.b16 %v501
    %v1125 = vunpack.c.h.b16 %v501
    %v1126 = vunpack.c.l.b16 %v502
    %v1127 = vunpack.c.h.b16 %v502
    %v1128 = vunpack.c.l.b16 %v503
    %v1129 = vunpack.c.h.b16 %v503
    %v1130 = vunpack.c.l.b16 %v504
    %v1131 = vunpack.c.h.b16 %v504
    %v1132 = vunpack.c.l.b16 %v505
    %v1133 = vunpack.c.h.b16 %v505
    %v1134 = vunpack.c.l.b16 %v506
    %v1135 = vunpack.c.h.b16 %v506
    %v1136 = vunpack.c.l.b16 %v507
    %v1137 = vunpack.c.h.b16 %v507
    %v1138 = vunpack.c.l.b16 %v508
    %v1139 = vunpack.c.h.b16 %v508
    %v1140 = vunpack.c.l.b16 %v509
    %v1141 = vunpack.c.h.b16 %v509
    %v1142 = vunpack.c.l.b16 %v510
    %v1143 = vunpack.c.h.b16 %v510
    %v1144 = vunpack.c.l.b16 %v511
    %v1145 = vunpack.c.h.b16 %v511
    %v1146 = vunpack.c.l.b16 %v512
    %v1147 = vunpack.c.h.b16 %v512
    %v1148 = vunpack.c.l.b16 %v513
    %v1149 = vunpack.c.h.b16 %v513
    %v1150 = vunpack.c.l.b16 %v514
    %v1151 = vunpack.c.h.b16 %v514
    %v1152 = vunpack.c.l.b16 %v515
    %v1153 = vunpack.c.h.b16 %v515
    %v1154 = vunpack.c.l.b16 %v516
    %v1155 = vunpack.c.h.b16 %v516
    %v1156 = vunpack.c.l.b16 %v517
    %v1157 = vunpack.c.h.b16 %v517
    %v1158 = vunpack.c.l.b16 %v518
    %v1159 = vunpack.c.h.b16 %v518
    %v1160 = vunpack.c.l.b16 %v519
    %v1161 = vunpack.c.h.b16 %v519
    %v1162 = vunpack.c.l.b16 %v520
    %v1163 = vunpack.c.h.b16 %v520
    %v1164 = vunpack.c.l.b16 %v521
    %v1165 = vunpack.c.h.b16 %v521
    %v1166 = vunpack.c.l.b16 %v522
    %v1167 = vunpack.c.h.b16 %v522
    %v1168 = vunpack.c.l.b16 %v523
    %v1169 = vunpack.c.h.b16 %v523
    %v1170 = vunpack.c.l.b16 %v524
    %v1171 = vunpack.c.h.b16 %v524
    %v1172 = vunpack.c.l.b16 %v525
    %v1173 = vunpack.c.h.b16 %v525
    %v1174 = vunpack.c.l.b16 %v526
    %v1175 = vunpack.c.h.b16 %v526
    %v1176 = vunpack.c.l.b16 %v527
    %v1177 = vunpack.c.h.b16 %v527
    %v1178 = vunpack.c.l.b16 %v528
    %v1179 = vunpack.c.h.b16 %v528
    %v1180 = vunpack.c.l.b16 %v529
    %v1181 = vunpack.c.h.b16 %v529
    %v1182 = vunpack.c.l.b16 %v530
    %v1183 = vunpack.c.h.b16 %v530
    %v1184 = vunpack.c.l.b16 %v531
    %v1185 = vunpack.c.h.b16 %v531
    %v1186 = vunpack.c.l.b16 %v532
    %v1187 = vunpack.c.h.b16 %v532
    %v1188 = vunpack.c.l.b16 %v533
    %v1189 = vunpack.c.h.b16 %v533
    %v1190 = vunpack.c.l.b16 %v534
    %v1191 = vunpack.c.h.b16 %v534
    %v1192 = vunpack.c.l.b16 %v535
    %v1193 = vunpack.c.h.b16 %v535
    %v1194 = vunpack.c.l.b16 %v536
    %v1195 = vunpack.c.h.b16 %v536
    %v1196 = vunpack.c.l.b16 %v537
    %v1197 = vunpack.c.h.b16 %v537
    %v1198 = vunpack.c.l.b16 %v538
    %v1199 = vunpack.c.h.b16 %v538
    %v1200 = vunpack.c.l.b16 %v539
    %v1201 = vunpack.c.h.b16 %v539
    %v1202 = vunpack.c.l.b16 %v540
    %v1203 = vunpack.c.h.b16 %v540
    %v1204 = vunpack.c.l.b16 %v541
    %v1205 = vunpack.c.h.b16 %v541
    %v1206 = vunpack.c.l.b16 %v542
    %v1207 = vunpack.c.h.b16 %v542
    %v1208 = vunpack.c.l.b16 %v543
    %v1209 = vunpack.c.h.b16 %v543
    %v1210 = vunpack.c.l.b16 %v544
    %v1211 = vunpack.c.h.b16 %v544
    %v1212 = vunpack.c.l.b16 %v545
    %v1213 = vunpack.c.h.b16 %v545
    %v1214 = vunpack.c.l.b16 %v546
    %v1215 = vunpack.c.h.b16 %v546
    %v1216 = vunpack.c.l.b16 %v547
    %v1217 = vunpack.c.h.b16 %v547
    %v1218 = vunpack.c.l.b16 %v548
    %v1219 = vunpack.c.h.b16 %v548
    %v1220 = vunpack.c.l.b16 %v549
    %v1221 = vunpack.c.h.b16 %v549
    %v1222 = vunpack.c.l.b16 %v550
    %v1223 = vunpack.c.h.b16 %v550
    %v1224 = vunpack.c.l.b16 %v551
    %v1225 = vunpack.c.h.b16 %v551
    %v1226 = vunpack.c.l.b16 %v552
    %v1227 = vunpack.c.h.b16 %v552
    %v1228 = vunpack.c.l.b16 %v553
    %v1229 = vunpack.c.h.b16 %v553
    %v1230 = vunpack.c.l.b16 %v554
    %v1231 = vunpack.c.h.b16 %v554
    %v1232 = vunpack.c.l.b16 %v555
    %v1233 = vunpack.c.h.b16 %v555
    %v1234 = vunpack.c.l.b16 %v556
    %v1235 = vunpack.c.h.b16 %v556
    %v1236 = vunpack.c.l.b16 %v557
    %v1237 = vunpack.c.h.b16 %v557
    %v1238 = vunpack.c.l.b16 %v558
    %v1239 = vunpack.c.h.b16 %v558
    %v1240 = vunpack.c.l.b16 %v559
    %v1241 = vunpack.c.h.b16 %v559
    %v1242 = vunpack.c.l.b16 %v560
    %v1243 = vunpack.c.h.b16 %v560
    %v1244 = vunpack.c.l.b16 %v561
    %v1245 = vunpack.c.h.b16 %v561
    %v1246 = vunpack.c.l.b16 %v562
    %v1247 = vunpack.c.h.b16 %v562
    %v1248 = vunpack.c.l.b16 %v563
    %v1249 = vunpack.c.h.b16 %v563
    %v1250 = vunpack.c.l.b16 %v564
    %v1251 = vunpack.c.h.b16 %v564
    %v1252 = vunpack.c.l.b16 %v565
    %v1253 = vunpack.c.h.b16 %v565
    %v1254 = vunpack.c.l.b16 %v566
    %v1255 = vunpack.c.h.b16 %v566
    %v1256 = vunpack.c.l.b16 %v567
    %v1257 = vunpack.c.h.b16 %v567
    %v1258 = vunpack.c.l.b16 %v568
    %v1259 = vunpack.c.h.b16 %v568
    %v1260 = vunpack.c.l.b16 %v569
    %v1261 = vunpack.c.h.b16 %v569
    %v1262 = vunpack.c.l.b16 %v570
    %v1263 = vunpack.c.h.b16 %v570
    %v1264 = vunpack.c.l.b16 %v571
    %v1265 = vunpack.c.h.b16 %v571
    %v1266 = vunpack.c.l.b16 %v572
    %v1267 = vunpack.c.h.b16 %v572
    %v1268 = vunpack.c.l.b16 %v573
    %v1269 = vunpack.c.h.b16 %v573
    %v1270 = vunpack.c.l.b16 %v574
    %v1271 = vunpack.c.h.b16 %v574
    %v1272 = vunpack.c.l.b16 %v575
    %v1273 = vunpack.c.h.b16 %v575
    %v1274 = vunpack.c.l.b16 %v576
    %v1275 = vunpack.c.h.b16 %v576
    %v1276 = vunpack.c.l.b16 %v577
    %v1277 = vunpack.c.h.b16 %v577
    %v1278 = vunpack.c.l.b16 %v578
    %v1279 = vunpack.c.h.b16 %v578
    %v1280 = vunpack.c.l.b16 %v579
    %v1281 = vunpack.c.h.b16 %v579
    %v1282 = vunpack.c.l.b16 %v580
    %v1283 = vunpack.c.h.b16 %v580
    %v1284 = vunpack.c.l.b16 %v581
    %v1285 = vunpack.c.h.b16 %v581
    %v1286 = vunpack.c.l.b16 %v582
    %v1287 = vunpack.c.h.b16 %v582
    %v1288 = vunpack.c.l.b16 %v583
    %v1289 = vunpack.c.h.b16 %v583
    %v1290 = vunpack.c.l.b16 %v584
    %v1291 = vunpack.c.h.b16 %v584
    %v1292 = vunpack.c.l.b16 %v585
    %v1293 = vunpack.c.h.b16 %v585
    %v1294 = vunpack.c.l.b16 %v586
    %v1295 = vunpack.c.h.b16 %v586
    %v1296 = vunpack.c.l.b16 %v587
    %v1297 = vunpack.c.h.b16 %v587
    %v1298 = vunpack.c.l.b16 %v588
    %v1299 = vunpack.c.h.b16 %v588
    %v1300 = vunpack.c.l.b16 %v589
    %v1301 = vunpack.c.h.b16 %v589
    %v1302 = vunpack.c.l.b16 %v590
    %v1303 = vunpack.c.h.b16 %v590
    %v1304 = vunpack.c.l.b16 %v591
    %v1305 = vunpack.c.h.b16 %v591
    %v1306 = vunpack.c.l.b16 %v592
    %v1307 = vunpack.c.h.b16 %v592
    %v1308 = vunpack.c.l.b16 %v593
    %v1309 = vunpack.c.h.b16 %v593
    %v1310 = vunpack.c.l.b16 %v594
    %v1311 = vunpack.c.h.b16 %v594
    %v1312 = vunpack.c.l.b16 %v595
    %v1313 = vunpack.c.h.b16 %v595
    %v1314 = vunpack.c.l.b16 %v596
    %v1315 = vunpack.c.h.b16 %v596
    %v1316 = vunpack.c.l.b16 %v597
    %v1317 = vunpack.c.h.b16 %v597
    %v1318 = vunpack.c.l.b16 %v598
    %v1319 = vunpack.c.h.b16 %v598
    %v1320 = vunpack.c.l.b16 %v599
    %v1321 = vunpack.c.h.b16 %v599
    %v1322 = vunpack.c.l.b16 %v600
    %v1323 = vunpack.c.h.b16 %v600
    %v1324 = vunpack.c.l.b16 %v601
    %v1325 = vunpack.c.h.b16 %v601
    %v1326 = vunpack.c.l.b16 %v602
    %v1327 = vunpack.c.h.b16 %v602
    %v1328 = vunpack.c.l.b16 %v603
    %v1329 = vunpack.c.h.b16 %v603
    %v1330 = vunpack.c.l.b16 %v604
    %v1331 = vunpack.c.h.b16 %v604
    %v1332 = vunpack.c.l.b16 %v605
    %v1333 = vunpack.c.h.b16 %v605
    %v1334 = vunpack.c.l.b16 %v606
    %v1335 = vunpack.c.h.b16 %v606
    %v1336 = vunpack.c.l.b16 %v607
    %v1337 = vunpack.c.h.b16 %v607
    %v1338 = vunpack.c.l.b16 %v608
    %v1339 = vunpack.c.h.b16 %v608
    %v1340 = vunpack.c.l.b16 %v609
    %v1341 = vunpack.c.h.b16 %v609
    %v1342 = vunpack.c.l.b16 %v610
    %v1343 = vunpack.c.h.b16 %v610
    %v1344 = vunpack.c.l.b16 %v611
    %v1345 = vunpack.c.h.b16 %v611
    %v1346 = vunpack.c.l.b16 %v612
    %v1347 = vunpack.c.h.b16 %v612
    %v1348 = vunpack.c.l.b16 %v613
    %v1349 = vunpack.c.h.b16 %v613
    %v1350 = vunpack.c.l.b16 %v614
    %v1351 = vunpack.c.h.b16 %v614
    %v1352 = vunpack.c.l.b16 %v615
    %v1353 = vunpack.c.h.b16 %v615
    %v1354 = vunpack.c.l.b16 %v616
    %v1355 = vunpack.c.h.b16 %v616
    %v1356 = vunpack.c.l.b16 %v617
    %v1357 = vunpack.c.h.b16 %v617
    %v1358 = vunpack.c.l.b16 %v618
    %v1359 = vunpack.c.h.b16 %v618
    %v1360 = vunpack.c.l.b16 %v619
    %v1361 = vunpack.c.h.b16 %v619
    %v1362 = vunpack.c.l.b16 %v620
    %v1363 = vunpack.c.h.b16 %v620
    %v1364 = vunpack.c.l.b16 %v621
    %v1365 = vunpack.c.h.b16 %v621
    %v1366 = vunpack.c.l.b16 %v622
    %v1367 = vunpack.c.h.b16 %v622
    %v1368 = vunpack.c.l.b16 %v623
    %v1369 = vunpack.c.h.b16 %v623
    %v1370 = vunpack.c.l.b16 %v624
    %v1371 = vunpack.c.h.b16 %v624
    %v1372 = vunpack.c.l.b16 %v625
    %v1373 = vunpack.c.h.b16 %v625
    %v1374 = vunpack.c.l.b16 %v626
    %v1375 = vunpack.c.h.b16 %v626
    %v1376 = vunpack.c.l.b16 %v627
    %v1377 = vunpack.c.h.b16 %v627
    %v1378 = vunpack.c.l.b16 %v628
    %v1379 = vunpack.c.h.b16 %v628
    %v1380 = vunpack.c.l.b16 %v629
    %v1381 = vunpack.c.h.b16 %v629
    %v1382 = vunpack.c.l.b16 %v630
    %v1383 = vunpack.c.h.b16 %v630
    %v1384 = vunpack.c.l.b16 %v631
    %v1385 = vunpack.c.h.b16 %v631
    %v1386 = vunpack.c.l.b16 %v632
    %v1387 = vunpack.c.h.b16 %v632
    %v1388 = vunpack.c.l.b16 %v633
    %v1389 = vunpack.c.h.b16 %v633
    %v1390 = vunpack.c.l.b16 %v634
    %v1391 = vunpack.c.h.b16 %v634
    %v1392 = vunpack.c.l.b16 %v635
    %v1393 = vunpack.c.h.b16 %v635
    %v1394 = vunpack.c.l.b16 %v636
    %v1395 = vunpack.c.h.b16 %v636
    %v1396 = vunpack.c.l.b16 %v637
    %v1397 = vunpack.c.h.b16 %v637
    %v1398 = vunpack.c.l.b16 %v638
    %v1399 = vunpack.c.h.b16 %v638
    %v1400 = vunpack.c.l.b16 %v639
    %v1401 = vunpack.c.h.b16 %v639
    %v1402 = vunpack.c.l.b16 %v640
    %v1403 = vunpack.c.h.b16 %v640
    %v1404 = vunpack.c.l.b16 %v641
    %v1405 = vunpack.c.h.b16 %v641
    %v1406 = vunpack.c.l.b16 %v642
    %v1407 = vunpack.c.h.b16 %v642
    %v1408 = vunpack.c.l.b16 %v643
    %v1409 = vunpack.c.h.b16 %v643
    %v1410 = vunpack.c.l.b16 %v644
    %v1411 = vunpack.c.h.b16 %v644
    %v1412 = vunpack.c.l.b16 %v645
    %v1413 = vunpack.c.h.b16 %v645
    %v1414 = vunpack.c.l.b16 %v646
    %v1415 = vunpack.c.h.b16 %v646
    %v1416 = vunpack.c.l.b16 %v647
    %v1417 = vunpack.c.h.b16 %v647
    %v1418 = vunpack.c.l.b16 %v648
    %v1419 = vunpack.c.h.b16 %v648
    %v1420 = vunpack.c.l.b16 %v649
    %v1421 = vunpack.c.h.b16 %v649
    %v1422 = vunpack.c.l.b16 %v650
    %v1423 = vunpack.c.h.b16 %v650
    %v1424 = vunpack.c.l.b16 %v651
    %v1425 = vunpack.c.h.b16 %v651
    %v1426 = vunpack.c.l.b16 %v652
    %v1427 = vunpack.c.h.b16 %v652
    %v1428 = vunpack.c.l.b16 %v653
    %v1429 = vunpack.c.h.b16 %v653
    %v1430 = vunpack.c.l.b16 %v654
    %v1431 = vunpack.c.h.b16 %v654
    %v1432 = vunpack.c.l.b16 %v655
    %v1433 = vunpack.c.h.b16 %v655
    %v1434 = vunpack.c.l.b16 %v656
    %v1435 = vunpack.c.h.b16 %v656
    %v1436 = vunpack.c.l.b16 %v657
    %v1437 = vunpack.c.h.b16 %v657
    %v1438 = vunpack.c.l.b16 %v658
    %v1439 = vunpack.c.h.b16 %v658
    %v1440 = vunpack.c.l.b16 %v659
    %v1441 = vunpack.c.h.b16 %v659
    %v1442 = vunpack.c.l.b16 %v660
    %v1443 = vunpack.c.h.b16 %v660
    %v1444 = vunpack.c.l.b16 %v661
    %v1445 = vunpack.c.h.b16 %v661
    %v1446 = vunpack.c.l.b16 %v662
    %v1447 = vunpack.c.h.b16 %v662
    %v1448 = vunpack.c.l.b16 %v663
    %v1449 = vunpack.c.h.b16 %v663
    %v1450 = vunpack.c.l.b16 %v664
    %v1451 = vunpack.c.h.b16 %v664
    %v1452 = vunpack.c.l.b16 %v665
    %v1453 = vunpack.c.h.b16 %v665
    %v1454 = vunpack.c.l.b16 %v666
    %v1455 = vunpack.c.h.b16 %v666
    %v1456 = vunpack.c.l.b16 %v667
    %v1457 = vunpack.c.h.b16 %v667
    %v1458 = vpack.c.b16 %v954, %v946
    %v1459 = vpack.c.b16 %v955, %v947
    %v1460 = vpack.c.b16 %v956, %v948
    %v1461 = vpack.c.b16 %v957, %v949
    %v1462 = vpack.c.b16 %v958, %v950
    %v1463 = vpack.c.b16 %v959, %v951
    %v1464 = vpack.c.b16 %v960, %v952
    %v1465 = vpack.c.b16 %v961, %v953
    %v1466 = vpack.c.b16 %v970, %v962
    %v1467 = vpack.c.b16 %v971, %v963
    %v1468 = vpack.c.b16 %v972, %v964
    %v1469 = vpack.c.b16 %v973, %v965
    %v1470 = vpack.c.b16 %v974, %v966
    %v1471 = vpack.c.b16 %v975, %v967
    %v1472 = vpack.c.b16 %v976, %v968
    %v1473 = vpack.c.b16 %v977, %v969
    %v1474 = vpack.c.b16 %v986, %v978
    %v1475 = vpack.c.b16 %v987, %v979
    %v1476 = vpack.c.b16 %v988, %v980
    %v1477 = vpack.c.b16 %v989, %v981
    %v1478 = vpack.c.b16 %v990, %v982
    %v1479 = vpack.c.b16 %v991, %v983
    %v1480 = vpack.c.b16 %v992, %v984
    %v1481 = vpack.c.b16 %v993, %v985
    %v1482 = vpack.c.b16 %v1002, %v994
    %v1483 = vpack.c.b16 %v1003, %v995
    %v1484 = vpack.c.b16 %v1004, %v996
    %v1485 = vpack.c.b16 %v1005, %v997
    %v1486 = vpack.c.b16 %v1006, %v998
    %v1487 = vpack.c.b16 %v1007, %v999
    %v1488 = vpack.c.b16 %v1008, %v1000
    %v1489 = vpack.c.b16 %v1009, %v1001
    %v1490 = vpack.c.b16 %v1018, %v1010
    %v1491 = vpack.c.b16 %v1019, %v1011
    %v1492 = vpack.c.b16 %v1020, %v1012
    %v1493 = vpack.c.b16 %v1021, %v1013
    %v1494 = vpack.c.b16 %v1022, %v1014
    %v1495 = vpack.c.b16 %v1023, %v1015
    %v1496 = vpack.c.b16 %v1024, %v1016
    %v1497 = vpack.c.b16 %v1025, %v1017
    %v1498 = vpack.c.b16 %v1034, %v1026
    %v1499 = vpack.c.b16 %v1035, %v1027
    %v1500 = vpack.c.b16 %v1036, %v1028
    %v1501 = vpack.c.b16 %v1037, %v1029
    %v1502 = vpack.c.b16 %v1038, %v1030
    %v1503 = vpack.c.b16 %v1039, %v1031
    %v1504 = vpack.c.b16 %v1040, %v1032
    %v1505 = vpack.c.b16 %v1041, %v1033
    %v1506 = vpack.c.b16 %v1050, %v1042
    %v1507 = vpack.c.b16 %v1051, %v1043
    %v1508 = vpack.c.b16 %v1052, %v1044
    %v1509 = vpack.c.b16 %v1053, %v1045
    %v1510 = vpack.c.b16 %v1054, %v1046
    %v1511 = vpack.c.b16 %v1055, %v1047
    %v1512 = vpack.c.b16 %v1056, %v1048
    %v1513 = vpack.c.b16 %v1057, %v1049
    %v1514 = vpack.c.b16 %v1066, %v1058
    %v1515 = vpack.c.b16 %v1067, %v1059
    %v1516 = vpack.c.b16 %v1068, %v1060
    %v1517 = vpack.c.b16 %v1069, %v1061
    %v1518 = vpack.c.b16 %v1070, %v1062
    %v1519 = vpack.c.b16 %v1071, %v1063
    %v1520 = vpack.c.b16 %v1072, %v1064
    %v1521 = vpack.c.b16 %v1073, %v1065
    %v1522 = vpack.c.b16 %v1082, %v1074
    %v1523 = vpack.c.b16 %v1083, %v1075
    %v1524 = vpack.c.b16 %v1084, %v1076
    %v1525 = vpack.c.b16 %v1085, %v1077
    %v1526 = vpack.c.b16 %v1086, %v1078
    %v1527 = vpack.c.b16 %v1087, %v1079
    %v1528 = vpack.c.b16 %v1088, %v1080
    %v1529 = vpack.c.b16 %v1089, %v1081
    %v1530 = vpack.c.b16 %v1098, %v1090
    %v1531 = vpack.c.b16 %v1099, %v1091
    %v1532 = vpack.c.b16 %v1100, %v1092
    %v1533 = vpack.c.b16 %v1101, %v1093
    %v1534 = vpack.c.b16 %v1102, %v1094
    %v1535 = vpack.c.b16 %v1103, %v1095
    %v1536 = vpack.c.b16 %v1104, %v1096
    %v1537 = vpack.c.b16 %v1105, %v1097
    %v1538 = vpack.c.b16 %v1114, %v1106
    %v1539 = vpack.c.b16 %v1115, %v1107
    %v1540 = vpack.c.b16 %v1116, %v1108
    %v1541 = vpack.c.b16 %v1117, %v1109
    %v1542 = vpack.c.b16 %v1118, %v1110
    %v1543 = vpack.c.b16 %v1119, %v1111
    %v1544 = vpack.c.b16 %v1120, %v1112
    %v1545 = vpack.c.b16 %v1121, %v1113
    %v1546 = vpack.c.b16 %v1130, %v1122
    %v1547 = vpack.c.b16 %v1131, %v1123
    %v1548 = vpack.c.b16 %v1132, %v1124
    %v1549 = vpack.c.b16 %v1133, %v1125
    %v1550 = vpack.c.b16 %v1134, %v1126
    %v1551 = vpack.c.b16 %v1135, %v1127
    %v1552 = vpack.c.b16 %v1136, %v1128
    %v1553 = vpack.c.b16 %v1137, %v1129
    %v1554 = vpack.c.b16 %v1146, %v1138
    %v1555 = vpack.c.b16 %v1147, %v1139
    %v1556 = vpack.c.b16 %v1148, %v1140
    %v1557 = vpack.c.b16 %v1149, %v1141
    %v1558 = vpack.c.b16 %v1150, %v1142
    %v1559 = vpack.c.b16 %v1151, %v1143
    %v1560 = vpack.c.b16 %v1152, %v1144
    %v1561 = vpack.c.b16 %v1153, %v1145
    %v1562 = vpack.c.b16 %v1162, %v1154
    %v1563 = vpack.c.b16 %v1163, %v1155
    %v1564 = vpack.c.b16 %v1164, %v1156
    %v1565 = vpack.c.b16 %v1165, %v1157
    %v1566 = vpack.c.b16 %v1166, %v1158
    %v1567 = vpack.c.b16 %v1167, %v1159
    %v1568 = vpack.c.b16 %v1168, %v1160
    %v1569 = vpack.c.b16 %v1169, %v1161
    %v1570 = vpack.c.b16 %v1178, %v1170
    %v1571 = vpack.c.b16 %v1179, %v1171
    %v1572 = vpack.c.b16 %v1180, %v1172
    %v1573 = vpack.c.b16 %v1181, %v1173
    %v1574 = vpack.c.b16 %v1182, %v1174
    %v1575 = vpack.c.b16 %v1183, %v1175
    %v1576 = vpack.c.b16 %v1184, %v1176
    %v1577 = vpack.c.b16 %v1185, %v1177
    %v1578 = vpack.c.b16 %v1194, %v1186
    %v1579 = vpack.c.b16 %v1195, %v1187
    %v1580 = vpack.c.b16 %v1196, %v1188
    %v1581 = vpack.c.b16 %v1197, %v1189
    %v1582 = vpack.c.b16 %v1198, %v1190
    %v1583 = vpack.c.b16 %v1199, %v1191
    %v1584 = vpack.c.b16 %v1200, %v1192
    %v1585 = vpack.c.b16 %v1201, %v1193
    %v1586 = vpack.c.b16 %v1210, %v1202
    %v1587 = vpack.c.b16 %v1211, %v1203
    %v1588 = vpack.c.b16 %v1212, %v1204
    %v1589 = vpack.c.b16 %v1213, %v1205
    %v1590 = vpack.c.b16 %v1214, %v1206
    %v1591 = vpack.c.b16 %v1215, %v1207
    %v1592 = vpack.c.b16 %v1216, %v1208
    %v1593 = vpack.c.b16 %v1217, %v1209
    %v1594 = vpack.c.b16 %v1226, %v1218
    %v1595 = vpack.c.b16 %v1227, %v1219
    %v1596 = vpack.c.b16 %v1228, %v1220
    %v1597 = vpack.c.b16 %v1229, %v1221
    %v1598 = vpack.c.b16 %v1230, %v1222
    %v1599 = vpack.c.b16 %v1231, %v1223
    %v1600 = vpack.c.b16 %v1232, %v1224
    %v1601 = vpack.c.b16 %v1233, %v1225
    %v1602 = vpack.c.b16 %v1242, %v1234
    %v1603 = vpack.c.b16 %v1243, %v1235
    %v1604 = vpack.c.b16 %v1244, %v1236
    %v1605 = vpack.c.b16 %v1245, %v1237
    %v1606 = vpack.c.b16 %v1246, %v1238
    %v1607 = vpack.c.b16 %v1247, %v1239
    %v1608 = vpack.c.b16 %v1248, %v1240
    %v1609 = vpack.c.b16 %v1249, %v1241
    %v1610 = vpack.c.b16 %v1258, %v1250
    %v1611 = vpack.c.b16 %v1259, %v1251
    %v1612 = vpack.c.b16 %v1260, %v1252
    %v1613 = vpack.c.b16 %v1261, %v1253
    %v1614 = vpack.c.b16 %v1262, %v1254
    %v1615 = vpack.c.b16 %v1263, %v1255
    %v1616 = vpack.c.b16 %v1264, %v1256
    %v1617 = vpack.c.b16 %v1265, %v1257
    %v1618 = vpack.c.b16 %v1274, %v1266
    %v1619 = vpack.c.b16 %v1275, %v1267
    %v1620 = vpack.c.b16 %v1276, %v1268
    %v1621 = vpack.c.b16 %v1277, %v1269
    %v1622 = vpack.c.b16 %v1278, %v1270
    %v1623 = vpack.c.b16 %v1279, %v1271
    %v1624 = vpack.c.b16 %v1280, %v1272
    %v1625 = vpack.c.b16 %v1281, %v1273
    %v1626 = vpack.c.b16 %v1290, %v1282
    %v1627 = vpack.c.b16 %v1291, %v1283
    %v1628 = vpack.c.b16 %v1292, %v1284
    %v1629 = vpack.c.b16 %v1293, %v1285
    %v1630 = vpack.c.b16 %v1294, %v1286
    %v1631 = vpack.c.b16 %v1295, %v1287
    %v1632 = vpack.c.b16 %v1296, %v1288
    %v1633 = vpack.c.b16 %v1297, %v1289
    %v1634 = vpack.c.b16 %v1306, %v1298
    %v1635 = vpack.c.b16 %v1307, %v1299
    %v1636 = vpack.c.b16 %v1308, %v1300
    %v1637 = vpack.c.b16 %v1309, %v1301
    %v1638 = vpack.c.b16 %v1310, %v1302
    %v1639 = vpack.c.b16 %v1311, %v1303
    %v1640 = vpack.c.b16 %v1312, %v1304
    %v1641 = vpack.c.b16 %v1313, %v1305
    %v1642 = vpack.c.b16 %v1322, %v1314
    %v1643 = vpack.c.b16 %v1323, %v1315
    %v1644 = vpack.c.b16 %v1324, %v1316
    %v1645 = vpack.c.b16 %v1325, %v1317
    %v1646 = vpack.c.b16 %v1326, %v1318
    %v1647 = vpack.c.b16 %v1327, %v1319
    %v1648 = vpack.c.b16 %v1328, %v1320
    %v1649 = vpack.c.b16 %v1329, %v1321
    %v1650 = vpack.c.b16 %v1338, %v1330
    %v1651 = vpack.c.b16 %v1339, %v1331
    %v1652 = vpack.c.b16 %v1340, %v1332
    %v1653 = vpack.c.b16 %v1341, %v1333
    %v1654 = vpack.c.b16 %v1342, %v1334
    %v1655 = vpack.c.b16 %v1343, %v1335
    %v1656 = vpack.c.b16 %v1344, %v1336
    %v1657 = vpack.c.b16 %v1345, %v1337
    %v1658 = vpack.c.b16 %v1354, %v1346
    %v1659 = vpack.c.b16 %v1355, %v1347
    %v1660 = vpack.c.b16 %v1356, %v1348
    %v1661 = vpack.c.b16 %v1357, %v1349
    %v1662 = vpack.c.b16 %v1358, %v1350
    %v1663 = vpack.c.b16 %v1359, %v1351
    %v1664 = vpack.c.b16 %v1360, %v1352
    %v1665 = vpack.c.b16 %v1361, %v1353
    %v1666 = vpack.c.b16 %v1370, %v1362
    %v1667 = vpack.c.b16 %v1371, %v1363
    %v1668 = vpack.c.b16 %v1372, %v1364
    %v1669 = vpack.c.b16 %v1373, %v1365
    %v1670 = vpack.c.b16 %v1374, %v1366
    %v1671 = vpack.c.b16 %v1375, %v1367
    %v1672 = vpack.c.b16 %v1376, %v1368
    %v1673 = vpack.c.b16 %v1377, %v1369
    %v1674 = vpack.c.b16 %v1386, %v1378
    %v1675 = vpack.c.b16 %v1387, %v1379
    %v1676 = vpack.c.b16 %v1388, %v1380
    %v1677 = vpack.c.b16 %v1389, %v1381
    %v1678 = vpack.c.b16 %v1390, %v1382
    %v1679 = vpack.c.b16 %v1391, %v1383
    %v1680 = vpack.c.b16 %v1392, %v1384
    %v1681 = vpack.c.b16 %v1393, %v1385
    %v1682 = vpack.c.b16 %v1402, %v1394
    %v1683 = vpack.c.b16 %v1403, %v1395
    %v1684 = vpack.c.b16 %v1404, %v1396
    %v1685 = vpack.c.b16 %v1405, %v1397
    %v1686 = vpack.c.b16 %v1406, %v1398
    %v1687 = vpack.c.b16 %v1407, %v1399
    %v1688 = vpack.c.b16 %v1408, %v1400
    %v1689 = vpack.c.b16 %v1409, %v1401
    %v1690 = vpack.c.b16 %v1418, %v1410
    %v1691 = vpack.c.b16 %v1419, %v1411
    %v1692 = vpack.c.b16 %v1420, %v1412
    %v1693 = vpack.c.b16 %v1421, %v1413
    %v1694 = vpack.c.b16 %v1422, %v1414
    %v1695 = vpack.c.b16 %v1423, %v1415
    %v1696 = vpack.c.b16 %v1424, %v1416
    %v1697 = vpack.c.b16 %v1425, %v1417
    %v1698 = vpack.c.b16 %v1434, %v1426
    %v1699 = vpack.c.b16 %v1435, %v1427
    %v1700 = vpack.c.b16 %v1436, %v1428
    %v1701 = vpack.c.b16 %v1437, %v1429
    %v1702 = vpack.c.b16 %v1438, %v1430
    %v1703 = vpack.c.b16 %v1439, %v1431
    %v1704 = vpack.c.b16 %v1440, %v1432
    %v1705 = vpack.c.b16 %v1441, %v1433
    %v1706 = vpack.c.b16 %v1450, %v1442
    %v1707 = vpack.c.b16 %v1451, %v1443
    %v1708 = vpack.c.b16 %v1452, %v1444
    %v1709 = vpack.c.b16 %v1453, %v1445
    %v1710 = vpack.c.b16 %v1454, %v1446
    %v1711 = vpack.c.b16 %v1455, %v1447
    %v1712 = vpack.c.b16 %v1456, %v1448
    %v1713 = vpack.c.b16 %v1457, %v1449
    %1970 = vmatpush.bf16.msra.mxu0 %v1514
    %1971 = vmatpush.bf16.msra.mxu0 %v1506
    %1972 = vmatpush.bf16.msra.mxu0 %v1498
    %1973 = vmatpush.bf16.msra.mxu0 %v1490
    %1974 = vmatpush.bf16.msra.mxu0 %v1482
    %1975 = vmatpush.bf16.msra.mxu0 %v1474
    %1976 = vmatpush.bf16.msra.mxu0 %v1466
    %1977 = vmatpush.bf16.msra.mxu0 %v1458
    %1978 = vmatmul.bf16.gmra.mxu0 %v669
    %v1979 = vpop.f32.mrf.mxu0
    %v1980 = vadd.f32 %v674, %v1979
    %v1981 = vpop.f32.mrf.mxu0
    %1982 = vdwg.mxu0
    %1983 = vmatpush.bf16.msra.mxu0 %v1578
    %1984 = vmatpush.bf16.msra.mxu0 %v1570
    %1985 = vmatpush.bf16.msra.mxu0 %v1562
    %1986 = vmatpush.bf16.msra.mxu0 %v1554
    %1987 = vmatpush.bf16.msra.mxu0 %v1546
    %1988 = vmatpush.bf16.msra.mxu0 %v1538
    %1989 = vmatpush.bf16.msra.mxu0 %v1530
    %1990 = vmatpush.bf16.msra.mxu0 %v1522
    %1991 = vmatmul.bf16.gmra.mxu0 %v670
    %v1992 = vpop.f32.mrf.mxu0
    %v1993 = vadd.f32 %v1980, %v1992
    %v1994 = vpop.f32.mrf.mxu0
    %1995 = vdwg.mxu0
    %1996 = vmatpush.bf16.msra.mxu0 %v1642
    %1997 = vmatpush.bf16.msra.mxu0 %v1634
    %1998 = vmatpush.bf16.msra.mxu0 %v1626
    %1999 = vmatpush.bf16.msra.mxu0 %v1618
    %2000 = vmatpush.bf16.msra.mxu0 %v1610
    %2001 = vmatpush.bf16.msra.mxu0 %v1602
    %2002 = vmatpush.bf16.msra.mxu0 %v1594
    %2003 = vmatpush.bf16.msra.mxu0 %v1586
    %2004 = vmatmul.bf16.gmra.mxu0 %v671
    %v2005 = vpop.f32.mrf.mxu0
    %v2006 = vadd.f32 %v1993, %v2005
    %v2007 = vpop.f32.mrf.mxu0
    %2008 = vdwg.mxu0
    %2009 = vmatpush.bf16.msra.mxu0 %v1706
    %2010 = vmatpush.bf16.msra.mxu0 %v1698
    %2011 = vmatpush.bf16.msra.mxu0 %v1690
    %2012 = vmatpush.bf16.msra.mxu0 %v1682
    %2013 = vmatpush.bf16.msra.mxu0 %v1674
    %2014 = vmatpush.bf16.msra.mxu0 %v1666
    %2015 = vmatpush.bf16.msra.mxu0 %v1658
    %2016 = vmatpush.bf16.msra.mxu0 %v1650
    %2017 = vmatmul.bf16.gmra.mxu0 %v672
    %v2018 = vpop.f32.mrf.mxu0
    %v2019 = vadd.f32 %v2006, %v2018
    %v2020 = vpop.f32.mrf.mxu0
    %2021 = vdwg.mxu0
    %2022 = vmatpush.bf16.msra.mxu0 %v1515
    %2023 = vmatpush.bf16.msra.mxu0 %v1507
    %2024 = vmatpush.bf16.msra.mxu0 %v1499
    %2025 = vmatpush.bf16.msra.mxu0 %v1491
    %2026 = vmatpush.bf16.msra.mxu0 %v1483
    %2027 = vmatpush.bf16.msra.mxu0 %v1475
    %2028 = vmatpush.bf16.msra.mxu0 %v1467
    %2029 = vmatpush.bf16.msra.mxu0 %v1459
    %2030 = vmatmul.bf16.gmra.mxu0 %v669
    %v2031 = vpop.f32.mrf.mxu0
    %v2032 = vadd.f32 %v675, %v2031
    %v2033 = vpop.f32.mrf.mxu0
    %2034 = vdwg.mxu0
    %2035 = vmatpush.bf16.msra.mxu0 %v1579
    %2036 = vmatpush.bf16.msra.mxu0 %v1571
    %2037 = vmatpush.bf16.msra.mxu0 %v1563
    %2038 = vmatpush.bf16.msra.mxu0 %v1555
    %2039 = vmatpush.bf16.msra.mxu0 %v1547
    %2040 = vmatpush.bf16.msra.mxu0 %v1539
    %2041 = vmatpush.bf16.msra.mxu0 %v1531
    %2042 = vmatpush.bf16.msra.mxu0 %v1523
    %2043 = vmatmul.bf16.gmra.mxu0 %v670
    %v2044 = vpop.f32.mrf.mxu0
    %v2045 = vadd.f32 %v2032, %v2044
    %v2046 = vpop.f32.mrf.mxu0
    %2047 = vdwg.mxu0
    %2048 = vmatpush.bf16.msra.mxu0 %v1643
    %2049 = vmatpush.bf16.msra.mxu0 %v1635
    %2050 = vmatpush.bf16.msra.mxu0 %v1627
    %2051 = vmatpush.bf16.msra.mxu0 %v1619
    %2052 = vmatpush.bf16.msra.mxu0 %v1611
    %2053 = vmatpush.bf16.msra.mxu0 %v1603
    %2054 = vmatpush.bf16.msra.mxu0 %v1595
    %2055 = vmatpush.bf16.msra.mxu0 %v1587
    %2056 = vmatmul.bf16.gmra.mxu0 %v671
    %v2057 = vpop.f32.mrf.mxu0
    %v2058 = vadd.f32 %v2045, %v2057
    %v2059 = vpop.f32.mrf.mxu0
    %2060 = vdwg.mxu0
    %2061 = vmatpush.bf16.msra.mxu0 %v1707
    %2062 = vmatpush.bf16.msra.mxu0 %v1699
    %2063 = vmatpush.bf16.msra.mxu0 %v1691
    %2064 = vmatpush.bf16.msra.mxu0 %v1683
    %2065 = vmatpush.bf16.msra.mxu0 %v1675
    %2066 = vmatpush.bf16.msra.mxu0 %v1667
    %2067 = vmatpush.bf16.msra.mxu0 %v1659
    %2068 = vmatpush.bf16.msra.mxu0 %v1651
    %2069 = vmatmul.bf16.gmra.mxu0 %v672
    %v2070 = vpop.f32.mrf.mxu0
    %v2071 = vadd.f32 %v2058, %v2070
    %v2072 = vpop.f32.mrf.mxu0
    %2073 = vdwg.mxu0
    %2074 = vmatpush.bf16.msra.mxu0 %v1516
    %2075 = vmatpush.bf16.msra.mxu0 %v1508
    %2076 = vmatpush.bf16.msra.mxu0 %v1500
    %2077 = vmatpush.bf16.msra.mxu0 %v1492
    %2078 = vmatpush.bf16.msra.mxu0 %v1484
    %2079 = vmatpush.bf16.msra.mxu0 %v1476
    %2080 = vmatpush.bf16.msra.mxu0 %v1468
    %2081 = vmatpush.bf16.msra.mxu0 %v1460
    %2082 = vmatmul.bf16.gmra.mxu0 %v669
    %v2083 = vpop.f32.mrf.mxu0
    %v2084 = vadd.f32 %v676, %v2083
    %v2085 = vpop.f32.mrf.mxu0
    %2086 = vdwg.mxu0
    %2087 = vmatpush.bf16.msra.mxu0 %v1580
    %2088 = vmatpush.bf16.msra.mxu0 %v1572
    %2089 = vmatpush.bf16.msra.mxu0 %v1564
    %2090 = vmatpush.bf16.msra.mxu0 %v1556
    %2091 = vmatpush.bf16.msra.mxu0 %v1548
    %2092 = vmatpush.bf16.msra.mxu0 %v1540
    %2093 = vmatpush.bf16.msra.mxu0 %v1532
    %2094 = vmatpush.bf16.msra.mxu0 %v1524
    %2095 = vmatmul.bf16.gmra.mxu0 %v670
    %v2096 = vpop.f32.mrf.mxu0
    %v2097 = vadd.f32 %v2084, %v2096
    %v2098 = vpop.f32.mrf.mxu0
    %2099 = vdwg.mxu0
    %2100 = vmatpush.bf16.msra.mxu0 %v1644
    %2101 = vmatpush.bf16.msra.mxu0 %v1636
    %2102 = vmatpush.bf16.msra.mxu0 %v1628
    %2103 = vmatpush.bf16.msra.mxu0 %v1620
    %2104 = vmatpush.bf16.msra.mxu0 %v1612
    %2105 = vmatpush.bf16.msra.mxu0 %v1604
    %2106 = vmatpush.bf16.msra.mxu0 %v1596
    %2107 = vmatpush.bf16.msra.mxu0 %v1588
    %2108 = vmatmul.bf16.gmra.mxu0 %v671
    %v2109 = vpop.f32.mrf.mxu0
    %v2110 = vadd.f32 %v2097, %v2109
    %v2111 = vpop.f32.mrf.mxu0
    %2112 = vdwg.mxu0
    %2113 = vmatpush.bf16.msra.mxu0 %v1708
    %2114 = vmatpush.bf16.msra.mxu0 %v1700
    %2115 = vmatpush.bf16.msra.mxu0 %v1692
    %2116 = vmatpush.bf16.msra.mxu0 %v1684
    %2117 = vmatpush.bf16.msra.mxu0 %v1676
    %2118 = vmatpush.bf16.msra.mxu0 %v1668
    %2119 = vmatpush.bf16.msra.mxu0 %v1660
    %2120 = vmatpush.bf16.msra.mxu0 %v1652
    %2121 = vmatmul.bf16.gmra.mxu0 %v672
    %v2122 = vpop.f32.mrf.mxu0
    %v2123 = vadd.f32 %v2110, %v2122
    %v2124 = vpop.f32.mrf.mxu0
    %2125 = vdwg.mxu0
    %2126 = vmatpush.bf16.msra.mxu0 %v1517
    %2127 = vmatpush.bf16.msra.mxu0 %v1509
    %2128 = vmatpush.bf16.msra.mxu0 %v1501
    %2129 = vmatpush.bf16.msra.mxu0 %v1493
    %2130 = vmatpush.bf16.msra.mxu0 %v1485
    %2131 = vmatpush.bf16.msra.mxu0 %v1477
    %2132 = vmatpush.bf16.msra.mxu0 %v1469
    %2133 = vmatpush.bf16.msra.mxu0 %v1461
    %2134 = vmatmul.bf16.gmra.mxu0 %v669
    %v2135 = vpop.f32.mrf.mxu0
    %v2136 = vadd.f32 %v677, %v2135
    %v2137 = vpop.f32.mrf.mxu0
    %2138 = vdwg.mxu0
    %2139 = vmatpush.bf16.msra.mxu0 %v1581
    %2140 = vmatpush.bf16.msra.mxu0 %v1573
    %2141 = vmatpush.bf16.msra.mxu0 %v1565
    %2142 = vmatpush.bf16.msra.mxu0 %v1557
    %2143 = vmatpush.bf16.msra.mxu0 %v1549
    %2144 = vmatpush.bf16.msra.mxu0 %v1541
    %2145 = vmatpush.bf16.msra.mxu0 %v1533
    %2146 = vmatpush.bf16.msra.mxu0 %v1525
    %2147 = vmatmul.bf16.gmra.mxu0 %v670
    %v2148 = vpop.f32.mrf.mxu0
    %v2149 = vadd.f32 %v2136, %v2148
    %v2150 = vpop.f32.mrf.mxu0
    %2151 = vdwg.mxu0
    %2152 = vmatpush.bf16.msra.mxu0 %v1645
    %2153 = vmatpush.bf16.msra.mxu0 %v1637
    %2154 = vmatpush.bf16.msra.mxu0 %v1629
    %2155 = vmatpush.bf16.msra.mxu0 %v1621
    %2156 = vmatpush.bf16.msra.mxu0 %v1613
    %2157 = vmatpush.bf16.msra.mxu0 %v1605
    %2158 = vmatpush.bf16.msra.mxu0 %v1597
    %2159 = vmatpush.bf16.msra.mxu0 %v1589
    %2160 = vmatmul.bf16.gmra.mxu0 %v671
    %v2161 = vpop.f32.mrf.mxu0
    %v2162 = vadd.f32 %v2149, %v2161
    %v2163 = vpop.f32.mrf.mxu0
    %2164 = vdwg.mxu0
    %2165 = vmatpush.bf16.msra.mxu0 %v1709
    %2166 = vmatpush.bf16.msra.mxu0 %v1701
    %2167 = vmatpush.bf16.msra.mxu0 %v1693
    %2168 = vmatpush.bf16.msra.mxu0 %v1685
    %2169 = vmatpush.bf16.msra.mxu0 %v1677
    %2170 = vmatpush.bf16.msra.mxu0 %v1669
    %2171 = vmatpush.bf16.msra.mxu0 %v1661
    %2172 = vmatpush.bf16.msra.mxu0 %v1653
    %2173 = vmatmul.bf16.gmra.mxu0 %v672
    %v2174 = vpop.f32.mrf.mxu0
    %v2175 = vadd.f32 %v2162, %v2174
    %v2176 = vpop.f32.mrf.mxu0
    %2177 = vdwg.mxu0
    %2178 = vmatpush.bf16.msra.mxu0 %v1518
    %2179 = vmatpush.bf16.msra.mxu0 %v1510
    %2180 = vmatpush.bf16.msra.mxu0 %v1502
    %2181 = vmatpush.bf16.msra.mxu0 %v1494
    %2182 = vmatpush.bf16.msra.mxu0 %v1486
    %2183 = vmatpush.bf16.msra.mxu0 %v1478
    %2184 = vmatpush.bf16.msra.mxu0 %v1470
    %2185 = vmatpush.bf16.msra.mxu0 %v1462
    %2186 = vmatmul.bf16.gmra.mxu0 %v669
    %v2187 = vpop.f32.mrf.mxu0
    %v2188 = vadd.f32 %v678, %v2187
    %v2189 = vpop.f32.mrf.mxu0
    %2190 = vdwg.mxu0
    %2191 = vmatpush.bf16.msra.mxu0 %v1582
    %2192 = vmatpush.bf16.msra.mxu0 %v1574
    %2193 = vmatpush.bf16.msra.mxu0 %v1566
    %2194 = vmatpush.bf16.msra.mxu0 %v1558
    %2195 = vmatpush.bf16.msra.mxu0 %v1550
    %2196 = vmatpush.bf16.msra.mxu0 %v1542
    %2197 = vmatpush.bf16.msra.mxu0 %v1534
    %2198 = vmatpush.bf16.msra.mxu0 %v1526
    %2199 = vmatmul.bf16.gmra.mxu0 %v670
    %v2200 = vpop.f32.mrf.mxu0
    %v2201 = vadd.f32 %v2188, %v2200
    %v2202 = vpop.f32.mrf.mxu0
    %2203 = vdwg.mxu0
    %2204 = vmatpush.bf16.msra.mxu0 %v1646
    %2205 = vmatpush.bf16.msra.mxu0 %v1638
    %2206 = vmatpush.bf16.msra.mxu0 %v1630
    %2207 = vmatpush.bf16.msra.mxu0 %v1622
    %2208 = vmatpush.bf16.msra.mxu0 %v1614
    %2209 = vmatpush.bf16.msra.mxu0 %v1606
    %2210 = vmatpush.bf16.msra.mxu0 %v1598
    %2211 = vmatpush.bf16.msra.mxu0 %v1590
    %2212 = vmatmul.bf16.gmra.mxu0 %v671
    %v2213 = vpop.f32.mrf.mxu0
    %v2214 = vadd.f32 %v2201, %v2213
    %v2215 = vpop.f32.mrf.mxu0
    %2216 = vdwg.mxu0
    %2217 = vmatpush.bf16.msra.mxu0 %v1710
    %2218 = vmatpush.bf16.msra.mxu0 %v1702
    %2219 = vmatpush.bf16.msra.mxu0 %v1694
    %2220 = vmatpush.bf16.msra.mxu0 %v1686
    %2221 = vmatpush.bf16.msra.mxu0 %v1678
    %2222 = vmatpush.bf16.msra.mxu0 %v1670
    %2223 = vmatpush.bf16.msra.mxu0 %v1662
    %2224 = vmatpush.bf16.msra.mxu0 %v1654
    %2225 = vmatmul.bf16.gmra.mxu0 %v672
    %v2226 = vpop.f32.mrf.mxu0
    %v2227 = vadd.f32 %v2214, %v2226
    %v2228 = vpop.f32.mrf.mxu0
    %2229 = vdwg.mxu0
    %2230 = vmatpush.bf16.msra.mxu0 %v1519
    %2231 = vmatpush.bf16.msra.mxu0 %v1511
    %2232 = vmatpush.bf16.msra.mxu0 %v1503
    %2233 = vmatpush.bf16.msra.mxu0 %v1495
    %2234 = vmatpush.bf16.msra.mxu0 %v1487
    %2235 = vmatpush.bf16.msra.mxu0 %v1479
    %2236 = vmatpush.bf16.msra.mxu0 %v1471
    %2237 = vmatpush.bf16.msra.mxu0 %v1463
    %2238 = vmatmul.bf16.gmra.mxu0 %v669
    %v2239 = vpop.f32.mrf.mxu0
    %v2240 = vadd.f32 %v679, %v2239
    %v2241 = vpop.f32.mrf.mxu0
    %2242 = vdwg.mxu0
    %2243 = vmatpush.bf16.msra.mxu0 %v1583
    %2244 = vmatpush.bf16.msra.mxu0 %v1575
    %2245 = vmatpush.bf16.msra.mxu0 %v1567
    %2246 = vmatpush.bf16.msra.mxu0 %v1559
    %2247 = vmatpush.bf16.msra.mxu0 %v1551
    %2248 = vmatpush.bf16.msra.mxu0 %v1543
    %2249 = vmatpush.bf16.msra.mxu0 %v1535
    %2250 = vmatpush.bf16.msra.mxu0 %v1527
    %2251 = vmatmul.bf16.gmra.mxu0 %v670
    %v2252 = vpop.f32.mrf.mxu0
    %v2253 = vadd.f32 %v2240, %v2252
    %v2254 = vpop.f32.mrf.mxu0
    %2255 = vdwg.mxu0
    %2256 = vmatpush.bf16.msra.mxu0 %v1647
    %2257 = vmatpush.bf16.msra.mxu0 %v1639
    %2258 = vmatpush.bf16.msra.mxu0 %v1631
    %2259 = vmatpush.bf16.msra.mxu0 %v1623
    %2260 = vmatpush.bf16.msra.mxu0 %v1615
    %2261 = vmatpush.bf16.msra.mxu0 %v1607
    %2262 = vmatpush.bf16.msra.mxu0 %v1599
    %2263 = vmatpush.bf16.msra.mxu0 %v1591
    %2264 = vmatmul.bf16.gmra.mxu0 %v671
    %v2265 = vpop.f32.mrf.mxu0
    %v2266 = vadd.f32 %v2253, %v2265
    %v2267 = vpop.f32.mrf.mxu0
    %2268 = vdwg.mxu0
    %2269 = vmatpush.bf16.msra.mxu0 %v1711
    %2270 = vmatpush.bf16.msra.mxu0 %v1703
    %2271 = vmatpush.bf16.msra.mxu0 %v1695
    %2272 = vmatpush.bf16.msra.mxu0 %v1687
    %2273 = vmatpush.bf16.msra.mxu0 %v1679
    %2274 = vmatpush.bf16.msra.mxu0 %v1671
    %2275 = vmatpush.bf16.msra.mxu0 %v1663
    %2276 = vmatpush.bf16.msra.mxu0 %v1655
    %2277 = vmatmul.bf16.gmra.mxu0 %v672
    %v2278 = vpop.f32.mrf.mxu0
    %v2279 = vadd.f32 %v2266, %v2278
    %v2280 = vpop.f32.mrf.mxu0
    %2281 = vdwg.mxu0
    %2282 = vmatpush.bf16.msra.mxu0 %v1520
    %2283 = vmatpush.bf16.msra.mxu0 %v1512
    %2284 = vmatpush.bf16.msra.mxu0 %v1504
    %2285 = vmatpush.bf16.msra.mxu0 %v1496
    %2286 = vmatpush.bf16.msra.mxu0 %v1488
    %2287 = vmatpush.bf16.msra.mxu0 %v1480
    %2288 = vmatpush.bf16.msra.mxu0 %v1472
    %2289 = vmatpush.bf16.msra.mxu0 %v1464
    %2290 = vmatmul.bf16.gmra.mxu0 %v669
    %v2291 = vpop.f32.mrf.mxu0
    %v2292 = vadd.f32 %v680, %v2291
    %v2293 = vpop.f32.mrf.mxu0
    %2294 = vdwg.mxu0
    %2295 = vmatpush.bf16.msra.mxu0 %v1584
    %2296 = vmatpush.bf16.msra.mxu0 %v1576
    %2297 = vmatpush.bf16.msra.mxu0 %v1568
    %2298 = vmatpush.bf16.msra.mxu0 %v1560
    %2299 = vmatpush.bf16.msra.mxu0 %v1552
    %2300 = vmatpush.bf16.msra.mxu0 %v1544
    %2301 = vmatpush.bf16.msra.mxu0 %v1536
    %2302 = vmatpush.bf16.msra.mxu0 %v1528
    %2303 = vmatmul.bf16.gmra.mxu0 %v670
    %v2304 = vpop.f32.mrf.mxu0
    %v2305 = vadd.f32 %v2292, %v2304
    %v2306 = vpop.f32.mrf.mxu0
    %2307 = vdwg.mxu0
    %2308 = vmatpush.bf16.msra.mxu0 %v1648
    %2309 = vmatpush.bf16.msra.mxu0 %v1640
    %2310 = vmatpush.bf16.msra.mxu0 %v1632
    %2311 = vmatpush.bf16.msra.mxu0 %v1624
    %2312 = vmatpush.bf16.msra.mxu0 %v1616
    %2313 = vmatpush.bf16.msra.mxu0 %v1608
    %2314 = vmatpush.bf16.msra.mxu0 %v1600
    %2315 = vmatpush.bf16.msra.mxu0 %v1592
    %2316 = vmatmul.bf16.gmra.mxu0 %v671
    %v2317 = vpop.f32.mrf.mxu0
    %v2318 = vadd.f32 %v2305, %v2317
    %v2319 = vpop.f32.mrf.mxu0
    %2320 = vdwg.mxu0
    %2321 = vmatpush.bf16.msra.mxu0 %v1712
    %2322 = vmatpush.bf16.msra.mxu0 %v1704
    %2323 = vmatpush.bf16.msra.mxu0 %v1696
    %2324 = vmatpush.bf16.msra.mxu0 %v1688
    %2325 = vmatpush.bf16.msra.mxu0 %v1680
    %2326 = vmatpush.bf16.msra.mxu0 %v1672
    %2327 = vmatpush.bf16.msra.mxu0 %v1664
    %2328 = vmatpush.bf16.msra.mxu0 %v1656
    %2329 = vmatmul.bf16.gmra.mxu0 %v672
    %v2330 = vpop.f32.mrf.mxu0
    %v2331 = vadd.f32 %v2318, %v2330
    %v2332 = vpop.f32.mrf.mxu0
    %2333 = vdwg.mxu0
    %2334 = vmatpush.bf16.msra.mxu0 %v1521
    %2335 = vmatpush.bf16.msra.mxu0 %v1513
    %2336 = vmatpush.bf16.msra.mxu0 %v1505
    %2337 = vmatpush.bf16.msra.mxu0 %v1497
    %2338 = vmatpush.bf16.msra.mxu0 %v1489
    %2339 = vmatpush.bf16.msra.mxu0 %v1481
    %2340 = vmatpush.bf16.msra.mxu0 %v1473
    %2341 = vmatpush.bf16.msra.mxu0 %v1465
    %2342 = vmatmul.bf16.gmra.mxu0 %v669
    %v2343 = vpop.f32.mrf.mxu0
    %v2344 = vadd.f32 %v681, %v2343
    %v2345 = vpop.f32.mrf.mxu0
    %2346 = vdwg.mxu0
    %2347 = vmatpush.bf16.msra.mxu0 %v1585
    %2348 = vmatpush.bf16.msra.mxu0 %v1577
    %2349 = vmatpush.bf16.msra.mxu0 %v1569
    %2350 = vmatpush.bf16.msra.mxu0 %v1561
    %2351 = vmatpush.bf16.msra.mxu0 %v1553
    %2352 = vmatpush.bf16.msra.mxu0 %v1545
    %2353 = vmatpush.bf16.msra.mxu0 %v1537
    %2354 = vmatpush.bf16.msra.mxu0 %v1529
    %2355 = vmatmul.bf16.gmra.mxu0 %v670
    %v2356 = vpop.f32.mrf.mxu0
    %v2357 = vadd.f32 %v2344, %v2356
    %v2358 = vpop.f32.mrf.mxu0
    %2359 = vdwg.mxu0
    %2360 = vmatpush.bf16.msra.mxu0 %v1649
    %2361 = vmatpush.bf16.msra.mxu0 %v1641
    %2362 = vmatpush.bf16.msra.mxu0 %v1633
    %2363 = vmatpush.bf16.msra.mxu0 %v1625
    %2364 = vmatpush.bf16.msra.mxu0 %v1617
    %2365 = vmatpush.bf16.msra.mxu0 %v1609
    %2366 = vmatpush.bf16.msra.mxu0 %v1601
    %2367 = vmatpush.bf16.msra.mxu0 %v1593
    %2368 = vmatmul.bf16.gmra.mxu0 %v671
    %v2369 = vpop.f32.mrf.mxu0
    %v2370 = vadd.f32 %v2357, %v2369
    %v2371 = vpop.f32.mrf.mxu0
    %2372 = vdwg.mxu0
    %2373 = vmatpush.bf16.msra.mxu0 %v1713
    %2374 = vmatpush.bf16.msra.mxu0 %v1705
    %2375 = vmatpush.bf16.msra.mxu0 %v1697
    %2376 = vmatpush.bf16.msra.mxu0 %v1689
    %2377 = vmatpush.bf16.msra.mxu0 %v1681
    %2378 = vmatpush.bf16.msra.mxu0 %v1673
    %2379 = vmatpush.bf16.msra.mxu0 %v1665
    %2380 = vmatpush.bf16.msra.mxu0 %v1657
    %2381 = vmatmul.bf16.gmra.mxu0 %v672
    %v2382 = vpop.f32.mrf.mxu0
    %v2383 = vadd.f32 %v2370, %v2382
    %v2384 = vpop.f32.mrf.mxu0
    %2385 = vdwg.mxu0
    %v2386 = vmax.f32 %v2019, 0.0
    %v2387 = vmax.f32 %v2071, 0.0
    %v2388 = vmax.f32 %v2123, 0.0
    %v2389 = vmax.f32 %v2175, 0.0
    %v2390 = vmax.f32 %v2227, 0.0
    %v2391 = vmax.f32 %v2279, 0.0
    %v2392 = vmax.f32 %v2331, 0.0
    %v2393 = vmax.f32 %v2383, 0.0
    %s2394 = smul.u32 4, 128
    %s2395 = smul.u32 %s2394, 8
    %s2396 = sshll.u32 %s2395, 4
    %2397 = dma.done %s74, %s2396
    %v2398 = vld [vmem:[#allocation4] sm:$0xff]
    %v2399 = vld [vmem:[#allocation4 + $0x8] sm:$0xff]
    %v2400 = vld [vmem:[#allocation4 + $0x10] sm:$0xff]
    %v2401 = vld [vmem:[#allocation4 + $0x18] sm:$0xff]
    %v2402 = vld [vmem:[#allocation4 + $0x20] sm:$0xff]
    %v2403 = vld [vmem:[#allocation4 + $0x28] sm:$0xff]
    %v2404 = vld [vmem:[#allocation4 + $0x30] sm:$0xff]
    %v2405 = vld [vmem:[#allocation4 + $0x38] sm:$0xff]
    %v2406 = vld [vmem:[#allocation4 + $0x40] sm:$0xff]
    %v2407 = vld [vmem:[#allocation4 + $0x48] sm:$0xff]
    %v2408 = vld [vmem:[#allocation4 + $0x50] sm:$0xff]
    %v2409 = vld [vmem:[#allocation4 + $0x58] sm:$0xff]
    %v2410 = vld [vmem:[#allocation4 + $0x60] sm:$0xff]
    %v2411 = vld [vmem:[#allocation4 + $0x68] sm:$0xff]
    %v2412 = vld [vmem:[#allocation4 + $0x70] sm:$0xff]
    %v2413 = vld [vmem:[#allocation4 + $0x78] sm:$0xff]
    %v2414 = vld [vmem:[#allocation4 + $0x80] sm:$0xff]
    %v2415 = vld [vmem:[#allocation4 + $0x88] sm:$0xff]
    %v2416 = vld [vmem:[#allocation4 + $0x90] sm:$0xff]
    %v2417 = vld [vmem:[#allocation4 + $0x98] sm:$0xff]
    %v2418 = vld [vmem:[#allocation4 + $0xa0] sm:$0xff]
    %v2419 = vld [vmem:[#allocation4 + $0xa8] sm:$0xff]
    %v2420 = vld [vmem:[#allocation4 + $0xb0] sm:$0xff]
    %v2421 = vld [vmem:[#allocation4 + $0xb8] sm:$0xff]
    %v2422 = vld [vmem:[#allocation4 + $0xc0] sm:$0xff]
    %v2423 = vld [vmem:[#allocation4 + $0xc8] sm:$0xff]
    %v2424 = vld [vmem:[#allocation4 + $0xd0] sm:$0xff]
    %v2425 = vld [vmem:[#allocation4 + $0xd8] sm:$0xff]
    %v2426 = vld [vmem:[#allocation4 + $0xe0] sm:$0xff]
    %v2427 = vld [vmem:[#allocation4 + $0xe8] sm:$0xff]
    %v2428 = vld [vmem:[#allocation4 + $0xf0] sm:$0xff]
    %v2429 = vld [vmem:[#allocation4 + $0xf8] sm:$0xff]
    %v2430 = vld [vmem:[#allocation4 + $0x100] sm:$0xff]
    %v2431 = vld [vmem:[#allocation4 + $0x108] sm:$0xff]
    %v2432 = vld [vmem:[#allocation4 + $0x110] sm:$0xff]
    %v2433 = vld [vmem:[#allocation4 + $0x118] sm:$0xff]
    %v2434 = vld [vmem:[#allocation4 + $0x120] sm:$0xff]
    %v2435 = vld [vmem:[#allocation4 + $0x128] sm:$0xff]
    %v2436 = vld [vmem:[#allocation4 + $0x130] sm:$0xff]
    %v2437 = vld [vmem:[#allocation4 + $0x138] sm:$0xff]
    %v2438 = vld [vmem:[#allocation4 + $0x140] sm:$0xff]
    %v2439 = vld [vmem:[#allocation4 + $0x148] sm:$0xff]
    %v2440 = vld [vmem:[#allocation4 + $0x150] sm:$0xff]
    %v2441 = vld [vmem:[#allocation4 + $0x158] sm:$0xff]
    %v2442 = vld [vmem:[#allocation4 + $0x160] sm:$0xff]
    %v2443 = vld [vmem:[#allocation4 + $0x168] sm:$0xff]
    %v2444 = vld [vmem:[#allocation4 + $0x170] sm:$0xff]
    %v2445 = vld [vmem:[#allocation4 + $0x178] sm:$0xff]
    %v2446 = vld [vmem:[#allocation4 + $0x180] sm:$0xff]
    %v2447 = vld [vmem:[#allocation4 + $0x188] sm:$0xff]
    %v2448 = vld [vmem:[#allocation4 + $0x190] sm:$0xff]
    %v2449 = vld [vmem:[#allocation4 + $0x198] sm:$0xff]
    %v2450 = vld [vmem:[#allocation4 + $0x1a0] sm:$0xff]
    %v2451 = vld [vmem:[#allocation4 + $0x1a8] sm:$0xff]
    %v2452 = vld [vmem:[#allocation4 + $0x1b0] sm:$0xff]
    %v2453 = vld [vmem:[#allocation4 + $0x1b8] sm:$0xff]
    %v2454 = vld [vmem:[#allocation4 + $0x1c0] sm:$0xff]
    %v2455 = vld [vmem:[#allocation4 + $0x1c8] sm:$0xff]
    %v2456 = vld [vmem:[#allocation4 + $0x1d0] sm:$0xff]
    %v2457 = vld [vmem:[#allocation4 + $0x1d8] sm:$0xff]
    %v2458 = vld [vmem:[#allocation4 + $0x1e0] sm:$0xff]
    %v2459 = vld [vmem:[#allocation4 + $0x1e8] sm:$0xff]
    %v2460 = vld [vmem:[#allocation4 + $0x1f0] sm:$0xff]
    %v2461 = vld [vmem:[#allocation4 + $0x1f8] sm:$0xff]
    %v2462 = vld [vmem:[#allocation4 + $0x200] sm:$0xff]
    %v2463 = vld [vmem:[#allocation4 + $0x208] sm:$0xff]
    %v2464 = vld [vmem:[#allocation4 + $0x210] sm:$0xff]
    %v2465 = vld [vmem:[#allocation4 + $0x218] sm:$0xff]
    %v2466 = vld [vmem:[#allocation4 + $0x220] sm:$0xff]
    %v2467 = vld [vmem:[#allocation4 + $0x228] sm:$0xff]
    %v2468 = vld [vmem:[#allocation4 + $0x230] sm:$0xff]
    %v2469 = vld [vmem:[#allocation4 + $0x238] sm:$0xff]
    %v2470 = vld [vmem:[#allocation4 + $0x240] sm:$0xff]
    %v2471 = vld [vmem:[#allocation4 + $0x248] sm:$0xff]
    %v2472 = vld [vmem:[#allocation4 + $0x250] sm:$0xff]
    %v2473 = vld [vmem:[#allocation4 + $0x258] sm:$0xff]
    %v2474 = vld [vmem:[#allocation4 + $0x260] sm:$0xff]
    %v2475 = vld [vmem:[#allocation4 + $0x268] sm:$0xff]
    %v2476 = vld [vmem:[#allocation4 + $0x270] sm:$0xff]
    %v2477 = vld [vmem:[#allocation4 + $0x278] sm:$0xff]
    %v2478 = vld [vmem:[#allocation4 + $0x280] sm:$0xff]
    %v2479 = vld [vmem:[#allocation4 + $0x288] sm:$0xff]
    %v2480 = vld [vmem:[#allocation4 + $0x290] sm:$0xff]
    %v2481 = vld [vmem:[#allocation4 + $0x298] sm:$0xff]
    %v2482 = vld [vmem:[#allocation4 + $0x2a0] sm:$0xff]
    %v2483 = vld [vmem:[#allocation4 + $0x2a8] sm:$0xff]
    %v2484 = vld [vmem:[#allocation4 + $0x2b0] sm:$0xff]
    %v2485 = vld [vmem:[#allocation4 + $0x2b8] sm:$0xff]
    %v2486 = vld [vmem:[#allocation4 + $0x2c0] sm:$0xff]
    %v2487 = vld [vmem:[#allocation4 + $0x2c8] sm:$0xff]
    %v2488 = vld [vmem:[#allocation4 + $0x2d0] sm:$0xff]
    %v2489 = vld [vmem:[#allocation4 + $0x2d8] sm:$0xff]
    %v2490 = vld [vmem:[#allocation4 + $0x2e0] sm:$0xff]
    %v2491 = vld [vmem:[#allocation4 + $0x2e8] sm:$0xff]
    %v2492 = vld [vmem:[#allocation4 + $0x2f0] sm:$0xff]
    %v2493 = vld [vmem:[#allocation4 + $0x2f8] sm:$0xff]
    %v2494 = vld [vmem:[#allocation4 + $0x300] sm:$0xff]
    %v2495 = vld [vmem:[#allocation4 + $0x308] sm:$0xff]
    %v2496 = vld [vmem:[#allocation4 + $0x310] sm:$0xff]
    %v2497 = vld [vmem:[#allocation4 + $0x318] sm:$0xff]
    %v2498 = vld [vmem:[#allocation4 + $0x320] sm:$0xff]
    %v2499 = vld [vmem:[#allocation4 + $0x328] sm:$0xff]
    %v2500 = vld [vmem:[#allocation4 + $0x330] sm:$0xff]
    %v2501 = vld [vmem:[#allocation4 + $0x338] sm:$0xff]
    %v2502 = vld [vmem:[#allocation4 + $0x340] sm:$0xff]
    %v2503 = vld [vmem:[#allocation4 + $0x348] sm:$0xff]
    %v2504 = vld [vmem:[#allocation4 + $0x350] sm:$0xff]
    %v2505 = vld [vmem:[#allocation4 + $0x358] sm:$0xff]
    %v2506 = vld [vmem:[#allocation4 + $0x360] sm:$0xff]
    %v2507 = vld [vmem:[#allocation4 + $0x368] sm:$0xff]
    %v2508 = vld [vmem:[#allocation4 + $0x370] sm:$0xff]
    %v2509 = vld [vmem:[#allocation4 + $0x378] sm:$0xff]
    %v2510 = vld [vmem:[#allocation4 + $0x380] sm:$0xff]
    %v2511 = vld [vmem:[#allocation4 + $0x388] sm:$0xff]
    %v2512 = vld [vmem:[#allocation4 + $0x390] sm:$0xff]
    %v2513 = vld [vmem:[#allocation4 + $0x398] sm:$0xff]
    %v2514 = vld [vmem:[#allocation4 + $0x3a0] sm:$0xff]
    %v2515 = vld [vmem:[#allocation4 + $0x3a8] sm:$0xff]
    %v2516 = vld [vmem:[#allocation4 + $0x3b0] sm:$0xff]
    %v2517 = vld [vmem:[#allocation4 + $0x3b8] sm:$0xff]
    %v2518 = vld [vmem:[#allocation4 + $0x3c0] sm:$0xff]
    %v2519 = vld [vmem:[#allocation4 + $0x3c8] sm:$0xff]
    %v2520 = vld [vmem:[#allocation4 + $0x3d0] sm:$0xff]
    %v2521 = vld [vmem:[#allocation4 + $0x3d8] sm:$0xff]
    %v2522 = vld [vmem:[#allocation4 + $0x3e0] sm:$0xff]
    %v2523 = vld [vmem:[#allocation4 + $0x3e8] sm:$0xff]
    %v2524 = vld [vmem:[#allocation4 + $0x3f0] sm:$0xff]
    %v2525 = vld [vmem:[#allocation4 + $0x3f8] sm:$0xff]
    %v2526 = vld [vmem:[#allocation4 + $0x400] sm:$0xff]
    %v2527 = vld [vmem:[#allocation4 + $0x408] sm:$0xff]
    %v2528 = vld [vmem:[#allocation4 + $0x410] sm:$0xff]
    %v2529 = vld [vmem:[#allocation4 + $0x418] sm:$0xff]
    %v2530 = vld [vmem:[#allocation4 + $0x420] sm:$0xff]
    %v2531 = vld [vmem:[#allocation4 + $0x428] sm:$0xff]
    %v2532 = vld [vmem:[#allocation4 + $0x430] sm:$0xff]
    %v2533 = vld [vmem:[#allocation4 + $0x438] sm:$0xff]
    %v2534 = vld [vmem:[#allocation4 + $0x440] sm:$0xff]
    %v2535 = vld [vmem:[#allocation4 + $0x448] sm:$0xff]
    %v2536 = vld [vmem:[#allocation4 + $0x450] sm:$0xff]
    %v2537 = vld [vmem:[#allocation4 + $0x458] sm:$0xff]
    %v2538 = vld [vmem:[#allocation4 + $0x460] sm:$0xff]
    %v2539 = vld [vmem:[#allocation4 + $0x468] sm:$0xff]
    %v2540 = vld [vmem:[#allocation4 + $0x470] sm:$0xff]
    %v2541 = vld [vmem:[#allocation4 + $0x478] sm:$0xff]
    %v2542 = vld [vmem:[#allocation4 + $0x480] sm:$0xff]
    %v2543 = vld [vmem:[#allocation4 + $0x488] sm:$0xff]
    %v2544 = vld [vmem:[#allocation4 + $0x490] sm:$0xff]
    %v2545 = vld [vmem:[#allocation4 + $0x498] sm:$0xff]
    %v2546 = vld [vmem:[#allocation4 + $0x4a0] sm:$0xff]
    %v2547 = vld [vmem:[#allocation4 + $0x4a8] sm:$0xff]
    %v2548 = vld [vmem:[#allocation4 + $0x4b0] sm:$0xff]
    %v2549 = vld [vmem:[#allocation4 + $0x4b8] sm:$0xff]
    %v2550 = vld [vmem:[#allocation4 + $0x4c0] sm:$0xff]
    %v2551 = vld [vmem:[#allocation4 + $0x4c8] sm:$0xff]
    %v2552 = vld [vmem:[#allocation4 + $0x4d0] sm:$0xff]
    %v2553 = vld [vmem:[#allocation4 + $0x4d8] sm:$0xff]
    %v2554 = vld [vmem:[#allocation4 + $0x4e0] sm:$0xff]
    %v2555 = vld [vmem:[#allocation4 + $0x4e8] sm:$0xff]
    %v2556 = vld [vmem:[#allocation4 + $0x4f0] sm:$0xff]
    %v2557 = vld [vmem:[#allocation4 + $0x4f8] sm:$0xff]
    %v2558 = vld [vmem:[#allocation4 + $0x500] sm:$0xff]
    %v2559 = vld [vmem:[#allocation4 + $0x508] sm:$0xff]
    %v2560 = vld [vmem:[#allocation4 + $0x510] sm:$0xff]
    %v2561 = vld [vmem:[#allocation4 + $0x518] sm:$0xff]
    %v2562 = vld [vmem:[#allocation4 + $0x520] sm:$0xff]
    %v2563 = vld [vmem:[#allocation4 + $0x528] sm:$0xff]
    %v2564 = vld [vmem:[#allocation4 + $0x530] sm:$0xff]
    %v2565 = vld [vmem:[#allocation4 + $0x538] sm:$0xff]
    %v2566 = vld [vmem:[#allocation4 + $0x540] sm:$0xff]
    %v2567 = vld [vmem:[#allocation4 + $0x548] sm:$0xff]
    %v2568 = vld [vmem:[#allocation4 + $0x550] sm:$0xff]
    %v2569 = vld [vmem:[#allocation4 + $0x558] sm:$0xff]
    %v2570 = vld [vmem:[#allocation4 + $0x560] sm:$0xff]
    %v2571 = vld [vmem:[#allocation4 + $0x568] sm:$0xff]
    %v2572 = vld [vmem:[#allocation4 + $0x570] sm:$0xff]
    %v2573 = vld [vmem:[#allocation4 + $0x578] sm:$0xff]
    %v2574 = vld [vmem:[#allocation4 + $0x580] sm:$0xff]
    %v2575 = vld [vmem:[#allocation4 + $0x588] sm:$0xff]
    %v2576 = vld [vmem:[#allocation4 + $0x590] sm:$0xff]
    %v2577 = vld [vmem:[#allocation4 + $0x598] sm:$0xff]
    %v2578 = vld [vmem:[#allocation4 + $0x5a0] sm:$0xff]
    %v2579 = vld [vmem:[#allocation4 + $0x5a8] sm:$0xff]
    %v2580 = vld [vmem:[#allocation4 + $0x5b0] sm:$0xff]
    %v2581 = vld [vmem:[#allocation4 + $0x5b8] sm:$0xff]
    %v2582 = vld [vmem:[#allocation4 + $0x5c0] sm:$0xff]
    %v2583 = vld [vmem:[#allocation4 + $0x5c8] sm:$0xff]
    %v2584 = vld [vmem:[#allocation4 + $0x5d0] sm:$0xff]
    %v2585 = vld [vmem:[#allocation4 + $0x5d8] sm:$0xff]
    %v2586 = vld [vmem:[#allocation4 + $0x5e0] sm:$0xff]
    %v2587 = vld [vmem:[#allocation4 + $0x5e8] sm:$0xff]
    %v2588 = vld [vmem:[#allocation4 + $0x5f0] sm:$0xff]
    %v2589 = vld [vmem:[#allocation4 + $0x5f8] sm:$0xff]
    %v2590 = vld [vmem:[#allocation4 + $0x600] sm:$0xff]
    %v2591 = vld [vmem:[#allocation4 + $0x608] sm:$0xff]
    %v2592 = vld [vmem:[#allocation4 + $0x610] sm:$0xff]
    %v2593 = vld [vmem:[#allocation4 + $0x618] sm:$0xff]
    %v2594 = vld [vmem:[#allocation4 + $0x620] sm:$0xff]
    %v2595 = vld [vmem:[#allocation4 + $0x628] sm:$0xff]
    %v2596 = vld [vmem:[#allocation4 + $0x630] sm:$0xff]
    %v2597 = vld [vmem:[#allocation4 + $0x638] sm:$0xff]
    %v2598 = vld [vmem:[#allocation4 + $0x640] sm:$0xff]
    %v2599 = vld [vmem:[#allocation4 + $0x648] sm:$0xff]
    %v2600 = vld [vmem:[#allocation4 + $0x650] sm:$0xff]
    %v2601 = vld [vmem:[#allocation4 + $0x658] sm:$0xff]
    %v2602 = vld [vmem:[#allocation4 + $0x660] sm:$0xff]
    %v2603 = vld [vmem:[#allocation4 + $0x668] sm:$0xff]
    %v2604 = vld [vmem:[#allocation4 + $0x670] sm:$0xff]
    %v2605 = vld [vmem:[#allocation4 + $0x678] sm:$0xff]
    %v2606 = vld [vmem:[#allocation4 + $0x680] sm:$0xff]
    %v2607 = vld [vmem:[#allocation4 + $0x688] sm:$0xff]
    %v2608 = vld [vmem:[#allocation4 + $0x690] sm:$0xff]
    %v2609 = vld [vmem:[#allocation4 + $0x698] sm:$0xff]
    %v2610 = vld [vmem:[#allocation4 + $0x6a0] sm:$0xff]
    %v2611 = vld [vmem:[#allocation4 + $0x6a8] sm:$0xff]
    %v2612 = vld [vmem:[#allocation4 + $0x6b0] sm:$0xff]
    %v2613 = vld [vmem:[#allocation4 + $0x6b8] sm:$0xff]
    %v2614 = vld [vmem:[#allocation4 + $0x6c0] sm:$0xff]
    %v2615 = vld [vmem:[#allocation4 + $0x6c8] sm:$0xff]
    %v2616 = vld [vmem:[#allocation4 + $0x6d0] sm:$0xff]
    %v2617 = vld [vmem:[#allocation4 + $0x6d8] sm:$0xff]
    %v2618 = vld [vmem:[#allocation4 + $0x6e0] sm:$0xff]
    %v2619 = vld [vmem:[#allocation4 + $0x6e8] sm:$0xff]
    %v2620 = vld [vmem:[#allocation4 + $0x6f0] sm:$0xff]
    %v2621 = vld [vmem:[#allocation4 + $0x6f8] sm:$0xff]
    %v2622 = vld [vmem:[#allocation4 + $0x700] sm:$0xff]
    %v2623 = vld [vmem:[#allocation4 + $0x708] sm:$0xff]
    %v2624 = vld [vmem:[#allocation4 + $0x710] sm:$0xff]
    %v2625 = vld [vmem:[#allocation4 + $0x718] sm:$0xff]
    %v2626 = vld [vmem:[#allocation4 + $0x720] sm:$0xff]
    %v2627 = vld [vmem:[#allocation4 + $0x728] sm:$0xff]
    %v2628 = vld [vmem:[#allocation4 + $0x730] sm:$0xff]
    %v2629 = vld [vmem:[#allocation4 + $0x738] sm:$0xff]
    %v2630 = vld [vmem:[#allocation4 + $0x740] sm:$0xff]
    %v2631 = vld [vmem:[#allocation4 + $0x748] sm:$0xff]
    %v2632 = vld [vmem:[#allocation4 + $0x750] sm:$0xff]
    %v2633 = vld [vmem:[#allocation4 + $0x758] sm:$0xff]
    %v2634 = vld [vmem:[#allocation4 + $0x760] sm:$0xff]
    %v2635 = vld [vmem:[#allocation4 + $0x768] sm:$0xff]
    %v2636 = vld [vmem:[#allocation4 + $0x770] sm:$0xff]
    %v2637 = vld [vmem:[#allocation4 + $0x778] sm:$0xff]
    %v2638 = vld [vmem:[#allocation4 + $0x780] sm:$0xff]
    %v2639 = vld [vmem:[#allocation4 + $0x788] sm:$0xff]
    %v2640 = vld [vmem:[#allocation4 + $0x790] sm:$0xff]
    %v2641 = vld [vmem:[#allocation4 + $0x798] sm:$0xff]
    %v2642 = vld [vmem:[#allocation4 + $0x7a0] sm:$0xff]
    %v2643 = vld [vmem:[#allocation4 + $0x7a8] sm:$0xff]
    %v2644 = vld [vmem:[#allocation4 + $0x7b0] sm:$0xff]
    %v2645 = vld [vmem:[#allocation4 + $0x7b8] sm:$0xff]
    %v2646 = vld [vmem:[#allocation4 + $0x7c0] sm:$0xff]
    %v2647 = vld [vmem:[#allocation4 + $0x7c8] sm:$0xff]
    %v2648 = vld [vmem:[#allocation4 + $0x7d0] sm:$0xff]
    %v2649 = vld [vmem:[#allocation4 + $0x7d8] sm:$0xff]
    %v2650 = vld [vmem:[#allocation4 + $0x7e0] sm:$0xff]
    %v2651 = vld [vmem:[#allocation4 + $0x7e8] sm:$0xff]
    %v2652 = vld [vmem:[#allocation4 + $0x7f0] sm:$0xff]
    %v2653 = vld [vmem:[#allocation4 + $0x7f8] sm:$0xff]
    %v2654 = vld [vmem:[#allocation4 + $0x800] sm:$0xff]
    %v2655 = vld [vmem:[#allocation4 + $0x808] sm:$0xff]
    %v2656 = vld [vmem:[#allocation4 + $0x810] sm:$0xff]
    %v2657 = vld [vmem:[#allocation4 + $0x818] sm:$0xff]
    %v2658 = vld [vmem:[#allocation4 + $0x820] sm:$0xff]
    %v2659 = vld [vmem:[#allocation4 + $0x828] sm:$0xff]
    %v2660 = vld [vmem:[#allocation4 + $0x830] sm:$0xff]
    %v2661 = vld [vmem:[#allocation4 + $0x838] sm:$0xff]
    %v2662 = vld [vmem:[#allocation4 + $0x840] sm:$0xff]
    %v2663 = vld [vmem:[#allocation4 + $0x848] sm:$0xff]
    %v2664 = vld [vmem:[#allocation4 + $0x850] sm:$0xff]
    %v2665 = vld [vmem:[#allocation4 + $0x858] sm:$0xff]
    %v2666 = vld [vmem:[#allocation4 + $0x860] sm:$0xff]
    %v2667 = vld [vmem:[#allocation4 + $0x868] sm:$0xff]
    %v2668 = vld [vmem:[#allocation4 + $0x870] sm:$0xff]
    %v2669 = vld [vmem:[#allocation4 + $0x878] sm:$0xff]
    %v2670 = vld [vmem:[#allocation4 + $0x880] sm:$0xff]
    %v2671 = vld [vmem:[#allocation4 + $0x888] sm:$0xff]
    %v2672 = vld [vmem:[#allocation4 + $0x890] sm:$0xff]
    %v2673 = vld [vmem:[#allocation4 + $0x898] sm:$0xff]
    %v2674 = vld [vmem:[#allocation4 + $0x8a0] sm:$0xff]
    %v2675 = vld [vmem:[#allocation4 + $0x8a8] sm:$0xff]
    %v2676 = vld [vmem:[#allocation4 + $0x8b0] sm:$0xff]
    %v2677 = vld [vmem:[#allocation4 + $0x8b8] sm:$0xff]
    %v2678 = vld [vmem:[#allocation4 + $0x8c0] sm:$0xff]
    %v2679 = vld [vmem:[#allocation4 + $0x8c8] sm:$0xff]
    %v2680 = vld [vmem:[#allocation4 + $0x8d0] sm:$0xff]
    %v2681 = vld [vmem:[#allocation4 + $0x8d8] sm:$0xff]
    %v2682 = vld [vmem:[#allocation4 + $0x8e0] sm:$0xff]
    %v2683 = vld [vmem:[#allocation4 + $0x8e8] sm:$0xff]
    %v2684 = vld [vmem:[#allocation4 + $0x8f0] sm:$0xff]
    %v2685 = vld [vmem:[#allocation4 + $0x8f8] sm:$0xff]
    %v2686 = vld [vmem:[#allocation4 + $0x900] sm:$0xff]
    %v2687 = vld [vmem:[#allocation4 + $0x908] sm:$0xff]
    %v2688 = vld [vmem:[#allocation4 + $0x910] sm:$0xff]
    %v2689 = vld [vmem:[#allocation4 + $0x918] sm:$0xff]
    %v2690 = vld [vmem:[#allocation4 + $0x920] sm:$0xff]
    %v2691 = vld [vmem:[#allocation4 + $0x928] sm:$0xff]
    %v2692 = vld [vmem:[#allocation4 + $0x930] sm:$0xff]
    %v2693 = vld [vmem:[#allocation4 + $0x938] sm:$0xff]
    %v2694 = vld [vmem:[#allocation4 + $0x940] sm:$0xff]
    %v2695 = vld [vmem:[#allocation4 + $0x948] sm:$0xff]
    %v2696 = vld [vmem:[#allocation4 + $0x950] sm:$0xff]
    %v2697 = vld [vmem:[#allocation4 + $0x958] sm:$0xff]
    %v2698 = vld [vmem:[#allocation4 + $0x960] sm:$0xff]
    %v2699 = vld [vmem:[#allocation4 + $0x968] sm:$0xff]
    %v2700 = vld [vmem:[#allocation4 + $0x970] sm:$0xff]
    %v2701 = vld [vmem:[#allocation4 + $0x978] sm:$0xff]
    %v2702 = vld [vmem:[#allocation4 + $0x980] sm:$0xff]
    %v2703 = vld [vmem:[#allocation4 + $0x988] sm:$0xff]
    %v2704 = vld [vmem:[#allocation4 + $0x990] sm:$0xff]
    %v2705 = vld [vmem:[#allocation4 + $0x998] sm:$0xff]
    %v2706 = vld [vmem:[#allocation4 + $0x9a0] sm:$0xff]
    %v2707 = vld [vmem:[#allocation4 + $0x9a8] sm:$0xff]
    %v2708 = vld [vmem:[#allocation4 + $0x9b0] sm:$0xff]
    %v2709 = vld [vmem:[#allocation4 + $0x9b8] sm:$0xff]
    %v2710 = vld [vmem:[#allocation4 + $0x9c0] sm:$0xff]
    %v2711 = vld [vmem:[#allocation4 + $0x9c8] sm:$0xff]
    %v2712 = vld [vmem:[#allocation4 + $0x9d0] sm:$0xff]
    %v2713 = vld [vmem:[#allocation4 + $0x9d8] sm:$0xff]
    %v2714 = vld [vmem:[#allocation4 + $0x9e0] sm:$0xff]
    %v2715 = vld [vmem:[#allocation4 + $0x9e8] sm:$0xff]
    %v2716 = vld [vmem:[#allocation4 + $0x9f0] sm:$0xff]
    %v2717 = vld [vmem:[#allocation4 + $0x9f8] sm:$0xff]
    %v2718 = vld [vmem:[#allocation4 + $0xa00] sm:$0xff]
    %v2719 = vld [vmem:[#allocation4 + $0xa08] sm:$0xff]
    %v2720 = vld [vmem:[#allocation4 + $0xa10] sm:$0xff]
    %v2721 = vld [vmem:[#allocation4 + $0xa18] sm:$0xff]
    %v2722 = vld [vmem:[#allocation4 + $0xa20] sm:$0xff]
    %v2723 = vld [vmem:[#allocation4 + $0xa28] sm:$0xff]
    %v2724 = vld [vmem:[#allocation4 + $0xa30] sm:$0xff]
    %v2725 = vld [vmem:[#allocation4 + $0xa38] sm:$0xff]
    %v2726 = vld [vmem:[#allocation4 + $0xa40] sm:$0xff]
    %v2727 = vld [vmem:[#allocation4 + $0xa48] sm:$0xff]
    %v2728 = vld [vmem:[#allocation4 + $0xa50] sm:$0xff]
    %v2729 = vld [vmem:[#allocation4 + $0xa58] sm:$0xff]
    %v2730 = vld [vmem:[#allocation4 + $0xa60] sm:$0xff]
    %v2731 = vld [vmem:[#allocation4 + $0xa68] sm:$0xff]
    %v2732 = vld [vmem:[#allocation4 + $0xa70] sm:$0xff]
    %v2733 = vld [vmem:[#allocation4 + $0xa78] sm:$0xff]
    %v2734 = vld [vmem:[#allocation4 + $0xa80] sm:$0xff]
    %v2735 = vld [vmem:[#allocation4 + $0xa88] sm:$0xff]
    %v2736 = vld [vmem:[#allocation4 + $0xa90] sm:$0xff]
    %v2737 = vld [vmem:[#allocation4 + $0xa98] sm:$0xff]
    %v2738 = vld [vmem:[#allocation4 + $0xaa0] sm:$0xff]
    %v2739 = vld [vmem:[#allocation4 + $0xaa8] sm:$0xff]
    %v2740 = vld [vmem:[#allocation4 + $0xab0] sm:$0xff]
    %v2741 = vld [vmem:[#allocation4 + $0xab8] sm:$0xff]
    %v2742 = vld [vmem:[#allocation4 + $0xac0] sm:$0xff]
    %v2743 = vld [vmem:[#allocation4 + $0xac8] sm:$0xff]
    %v2744 = vld [vmem:[#allocation4 + $0xad0] sm:$0xff]
    %v2745 = vld [vmem:[#allocation4 + $0xad8] sm:$0xff]
    %v2746 = vld [vmem:[#allocation4 + $0xae0] sm:$0xff]
    %v2747 = vld [vmem:[#allocation4 + $0xae8] sm:$0xff]
    %v2748 = vld [vmem:[#allocation4 + $0xaf0] sm:$0xff]
    %v2749 = vld [vmem:[#allocation4 + $0xaf8] sm:$0xff]
    %v2750 = vld [vmem:[#allocation4 + $0xb00] sm:$0xff]
    %v2751 = vld [vmem:[#allocation4 + $0xb08] sm:$0xff]
    %v2752 = vld [vmem:[#allocation4 + $0xb10] sm:$0xff]
    %v2753 = vld [vmem:[#allocation4 + $0xb18] sm:$0xff]
    %v2754 = vld [vmem:[#allocation4 + $0xb20] sm:$0xff]
    %v2755 = vld [vmem:[#allocation4 + $0xb28] sm:$0xff]
    %v2756 = vld [vmem:[#allocation4 + $0xb30] sm:$0xff]
    %v2757 = vld [vmem:[#allocation4 + $0xb38] sm:$0xff]
    %v2758 = vld [vmem:[#allocation4 + $0xb40] sm:$0xff]
    %v2759 = vld [vmem:[#allocation4 + $0xb48] sm:$0xff]
    %v2760 = vld [vmem:[#allocation4 + $0xb50] sm:$0xff]
    %v2761 = vld [vmem:[#allocation4 + $0xb58] sm:$0xff]
    %v2762 = vld [vmem:[#allocation4 + $0xb60] sm:$0xff]
    %v2763 = vld [vmem:[#allocation4 + $0xb68] sm:$0xff]
    %v2764 = vld [vmem:[#allocation4 + $0xb70] sm:$0xff]
    %v2765 = vld [vmem:[#allocation4 + $0xb78] sm:$0xff]
    %v2766 = vld [vmem:[#allocation4 + $0xb80] sm:$0xff]
    %v2767 = vld [vmem:[#allocation4 + $0xb88] sm:$0xff]
    %v2768 = vld [vmem:[#allocation4 + $0xb90] sm:$0xff]
    %v2769 = vld [vmem:[#allocation4 + $0xb98] sm:$0xff]
    %v2770 = vld [vmem:[#allocation4 + $0xba0] sm:$0xff]
    %v2771 = vld [vmem:[#allocation4 + $0xba8] sm:$0xff]
    %v2772 = vld [vmem:[#allocation4 + $0xbb0] sm:$0xff]
    %v2773 = vld [vmem:[#allocation4 + $0xbb8] sm:$0xff]
    %v2774 = vld [vmem:[#allocation4 + $0xbc0] sm:$0xff]
    %v2775 = vld [vmem:[#allocation4 + $0xbc8] sm:$0xff]
    %v2776 = vld [vmem:[#allocation4 + $0xbd0] sm:$0xff]
    %v2777 = vld [vmem:[#allocation4 + $0xbd8] sm:$0xff]
    %v2778 = vld [vmem:[#allocation4 + $0xbe0] sm:$0xff]
    %v2779 = vld [vmem:[#allocation4 + $0xbe8] sm:$0xff]
    %v2780 = vld [vmem:[#allocation4 + $0xbf0] sm:$0xff]
    %v2781 = vld [vmem:[#allocation4 + $0xbf8] sm:$0xff]
    %v2782 = vld [vmem:[#allocation4 + $0xc00] sm:$0xff]
    %v2783 = vld [vmem:[#allocation4 + $0xc08] sm:$0xff]
    %v2784 = vld [vmem:[#allocation4 + $0xc10] sm:$0xff]
    %v2785 = vld [vmem:[#allocation4 + $0xc18] sm:$0xff]
    %v2786 = vld [vmem:[#allocation4 + $0xc20] sm:$0xff]
    %v2787 = vld [vmem:[#allocation4 + $0xc28] sm:$0xff]
    %v2788 = vld [vmem:[#allocation4 + $0xc30] sm:$0xff]
    %v2789 = vld [vmem:[#allocation4 + $0xc38] sm:$0xff]
    %v2790 = vld [vmem:[#allocation4 + $0xc40] sm:$0xff]
    %v2791 = vld [vmem:[#allocation4 + $0xc48] sm:$0xff]
    %v2792 = vld [vmem:[#allocation4 + $0xc50] sm:$0xff]
    %v2793 = vld [vmem:[#allocation4 + $0xc58] sm:$0xff]
    %v2794 = vld [vmem:[#allocation4 + $0xc60] sm:$0xff]
    %v2795 = vld [vmem:[#allocation4 + $0xc68] sm:$0xff]
    %v2796 = vld [vmem:[#allocation4 + $0xc70] sm:$0xff]
    %v2797 = vld [vmem:[#allocation4 + $0xc78] sm:$0xff]
    %v2798 = vld [vmem:[#allocation4 + $0xc80] sm:$0xff]
    %v2799 = vld [vmem:[#allocation4 + $0xc88] sm:$0xff]
    %v2800 = vld [vmem:[#allocation4 + $0xc90] sm:$0xff]
    %v2801 = vld [vmem:[#allocation4 + $0xc98] sm:$0xff]
    %v2802 = vld [vmem:[#allocation4 + $0xca0] sm:$0xff]
    %v2803 = vld [vmem:[#allocation4 + $0xca8] sm:$0xff]
    %v2804 = vld [vmem:[#allocation4 + $0xcb0] sm:$0xff]
    %v2805 = vld [vmem:[#allocation4 + $0xcb8] sm:$0xff]
    %v2806 = vld [vmem:[#allocation4 + $0xcc0] sm:$0xff]
    %v2807 = vld [vmem:[#allocation4 + $0xcc8] sm:$0xff]
    %v2808 = vld [vmem:[#allocation4 + $0xcd0] sm:$0xff]
    %v2809 = vld [vmem:[#allocation4 + $0xcd8] sm:$0xff]
    %v2810 = vld [vmem:[#allocation4 + $0xce0] sm:$0xff]
    %v2811 = vld [vmem:[#allocation4 + $0xce8] sm:$0xff]
    %v2812 = vld [vmem:[#allocation4 + $0xcf0] sm:$0xff]
    %v2813 = vld [vmem:[#allocation4 + $0xcf8] sm:$0xff]
    %v2814 = vld [vmem:[#allocation4 + $0xd00] sm:$0xff]
    %v2815 = vld [vmem:[#allocation4 + $0xd08] sm:$0xff]
    %v2816 = vld [vmem:[#allocation4 + $0xd10] sm:$0xff]
    %v2817 = vld [vmem:[#allocation4 + $0xd18] sm:$0xff]
    %v2818 = vld [vmem:[#allocation4 + $0xd20] sm:$0xff]
    %v2819 = vld [vmem:[#allocation4 + $0xd28] sm:$0xff]
    %v2820 = vld [vmem:[#allocation4 + $0xd30] sm:$0xff]
    %v2821 = vld [vmem:[#allocation4 + $0xd38] sm:$0xff]
    %v2822 = vld [vmem:[#allocation4 + $0xd40] sm:$0xff]
    %v2823 = vld [vmem:[#allocation4 + $0xd48] sm:$0xff]
    %v2824 = vld [vmem:[#allocation4 + $0xd50] sm:$0xff]
    %v2825 = vld [vmem:[#allocation4 + $0xd58] sm:$0xff]
    %v2826 = vld [vmem:[#allocation4 + $0xd60] sm:$0xff]
    %v2827 = vld [vmem:[#allocation4 + $0xd68] sm:$0xff]
    %v2828 = vld [vmem:[#allocation4 + $0xd70] sm:$0xff]
    %v2829 = vld [vmem:[#allocation4 + $0xd78] sm:$0xff]
    %v2830 = vld [vmem:[#allocation4 + $0xd80] sm:$0xff]
    %v2831 = vld [vmem:[#allocation4 + $0xd88] sm:$0xff]
    %v2832 = vld [vmem:[#allocation4 + $0xd90] sm:$0xff]
    %v2833 = vld [vmem:[#allocation4 + $0xd98] sm:$0xff]
    %v2834 = vld [vmem:[#allocation4 + $0xda0] sm:$0xff]
    %v2835 = vld [vmem:[#allocation4 + $0xda8] sm:$0xff]
    %v2836 = vld [vmem:[#allocation4 + $0xdb0] sm:$0xff]
    %v2837 = vld [vmem:[#allocation4 + $0xdb8] sm:$0xff]
    %v2838 = vld [vmem:[#allocation4 + $0xdc0] sm:$0xff]
    %v2839 = vld [vmem:[#allocation4 + $0xdc8] sm:$0xff]
    %v2840 = vld [vmem:[#allocation4 + $0xdd0] sm:$0xff]
    %v2841 = vld [vmem:[#allocation4 + $0xdd8] sm:$0xff]
    %v2842 = vld [vmem:[#allocation4 + $0xde0] sm:$0xff]
    %v2843 = vld [vmem:[#allocation4 + $0xde8] sm:$0xff]
    %v2844 = vld [vmem:[#allocation4 + $0xdf0] sm:$0xff]
    %v2845 = vld [vmem:[#allocation4 + $0xdf8] sm:$0xff]
    %v2846 = vld [vmem:[#allocation4 + $0xe00] sm:$0xff]
    %v2847 = vld [vmem:[#allocation4 + $0xe08] sm:$0xff]
    %v2848 = vld [vmem:[#allocation4 + $0xe10] sm:$0xff]
    %v2849 = vld [vmem:[#allocation4 + $0xe18] sm:$0xff]
    %v2850 = vld [vmem:[#allocation4 + $0xe20] sm:$0xff]
    %v2851 = vld [vmem:[#allocation4 + $0xe28] sm:$0xff]
    %v2852 = vld [vmem:[#allocation4 + $0xe30] sm:$0xff]
    %v2853 = vld [vmem:[#allocation4 + $0xe38] sm:$0xff]
    %v2854 = vld [vmem:[#allocation4 + $0xe40] sm:$0xff]
    %v2855 = vld [vmem:[#allocation4 + $0xe48] sm:$0xff]
    %v2856 = vld [vmem:[#allocation4 + $0xe50] sm:$0xff]
    %v2857 = vld [vmem:[#allocation4 + $0xe58] sm:$0xff]
    %v2858 = vld [vmem:[#allocation4 + $0xe60] sm:$0xff]
    %v2859 = vld [vmem:[#allocation4 + $0xe68] sm:$0xff]
    %v2860 = vld [vmem:[#allocation4 + $0xe70] sm:$0xff]
    %v2861 = vld [vmem:[#allocation4 + $0xe78] sm:$0xff]
    %v2862 = vld [vmem:[#allocation4 + $0xe80] sm:$0xff]
    %v2863 = vld [vmem:[#allocation4 + $0xe88] sm:$0xff]
    %v2864 = vld [vmem:[#allocation4 + $0xe90] sm:$0xff]
    %v2865 = vld [vmem:[#allocation4 + $0xe98] sm:$0xff]
    %v2866 = vld [vmem:[#allocation4 + $0xea0] sm:$0xff]
    %v2867 = vld [vmem:[#allocation4 + $0xea8] sm:$0xff]
    %v2868 = vld [vmem:[#allocation4 + $0xeb0] sm:$0xff]
    %v2869 = vld [vmem:[#allocation4 + $0xeb8] sm:$0xff]
    %v2870 = vld [vmem:[#allocation4 + $0xec0] sm:$0xff]
    %v2871 = vld [vmem:[#allocation4 + $0xec8] sm:$0xff]
    %v2872 = vld [vmem:[#allocation4 + $0xed0] sm:$0xff]
    %v2873 = vld [vmem:[#allocation4 + $0xed8] sm:$0xff]
    %v2874 = vld [vmem:[#allocation4 + $0xee0] sm:$0xff]
    %v2875 = vld [vmem:[#allocation4 + $0xee8] sm:$0xff]
    %v2876 = vld [vmem:[#allocation4 + $0xef0] sm:$0xff]
    %v2877 = vld [vmem:[#allocation4 + $0xef8] sm:$0xff]
    %v2878 = vld [vmem:[#allocation4 + $0xf00] sm:$0xff]
    %v2879 = vld [vmem:[#allocation4 + $0xf08] sm:$0xff]
    %v2880 = vld [vmem:[#allocation4 + $0xf10] sm:$0xff]
    %v2881 = vld [vmem:[#allocation4 + $0xf18] sm:$0xff]
    %v2882 = vld [vmem:[#allocation4 + $0xf20] sm:$0xff]
    %v2883 = vld [vmem:[#allocation4 + $0xf28] sm:$0xff]
    %v2884 = vld [vmem:[#allocation4 + $0xf30] sm:$0xff]
    %v2885 = vld [vmem:[#allocation4 + $0xf38] sm:$0xff]
    %v2886 = vld [vmem:[#allocation4 + $0xf40] sm:$0xff]
    %v2887 = vld [vmem:[#allocation4 + $0xf48] sm:$0xff]
    %v2888 = vld [vmem:[#allocation4 + $0xf50] sm:$0xff]
    %v2889 = vld [vmem:[#allocation4 + $0xf58] sm:$0xff]
    %v2890 = vld [vmem:[#allocation4 + $0xf60] sm:$0xff]
    %v2891 = vld [vmem:[#allocation4 + $0xf68] sm:$0xff]
    %v2892 = vld [vmem:[#allocation4 + $0xf70] sm:$0xff]
    %v2893 = vld [vmem:[#allocation4 + $0xf78] sm:$0xff]
    %v2894 = vld [vmem:[#allocation4 + $0xf80] sm:$0xff]
    %v2895 = vld [vmem:[#allocation4 + $0xf88] sm:$0xff]
    %v2896 = vld [vmem:[#allocation4 + $0xf90] sm:$0xff]
    %v2897 = vld [vmem:[#allocation4 + $0xf98] sm:$0xff]
    %v2898 = vld [vmem:[#allocation4 + $0xfa0] sm:$0xff]
    %v2899 = vld [vmem:[#allocation4 + $0xfa8] sm:$0xff]
    %v2900 = vld [vmem:[#allocation4 + $0xfb0] sm:$0xff]
    %v2901 = vld [vmem:[#allocation4 + $0xfb8] sm:$0xff]
    %v2902 = vld [vmem:[#allocation4 + $0xfc0] sm:$0xff]
    %v2903 = vld [vmem:[#allocation4 + $0xfc8] sm:$0xff]
    %v2904 = vld [vmem:[#allocation4 + $0xfd0] sm:$0xff]
    %v2905 = vld [vmem:[#allocation4 + $0xfd8] sm:$0xff]
    %v2906 = vld [vmem:[#allocation4 + $0xfe0] sm:$0xff]
    %v2907 = vld [vmem:[#allocation4 + $0xfe8] sm:$0xff]
    %v2908 = vld [vmem:[#allocation4 + $0xff0] sm:$0xff]
    %v2909 = vld [vmem:[#allocation4 + $0xff8] sm:$0xff]
    %v2910 = vld [vmem:[#allocation13 + $0xc] sm:$0xff]
    %v2911 = vpack.c.bf16 %v2386, %v2386
    %v2912 = vpack.c.bf16 %v2387, %v2387
    %v2913 = vpack.c.bf16 %v2388, %v2388
    %v2914 = vpack.c.bf16 %v2389, %v2389
    %v2915 = vpack.c.bf16 %v2390, %v2390
    %v2916 = vpack.c.bf16 %v2391, %v2391
    %v2917 = vpack.c.bf16 %v2392, %v2392
    %v2918 = vpack.c.bf16 %v2393, %v2393
    %v2920 = vperm.slane %v2910, 0
    %v2921 = vperm.slane %v2910, 1
    %v2922 = vperm.slane %v2910, 2
    %v2923 = vperm.slane %v2910, 3
    %v2924 = vperm.slane %v2910, 4
    %v2925 = vperm.slane %v2910, 5
    %v2926 = vperm.slane %v2910, 6
    %v2927 = vperm.slane %v2910, 7
    %v3448 = vunpack.c.l.b16 %v2398
    %v3449 = vunpack.c.h.b16 %v2398
    %v3450 = vunpack.c.l.b16 %v2399
    %v3451 = vunpack.c.h.b16 %v2399
    %v3452 = vunpack.c.l.b16 %v2400
    %v3453 = vunpack.c.h.b16 %v2400
    %v3454 = vunpack.c.l.b16 %v2401
    %v3455 = vunpack.c.h.b16 %v2401
    %v3456 = vunpack.c.l.b16 %v2402
    %v3457 = vunpack.c.h.b16 %v2402
    %v3458 = vunpack.c.l.b16 %v2403
    %v3459 = vunpack.c.h.b16 %v2403
    %v3460 = vunpack.c.l.b16 %v2404
    %v3461 = vunpack.c.h.b16 %v2404
    %v3462 = vunpack.c.l.b16 %v2405
    %v3463 = vunpack.c.h.b16 %v2405
    %v3464 = vunpack.c.l.b16 %v2406
    %v3465 = vunpack.c.h.b16 %v2406
    %v3466 = vunpack.c.l.b16 %v2407
    %v3467 = vunpack.c.h.b16 %v2407
    %v3468 = vunpack.c.l.b16 %v2408
    %v3469 = vunpack.c.h.b16 %v2408
    %v3470 = vunpack.c.l.b16 %v2409
    %v3471 = vunpack.c.h.b16 %v2409
    %v3472 = vunpack.c.l.b16 %v2410
    %v3473 = vunpack.c.h.b16 %v2410
    %v3474 = vunpack.c.l.b16 %v2411
    %v3475 = vunpack.c.h.b16 %v2411
    %v3476 = vunpack.c.l.b16 %v2412
    %v3477 = vunpack.c.h.b16 %v2412
    %v3478 = vunpack.c.l.b16 %v2413
    %v3479 = vunpack.c.h.b16 %v2413
    %v3480 = vunpack.c.l.b16 %v2414
    %v3481 = vunpack.c.h.b16 %v2414
    %v3482 = vunpack.c.l.b16 %v2415
    %v3483 = vunpack.c.h.b16 %v2415
    %v3484 = vunpack.c.l.b16 %v2416
    %v3485 = vunpack.c.h.b16 %v2416
    %v3486 = vunpack.c.l.b16 %v2417
    %v3487 = vunpack.c.h.b16 %v2417
    %v3488 = vunpack.c.l.b16 %v2418
    %v3489 = vunpack.c.h.b16 %v2418
    %v3490 = vunpack.c.l.b16 %v2419
    %v3491 = vunpack.c.h.b16 %v2419
    %v3492 = vunpack.c.l.b16 %v2420
    %v3493 = vunpack.c.h.b16 %v2420
    %v3494 = vunpack.c.l.b16 %v2421
    %v3495 = vunpack.c.h.b16 %v2421
    %v3496 = vunpack.c.l.b16 %v2422
    %v3497 = vunpack.c.h.b16 %v2422
    %v3498 = vunpack.c.l.b16 %v2423
    %v3499 = vunpack.c.h.b16 %v2423
    %v3500 = vunpack.c.l.b16 %v2424
    %v3501 = vunpack.c.h.b16 %v2424
    %v3502 = vunpack.c.l.b16 %v2425
    %v3503 = vunpack.c.h.b16 %v2425
    %v3504 = vunpack.c.l.b16 %v2426
    %v3505 = vunpack.c.h.b16 %v2426
    %v3506 = vunpack.c.l.b16 %v2427
    %v3507 = vunpack.c.h.b16 %v2427
    %v3508 = vunpack.c.l.b16 %v2428
    %v3509 = vunpack.c.h.b16 %v2428
    %v3510 = vunpack.c.l.b16 %v2429
    %v3511 = vunpack.c.h.b16 %v2429
    %v3512 = vunpack.c.l.b16 %v2430
    %v3513 = vunpack.c.h.b16 %v2430
    %v3514 = vunpack.c.l.b16 %v2431
    %v3515 = vunpack.c.h.b16 %v2431
    %v3516 = vunpack.c.l.b16 %v2432
    %v3517 = vunpack.c.h.b16 %v2432
    %v3518 = vunpack.c.l.b16 %v2433
    %v3519 = vunpack.c.h.b16 %v2433
    %v3520 = vunpack.c.l.b16 %v2434
    %v3521 = vunpack.c.h.b16 %v2434
    %v3522 = vunpack.c.l.b16 %v2435
    %v3523 = vunpack.c.h.b16 %v2435
    %v3524 = vunpack.c.l.b16 %v2436
    %v3525 = vunpack.c.h.b16 %v2436
    %v3526 = vunpack.c.l.b16 %v2437
    %v3527 = vunpack.c.h.b16 %v2437
    %v3528 = vunpack.c.l.b16 %v2438
    %v3529 = vunpack.c.h.b16 %v2438
    %v3530 = vunpack.c.l.b16 %v2439
    %v3531 = vunpack.c.h.b16 %v2439
    %v3532 = vunpack.c.l.b16 %v2440
    %v3533 = vunpack.c.h.b16 %v2440
    %v3534 = vunpack.c.l.b16 %v2441
    %v3535 = vunpack.c.h.b16 %v2441
    %v3536 = vunpack.c.l.b16 %v2442
    %v3537 = vunpack.c.h.b16 %v2442
    %v3538 = vunpack.c.l.b16 %v2443
    %v3539 = vunpack.c.h.b16 %v2443
    %v3540 = vunpack.c.l.b16 %v2444
    %v3541 = vunpack.c.h.b16 %v2444
    %v3542 = vunpack.c.l.b16 %v2445
    %v3543 = vunpack.c.h.b16 %v2445
    %v3544 = vunpack.c.l.b16 %v2446
    %v3545 = vunpack.c.h.b16 %v2446
    %v3546 = vunpack.c.l.b16 %v2447
    %v3547 = vunpack.c.h.b16 %v2447
    %v3548 = vunpack.c.l.b16 %v2448
    %v3549 = vunpack.c.h.b16 %v2448
    %v3550 = vunpack.c.l.b16 %v2449
    %v3551 = vunpack.c.h.b16 %v2449
    %v3552 = vunpack.c.l.b16 %v2450
    %v3553 = vunpack.c.h.b16 %v2450
    %v3554 = vunpack.c.l.b16 %v2451
    %v3555 = vunpack.c.h.b16 %v2451
    %v3556 = vunpack.c.l.b16 %v2452
    %v3557 = vunpack.c.h.b16 %v2452
    %v3558 = vunpack.c.l.b16 %v2453
    %v3559 = vunpack.c.h.b16 %v2453
    %v3560 = vunpack.c.l.b16 %v2454
    %v3561 = vunpack.c.h.b16 %v2454
    %v3562 = vunpack.c.l.b16 %v2455
    %v3563 = vunpack.c.h.b16 %v2455
    %v3564 = vunpack.c.l.b16 %v2456
    %v3565 = vunpack.c.h.b16 %v2456
    %v3566 = vunpack.c.l.b16 %v2457
    %v3567 = vunpack.c.h.b16 %v2457
    %v3568 = vunpack.c.l.b16 %v2458
    %v3569 = vunpack.c.h.b16 %v2458
    %v3570 = vunpack.c.l.b16 %v2459
    %v3571 = vunpack.c.h.b16 %v2459
    %v3572 = vunpack.c.l.b16 %v2460
    %v3573 = vunpack.c.h.b16 %v2460
    %v3574 = vunpack.c.l.b16 %v2461
    %v3575 = vunpack.c.h.b16 %v2461
    %v3576 = vunpack.c.l.b16 %v2462
    %v3577 = vunpack.c.h.b16 %v2462
    %v3578 = vunpack.c.l.b16 %v2463
    %v3579 = vunpack.c.h.b16 %v2463
    %v3580 = vunpack.c.l.b16 %v2464
    %v3581 = vunpack.c.h.b16 %v2464
    %v3582 = vunpack.c.l.b16 %v2465
    %v3583 = vunpack.c.h.b16 %v2465
    %v3584 = vunpack.c.l.b16 %v2466
    %v3585 = vunpack.c.h.b16 %v2466
    %v3586 = vunpack.c.l.b16 %v2467
    %v3587 = vunpack.c.h.b16 %v2467
    %v3588 = vunpack.c.l.b16 %v2468
    %v3589 = vunpack.c.h.b16 %v2468
    %v3590 = vunpack.c.l.b16 %v2469
    %v3591 = vunpack.c.h.b16 %v2469
    %v3592 = vunpack.c.l.b16 %v2470
    %v3593 = vunpack.c.h.b16 %v2470
    %v3594 = vunpack.c.l.b16 %v2471
    %v3595 = vunpack.c.h.b16 %v2471
    %v3596 = vunpack.c.l.b16 %v2472
    %v3597 = vunpack.c.h.b16 %v2472
    %v3598 = vunpack.c.l.b16 %v2473
    %v3599 = vunpack.c.h.b16 %v2473
    %v3600 = vunpack.c.l.b16 %v2474
    %v3601 = vunpack.c.h.b16 %v2474
    %v3602 = vunpack.c.l.b16 %v2475
    %v3603 = vunpack.c.h.b16 %v2475
    %v3604 = vunpack.c.l.b16 %v2476
    %v3605 = vunpack.c.h.b16 %v2476
    %v3606 = vunpack.c.l.b16 %v2477
    %v3607 = vunpack.c.h.b16 %v2477
    %v3608 = vunpack.c.l.b16 %v2478
    %v3609 = vunpack.c.h.b16 %v2478
    %v3610 = vunpack.c.l.b16 %v2479
    %v3611 = vunpack.c.h.b16 %v2479
    %v3612 = vunpack.c.l.b16 %v2480
    %v3613 = vunpack.c.h.b16 %v2480
    %v3614 = vunpack.c.l.b16 %v2481
    %v3615 = vunpack.c.h.b16 %v2481
    %v3616 = vunpack.c.l.b16 %v2482
    %v3617 = vunpack.c.h.b16 %v2482
    %v3618 = vunpack.c.l.b16 %v2483
    %v3619 = vunpack.c.h.b16 %v2483
    %v3620 = vunpack.c.l.b16 %v2484
    %v3621 = vunpack.c.h.b16 %v2484
    %v3622 = vunpack.c.l.b16 %v2485
    %v3623 = vunpack.c.h.b16 %v2485
    %v3624 = vunpack.c.l.b16 %v2486
    %v3625 = vunpack.c.h.b16 %v2486
    %v3626 = vunpack.c.l.b16 %v2487
    %v3627 = vunpack.c.h.b16 %v2487
    %v3628 = vunpack.c.l.b16 %v2488
    %v3629 = vunpack.c.h.b16 %v2488
    %v3630 = vunpack.c.l.b16 %v2489
    %v3631 = vunpack.c.h.b16 %v2489
    %v3632 = vunpack.c.l.b16 %v2490
    %v3633 = vunpack.c.h.b16 %v2490
    %v3634 = vunpack.c.l.b16 %v2491
    %v3635 = vunpack.c.h.b16 %v2491
    %v3636 = vunpack.c.l.b16 %v2492
    %v3637 = vunpack.c.h.b16 %v2492
    %v3638 = vunpack.c.l.b16 %v2493
    %v3639 = vunpack.c.h.b16 %v2493
    %v3640 = vunpack.c.l.b16 %v2494
    %v3641 = vunpack.c.h.b16 %v2494
    %v3642 = vunpack.c.l.b16 %v2495
    %v3643 = vunpack.c.h.b16 %v2495
    %v3644 = vunpack.c.l.b16 %v2496
    %v3645 = vunpack.c.h.b16 %v2496
    %v3646 = vunpack.c.l.b16 %v2497
    %v3647 = vunpack.c.h.b16 %v2497
    %v3648 = vunpack.c.l.b16 %v2498
    %v3649 = vunpack.c.h.b16 %v2498
    %v3650 = vunpack.c.l.b16 %v2499
    %v3651 = vunpack.c.h.b16 %v2499
    %v3652 = vunpack.c.l.b16 %v2500
    %v3653 = vunpack.c.h.b16 %v2500
    %v3654 = vunpack.c.l.b16 %v2501
    %v3655 = vunpack.c.h.b16 %v2501
    %v3656 = vunpack.c.l.b16 %v2502
    %v3657 = vunpack.c.h.b16 %v2502
    %v3658 = vunpack.c.l.b16 %v2503
    %v3659 = vunpack.c.h.b16 %v2503
    %v3660 = vunpack.c.l.b16 %v2504
    %v3661 = vunpack.c.h.b16 %v2504
    %v3662 = vunpack.c.l.b16 %v2505
    %v3663 = vunpack.c.h.b16 %v2505
    %v3664 = vunpack.c.l.b16 %v2506
    %v3665 = vunpack.c.h.b16 %v2506
    %v3666 = vunpack.c.l.b16 %v2507
    %v3667 = vunpack.c.h.b16 %v2507
    %v3668 = vunpack.c.l.b16 %v2508
    %v3669 = vunpack.c.h.b16 %v2508
    %v3670 = vunpack.c.l.b16 %v2509
    %v3671 = vunpack.c.h.b16 %v2509
    %v3672 = vunpack.c.l.b16 %v2510
    %v3673 = vunpack.c.h.b16 %v2510
    %v3674 = vunpack.c.l.b16 %v2511
    %v3675 = vunpack.c.h.b16 %v2511
    %v3676 = vunpack.c.l.b16 %v2512
    %v3677 = vunpack.c.h.b16 %v2512
    %v3678 = vunpack.c.l.b16 %v2513
    %v3679 = vunpack.c.h.b16 %v2513
    %v3680 = vunpack.c.l.b16 %v2514
    %v3681 = vunpack.c.h.b16 %v2514
    %v3682 = vunpack.c.l.b16 %v2515
    %v3683 = vunpack.c.h.b16 %v2515
    %v3684 = vunpack.c.l.b16 %v2516
    %v3685 = vunpack.c.h.b16 %v2516
    %v3686 = vunpack.c.l.b16 %v2517
    %v3687 = vunpack.c.h.b16 %v2517
    %v3688 = vunpack.c.l.b16 %v2518
    %v3689 = vunpack.c.h.b16 %v2518
    %v3690 = vunpack.c.l.b16 %v2519
    %v3691 = vunpack.c.h.b16 %v2519
    %v3692 = vunpack.c.l.b16 %v2520
    %v3693 = vunpack.c.h.b16 %v2520
    %v3694 = vunpack.c.l.b16 %v2521
    %v3695 = vunpack.c.h.b16 %v2521
    %v3696 = vunpack.c.l.b16 %v2522
    %v3697 = vunpack.c.h.b16 %v2522
    %v3698 = vunpack.c.l.b16 %v2523
    %v3699 = vunpack.c.h.b16 %v2523
    %v3700 = vunpack.c.l.b16 %v2524
    %v3701 = vunpack.c.h.b16 %v2524
    %v3702 = vunpack.c.l.b16 %v2525
    %v3703 = vunpack.c.h.b16 %v2525
    %v3704 = vunpack.c.l.b16 %v2526
    %v3705 = vunpack.c.h.b16 %v2526
    %v3706 = vunpack.c.l.b16 %v2527
    %v3707 = vunpack.c.h.b16 %v2527
    %v3708 = vunpack.c.l.b16 %v2528
    %v3709 = vunpack.c.h.b16 %v2528
    %v3710 = vunpack.c.l.b16 %v2529
    %v3711 = vunpack.c.h.b16 %v2529
    %v3712 = vunpack.c.l.b16 %v2530
    %v3713 = vunpack.c.h.b16 %v2530
    %v3714 = vunpack.c.l.b16 %v2531
    %v3715 = vunpack.c.h.b16 %v2531
    %v3716 = vunpack.c.l.b16 %v2532
    %v3717 = vunpack.c.h.b16 %v2532
    %v3718 = vunpack.c.l.b16 %v2533
    %v3719 = vunpack.c.h.b16 %v2533
    %v3720 = vunpack.c.l.b16 %v2534
    %v3721 = vunpack.c.h.b16 %v2534
    %v3722 = vunpack.c.l.b16 %v2535
    %v3723 = vunpack.c.h.b16 %v2535
    %v3724 = vunpack.c.l.b16 %v2536
    %v3725 = vunpack.c.h.b16 %v2536
    %v3726 = vunpack.c.l.b16 %v2537
    %v3727 = vunpack.c.h.b16 %v2537
    %v3728 = vunpack.c.l.b16 %v2538
    %v3729 = vunpack.c.h.b16 %v2538
    %v3730 = vunpack.c.l.b16 %v2539
    %v3731 = vunpack.c.h.b16 %v2539
    %v3732 = vunpack.c.l.b16 %v2540
    %v3733 = vunpack.c.h.b16 %v2540
    %v3734 = vunpack.c.l.b16 %v2541
    %v3735 = vunpack.c.h.b16 %v2541
    %v3736 = vunpack.c.l.b16 %v2542
    %v3737 = vunpack.c.h.b16 %v2542
    %v3738 = vunpack.c.l.b16 %v2543
    %v3739 = vunpack.c.h.b16 %v2543
    %v3740 = vunpack.c.l.b16 %v2544
    %v3741 = vunpack.c.h.b16 %v2544
    %v3742 = vunpack.c.l.b16 %v2545
    %v3743 = vunpack.c.h.b16 %v2545
    %v3744 = vunpack.c.l.b16 %v2546
    %v3745 = vunpack.c.h.b16 %v2546
    %v3746 = vunpack.c.l.b16 %v2547
    %v3747 = vunpack.c.h.b16 %v2547
    %v3748 = vunpack.c.l.b16 %v2548
    %v3749 = vunpack.c.h.b16 %v2548
    %v3750 = vunpack.c.l.b16 %v2549
    %v3751 = vunpack.c.h.b16 %v2549
    %v3752 = vunpack.c.l.b16 %v2550
    %v3753 = vunpack.c.h.b16 %v2550
    %v3754 = vunpack.c.l.b16 %v2551
    %v3755 = vunpack.c.h.b16 %v2551
    %v3756 = vunpack.c.l.b16 %v2552
    %v3757 = vunpack.c.h.b16 %v2552
    %v3758 = vunpack.c.l.b16 %v2553
    %v3759 = vunpack.c.h.b16 %v2553
    %v3760 = vunpack.c.l.b16 %v2554
    %v3761 = vunpack.c.h.b16 %v2554
    %v3762 = vunpack.c.l.b16 %v2555
    %v3763 = vunpack.c.h.b16 %v2555
    %v3764 = vunpack.c.l.b16 %v2556
    %v3765 = vunpack.c.h.b16 %v2556
    %v3766 = vunpack.c.l.b16 %v2557
    %v3767 = vunpack.c.h.b16 %v2557
    %v3768 = vunpack.c.l.b16 %v2558
    %v3769 = vunpack.c.h.b16 %v2558
    %v3770 = vunpack.c.l.b16 %v2559
    %v3771 = vunpack.c.h.b16 %v2559
    %v3772 = vunpack.c.l.b16 %v2560
    %v3773 = vunpack.c.h.b16 %v2560
    %v3774 = vunpack.c.l.b16 %v2561
    %v3775 = vunpack.c.h.b16 %v2561
    %v3776 = vunpack.c.l.b16 %v2562
    %v3777 = vunpack.c.h.b16 %v2562
    %v3778 = vunpack.c.l.b16 %v2563
    %v3779 = vunpack.c.h.b16 %v2563
    %v3780 = vunpack.c.l.b16 %v2564
    %v3781 = vunpack.c.h.b16 %v2564
    %v3782 = vunpack.c.l.b16 %v2565
    %v3783 = vunpack.c.h.b16 %v2565
    %v3784 = vunpack.c.l.b16 %v2566
    %v3785 = vunpack.c.h.b16 %v2566
    %v3786 = vunpack.c.l.b16 %v2567
    %v3787 = vunpack.c.h.b16 %v2567
    %v3788 = vunpack.c.l.b16 %v2568
    %v3789 = vunpack.c.h.b16 %v2568
    %v3790 = vunpack.c.l.b16 %v2569
    %v3791 = vunpack.c.h.b16 %v2569
    %v3792 = vunpack.c.l.b16 %v2570
    %v3793 = vunpack.c.h.b16 %v2570
    %v3794 = vunpack.c.l.b16 %v2571
    %v3795 = vunpack.c.h.b16 %v2571
    %v3796 = vunpack.c.l.b16 %v2572
    %v3797 = vunpack.c.h.b16 %v2572
    %v3798 = vunpack.c.l.b16 %v2573
    %v3799 = vunpack.c.h.b16 %v2573
    %v3800 = vunpack.c.l.b16 %v2574
    %v3801 = vunpack.c.h.b16 %v2574
    %v3802 = vunpack.c.l.b16 %v2575
    %v3803 = vunpack.c.h.b16 %v2575
    %v3804 = vunpack.c.l.b16 %v2576
    %v3805 = vunpack.c.h.b16 %v2576
    %v3806 = vunpack.c.l.b16 %v2577
    %v3807 = vunpack.c.h.b16 %v2577
    %v3808 = vunpack.c.l.b16 %v2578
    %v3809 = vunpack.c.h.b16 %v2578
    %v3810 = vunpack.c.l.b16 %v2579
    %v3811 = vunpack.c.h.b16 %v2579
    %v3812 = vunpack.c.l.b16 %v2580
    %v3813 = vunpack.c.h.b16 %v2580
    %v3814 = vunpack.c.l.b16 %v2581
    %v3815 = vunpack.c.h.b16 %v2581
    %v3816 = vunpack.c.l.b16 %v2582
    %v3817 = vunpack.c.h.b16 %v2582
    %v3818 = vunpack.c.l.b16 %v2583
    %v3819 = vunpack.c.h.b16 %v2583
    %v3820 = vunpack.c.l.b16 %v2584
    %v3821 = vunpack.c.h.b16 %v2584
    %v3822 = vunpack.c.l.b16 %v2585
    %v3823 = vunpack.c.h.b16 %v2585
    %v3824 = vunpack.c.l.b16 %v2586
    %v3825 = vunpack.c.h.b16 %v2586
    %v3826 = vunpack.c.l.b16 %v2587
    %v3827 = vunpack.c.h.b16 %v2587
    %v3828 = vunpack.c.l.b16 %v2588
    %v3829 = vunpack.c.h.b16 %v2588
    %v3830 = vunpack.c.l.b16 %v2589
    %v3831 = vunpack.c.h.b16 %v2589
    %v3832 = vunpack.c.l.b16 %v2590
    %v3833 = vunpack.c.h.b16 %v2590
    %v3834 = vunpack.c.l.b16 %v2591
    %v3835 = vunpack.c.h.b16 %v2591
    %v3836 = vunpack.c.l.b16 %v2592
    %v3837 = vunpack.c.h.b16 %v2592
    %v3838 = vunpack.c.l.b16 %v2593
    %v3839 = vunpack.c.h.b16 %v2593
    %v3840 = vunpack.c.l.b16 %v2594
    %v3841 = vunpack.c.h.b16 %v2594
    %v3842 = vunpack.c.l.b16 %v2595
    %v3843 = vunpack.c.h.b16 %v2595
    %v3844 = vunpack.c.l.b16 %v2596
    %v3845 = vunpack.c.h.b16 %v2596
    %v3846 = vunpack.c.l.b16 %v2597
    %v3847 = vunpack.c.h.b16 %v2597
    %v3848 = vunpack.c.l.b16 %v2598
    %v3849 = vunpack.c.h.b16 %v2598
    %v3850 = vunpack.c.l.b16 %v2599
    %v3851 = vunpack.c.h.b16 %v2599
    %v3852 = vunpack.c.l.b16 %v2600
    %v3853 = vunpack.c.h.b16 %v2600
    %v3854 = vunpack.c.l.b16 %v2601
    %v3855 = vunpack.c.h.b16 %v2601
    %v3856 = vunpack.c.l.b16 %v2602
    %v3857 = vunpack.c.h.b16 %v2602
    %v3858 = vunpack.c.l.b16 %v2603
    %v3859 = vunpack.c.h.b16 %v2603
    %v3860 = vunpack.c.l.b16 %v2604
    %v3861 = vunpack.c.h.b16 %v2604
    %v3862 = vunpack.c.l.b16 %v2605
    %v3863 = vunpack.c.h.b16 %v2605
    %v3864 = vunpack.c.l.b16 %v2606
    %v3865 = vunpack.c.h.b16 %v2606
    %v3866 = vunpack.c.l.b16 %v2607
    %v3867 = vunpack.c.h.b16 %v2607
    %v3868 = vunpack.c.l.b16 %v2608
    %v3869 = vunpack.c.h.b16 %v2608
    %v3870 = vunpack.c.l.b16 %v2609
    %v3871 = vunpack.c.h.b16 %v2609
    %v3872 = vunpack.c.l.b16 %v2610
    %v3873 = vunpack.c.h.b16 %v2610
    %v3874 = vunpack.c.l.b16 %v2611
    %v3875 = vunpack.c.h.b16 %v2611
    %v3876 = vunpack.c.l.b16 %v2612
    %v3877 = vunpack.c.h.b16 %v2612
    %v3878 = vunpack.c.l.b16 %v2613
    %v3879 = vunpack.c.h.b16 %v2613
    %v3880 = vunpack.c.l.b16 %v2614
    %v3881 = vunpack.c.h.b16 %v2614
    %v3882 = vunpack.c.l.b16 %v2615
    %v3883 = vunpack.c.h.b16 %v2615
    %v3884 = vunpack.c.l.b16 %v2616
    %v3885 = vunpack.c.h.b16 %v2616
    %v3886 = vunpack.c.l.b16 %v2617
    %v3887 = vunpack.c.h.b16 %v2617
    %v3888 = vunpack.c.l.b16 %v2618
    %v3889 = vunpack.c.h.b16 %v2618
    %v3890 = vunpack.c.l.b16 %v2619
    %v3891 = vunpack.c.h.b16 %v2619
    %v3892 = vunpack.c.l.b16 %v2620
    %v3893 = vunpack.c.h.b16 %v2620
    %v3894 = vunpack.c.l.b16 %v2621
    %v3895 = vunpack.c.h.b16 %v2621
    %v3896 = vunpack.c.l.b16 %v2622
    %v3897 = vunpack.c.h.b16 %v2622
    %v3898 = vunpack.c.l.b16 %v2623
    %v3899 = vunpack.c.h.b16 %v2623
    %v3900 = vunpack.c.l.b16 %v2624
    %v3901 = vunpack.c.h.b16 %v2624
    %v3902 = vunpack.c.l.b16 %v2625
    %v3903 = vunpack.c.h.b16 %v2625
    %v3904 = vunpack.c.l.b16 %v2626
    %v3905 = vunpack.c.h.b16 %v2626
    %v3906 = vunpack.c.l.b16 %v2627
    %v3907 = vunpack.c.h.b16 %v2627
    %v3908 = vunpack.c.l.b16 %v2628
    %v3909 = vunpack.c.h.b16 %v2628
    %v3910 = vunpack.c.l.b16 %v2629
    %v3911 = vunpack.c.h.b16 %v2629
    %v3912 = vunpack.c.l.b16 %v2630
    %v3913 = vunpack.c.h.b16 %v2630
    %v3914 = vunpack.c.l.b16 %v2631
    %v3915 = vunpack.c.h.b16 %v2631
    %v3916 = vunpack.c.l.b16 %v2632
    %v3917 = vunpack.c.h.b16 %v2632
    %v3918 = vunpack.c.l.b16 %v2633
    %v3919 = vunpack.c.h.b16 %v2633
    %v3920 = vunpack.c.l.b16 %v2634
    %v3921 = vunpack.c.h.b16 %v2634
    %v3922 = vunpack.c.l.b16 %v2635
    %v3923 = vunpack.c.h.b16 %v2635
    %v3924 = vunpack.c.l.b16 %v2636
    %v3925 = vunpack.c.h.b16 %v2636
    %v3926 = vunpack.c.l.b16 %v2637
    %v3927 = vunpack.c.h.b16 %v2637
    %v3928 = vunpack.c.l.b16 %v2638
    %v3929 = vunpack.c.h.b16 %v2638
    %v3930 = vunpack.c.l.b16 %v2639
    %v3931 = vunpack.c.h.b16 %v2639
    %v3932 = vunpack.c.l.b16 %v2640
    %v3933 = vunpack.c.h.b16 %v2640
    %v3934 = vunpack.c.l.b16 %v2641
    %v3935 = vunpack.c.h.b16 %v2641
    %v3936 = vunpack.c.l.b16 %v2642
    %v3937 = vunpack.c.h.b16 %v2642
    %v3938 = vunpack.c.l.b16 %v2643
    %v3939 = vunpack.c.h.b16 %v2643
    %v3940 = vunpack.c.l.b16 %v2644
    %v3941 = vunpack.c.h.b16 %v2644
    %v3942 = vunpack.c.l.b16 %v2645
    %v3943 = vunpack.c.h.b16 %v2645
    %v3944 = vunpack.c.l.b16 %v2646
    %v3945 = vunpack.c.h.b16 %v2646
    %v3946 = vunpack.c.l.b16 %v2647
    %v3947 = vunpack.c.h.b16 %v2647
    %v3948 = vunpack.c.l.b16 %v2648
    %v3949 = vunpack.c.h.b16 %v2648
    %v3950 = vunpack.c.l.b16 %v2649
    %v3951 = vunpack.c.h.b16 %v2649
    %v3952 = vunpack.c.l.b16 %v2650
    %v3953 = vunpack.c.h.b16 %v2650
    %v3954 = vunpack.c.l.b16 %v2651
    %v3955 = vunpack.c.h.b16 %v2651
    %v3956 = vunpack.c.l.b16 %v2652
    %v3957 = vunpack.c.h.b16 %v2652
    %v3958 = vunpack.c.l.b16 %v2653
    %v3959 = vunpack.c.h.b16 %v2653
    %v3960 = vunpack.c.l.b16 %v2654
    %v3961 = vunpack.c.h.b16 %v2654
    %v3962 = vunpack.c.l.b16 %v2655
    %v3963 = vunpack.c.h.b16 %v2655
    %v3964 = vunpack.c.l.b16 %v2656
    %v3965 = vunpack.c.h.b16 %v2656
    %v3966 = vunpack.c.l.b16 %v2657
    %v3967 = vunpack.c.h.b16 %v2657
    %v3968 = vunpack.c.l.b16 %v2658
    %v3969 = vunpack.c.h.b16 %v2658
    %v3970 = vunpack.c.l.b16 %v2659
    %v3971 = vunpack.c.h.b16 %v2659
    %v3972 = vunpack.c.l.b16 %v2660
    %v3973 = vunpack.c.h.b16 %v2660
    %v3974 = vunpack.c.l.b16 %v2661
    %v3975 = vunpack.c.h.b16 %v2661
    %v3976 = vunpack.c.l.b16 %v2662
    %v3977 = vunpack.c.h.b16 %v2662
    %v3978 = vunpack.c.l.b16 %v2663
    %v3979 = vunpack.c.h.b16 %v2663
    %v3980 = vunpack.c.l.b16 %v2664
    %v3981 = vunpack.c.h.b16 %v2664
    %v3982 = vunpack.c.l.b16 %v2665
    %v3983 = vunpack.c.h.b16 %v2665
    %v3984 = vunpack.c.l.b16 %v2666
    %v3985 = vunpack.c.h.b16 %v2666
    %v3986 = vunpack.c.l.b16 %v2667
    %v3987 = vunpack.c.h.b16 %v2667
    %v3988 = vunpack.c.l.b16 %v2668
    %v3989 = vunpack.c.h.b16 %v2668
    %v3990 = vunpack.c.l.b16 %v2669
    %v3991 = vunpack.c.h.b16 %v2669
    %v3992 = vunpack.c.l.b16 %v2670
    %v3993 = vunpack.c.h.b16 %v2670
    %v3994 = vunpack.c.l.b16 %v2671
    %v3995 = vunpack.c.h.b16 %v2671
    %v3996 = vunpack.c.l.b16 %v2672
    %v3997 = vunpack.c.h.b16 %v2672
    %v3998 = vunpack.c.l.b16 %v2673
    %v3999 = vunpack.c.h.b16 %v2673
    %v4000 = vunpack.c.l.b16 %v2674
    %v4001 = vunpack.c.h.b16 %v2674
    %v4002 = vunpack.c.l.b16 %v2675
    %v4003 = vunpack.c.h.b16 %v2675
    %v4004 = vunpack.c.l.b16 %v2676
    %v4005 = vunpack.c.h.b16 %v2676
    %v4006 = vunpack.c.l.b16 %v2677
    %v4007 = vunpack.c.h.b16 %v2677
    %v4008 = vunpack.c.l.b16 %v2678
    %v4009 = vunpack.c.h.b16 %v2678
    %v4010 = vunpack.c.l.b16 %v2679
    %v4011 = vunpack.c.h.b16 %v2679
    %v4012 = vunpack.c.l.b16 %v2680
    %v4013 = vunpack.c.h.b16 %v2680
    %v4014 = vunpack.c.l.b16 %v2681
    %v4015 = vunpack.c.h.b16 %v2681
    %v4016 = vunpack.c.l.b16 %v2682
    %v4017 = vunpack.c.h.b16 %v2682
    %v4018 = vunpack.c.l.b16 %v2683
    %v4019 = vunpack.c.h.b16 %v2683
    %v4020 = vunpack.c.l.b16 %v2684
    %v4021 = vunpack.c.h.b16 %v2684
    %v4022 = vunpack.c.l.b16 %v2685
    %v4023 = vunpack.c.h.b16 %v2685
    %v4024 = vunpack.c.l.b16 %v2686
    %v4025 = vunpack.c.h.b16 %v2686
    %v4026 = vunpack.c.l.b16 %v2687
    %v4027 = vunpack.c.h.b16 %v2687
    %v4028 = vunpack.c.l.b16 %v2688
    %v4029 = vunpack.c.h.b16 %v2688
    %v4030 = vunpack.c.l.b16 %v2689
    %v4031 = vunpack.c.h.b16 %v2689
    %v4032 = vunpack.c.l.b16 %v2690
    %v4033 = vunpack.c.h.b16 %v2690
    %v4034 = vunpack.c.l.b16 %v2691
    %v4035 = vunpack.c.h.b16 %v2691
    %v4036 = vunpack.c.l.b16 %v2692
    %v4037 = vunpack.c.h.b16 %v2692
    %v4038 = vunpack.c.l.b16 %v2693
    %v4039 = vunpack.c.h.b16 %v2693
    %v4040 = vunpack.c.l.b16 %v2694
    %v4041 = vunpack.c.h.b16 %v2694
    %v4042 = vunpack.c.l.b16 %v2695
    %v4043 = vunpack.c.h.b16 %v2695
    %v4044 = vunpack.c.l.b16 %v2696
    %v4045 = vunpack.c.h.b16 %v2696
    %v4046 = vunpack.c.l.b16 %v2697
    %v4047 = vunpack.c.h.b16 %v2697
    %v4048 = vunpack.c.l.b16 %v2698
    %v4049 = vunpack.c.h.b16 %v2698
    %v4050 = vunpack.c.l.b16 %v2699
    %v4051 = vunpack.c.h.b16 %v2699
    %v4052 = vunpack.c.l.b16 %v2700
    %v4053 = vunpack.c.h.b16 %v2700
    %v4054 = vunpack.c.l.b16 %v2701
    %v4055 = vunpack.c.h.b16 %v2701
    %v4056 = vunpack.c.l.b16 %v2702
    %v4057 = vunpack.c.h.b16 %v2702
    %v4058 = vunpack.c.l.b16 %v2703
    %v4059 = vunpack.c.h.b16 %v2703
    %v4060 = vunpack.c.l.b16 %v2704
    %v4061 = vunpack.c.h.b16 %v2704
    %v4062 = vunpack.c.l.b16 %v2705
    %v4063 = vunpack.c.h.b16 %v2705
    %v4064 = vunpack.c.l.b16 %v2706
    %v4065 = vunpack.c.h.b16 %v2706
    %v4066 = vunpack.c.l.b16 %v2707
    %v4067 = vunpack.c.h.b16 %v2707
    %v4068 = vunpack.c.l.b16 %v2708
    %v4069 = vunpack.c.h.b16 %v2708
    %v4070 = vunpack.c.l.b16 %v2709
    %v4071 = vunpack.c.h.b16 %v2709
    %v4072 = vunpack.c.l.b16 %v2710
    %v4073 = vunpack.c.h.b16 %v2710
    %v4074 = vunpack.c.l.b16 %v2711
    %v4075 = vunpack.c.h.b16 %v2711
    %v4076 = vunpack.c.l.b16 %v2712
    %v4077 = vunpack.c.h.b16 %v2712
    %v4078 = vunpack.c.l.b16 %v2713
    %v4079 = vunpack.c.h.b16 %v2713
    %v4080 = vunpack.c.l.b16 %v2714
    %v4081 = vunpack.c.h.b16 %v2714
    %v4082 = vunpack.c.l.b16 %v2715
    %v4083 = vunpack.c.h.b16 %v2715
    %v4084 = vunpack.c.l.b16 %v2716
    %v4085 = vunpack.c.h.b16 %v2716
    %v4086 = vunpack.c.l.b16 %v2717
    %v4087 = vunpack.c.h.b16 %v2717
    %v4088 = vunpack.c.l.b16 %v2718
    %v4089 = vunpack.c.h.b16 %v2718
    %v4090 = vunpack.c.l.b16 %v2719
    %v4091 = vunpack.c.h.b16 %v2719
    %v4092 = vunpack.c.l.b16 %v2720
    %v4093 = vunpack.c.h.b16 %v2720
    %v4094 = vunpack.c.l.b16 %v2721
    %v4095 = vunpack.c.h.b16 %v2721
    %v4096 = vunpack.c.l.b16 %v2722
    %v4097 = vunpack.c.h.b16 %v2722
    %v4098 = vunpack.c.l.b16 %v2723
    %v4099 = vunpack.c.h.b16 %v2723
    %v4100 = vunpack.c.l.b16 %v2724
    %v4101 = vunpack.c.h.b16 %v2724
    %v4102 = vunpack.c.l.b16 %v2725
    %v4103 = vunpack.c.h.b16 %v2725
    %v4104 = vunpack.c.l.b16 %v2726
    %v4105 = vunpack.c.h.b16 %v2726
    %v4106 = vunpack.c.l.b16 %v2727
    %v4107 = vunpack.c.h.b16 %v2727
    %v4108 = vunpack.c.l.b16 %v2728
    %v4109 = vunpack.c.h.b16 %v2728
    %v4110 = vunpack.c.l.b16 %v2729
    %v4111 = vunpack.c.h.b16 %v2729
    %v4112 = vunpack.c.l.b16 %v2730
    %v4113 = vunpack.c.h.b16 %v2730
    %v4114 = vunpack.c.l.b16 %v2731
    %v4115 = vunpack.c.h.b16 %v2731
    %v4116 = vunpack.c.l.b16 %v2732
    %v4117 = vunpack.c.h.b16 %v2732
    %v4118 = vunpack.c.l.b16 %v2733
    %v4119 = vunpack.c.h.b16 %v2733
    %v4120 = vunpack.c.l.b16 %v2734
    %v4121 = vunpack.c.h.b16 %v2734
    %v4122 = vunpack.c.l.b16 %v2735
    %v4123 = vunpack.c.h.b16 %v2735
    %v4124 = vunpack.c.l.b16 %v2736
    %v4125 = vunpack.c.h.b16 %v2736
    %v4126 = vunpack.c.l.b16 %v2737
    %v4127 = vunpack.c.h.b16 %v2737
    %v4128 = vunpack.c.l.b16 %v2738
    %v4129 = vunpack.c.h.b16 %v2738
    %v4130 = vunpack.c.l.b16 %v2739
    %v4131 = vunpack.c.h.b16 %v2739
    %v4132 = vunpack.c.l.b16 %v2740
    %v4133 = vunpack.c.h.b16 %v2740
    %v4134 = vunpack.c.l.b16 %v2741
    %v4135 = vunpack.c.h.b16 %v2741
    %v4136 = vunpack.c.l.b16 %v2742
    %v4137 = vunpack.c.h.b16 %v2742
    %v4138 = vunpack.c.l.b16 %v2743
    %v4139 = vunpack.c.h.b16 %v2743
    %v4140 = vunpack.c.l.b16 %v2744
    %v4141 = vunpack.c.h.b16 %v2744
    %v4142 = vunpack.c.l.b16 %v2745
    %v4143 = vunpack.c.h.b16 %v2745
    %v4144 = vunpack.c.l.b16 %v2746
    %v4145 = vunpack.c.h.b16 %v2746
    %v4146 = vunpack.c.l.b16 %v2747
    %v4147 = vunpack.c.h.b16 %v2747
    %v4148 = vunpack.c.l.b16 %v2748
    %v4149 = vunpack.c.h.b16 %v2748
    %v4150 = vunpack.c.l.b16 %v2749
    %v4151 = vunpack.c.h.b16 %v2749
    %v4152 = vunpack.c.l.b16 %v2750
    %v4153 = vunpack.c.h.b16 %v2750
    %v4154 = vunpack.c.l.b16 %v2751
    %v4155 = vunpack.c.h.b16 %v2751
    %v4156 = vunpack.c.l.b16 %v2752
    %v4157 = vunpack.c.h.b16 %v2752
    %v4158 = vunpack.c.l.b16 %v2753
    %v4159 = vunpack.c.h.b16 %v2753
    %v4160 = vunpack.c.l.b16 %v2754
    %v4161 = vunpack.c.h.b16 %v2754
    %v4162 = vunpack.c.l.b16 %v2755
    %v4163 = vunpack.c.h.b16 %v2755
    %v4164 = vunpack.c.l.b16 %v2756
    %v4165 = vunpack.c.h.b16 %v2756
    %v4166 = vunpack.c.l.b16 %v2757
    %v4167 = vunpack.c.h.b16 %v2757
    %v4168 = vunpack.c.l.b16 %v2758
    %v4169 = vunpack.c.h.b16 %v2758
    %v4170 = vunpack.c.l.b16 %v2759
    %v4171 = vunpack.c.h.b16 %v2759
    %v4172 = vunpack.c.l.b16 %v2760
    %v4173 = vunpack.c.h.b16 %v2760
    %v4174 = vunpack.c.l.b16 %v2761
    %v4175 = vunpack.c.h.b16 %v2761
    %v4176 = vunpack.c.l.b16 %v2762
    %v4177 = vunpack.c.h.b16 %v2762
    %v4178 = vunpack.c.l.b16 %v2763
    %v4179 = vunpack.c.h.b16 %v2763
    %v4180 = vunpack.c.l.b16 %v2764
    %v4181 = vunpack.c.h.b16 %v2764
    %v4182 = vunpack.c.l.b16 %v2765
    %v4183 = vunpack.c.h.b16 %v2765
    %v4184 = vunpack.c.l.b16 %v2766
    %v4185 = vunpack.c.h.b16 %v2766
    %v4186 = vunpack.c.l.b16 %v2767
    %v4187 = vunpack.c.h.b16 %v2767
    %v4188 = vunpack.c.l.b16 %v2768
    %v4189 = vunpack.c.h.b16 %v2768
    %v4190 = vunpack.c.l.b16 %v2769
    %v4191 = vunpack.c.h.b16 %v2769
    %v4192 = vunpack.c.l.b16 %v2770
    %v4193 = vunpack.c.h.b16 %v2770
    %v4194 = vunpack.c.l.b16 %v2771
    %v4195 = vunpack.c.h.b16 %v2771
    %v4196 = vunpack.c.l.b16 %v2772
    %v4197 = vunpack.c.h.b16 %v2772
    %v4198 = vunpack.c.l.b16 %v2773
    %v4199 = vunpack.c.h.b16 %v2773
    %v4200 = vunpack.c.l.b16 %v2774
    %v4201 = vunpack.c.h.b16 %v2774
    %v4202 = vunpack.c.l.b16 %v2775
    %v4203 = vunpack.c.h.b16 %v2775
    %v4204 = vunpack.c.l.b16 %v2776
    %v4205 = vunpack.c.h.b16 %v2776
    %v4206 = vunpack.c.l.b16 %v2777
    %v4207 = vunpack.c.h.b16 %v2777
    %v4208 = vunpack.c.l.b16 %v2778
    %v4209 = vunpack.c.h.b16 %v2778
    %v4210 = vunpack.c.l.b16 %v2779
    %v4211 = vunpack.c.h.b16 %v2779
    %v4212 = vunpack.c.l.b16 %v2780
    %v4213 = vunpack.c.h.b16 %v2780
    %v4214 = vunpack.c.l.b16 %v2781
    %v4215 = vunpack.c.h.b16 %v2781
    %v4216 = vunpack.c.l.b16 %v2782
    %v4217 = vunpack.c.h.b16 %v2782
    %v4218 = vunpack.c.l.b16 %v2783
    %v4219 = vunpack.c.h.b16 %v2783
    %v4220 = vunpack.c.l.b16 %v2784
    %v4221 = vunpack.c.h.b16 %v2784
    %v4222 = vunpack.c.l.b16 %v2785
    %v4223 = vunpack.c.h.b16 %v2785
    %v4224 = vunpack.c.l.b16 %v2786
    %v4225 = vunpack.c.h.b16 %v2786
    %v4226 = vunpack.c.l.b16 %v2787
    %v4227 = vunpack.c.h.b16 %v2787
    %v4228 = vunpack.c.l.b16 %v2788
    %v4229 = vunpack.c.h.b16 %v2788
    %v4230 = vunpack.c.l.b16 %v2789
    %v4231 = vunpack.c.h.b16 %v2789
    %v4232 = vunpack.c.l.b16 %v2790
    %v4233 = vunpack.c.h.b16 %v2790
    %v4234 = vunpack.c.l.b16 %v2791
    %v4235 = vunpack.c.h.b16 %v2791
    %v4236 = vunpack.c.l.b16 %v2792
    %v4237 = vunpack.c.h.b16 %v2792
    %v4238 = vunpack.c.l.b16 %v2793
    %v4239 = vunpack.c.h.b16 %v2793
    %v4240 = vunpack.c.l.b16 %v2794
    %v4241 = vunpack.c.h.b16 %v2794
    %v4242 = vunpack.c.l.b16 %v2795
    %v4243 = vunpack.c.h.b16 %v2795
    %v4244 = vunpack.c.l.b16 %v2796
    %v4245 = vunpack.c.h.b16 %v2796
    %v4246 = vunpack.c.l.b16 %v2797
    %v4247 = vunpack.c.h.b16 %v2797
    %v4248 = vunpack.c.l.b16 %v2798
    %v4249 = vunpack.c.h.b16 %v2798
    %v4250 = vunpack.c.l.b16 %v2799
    %v4251 = vunpack.c.h.b16 %v2799
    %v4252 = vunpack.c.l.b16 %v2800
    %v4253 = vunpack.c.h.b16 %v2800
    %v4254 = vunpack.c.l.b16 %v2801
    %v4255 = vunpack.c.h.b16 %v2801
    %v4256 = vunpack.c.l.b16 %v2802
    %v4257 = vunpack.c.h.b16 %v2802
    %v4258 = vunpack.c.l.b16 %v2803
    %v4259 = vunpack.c.h.b16 %v2803
    %v4260 = vunpack.c.l.b16 %v2804
    %v4261 = vunpack.c.h.b16 %v2804
    %v4262 = vunpack.c.l.b16 %v2805
    %v4263 = vunpack.c.h.b16 %v2805
    %v4264 = vunpack.c.l.b16 %v2806
    %v4265 = vunpack.c.h.b16 %v2806
    %v4266 = vunpack.c.l.b16 %v2807
    %v4267 = vunpack.c.h.b16 %v2807
    %v4268 = vunpack.c.l.b16 %v2808
    %v4269 = vunpack.c.h.b16 %v2808
    %v4270 = vunpack.c.l.b16 %v2809
    %v4271 = vunpack.c.h.b16 %v2809
    %v4272 = vunpack.c.l.b16 %v2810
    %v4273 = vunpack.c.h.b16 %v2810
    %v4274 = vunpack.c.l.b16 %v2811
    %v4275 = vunpack.c.h.b16 %v2811
    %v4276 = vunpack.c.l.b16 %v2812
    %v4277 = vunpack.c.h.b16 %v2812
    %v4278 = vunpack.c.l.b16 %v2813
    %v4279 = vunpack.c.h.b16 %v2813
    %v4280 = vunpack.c.l.b16 %v2814
    %v4281 = vunpack.c.h.b16 %v2814
    %v4282 = vunpack.c.l.b16 %v2815
    %v4283 = vunpack.c.h.b16 %v2815
    %v4284 = vunpack.c.l.b16 %v2816
    %v4285 = vunpack.c.h.b16 %v2816
    %v4286 = vunpack.c.l.b16 %v2817
    %v4287 = vunpack.c.h.b16 %v2817
    %v4288 = vunpack.c.l.b16 %v2818
    %v4289 = vunpack.c.h.b16 %v2818
    %v4290 = vunpack.c.l.b16 %v2819
    %v4291 = vunpack.c.h.b16 %v2819
    %v4292 = vunpack.c.l.b16 %v2820
    %v4293 = vunpack.c.h.b16 %v2820
    %v4294 = vunpack.c.l.b16 %v2821
    %v4295 = vunpack.c.h.b16 %v2821
    %v4296 = vunpack.c.l.b16 %v2822
    %v4297 = vunpack.c.h.b16 %v2822
    %v4298 = vunpack.c.l.b16 %v2823
    %v4299 = vunpack.c.h.b16 %v2823
    %v4300 = vunpack.c.l.b16 %v2824
    %v4301 = vunpack.c.h.b16 %v2824
    %v4302 = vunpack.c.l.b16 %v2825
    %v4303 = vunpack.c.h.b16 %v2825
    %v4304 = vunpack.c.l.b16 %v2826
    %v4305 = vunpack.c.h.b16 %v2826
    %v4306 = vunpack.c.l.b16 %v2827
    %v4307 = vunpack.c.h.b16 %v2827
    %v4308 = vunpack.c.l.b16 %v2828
    %v4309 = vunpack.c.h.b16 %v2828
    %v4310 = vunpack.c.l.b16 %v2829
    %v4311 = vunpack.c.h.b16 %v2829
    %v4312 = vunpack.c.l.b16 %v2830
    %v4313 = vunpack.c.h.b16 %v2830
    %v4314 = vunpack.c.l.b16 %v2831
    %v4315 = vunpack.c.h.b16 %v2831
    %v4316 = vunpack.c.l.b16 %v2832
    %v4317 = vunpack.c.h.b16 %v2832
    %v4318 = vunpack.c.l.b16 %v2833
    %v4319 = vunpack.c.h.b16 %v2833
    %v4320 = vunpack.c.l.b16 %v2834
    %v4321 = vunpack.c.h.b16 %v2834
    %v4322 = vunpack.c.l.b16 %v2835
    %v4323 = vunpack.c.h.b16 %v2835
    %v4324 = vunpack.c.l.b16 %v2836
    %v4325 = vunpack.c.h.b16 %v2836
    %v4326 = vunpack.c.l.b16 %v2837
    %v4327 = vunpack.c.h.b16 %v2837
    %v4328 = vunpack.c.l.b16 %v2838
    %v4329 = vunpack.c.h.b16 %v2838
    %v4330 = vunpack.c.l.b16 %v2839
    %v4331 = vunpack.c.h.b16 %v2839
    %v4332 = vunpack.c.l.b16 %v2840
    %v4333 = vunpack.c.h.b16 %v2840
    %v4334 = vunpack.c.l.b16 %v2841
    %v4335 = vunpack.c.h.b16 %v2841
    %v4336 = vunpack.c.l.b16 %v2842
    %v4337 = vunpack.c.h.b16 %v2842
    %v4338 = vunpack.c.l.b16 %v2843
    %v4339 = vunpack.c.h.b16 %v2843
    %v4340 = vunpack.c.l.b16 %v2844
    %v4341 = vunpack.c.h.b16 %v2844
    %v4342 = vunpack.c.l.b16 %v2845
    %v4343 = vunpack.c.h.b16 %v2845
    %v4344 = vunpack.c.l.b16 %v2846
    %v4345 = vunpack.c.h.b16 %v2846
    %v4346 = vunpack.c.l.b16 %v2847
    %v4347 = vunpack.c.h.b16 %v2847
    %v4348 = vunpack.c.l.b16 %v2848
    %v4349 = vunpack.c.h.b16 %v2848
    %v4350 = vunpack.c.l.b16 %v2849
    %v4351 = vunpack.c.h.b16 %v2849
    %v4352 = vunpack.c.l.b16 %v2850
    %v4353 = vunpack.c.h.b16 %v2850
    %v4354 = vunpack.c.l.b16 %v2851
    %v4355 = vunpack.c.h.b16 %v2851
    %v4356 = vunpack.c.l.b16 %v2852
    %v4357 = vunpack.c.h.b16 %v2852
    %v4358 = vunpack.c.l.b16 %v2853
    %v4359 = vunpack.c.h.b16 %v2853
    %v4360 = vunpack.c.l.b16 %v2854
    %v4361 = vunpack.c.h.b16 %v2854
    %v4362 = vunpack.c.l.b16 %v2855
    %v4363 = vunpack.c.h.b16 %v2855
    %v4364 = vunpack.c.l.b16 %v2856
    %v4365 = vunpack.c.h.b16 %v2856
    %v4366 = vunpack.c.l.b16 %v2857
    %v4367 = vunpack.c.h.b16 %v2857
    %v4368 = vunpack.c.l.b16 %v2858
    %v4369 = vunpack.c.h.b16 %v2858
    %v4370 = vunpack.c.l.b16 %v2859
    %v4371 = vunpack.c.h.b16 %v2859
    %v4372 = vunpack.c.l.b16 %v2860
    %v4373 = vunpack.c.h.b16 %v2860
    %v4374 = vunpack.c.l.b16 %v2861
    %v4375 = vunpack.c.h.b16 %v2861
    %v4376 = vunpack.c.l.b16 %v2862
    %v4377 = vunpack.c.h.b16 %v2862
    %v4378 = vunpack.c.l.b16 %v2863
    %v4379 = vunpack.c.h.b16 %v2863
    %v4380 = vunpack.c.l.b16 %v2864
    %v4381 = vunpack.c.h.b16 %v2864
    %v4382 = vunpack.c.l.b16 %v2865
    %v4383 = vunpack.c.h.b16 %v2865
    %v4384 = vunpack.c.l.b16 %v2866
    %v4385 = vunpack.c.h.b16 %v2866
    %v4386 = vunpack.c.l.b16 %v2867
    %v4387 = vunpack.c.h.b16 %v2867
    %v4388 = vunpack.c.l.b16 %v2868
    %v4389 = vunpack.c.h.b16 %v2868
    %v4390 = vunpack.c.l.b16 %v2869
    %v4391 = vunpack.c.h.b16 %v2869
    %v4392 = vunpack.c.l.b16 %v2870
    %v4393 = vunpack.c.h.b16 %v2870
    %v4394 = vunpack.c.l.b16 %v2871
    %v4395 = vunpack.c.h.b16 %v2871
    %v4396 = vunpack.c.l.b16 %v2872
    %v4397 = vunpack.c.h.b16 %v2872
    %v4398 = vunpack.c.l.b16 %v2873
    %v4399 = vunpack.c.h.b16 %v2873
    %v4400 = vunpack.c.l.b16 %v2874
    %v4401 = vunpack.c.h.b16 %v2874
    %v4402 = vunpack.c.l.b16 %v2875
    %v4403 = vunpack.c.h.b16 %v2875
    %v4404 = vunpack.c.l.b16 %v2876
    %v4405 = vunpack.c.h.b16 %v2876
    %v4406 = vunpack.c.l.b16 %v2877
    %v4407 = vunpack.c.h.b16 %v2877
    %v4408 = vunpack.c.l.b16 %v2878
    %v4409 = vunpack.c.h.b16 %v2878
    %v4410 = vunpack.c.l.b16 %v2879
    %v4411 = vunpack.c.h.b16 %v2879
    %v4412 = vunpack.c.l.b16 %v2880
    %v4413 = vunpack.c.h.b16 %v2880
    %v4414 = vunpack.c.l.b16 %v2881
    %v4415 = vunpack.c.h.b16 %v2881
    %v4416 = vunpack.c.l.b16 %v2882
    %v4417 = vunpack.c.h.b16 %v2882
    %v4418 = vunpack.c.l.b16 %v2883
    %v4419 = vunpack.c.h.b16 %v2883
    %v4420 = vunpack.c.l.b16 %v2884
    %v4421 = vunpack.c.h.b16 %v2884
    %v4422 = vunpack.c.l.b16 %v2885
    %v4423 = vunpack.c.h.b16 %v2885
    %v4424 = vunpack.c.l.b16 %v2886
    %v4425 = vunpack.c.h.b16 %v2886
    %v4426 = vunpack.c.l.b16 %v2887
    %v4427 = vunpack.c.h.b16 %v2887
    %v4428 = vunpack.c.l.b16 %v2888
    %v4429 = vunpack.c.h.b16 %v2888
    %v4430 = vunpack.c.l.b16 %v2889
    %v4431 = vunpack.c.h.b16 %v2889
    %v4432 = vunpack.c.l.b16 %v2890
    %v4433 = vunpack.c.h.b16 %v2890
    %v4434 = vunpack.c.l.b16 %v2891
    %v4435 = vunpack.c.h.b16 %v2891
    %v4436 = vunpack.c.l.b16 %v2892
    %v4437 = vunpack.c.h.b16 %v2892
    %v4438 = vunpack.c.l.b16 %v2893
    %v4439 = vunpack.c.h.b16 %v2893
    %v4440 = vunpack.c.l.b16 %v2894
    %v4441 = vunpack.c.h.b16 %v2894
    %v4442 = vunpack.c.l.b16 %v2895
    %v4443 = vunpack.c.h.b16 %v2895
    %v4444 = vunpack.c.l.b16 %v2896
    %v4445 = vunpack.c.h.b16 %v2896
    %v4446 = vunpack.c.l.b16 %v2897
    %v4447 = vunpack.c.h.b16 %v2897
    %v4448 = vunpack.c.l.b16 %v2898
    %v4449 = vunpack.c.h.b16 %v2898
    %v4450 = vunpack.c.l.b16 %v2899
    %v4451 = vunpack.c.h.b16 %v2899
    %v4452 = vunpack.c.l.b16 %v2900
    %v4453 = vunpack.c.h.b16 %v2900
    %v4454 = vunpack.c.l.b16 %v2901
    %v4455 = vunpack.c.h.b16 %v2901
    %v4456 = vunpack.c.l.b16 %v2902
    %v4457 = vunpack.c.h.b16 %v2902
    %v4458 = vunpack.c.l.b16 %v2903
    %v4459 = vunpack.c.h.b16 %v2903
    %v4460 = vunpack.c.l.b16 %v2904
    %v4461 = vunpack.c.h.b16 %v2904
    %v4462 = vunpack.c.l.b16 %v2905
    %v4463 = vunpack.c.h.b16 %v2905
    %v4464 = vunpack.c.l.b16 %v2906
    %v4465 = vunpack.c.h.b16 %v2906
    %v4466 = vunpack.c.l.b16 %v2907
    %v4467 = vunpack.c.h.b16 %v2907
    %v4468 = vunpack.c.l.b16 %v2908
    %v4469 = vunpack.c.h.b16 %v2908
    %v4470 = vunpack.c.l.b16 %v2909
    %v4471 = vunpack.c.h.b16 %v2909
    %v4472 = vpack.c.b16 %v3456, %v3448
    %v4473 = vpack.c.b16 %v3457, %v3449
    %v4474 = vpack.c.b16 %v3458, %v3450
    %v4475 = vpack.c.b16 %v3459, %v3451
    %v4476 = vpack.c.b16 %v3460, %v3452
    %v4477 = vpack.c.b16 %v3461, %v3453
    %v4478 = vpack.c.b16 %v3462, %v3454
    %v4479 = vpack.c.b16 %v3463, %v3455
    %v4480 = vpack.c.b16 %v3472, %v3464
    %v4481 = vpack.c.b16 %v3473, %v3465
    %v4482 = vpack.c.b16 %v3474, %v3466
    %v4483 = vpack.c.b16 %v3475, %v3467
    %v4484 = vpack.c.b16 %v3476, %v3468
    %v4485 = vpack.c.b16 %v3477, %v3469
    %v4486 = vpack.c.b16 %v3478, %v3470
    %v4487 = vpack.c.b16 %v3479, %v3471
    %v4488 = vpack.c.b16 %v3488, %v3480
    %v4489 = vpack.c.b16 %v3489, %v3481
    %v4490 = vpack.c.b16 %v3490, %v3482
    %v4491 = vpack.c.b16 %v3491, %v3483
    %v4492 = vpack.c.b16 %v3492, %v3484
    %v4493 = vpack.c.b16 %v3493, %v3485
    %v4494 = vpack.c.b16 %v3494, %v3486
    %v4495 = vpack.c.b16 %v3495, %v3487
    %v4496 = vpack.c.b16 %v3504, %v3496
    %v4497 = vpack.c.b16 %v3505, %v3497
    %v4498 = vpack.c.b16 %v3506, %v3498
    %v4499 = vpack.c.b16 %v3507, %v3499
    %v4500 = vpack.c.b16 %v3508, %v3500
    %v4501 = vpack.c.b16 %v3509, %v3501
    %v4502 = vpack.c.b16 %v3510, %v3502
    %v4503 = vpack.c.b16 %v3511, %v3503
    %v4504 = vpack.c.b16 %v3520, %v3512
    %v4505 = vpack.c.b16 %v3521, %v3513
    %v4506 = vpack.c.b16 %v3522, %v3514
    %v4507 = vpack.c.b16 %v3523, %v3515
    %v4508 = vpack.c.b16 %v3524, %v3516
    %v4509 = vpack.c.b16 %v3525, %v3517
    %v4510 = vpack.c.b16 %v3526, %v3518
    %v4511 = vpack.c.b16 %v3527, %v3519
    %v4512 = vpack.c.b16 %v3536, %v3528
    %v4513 = vpack.c.b16 %v3537, %v3529
    %v4514 = vpack.c.b16 %v3538, %v3530
    %v4515 = vpack.c.b16 %v3539, %v3531
    %v4516 = vpack.c.b16 %v3540, %v3532
    %v4517 = vpack.c.b16 %v3541, %v3533
    %v4518 = vpack.c.b16 %v3542, %v3534
    %v4519 = vpack.c.b16 %v3543, %v3535
    %v4520 = vpack.c.b16 %v3552, %v3544
    %v4521 = vpack.c.b16 %v3553, %v3545
    %v4522 = vpack.c.b16 %v3554, %v3546
    %v4523 = vpack.c.b16 %v3555, %v3547
    %v4524 = vpack.c.b16 %v3556, %v3548
    %v4525 = vpack.c.b16 %v3557, %v3549
    %v4526 = vpack.c.b16 %v3558, %v3550
    %v4527 = vpack.c.b16 %v3559, %v3551
    %v4528 = vpack.c.b16 %v3568, %v3560
    %v4529 = vpack.c.b16 %v3569, %v3561
    %v4530 = vpack.c.b16 %v3570, %v3562
    %v4531 = vpack.c.b16 %v3571, %v3563
    %v4532 = vpack.c.b16 %v3572, %v3564
    %v4533 = vpack.c.b16 %v3573, %v3565
    %v4534 = vpack.c.b16 %v3574, %v3566
    %v4535 = vpack.c.b16 %v3575, %v3567
    %v4536 = vpack.c.b16 %v3584, %v3576
    %v4537 = vpack.c.b16 %v3585, %v3577
    %v4538 = vpack.c.b16 %v3586, %v3578
    %v4539 = vpack.c.b16 %v3587, %v3579
    %v4540 = vpack.c.b16 %v3588, %v3580
    %v4541 = vpack.c.b16 %v3589, %v3581
    %v4542 = vpack.c.b16 %v3590, %v3582
    %v4543 = vpack.c.b16 %v3591, %v3583
    %v4544 = vpack.c.b16 %v3600, %v3592
    %v4545 = vpack.c.b16 %v3601, %v3593
    %v4546 = vpack.c.b16 %v3602, %v3594
    %v4547 = vpack.c.b16 %v3603, %v3595
    %v4548 = vpack.c.b16 %v3604, %v3596
    %v4549 = vpack.c.b16 %v3605, %v3597
    %v4550 = vpack.c.b16 %v3606, %v3598
    %v4551 = vpack.c.b16 %v3607, %v3599
    %v4552 = vpack.c.b16 %v3616, %v3608
    %v4553 = vpack.c.b16 %v3617, %v3609
    %v4554 = vpack.c.b16 %v3618, %v3610
    %v4555 = vpack.c.b16 %v3619, %v3611
    %v4556 = vpack.c.b16 %v3620, %v3612
    %v4557 = vpack.c.b16 %v3621, %v3613
    %v4558 = vpack.c.b16 %v3622, %v3614
    %v4559 = vpack.c.b16 %v3623, %v3615
    %v4560 = vpack.c.b16 %v3632, %v3624
    %v4561 = vpack.c.b16 %v3633, %v3625
    %v4562 = vpack.c.b16 %v3634, %v3626
    %v4563 = vpack.c.b16 %v3635, %v3627
    %v4564 = vpack.c.b16 %v3636, %v3628
    %v4565 = vpack.c.b16 %v3637, %v3629
    %v4566 = vpack.c.b16 %v3638, %v3630
    %v4567 = vpack.c.b16 %v3639, %v3631
    %v4568 = vpack.c.b16 %v3648, %v3640
    %v4569 = vpack.c.b16 %v3649, %v3641
    %v4570 = vpack.c.b16 %v3650, %v3642
    %v4571 = vpack.c.b16 %v3651, %v3643
    %v4572 = vpack.c.b16 %v3652, %v3644
    %v4573 = vpack.c.b16 %v3653, %v3645
    %v4574 = vpack.c.b16 %v3654, %v3646
    %v4575 = vpack.c.b16 %v3655, %v3647
    %v4576 = vpack.c.b16 %v3664, %v3656
    %v4577 = vpack.c.b16 %v3665, %v3657
    %v4578 = vpack.c.b16 %v3666, %v3658
    %v4579 = vpack.c.b16 %v3667, %v3659
    %v4580 = vpack.c.b16 %v3668, %v3660
    %v4581 = vpack.c.b16 %v3669, %v3661
    %v4582 = vpack.c.b16 %v3670, %v3662
    %v4583 = vpack.c.b16 %v3671, %v3663
    %v4584 = vpack.c.b16 %v3680, %v3672
    %v4585 = vpack.c.b16 %v3681, %v3673
    %v4586 = vpack.c.b16 %v3682, %v3674
    %v4587 = vpack.c.b16 %v3683, %v3675
    %v4588 = vpack.c.b16 %v3684, %v3676
    %v4589 = vpack.c.b16 %v3685, %v3677
    %v4590 = vpack.c.b16 %v3686, %v3678
    %v4591 = vpack.c.b16 %v3687, %v3679
    %v4592 = vpack.c.b16 %v3696, %v3688
    %v4593 = vpack.c.b16 %v3697, %v3689
    %v4594 = vpack.c.b16 %v3698, %v3690
    %v4595 = vpack.c.b16 %v3699, %v3691
    %v4596 = vpack.c.b16 %v3700, %v3692
    %v4597 = vpack.c.b16 %v3701, %v3693
    %v4598 = vpack.c.b16 %v3702, %v3694
    %v4599 = vpack.c.b16 %v3703, %v3695
    %v4600 = vpack.c.b16 %v3712, %v3704
    %v4601 = vpack.c.b16 %v3713, %v3705
    %v4602 = vpack.c.b16 %v3714, %v3706
    %v4603 = vpack.c.b16 %v3715, %v3707
    %v4604 = vpack.c.b16 %v3716, %v3708
    %v4605 = vpack.c.b16 %v3717, %v3709
    %v4606 = vpack.c.b16 %v3718, %v3710
    %v4607 = vpack.c.b16 %v3719, %v3711
    %v4608 = vpack.c.b16 %v3728, %v3720
    %v4609 = vpack.c.b16 %v3729, %v3721
    %v4610 = vpack.c.b16 %v3730, %v3722
    %v4611 = vpack.c.b16 %v3731, %v3723
    %v4612 = vpack.c.b16 %v3732, %v3724
    %v4613 = vpack.c.b16 %v3733, %v3725
    %v4614 = vpack.c.b16 %v3734, %v3726
    %v4615 = vpack.c.b16 %v3735, %v3727
    %v4616 = vpack.c.b16 %v3744, %v3736
    %v4617 = vpack.c.b16 %v3745, %v3737
    %v4618 = vpack.c.b16 %v3746, %v3738
    %v4619 = vpack.c.b16 %v3747, %v3739
    %v4620 = vpack.c.b16 %v3748, %v3740
    %v4621 = vpack.c.b16 %v3749, %v3741
    %v4622 = vpack.c.b16 %v3750, %v3742
    %v4623 = vpack.c.b16 %v3751, %v3743
    %v4624 = vpack.c.b16 %v3760, %v3752
    %v4625 = vpack.c.b16 %v3761, %v3753
    %v4626 = vpack.c.b16 %v3762, %v3754
    %v4627 = vpack.c.b16 %v3763, %v3755
    %v4628 = vpack.c.b16 %v3764, %v3756
    %v4629 = vpack.c.b16 %v3765, %v3757
    %v4630 = vpack.c.b16 %v3766, %v3758
    %v4631 = vpack.c.b16 %v3767, %v3759
    %v4632 = vpack.c.b16 %v3776, %v3768
    %v4633 = vpack.c.b16 %v3777, %v3769
    %v4634 = vpack.c.b16 %v3778, %v3770
    %v4635 = vpack.c.b16 %v3779, %v3771
    %v4636 = vpack.c.b16 %v3780, %v3772
    %v4637 = vpack.c.b16 %v3781, %v3773
    %v4638 = vpack.c.b16 %v3782, %v3774
    %v4639 = vpack.c.b16 %v3783, %v3775
    %v4640 = vpack.c.b16 %v3792, %v3784
    %v4641 = vpack.c.b16 %v3793, %v3785
    %v4642 = vpack.c.b16 %v3794, %v3786
    %v4643 = vpack.c.b16 %v3795, %v3787
    %v4644 = vpack.c.b16 %v3796, %v3788
    %v4645 = vpack.c.b16 %v3797, %v3789
    %v4646 = vpack.c.b16 %v3798, %v3790
    %v4647 = vpack.c.b16 %v3799, %v3791
    %v4648 = vpack.c.b16 %v3808, %v3800
    %v4649 = vpack.c.b16 %v3809, %v3801
    %v4650 = vpack.c.b16 %v3810, %v3802
    %v4651 = vpack.c.b16 %v3811, %v3803
    %v4652 = vpack.c.b16 %v3812, %v3804
    %v4653 = vpack.c.b16 %v3813, %v3805
    %v4654 = vpack.c.b16 %v3814, %v3806
    %v4655 = vpack.c.b16 %v3815, %v3807
    %v4656 = vpack.c.b16 %v3824, %v3816
    %v4657 = vpack.c.b16 %v3825, %v3817
    %v4658 = vpack.c.b16 %v3826, %v3818
    %v4659 = vpack.c.b16 %v3827, %v3819
    %v4660 = vpack.c.b16 %v3828, %v3820
    %v4661 = vpack.c.b16 %v3829, %v3821
    %v4662 = vpack.c.b16 %v3830, %v3822
    %v4663 = vpack.c.b16 %v3831, %v3823
    %v4664 = vpack.c.b16 %v3840, %v3832
    %v4665 = vpack.c.b16 %v3841, %v3833
    %v4666 = vpack.c.b16 %v3842, %v3834
    %v4667 = vpack.c.b16 %v3843, %v3835
    %v4668 = vpack.c.b16 %v3844, %v3836
    %v4669 = vpack.c.b16 %v3845, %v3837
    %v4670 = vpack.c.b16 %v3846, %v3838
    %v4671 = vpack.c.b16 %v3847, %v3839
    %v4672 = vpack.c.b16 %v3856, %v3848
    %v4673 = vpack.c.b16 %v3857, %v3849
    %v4674 = vpack.c.b16 %v3858, %v3850
    %v4675 = vpack.c.b16 %v3859, %v3851
    %v4676 = vpack.c.b16 %v3860, %v3852
    %v4677 = vpack.c.b16 %v3861, %v3853
    %v4678 = vpack.c.b16 %v3862, %v3854
    %v4679 = vpack.c.b16 %v3863, %v3855
    %v4680 = vpack.c.b16 %v3872, %v3864
    %v4681 = vpack.c.b16 %v3873, %v3865
    %v4682 = vpack.c.b16 %v3874, %v3866
    %v4683 = vpack.c.b16 %v3875, %v3867
    %v4684 = vpack.c.b16 %v3876, %v3868
    %v4685 = vpack.c.b16 %v3877, %v3869
    %v4686 = vpack.c.b16 %v3878, %v3870
    %v4687 = vpack.c.b16 %v3879, %v3871
    %v4688 = vpack.c.b16 %v3888, %v3880
    %v4689 = vpack.c.b16 %v3889, %v3881
    %v4690 = vpack.c.b16 %v3890, %v3882
    %v4691 = vpack.c.b16 %v3891, %v3883
    %v4692 = vpack.c.b16 %v3892, %v3884
    %v4693 = vpack.c.b16 %v3893, %v3885
    %v4694 = vpack.c.b16 %v3894, %v3886
    %v4695 = vpack.c.b16 %v3895, %v3887
    %v4696 = vpack.c.b16 %v3904, %v3896
    %v4697 = vpack.c.b16 %v3905, %v3897
    %v4698 = vpack.c.b16 %v3906, %v3898
    %v4699 = vpack.c.b16 %v3907, %v3899
    %v4700 = vpack.c.b16 %v3908, %v3900
    %v4701 = vpack.c.b16 %v3909, %v3901
    %v4702 = vpack.c.b16 %v3910, %v3902
    %v4703 = vpack.c.b16 %v3911, %v3903
    %v4704 = vpack.c.b16 %v3920, %v3912
    %v4705 = vpack.c.b16 %v3921, %v3913
    %v4706 = vpack.c.b16 %v3922, %v3914
    %v4707 = vpack.c.b16 %v3923, %v3915
    %v4708 = vpack.c.b16 %v3924, %v3916
    %v4709 = vpack.c.b16 %v3925, %v3917
    %v4710 = vpack.c.b16 %v3926, %v3918
    %v4711 = vpack.c.b16 %v3927, %v3919
    %v4712 = vpack.c.b16 %v3936, %v3928
    %v4713 = vpack.c.b16 %v3937, %v3929
    %v4714 = vpack.c.b16 %v3938, %v3930
    %v4715 = vpack.c.b16 %v3939, %v3931
    %v4716 = vpack.c.b16 %v3940, %v3932
    %v4717 = vpack.c.b16 %v3941, %v3933
    %v4718 = vpack.c.b16 %v3942, %v3934
    %v4719 = vpack.c.b16 %v3943, %v3935
    %v4720 = vpack.c.b16 %v3952, %v3944
    %v4721 = vpack.c.b16 %v3953, %v3945
    %v4722 = vpack.c.b16 %v3954, %v3946
    %v4723 = vpack.c.b16 %v3955, %v3947
    %v4724 = vpack.c.b16 %v3956, %v3948
    %v4725 = vpack.c.b16 %v3957, %v3949
    %v4726 = vpack.c.b16 %v3958, %v3950
    %v4727 = vpack.c.b16 %v3959, %v3951
    %v4728 = vpack.c.b16 %v3968, %v3960
    %v4729 = vpack.c.b16 %v3969, %v3961
    %v4730 = vpack.c.b16 %v3970, %v3962
    %v4731 = vpack.c.b16 %v3971, %v3963
    %v4732 = vpack.c.b16 %v3972, %v3964
    %v4733 = vpack.c.b16 %v3973, %v3965
    %v4734 = vpack.c.b16 %v3974, %v3966
    %v4735 = vpack.c.b16 %v3975, %v3967
    %v4736 = vpack.c.b16 %v3984, %v3976
    %v4737 = vpack.c.b16 %v3985, %v3977
    %v4738 = vpack.c.b16 %v3986, %v3978
    %v4739 = vpack.c.b16 %v3987, %v3979
    %v4740 = vpack.c.b16 %v3988, %v3980
    %v4741 = vpack.c.b16 %v3989, %v3981
    %v4742 = vpack.c.b16 %v3990, %v3982
    %v4743 = vpack.c.b16 %v3991, %v3983
    %v4744 = vpack.c.b16 %v4000, %v3992
    %v4745 = vpack.c.b16 %v4001, %v3993
    %v4746 = vpack.c.b16 %v4002, %v3994
    %v4747 = vpack.c.b16 %v4003, %v3995
    %v4748 = vpack.c.b16 %v4004, %v3996
    %v4749 = vpack.c.b16 %v4005, %v3997
    %v4750 = vpack.c.b16 %v4006, %v3998
    %v4751 = vpack.c.b16 %v4007, %v3999
    %v4752 = vpack.c.b16 %v4016, %v4008
    %v4753 = vpack.c.b16 %v4017, %v4009
    %v4754 = vpack.c.b16 %v4018, %v4010
    %v4755 = vpack.c.b16 %v4019, %v4011
    %v4756 = vpack.c.b16 %v4020, %v4012
    %v4757 = vpack.c.b16 %v4021, %v4013
    %v4758 = vpack.c.b16 %v4022, %v4014
    %v4759 = vpack.c.b16 %v4023, %v4015
    %v4760 = vpack.c.b16 %v4032, %v4024
    %v4761 = vpack.c.b16 %v4033, %v4025
    %v4762 = vpack.c.b16 %v4034, %v4026
    %v4763 = vpack.c.b16 %v4035, %v4027
    %v4764 = vpack.c.b16 %v4036, %v4028
    %v4765 = vpack.c.b16 %v4037, %v4029
    %v4766 = vpack.c.b16 %v4038, %v4030
    %v4767 = vpack.c.b16 %v4039, %v4031
    %v4768 = vpack.c.b16 %v4048, %v4040
    %v4769 = vpack.c.b16 %v4049, %v4041
    %v4770 = vpack.c.b16 %v4050, %v4042
    %v4771 = vpack.c.b16 %v4051, %v4043
    %v4772 = vpack.c.b16 %v4052, %v4044
    %v4773 = vpack.c.b16 %v4053, %v4045
    %v4774 = vpack.c.b16 %v4054, %v4046
    %v4775 = vpack.c.b16 %v4055, %v4047
    %v4776 = vpack.c.b16 %v4064, %v4056
    %v4777 = vpack.c.b16 %v4065, %v4057
    %v4778 = vpack.c.b16 %v4066, %v4058
    %v4779 = vpack.c.b16 %v4067, %v4059
    %v4780 = vpack.c.b16 %v4068, %v4060
    %v4781 = vpack.c.b16 %v4069, %v4061
    %v4782 = vpack.c.b16 %v4070, %v4062
    %v4783 = vpack.c.b16 %v4071, %v4063
    %v4784 = vpack.c.b16 %v4080, %v4072
    %v4785 = vpack.c.b16 %v4081, %v4073
    %v4786 = vpack.c.b16 %v4082, %v4074
    %v4787 = vpack.c.b16 %v4083, %v4075
    %v4788 = vpack.c.b16 %v4084, %v4076
    %v4789 = vpack.c.b16 %v4085, %v4077
    %v4790 = vpack.c.b16 %v4086, %v4078
    %v4791 = vpack.c.b16 %v4087, %v4079
    %v4792 = vpack.c.b16 %v4096, %v4088
    %v4793 = vpack.c.b16 %v4097, %v4089
    %v4794 = vpack.c.b16 %v4098, %v4090
    %v4795 = vpack.c.b16 %v4099, %v4091
    %v4796 = vpack.c.b16 %v4100, %v4092
    %v4797 = vpack.c.b16 %v4101, %v4093
    %v4798 = vpack.c.b16 %v4102, %v4094
    %v4799 = vpack.c.b16 %v4103, %v4095
    %v4800 = vpack.c.b16 %v4112, %v4104
    %v4801 = vpack.c.b16 %v4113, %v4105
    %v4802 = vpack.c.b16 %v4114, %v4106
    %v4803 = vpack.c.b16 %v4115, %v4107
    %v4804 = vpack.c.b16 %v4116, %v4108
    %v4805 = vpack.c.b16 %v4117, %v4109
    %v4806 = vpack.c.b16 %v4118, %v4110
    %v4807 = vpack.c.b16 %v4119, %v4111
    %v4808 = vpack.c.b16 %v4128, %v4120
    %v4809 = vpack.c.b16 %v4129, %v4121
    %v4810 = vpack.c.b16 %v4130, %v4122
    %v4811 = vpack.c.b16 %v4131, %v4123
    %v4812 = vpack.c.b16 %v4132, %v4124
    %v4813 = vpack.c.b16 %v4133, %v4125
    %v4814 = vpack.c.b16 %v4134, %v4126
    %v4815 = vpack.c.b16 %v4135, %v4127
    %v4816 = vpack.c.b16 %v4144, %v4136
    %v4817 = vpack.c.b16 %v4145, %v4137
    %v4818 = vpack.c.b16 %v4146, %v4138
    %v4819 = vpack.c.b16 %v4147, %v4139
    %v4820 = vpack.c.b16 %v4148, %v4140
    %v4821 = vpack.c.b16 %v4149, %v4141
    %v4822 = vpack.c.b16 %v4150, %v4142
    %v4823 = vpack.c.b16 %v4151, %v4143
    %v4824 = vpack.c.b16 %v4160, %v4152
    %v4825 = vpack.c.b16 %v4161, %v4153
    %v4826 = vpack.c.b16 %v4162, %v4154
    %v4827 = vpack.c.b16 %v4163, %v4155
    %v4828 = vpack.c.b16 %v4164, %v4156
    %v4829 = vpack.c.b16 %v4165, %v4157
    %v4830 = vpack.c.b16 %v4166, %v4158
    %v4831 = vpack.c.b16 %v4167, %v4159
    %v4832 = vpack.c.b16 %v4176, %v4168
    %v4833 = vpack.c.b16 %v4177, %v4169
    %v4834 = vpack.c.b16 %v4178, %v4170
    %v4835 = vpack.c.b16 %v4179, %v4171
    %v4836 = vpack.c.b16 %v4180, %v4172
    %v4837 = vpack.c.b16 %v4181, %v4173
    %v4838 = vpack.c.b16 %v4182, %v4174
    %v4839 = vpack.c.b16 %v4183, %v4175
    %v4840 = vpack.c.b16 %v4192, %v4184
    %v4841 = vpack.c.b16 %v4193, %v4185
    %v4842 = vpack.c.b16 %v4194, %v4186
    %v4843 = vpack.c.b16 %v4195, %v4187
    %v4844 = vpack.c.b16 %v4196, %v4188
    %v4845 = vpack.c.b16 %v4197, %v4189
    %v4846 = vpack.c.b16 %v4198, %v4190
    %v4847 = vpack.c.b16 %v4199, %v4191
    %v4848 = vpack.c.b16 %v4208, %v4200
    %v4849 = vpack.c.b16 %v4209, %v4201
    %v4850 = vpack.c.b16 %v4210, %v4202
    %v4851 = vpack.c.b16 %v4211, %v4203
    %v4852 = vpack.c.b16 %v4212, %v4204
    %v4853 = vpack.c.b16 %v4213, %v4205
    %v4854 = vpack.c.b16 %v4214, %v4206
    %v4855 = vpack.c.b16 %v4215, %v4207
    %v4856 = vpack.c.b16 %v4224, %v4216
    %v4857 = vpack.c.b16 %v4225, %v4217
    %v4858 = vpack.c.b16 %v4226, %v4218
    %v4859 = vpack.c.b16 %v4227, %v4219
    %v4860 = vpack.c.b16 %v4228, %v4220
    %v4861 = vpack.c.b16 %v4229, %v4221
    %v4862 = vpack.c.b16 %v4230, %v4222
    %v4863 = vpack.c.b16 %v4231, %v4223
    %v4864 = vpack.c.b16 %v4240, %v4232
    %v4865 = vpack.c.b16 %v4241, %v4233
    %v4866 = vpack.c.b16 %v4242, %v4234
    %v4867 = vpack.c.b16 %v4243, %v4235
    %v4868 = vpack.c.b16 %v4244, %v4236
    %v4869 = vpack.c.b16 %v4245, %v4237
    %v4870 = vpack.c.b16 %v4246, %v4238
    %v4871 = vpack.c.b16 %v4247, %v4239
    %v4872 = vpack.c.b16 %v4256, %v4248
    %v4873 = vpack.c.b16 %v4257, %v4249
    %v4874 = vpack.c.b16 %v4258, %v4250
    %v4875 = vpack.c.b16 %v4259, %v4251
    %v4876 = vpack.c.b16 %v4260, %v4252
    %v4877 = vpack.c.b16 %v4261, %v4253
    %v4878 = vpack.c.b16 %v4262, %v4254
    %v4879 = vpack.c.b16 %v4263, %v4255
    %v4880 = vpack.c.b16 %v4272, %v4264
    %v4881 = vpack.c.b16 %v4273, %v4265
    %v4882 = vpack.c.b16 %v4274, %v4266
    %v4883 = vpack.c.b16 %v4275, %v4267
    %v4884 = vpack.c.b16 %v4276, %v4268
    %v4885 = vpack.c.b16 %v4277, %v4269
    %v4886 = vpack.c.b16 %v4278, %v4270
    %v4887 = vpack.c.b16 %v4279, %v4271
    %v4888 = vpack.c.b16 %v4288, %v4280
    %v4889 = vpack.c.b16 %v4289, %v4281
    %v4890 = vpack.c.b16 %v4290, %v4282
    %v4891 = vpack.c.b16 %v4291, %v4283
    %v4892 = vpack.c.b16 %v4292, %v4284
    %v4893 = vpack.c.b16 %v4293, %v4285
    %v4894 = vpack.c.b16 %v4294, %v4286
    %v4895 = vpack.c.b16 %v4295, %v4287
    %v4896 = vpack.c.b16 %v4304, %v4296
    %v4897 = vpack.c.b16 %v4305, %v4297
    %v4898 = vpack.c.b16 %v4306, %v4298
    %v4899 = vpack.c.b16 %v4307, %v4299
    %v4900 = vpack.c.b16 %v4308, %v4300
    %v4901 = vpack.c.b16 %v4309, %v4301
    %v4902 = vpack.c.b16 %v4310, %v4302
    %v4903 = vpack.c.b16 %v4311, %v4303
    %v4904 = vpack.c.b16 %v4320, %v4312
    %v4905 = vpack.c.b16 %v4321, %v4313
    %v4906 = vpack.c.b16 %v4322, %v4314
    %v4907 = vpack.c.b16 %v4323, %v4315
    %v4908 = vpack.c.b16 %v4324, %v4316
    %v4909 = vpack.c.b16 %v4325, %v4317
    %v4910 = vpack.c.b16 %v4326, %v4318
    %v4911 = vpack.c.b16 %v4327, %v4319
    %v4912 = vpack.c.b16 %v4336, %v4328
    %v4913 = vpack.c.b16 %v4337, %v4329
    %v4914 = vpack.c.b16 %v4338, %v4330
    %v4915 = vpack.c.b16 %v4339, %v4331
    %v4916 = vpack.c.b16 %v4340, %v4332
    %v4917 = vpack.c.b16 %v4341, %v4333
    %v4918 = vpack.c.b16 %v4342, %v4334
    %v4919 = vpack.c.b16 %v4343, %v4335
    %v4920 = vpack.c.b16 %v4352, %v4344
    %v4921 = vpack.c.b16 %v4353, %v4345
    %v4922 = vpack.c.b16 %v4354, %v4346
    %v4923 = vpack.c.b16 %v4355, %v4347
    %v4924 = vpack.c.b16 %v4356, %v4348
    %v4925 = vpack.c.b16 %v4357, %v4349
    %v4926 = vpack.c.b16 %v4358, %v4350
    %v4927 = vpack.c.b16 %v4359, %v4351
    %v4928 = vpack.c.b16 %v4368, %v4360
    %v4929 = vpack.c.b16 %v4369, %v4361
    %v4930 = vpack.c.b16 %v4370, %v4362
    %v4931 = vpack.c.b16 %v4371, %v4363
    %v4932 = vpack.c.b16 %v4372, %v4364
    %v4933 = vpack.c.b16 %v4373, %v4365
    %v4934 = vpack.c.b16 %v4374, %v4366
    %v4935 = vpack.c.b16 %v4375, %v4367
    %v4936 = vpack.c.b16 %v4384, %v4376
    %v4937 = vpack.c.b16 %v4385, %v4377
    %v4938 = vpack.c.b16 %v4386, %v4378
    %v4939 = vpack.c.b16 %v4387, %v4379
    %v4940 = vpack.c.b16 %v4388, %v4380
    %v4941 = vpack.c.b16 %v4389, %v4381
    %v4942 = vpack.c.b16 %v4390, %v4382
    %v4943 = vpack.c.b16 %v4391, %v4383
    %v4944 = vpack.c.b16 %v4400, %v4392
    %v4945 = vpack.c.b16 %v4401, %v4393
    %v4946 = vpack.c.b16 %v4402, %v4394
    %v4947 = vpack.c.b16 %v4403, %v4395
    %v4948 = vpack.c.b16 %v4404, %v4396
    %v4949 = vpack.c.b16 %v4405, %v4397
    %v4950 = vpack.c.b16 %v4406, %v4398
    %v4951 = vpack.c.b16 %v4407, %v4399
    %v4952 = vpack.c.b16 %v4416, %v4408
    %v4953 = vpack.c.b16 %v4417, %v4409
    %v4954 = vpack.c.b16 %v4418, %v4410
    %v4955 = vpack.c.b16 %v4419, %v4411
    %v4956 = vpack.c.b16 %v4420, %v4412
    %v4957 = vpack.c.b16 %v4421, %v4413
    %v4958 = vpack.c.b16 %v4422, %v4414
    %v4959 = vpack.c.b16 %v4423, %v4415
    %v4960 = vpack.c.b16 %v4432, %v4424
    %v4961 = vpack.c.b16 %v4433, %v4425
    %v4962 = vpack.c.b16 %v4434, %v4426
    %v4963 = vpack.c.b16 %v4435, %v4427
    %v4964 = vpack.c.b16 %v4436, %v4428
    %v4965 = vpack.c.b16 %v4437, %v4429
    %v4966 = vpack.c.b16 %v4438, %v4430
    %v4967 = vpack.c.b16 %v4439, %v4431
    %v4968 = vpack.c.b16 %v4448, %v4440
    %v4969 = vpack.c.b16 %v4449, %v4441
    %v4970 = vpack.c.b16 %v4450, %v4442
    %v4971 = vpack.c.b16 %v4451, %v4443
    %v4972 = vpack.c.b16 %v4452, %v4444
    %v4973 = vpack.c.b16 %v4453, %v4445
    %v4974 = vpack.c.b16 %v4454, %v4446
    %v4975 = vpack.c.b16 %v4455, %v4447
    %v4976 = vpack.c.b16 %v4464, %v4456
    %v4977 = vpack.c.b16 %v4465, %v4457
    %v4978 = vpack.c.b16 %v4466, %v4458
    %v4979 = vpack.c.b16 %v4467, %v4459
    %v4980 = vpack.c.b16 %v4468, %v4460
    %v4981 = vpack.c.b16 %v4469, %v4461
    %v4982 = vpack.c.b16 %v4470, %v4462
    %v4983 = vpack.c.b16 %v4471, %v4463
    %5496 = vmatpush.bf16.msra.mxu0 %v4528
    %5497 = vmatpush.bf16.msra.mxu0 %v4520
    %5498 = vmatpush.bf16.msra.mxu0 %v4512
    %5499 = vmatpush.bf16.msra.mxu0 %v4504
    %5500 = vmatpush.bf16.msra.mxu0 %v4496
    %5501 = vmatpush.bf16.msra.mxu0 %v4488
    %5502 = vmatpush.bf16.msra.mxu0 %v4480
    %5503 = vmatpush.bf16.msra.mxu0 %v4472
    %5504 = vmatmul.bf16.gmra.mxu0 %v2911
    %v5505 = vpop.f32.mrf.mxu0
    %v5506 = vadd.f32 %v2920, %v5505
    %v5507 = vpop.f32.mrf.mxu0
    %5508 = vdwg.mxu0
    %5509 = vmatpush.bf16.msra.mxu0 %v4592
    %5510 = vmatpush.bf16.msra.mxu0 %v4584
    %5511 = vmatpush.bf16.msra.mxu0 %v4576
    %5512 = vmatpush.bf16.msra.mxu0 %v4568
    %5513 = vmatpush.bf16.msra.mxu0 %v4560
    %5514 = vmatpush.bf16.msra.mxu0 %v4552
    %5515 = vmatpush.bf16.msra.mxu0 %v4544
    %5516 = vmatpush.bf16.msra.mxu0 %v4536
    %5517 = vmatmul.bf16.gmra.mxu0 %v2912
    %v5518 = vpop.f32.mrf.mxu0
    %v5519 = vadd.f32 %v5506, %v5518
    %v5520 = vpop.f32.mrf.mxu0
    %5521 = vdwg.mxu0
    %5522 = vmatpush.bf16.msra.mxu0 %v4656
    %5523 = vmatpush.bf16.msra.mxu0 %v4648
    %5524 = vmatpush.bf16.msra.mxu0 %v4640
    %5525 = vmatpush.bf16.msra.mxu0 %v4632
    %5526 = vmatpush.bf16.msra.mxu0 %v4624
    %5527 = vmatpush.bf16.msra.mxu0 %v4616
    %5528 = vmatpush.bf16.msra.mxu0 %v4608
    %5529 = vmatpush.bf16.msra.mxu0 %v4600
    %5530 = vmatmul.bf16.gmra.mxu0 %v2913
    %v5531 = vpop.f32.mrf.mxu0
    %v5532 = vadd.f32 %v5519, %v5531
    %v5533 = vpop.f32.mrf.mxu0
    %5534 = vdwg.mxu0
    %5535 = vmatpush.bf16.msra.mxu0 %v4720
    %5536 = vmatpush.bf16.msra.mxu0 %v4712
    %5537 = vmatpush.bf16.msra.mxu0 %v4704
    %5538 = vmatpush.bf16.msra.mxu0 %v4696
    %5539 = vmatpush.bf16.msra.mxu0 %v4688
    %5540 = vmatpush.bf16.msra.mxu0 %v4680
    %5541 = vmatpush.bf16.msra.mxu0 %v4672
    %5542 = vmatpush.bf16.msra.mxu0 %v4664
    %5543 = vmatmul.bf16.gmra.mxu0 %v2914
    %v5544 = vpop.f32.mrf.mxu0
    %v5545 = vadd.f32 %v5532, %v5544
    %v5546 = vpop.f32.mrf.mxu0
    %5547 = vdwg.mxu0
    %5548 = vmatpush.bf16.msra.mxu0 %v4784
    %5549 = vmatpush.bf16.msra.mxu0 %v4776
    %5550 = vmatpush.bf16.msra.mxu0 %v4768
    %5551 = vmatpush.bf16.msra.mxu0 %v4760
    %5552 = vmatpush.bf16.msra.mxu0 %v4752
    %5553 = vmatpush.bf16.msra.mxu0 %v4744
    %5554 = vmatpush.bf16.msra.mxu0 %v4736
    %5555 = vmatpush.bf16.msra.mxu0 %v4728
    %5556 = vmatmul.bf16.gmra.mxu0 %v2915
    %v5557 = vpop.f32.mrf.mxu0
    %v5558 = vadd.f32 %v5545, %v5557
    %v5559 = vpop.f32.mrf.mxu0
    %5560 = vdwg.mxu0
    %5561 = vmatpush.bf16.msra.mxu0 %v4848
    %5562 = vmatpush.bf16.msra.mxu0 %v4840
    %5563 = vmatpush.bf16.msra.mxu0 %v4832
    %5564 = vmatpush.bf16.msra.mxu0 %v4824
    %5565 = vmatpush.bf16.msra.mxu0 %v4816
    %5566 = vmatpush.bf16.msra.mxu0 %v4808
    %5567 = vmatpush.bf16.msra.mxu0 %v4800
    %5568 = vmatpush.bf16.msra.mxu0 %v4792
    %5569 = vmatmul.bf16.gmra.mxu0 %v2916
    %v5570 = vpop.f32.mrf.mxu0
    %v5571 = vadd.f32 %v5558, %v5570
    %v5572 = vpop.f32.mrf.mxu0
    %5573 = vdwg.mxu0
    %5574 = vmatpush.bf16.msra.mxu0 %v4912
    %5575 = vmatpush.bf16.msra.mxu0 %v4904
    %5576 = vmatpush.bf16.msra.mxu0 %v4896
    %5577 = vmatpush.bf16.msra.mxu0 %v4888
    %5578 = vmatpush.bf16.msra.mxu0 %v4880
    %5579 = vmatpush.bf16.msra.mxu0 %v4872
    %5580 = vmatpush.bf16.msra.mxu0 %v4864
    %5581 = vmatpush.bf16.msra.mxu0 %v4856
    %5582 = vmatmul.bf16.gmra.mxu0 %v2917
    %v5583 = vpop.f32.mrf.mxu0
    %v5584 = vadd.f32 %v5571, %v5583
    %v5585 = vpop.f32.mrf.mxu0
    %5586 = vdwg.mxu0
    %5587 = vmatpush.bf16.msra.mxu0 %v4976
    %5588 = vmatpush.bf16.msra.mxu0 %v4968
    %5589 = vmatpush.bf16.msra.mxu0 %v4960
    %5590 = vmatpush.bf16.msra.mxu0 %v4952
    %5591 = vmatpush.bf16.msra.mxu0 %v4944
    %5592 = vmatpush.bf16.msra.mxu0 %v4936
    %5593 = vmatpush.bf16.msra.mxu0 %v4928
    %5594 = vmatpush.bf16.msra.mxu0 %v4920
    %5595 = vmatmul.bf16.gmra.mxu0 %v2918
    %v5596 = vpop.f32.mrf.mxu0
    %v5597 = vadd.f32 %v5584, %v5596
    %v5598 = vpop.f32.mrf.mxu0
    %5599 = vdwg.mxu0
    %5600 = vmatpush.bf16.msra.mxu0 %v4529
    %5601 = vmatpush.bf16.msra.mxu0 %v4521
    %5602 = vmatpush.bf16.msra.mxu0 %v4513
    %5603 = vmatpush.bf16.msra.mxu0 %v4505
    %5604 = vmatpush.bf16.msra.mxu0 %v4497
    %5605 = vmatpush.bf16.msra.mxu0 %v4489
    %5606 = vmatpush.bf16.msra.mxu0 %v4481
    %5607 = vmatpush.bf16.msra.mxu0 %v4473
    %5608 = vmatmul.bf16.gmra.mxu0 %v2911
    %v5609 = vpop.f32.mrf.mxu0
    %v5610 = vadd.f32 %v2921, %v5609
    %v5611 = vpop.f32.mrf.mxu0
    %5612 = vdwg.mxu0
    %5613 = vmatpush.bf16.msra.mxu0 %v4593
    %5614 = vmatpush.bf16.msra.mxu0 %v4585
    %5615 = vmatpush.bf16.msra.mxu0 %v4577
    %5616 = vmatpush.bf16.msra.mxu0 %v4569
    %5617 = vmatpush.bf16.msra.mxu0 %v4561
    %5618 = vmatpush.bf16.msra.mxu0 %v4553
    %5619 = vmatpush.bf16.msra.mxu0 %v4545
    %5620 = vmatpush.bf16.msra.mxu0 %v4537
    %5621 = vmatmul.bf16.gmra.mxu0 %v2912
    %v5622 = vpop.f32.mrf.mxu0
    %v5623 = vadd.f32 %v5610, %v5622
    %v5624 = vpop.f32.mrf.mxu0
    %5625 = vdwg.mxu0
    %5626 = vmatpush.bf16.msra.mxu0 %v4657
    %5627 = vmatpush.bf16.msra.mxu0 %v4649
    %5628 = vmatpush.bf16.msra.mxu0 %v4641
    %5629 = vmatpush.bf16.msra.mxu0 %v4633
    %5630 = vmatpush.bf16.msra.mxu0 %v4625
    %5631 = vmatpush.bf16.msra.mxu0 %v4617
    %5632 = vmatpush.bf16.msra.mxu0 %v4609
    %5633 = vmatpush.bf16.msra.mxu0 %v4601
    %5634 = vmatmul.bf16.gmra.mxu0 %v2913
    %v5635 = vpop.f32.mrf.mxu0
    %v5636 = vadd.f32 %v5623, %v5635
    %v5637 = vpop.f32.mrf.mxu0
    %5638 = vdwg.mxu0
    %5639 = vmatpush.bf16.msra.mxu0 %v4721
    %5640 = vmatpush.bf16.msra.mxu0 %v4713
    %5641 = vmatpush.bf16.msra.mxu0 %v4705
    %5642 = vmatpush.bf16.msra.mxu0 %v4697
    %5643 = vmatpush.bf16.msra.mxu0 %v4689
    %5644 = vmatpush.bf16.msra.mxu0 %v4681
    %5645 = vmatpush.bf16.msra.mxu0 %v4673
    %5646 = vmatpush.bf16.msra.mxu0 %v4665
    %5647 = vmatmul.bf16.gmra.mxu0 %v2914
    %v5648 = vpop.f32.mrf.mxu0
    %v5649 = vadd.f32 %v5636, %v5648
    %v5650 = vpop.f32.mrf.mxu0
    %5651 = vdwg.mxu0
    %5652 = vmatpush.bf16.msra.mxu0 %v4785
    %5653 = vmatpush.bf16.msra.mxu0 %v4777
    %5654 = vmatpush.bf16.msra.mxu0 %v4769
    %5655 = vmatpush.bf16.msra.mxu0 %v4761
    %5656 = vmatpush.bf16.msra.mxu0 %v4753
    %5657 = vmatpush.bf16.msra.mxu0 %v4745
    %5658 = vmatpush.bf16.msra.mxu0 %v4737
    %5659 = vmatpush.bf16.msra.mxu0 %v4729
    %5660 = vmatmul.bf16.gmra.mxu0 %v2915
    %v5661 = vpop.f32.mrf.mxu0
    %v5662 = vadd.f32 %v5649, %v5661
    %v5663 = vpop.f32.mrf.mxu0
    %5664 = vdwg.mxu0
    %5665 = vmatpush.bf16.msra.mxu0 %v4849
    %5666 = vmatpush.bf16.msra.mxu0 %v4841
    %5667 = vmatpush.bf16.msra.mxu0 %v4833
    %5668 = vmatpush.bf16.msra.mxu0 %v4825
    %5669 = vmatpush.bf16.msra.mxu0 %v4817
    %5670 = vmatpush.bf16.msra.mxu0 %v4809
    %5671 = vmatpush.bf16.msra.mxu0 %v4801
    %5672 = vmatpush.bf16.msra.mxu0 %v4793
    %5673 = vmatmul.bf16.gmra.mxu0 %v2916
    %v5674 = vpop.f32.mrf.mxu0
    %v5675 = vadd.f32 %v5662, %v5674
    %v5676 = vpop.f32.mrf.mxu0
    %5677 = vdwg.mxu0
    %5678 = vmatpush.bf16.msra.mxu0 %v4913
    %5679 = vmatpush.bf16.msra.mxu0 %v4905
    %5680 = vmatpush.bf16.msra.mxu0 %v4897
    %5681 = vmatpush.bf16.msra.mxu0 %v4889
    %5682 = vmatpush.bf16.msra.mxu0 %v4881
    %5683 = vmatpush.bf16.msra.mxu0 %v4873
    %5684 = vmatpush.bf16.msra.mxu0 %v4865
    %5685 = vmatpush.bf16.msra.mxu0 %v4857
    %5686 = vmatmul.bf16.gmra.mxu0 %v2917
    %v5687 = vpop.f32.mrf.mxu0
    %v5688 = vadd.f32 %v5675, %v5687
    %v5689 = vpop.f32.mrf.mxu0
    %5690 = vdwg.mxu0
    %5691 = vmatpush.bf16.msra.mxu0 %v4977
    %5692 = vmatpush.bf16.msra.mxu0 %v4969
    %5693 = vmatpush.bf16.msra.mxu0 %v4961
    %5694 = vmatpush.bf16.msra.mxu0 %v4953
    %5695 = vmatpush.bf16.msra.mxu0 %v4945
    %5696 = vmatpush.bf16.msra.mxu0 %v4937
    %5697 = vmatpush.bf16.msra.mxu0 %v4929
    %5698 = vmatpush.bf16.msra.mxu0 %v4921
    %5699 = vmatmul.bf16.gmra.mxu0 %v2918
    %v5700 = vpop.f32.mrf.mxu0
    %v5701 = vadd.f32 %v5688, %v5700
    %v5702 = vpop.f32.mrf.mxu0
    %5703 = vdwg.mxu0
    %5704 = vmatpush.bf16.msra.mxu0 %v4530
    %5705 = vmatpush.bf16.msra.mxu0 %v4522
    %5706 = vmatpush.bf16.msra.mxu0 %v4514
    %5707 = vmatpush.bf16.msra.mxu0 %v4506
    %5708 = vmatpush.bf16.msra.mxu0 %v4498
    %5709 = vmatpush.bf16.msra.mxu0 %v4490
    %5710 = vmatpush.bf16.msra.mxu0 %v4482
    %5711 = vmatpush.bf16.msra.mxu0 %v4474
    %5712 = vmatmul.bf16.gmra.mxu0 %v2911
    %v5713 = vpop.f32.mrf.mxu0
    %v5714 = vadd.f32 %v2922, %v5713
    %v5715 = vpop.f32.mrf.mxu0
    %5716 = vdwg.mxu0
    %5717 = vmatpush.bf16.msra.mxu0 %v4594
    %5718 = vmatpush.bf16.msra.mxu0 %v4586
    %5719 = vmatpush.bf16.msra.mxu0 %v4578
    %5720 = vmatpush.bf16.msra.mxu0 %v4570
    %5721 = vmatpush.bf16.msra.mxu0 %v4562
    %5722 = vmatpush.bf16.msra.mxu0 %v4554
    %5723 = vmatpush.bf16.msra.mxu0 %v4546
    %5724 = vmatpush.bf16.msra.mxu0 %v4538
    %5725 = vmatmul.bf16.gmra.mxu0 %v2912
    %v5726 = vpop.f32.mrf.mxu0
    %v5727 = vadd.f32 %v5714, %v5726
    %v5728 = vpop.f32.mrf.mxu0
    %5729 = vdwg.mxu0
    %5730 = vmatpush.bf16.msra.mxu0 %v4658
    %5731 = vmatpush.bf16.msra.mxu0 %v4650
    %5732 = vmatpush.bf16.msra.mxu0 %v4642
    %5733 = vmatpush.bf16.msra.mxu0 %v4634
    %5734 = vmatpush.bf16.msra.mxu0 %v4626
    %5735 = vmatpush.bf16.msra.mxu0 %v4618
    %5736 = vmatpush.bf16.msra.mxu0 %v4610
    %5737 = vmatpush.bf16.msra.mxu0 %v4602
    %5738 = vmatmul.bf16.gmra.mxu0 %v2913
    %v5739 = vpop.f32.mrf.mxu0
    %v5740 = vadd.f32 %v5727, %v5739
    %v5741 = vpop.f32.mrf.mxu0
    %5742 = vdwg.mxu0
    %5743 = vmatpush.bf16.msra.mxu0 %v4722
    %5744 = vmatpush.bf16.msra.mxu0 %v4714
    %5745 = vmatpush.bf16.msra.mxu0 %v4706
    %5746 = vmatpush.bf16.msra.mxu0 %v4698
    %5747 = vmatpush.bf16.msra.mxu0 %v4690
    %5748 = vmatpush.bf16.msra.mxu0 %v4682
    %5749 = vmatpush.bf16.msra.mxu0 %v4674
    %5750 = vmatpush.bf16.msra.mxu0 %v4666
    %5751 = vmatmul.bf16.gmra.mxu0 %v2914
    %v5752 = vpop.f32.mrf.mxu0
    %v5753 = vadd.f32 %v5740, %v5752
    %v5754 = vpop.f32.mrf.mxu0
    %5755 = vdwg.mxu0
    %5756 = vmatpush.bf16.msra.mxu0 %v4786
    %5757 = vmatpush.bf16.msra.mxu0 %v4778
    %5758 = vmatpush.bf16.msra.mxu0 %v4770
    %5759 = vmatpush.bf16.msra.mxu0 %v4762
    %5760 = vmatpush.bf16.msra.mxu0 %v4754
    %5761 = vmatpush.bf16.msra.mxu0 %v4746
    %5762 = vmatpush.bf16.msra.mxu0 %v4738
    %5763 = vmatpush.bf16.msra.mxu0 %v4730
    %5764 = vmatmul.bf16.gmra.mxu0 %v2915
    %v5765 = vpop.f32.mrf.mxu0
    %v5766 = vadd.f32 %v5753, %v5765
    %v5767 = vpop.f32.mrf.mxu0
    %5768 = vdwg.mxu0
    %5769 = vmatpush.bf16.msra.mxu0 %v4850
    %5770 = vmatpush.bf16.msra.mxu0 %v4842
    %5771 = vmatpush.bf16.msra.mxu0 %v4834
    %5772 = vmatpush.bf16.msra.mxu0 %v4826
    %5773 = vmatpush.bf16.msra.mxu0 %v4818
    %5774 = vmatpush.bf16.msra.mxu0 %v4810
    %5775 = vmatpush.bf16.msra.mxu0 %v4802
    %5776 = vmatpush.bf16.msra.mxu0 %v4794
    %5777 = vmatmul.bf16.gmra.mxu0 %v2916
    %v5778 = vpop.f32.mrf.mxu0
    %v5779 = vadd.f32 %v5766, %v5778
    %v5780 = vpop.f32.mrf.mxu0
    %5781 = vdwg.mxu0
    %5782 = vmatpush.bf16.msra.mxu0 %v4914
    %5783 = vmatpush.bf16.msra.mxu0 %v4906
    %5784 = vmatpush.bf16.msra.mxu0 %v4898
    %5785 = vmatpush.bf16.msra.mxu0 %v4890
    %5786 = vmatpush.bf16.msra.mxu0 %v4882
    %5787 = vmatpush.bf16.msra.mxu0 %v4874
    %5788 = vmatpush.bf16.msra.mxu0 %v4866
    %5789 = vmatpush.bf16.msra.mxu0 %v4858
    %5790 = vmatmul.bf16.gmra.mxu0 %v2917
    %v5791 = vpop.f32.mrf.mxu0
    %v5792 = vadd.f32 %v5779, %v5791
    %v5793 = vpop.f32.mrf.mxu0
    %5794 = vdwg.mxu0
    %5795 = vmatpush.bf16.msra.mxu0 %v4978
    %5796 = vmatpush.bf16.msra.mxu0 %v4970
    %5797 = vmatpush.bf16.msra.mxu0 %v4962
    %5798 = vmatpush.bf16.msra.mxu0 %v4954
    %5799 = vmatpush.bf16.msra.mxu0 %v4946
    %5800 = vmatpush.bf16.msra.mxu0 %v4938
    %5801 = vmatpush.bf16.msra.mxu0 %v4930
    %5802 = vmatpush.bf16.msra.mxu0 %v4922
    %5803 = vmatmul.bf16.gmra.mxu0 %v2918
    %v5804 = vpop.f32.mrf.mxu0
    %v5805 = vadd.f32 %v5792, %v5804
    %v5806 = vpop.f32.mrf.mxu0
    %5807 = vdwg.mxu0
    %5808 = vmatpush.bf16.msra.mxu0 %v4531
    %5809 = vmatpush.bf16.msra.mxu0 %v4523
    %5810 = vmatpush.bf16.msra.mxu0 %v4515
    %5811 = vmatpush.bf16.msra.mxu0 %v4507
    %5812 = vmatpush.bf16.msra.mxu0 %v4499
    %5813 = vmatpush.bf16.msra.mxu0 %v4491
    %5814 = vmatpush.bf16.msra.mxu0 %v4483
    %5815 = vmatpush.bf16.msra.mxu0 %v4475
    %5816 = vmatmul.bf16.gmra.mxu0 %v2911
    %v5817 = vpop.f32.mrf.mxu0
    %v5818 = vadd.f32 %v2923, %v5817
    %v5819 = vpop.f32.mrf.mxu0
    %5820 = vdwg.mxu0
    %5821 = vmatpush.bf16.msra.mxu0 %v4595
    %5822 = vmatpush.bf16.msra.mxu0 %v4587
    %5823 = vmatpush.bf16.msra.mxu0 %v4579
    %5824 = vmatpush.bf16.msra.mxu0 %v4571
    %5825 = vmatpush.bf16.msra.mxu0 %v4563
    %5826 = vmatpush.bf16.msra.mxu0 %v4555
    %5827 = vmatpush.bf16.msra.mxu0 %v4547
    %5828 = vmatpush.bf16.msra.mxu0 %v4539
    %5829 = vmatmul.bf16.gmra.mxu0 %v2912
    %v5830 = vpop.f32.mrf.mxu0
    %v5831 = vadd.f32 %v5818, %v5830
    %v5832 = vpop.f32.mrf.mxu0
    %5833 = vdwg.mxu0
    %5834 = vmatpush.bf16.msra.mxu0 %v4659
    %5835 = vmatpush.bf16.msra.mxu0 %v4651
    %5836 = vmatpush.bf16.msra.mxu0 %v4643
    %5837 = vmatpush.bf16.msra.mxu0 %v4635
    %5838 = vmatpush.bf16.msra.mxu0 %v4627
    %5839 = vmatpush.bf16.msra.mxu0 %v4619
    %5840 = vmatpush.bf16.msra.mxu0 %v4611
    %5841 = vmatpush.bf16.msra.mxu0 %v4603
    %5842 = vmatmul.bf16.gmra.mxu0 %v2913
    %v5843 = vpop.f32.mrf.mxu0
    %v5844 = vadd.f32 %v5831, %v5843
    %v5845 = vpop.f32.mrf.mxu0
    %5846 = vdwg.mxu0
    %5847 = vmatpush.bf16.msra.mxu0 %v4723
    %5848 = vmatpush.bf16.msra.mxu0 %v4715
    %5849 = vmatpush.bf16.msra.mxu0 %v4707
    %5850 = vmatpush.bf16.msra.mxu0 %v4699
    %5851 = vmatpush.bf16.msra.mxu0 %v4691
    %5852 = vmatpush.bf16.msra.mxu0 %v4683
    %5853 = vmatpush.bf16.msra.mxu0 %v4675
    %5854 = vmatpush.bf16.msra.mxu0 %v4667
    %5855 = vmatmul.bf16.gmra.mxu0 %v2914
    %v5856 = vpop.f32.mrf.mxu0
    %v5857 = vadd.f32 %v5844, %v5856
    %v5858 = vpop.f32.mrf.mxu0
    %5859 = vdwg.mxu0
    %5860 = vmatpush.bf16.msra.mxu0 %v4787
    %5861 = vmatpush.bf16.msra.mxu0 %v4779
    %5862 = vmatpush.bf16.msra.mxu0 %v4771
    %5863 = vmatpush.bf16.msra.mxu0 %v4763
    %5864 = vmatpush.bf16.msra.mxu0 %v4755
    %5865 = vmatpush.bf16.msra.mxu0 %v4747
    %5866 = vmatpush.bf16.msra.mxu0 %v4739
    %5867 = vmatpush.bf16.msra.mxu0 %v4731
    %5868 = vmatmul.bf16.gmra.mxu0 %v2915
    %v5869 = vpop.f32.mrf.mxu0
    %v5870 = vadd.f32 %v5857, %v5869
    %v5871 = vpop.f32.mrf.mxu0
    %5872 = vdwg.mxu0
    %5873 = vmatpush.bf16.msra.mxu0 %v4851
    %5874 = vmatpush.bf16.msra.mxu0 %v4843
    %5875 = vmatpush.bf16.msra.mxu0 %v4835
    %5876 = vmatpush.bf16.msra.mxu0 %v4827
    %5877 = vmatpush.bf16.msra.mxu0 %v4819
    %5878 = vmatpush.bf16.msra.mxu0 %v4811
    %5879 = vmatpush.bf16.msra.mxu0 %v4803
    %5880 = vmatpush.bf16.msra.mxu0 %v4795
    %5881 = vmatmul.bf16.gmra.mxu0 %v2916
    %v5882 = vpop.f32.mrf.mxu0
    %v5883 = vadd.f32 %v5870, %v5882
    %v5884 = vpop.f32.mrf.mxu0
    %5885 = vdwg.mxu0
    %5886 = vmatpush.bf16.msra.mxu0 %v4915
    %5887 = vmatpush.bf16.msra.mxu0 %v4907
    %5888 = vmatpush.bf16.msra.mxu0 %v4899
    %5889 = vmatpush.bf16.msra.mxu0 %v4891
    %5890 = vmatpush.bf16.msra.mxu0 %v4883
    %5891 = vmatpush.bf16.msra.mxu0 %v4875
    %5892 = vmatpush.bf16.msra.mxu0 %v4867
    %5893 = vmatpush.bf16.msra.mxu0 %v4859
    %5894 = vmatmul.bf16.gmra.mxu0 %v2917
    %v5895 = vpop.f32.mrf.mxu0
    %v5896 = vadd.f32 %v5883, %v5895
    %v5897 = vpop.f32.mrf.mxu0
    %5898 = vdwg.mxu0
    %5899 = vmatpush.bf16.msra.mxu0 %v4979
    %5900 = vmatpush.bf16.msra.mxu0 %v4971
    %5901 = vmatpush.bf16.msra.mxu0 %v4963
    %5902 = vmatpush.bf16.msra.mxu0 %v4955
    %5903 = vmatpush.bf16.msra.mxu0 %v4947
    %5904 = vmatpush.bf16.msra.mxu0 %v4939
    %5905 = vmatpush.bf16.msra.mxu0 %v4931
    %5906 = vmatpush.bf16.msra.mxu0 %v4923
    %5907 = vmatmul.bf16.gmra.mxu0 %v2918
    %v5908 = vpop.f32.mrf.mxu0
    %v5909 = vadd.f32 %v5896, %v5908
    %v5910 = vpop.f32.mrf.mxu0
    %5911 = vdwg.mxu0
    %5912 = vmatpush.bf16.msra.mxu0 %v4532
    %5913 = vmatpush.bf16.msra.mxu0 %v4524
    %5914 = vmatpush.bf16.msra.mxu0 %v4516
    %5915 = vmatpush.bf16.msra.mxu0 %v4508
    %5916 = vmatpush.bf16.msra.mxu0 %v4500
    %5917 = vmatpush.bf16.msra.mxu0 %v4492
    %5918 = vmatpush.bf16.msra.mxu0 %v4484
    %5919 = vmatpush.bf16.msra.mxu0 %v4476
    %5920 = vmatmul.bf16.gmra.mxu0 %v2911
    %v5921 = vpop.f32.mrf.mxu0
    %v5922 = vadd.f32 %v2924, %v5921
    %v5923 = vpop.f32.mrf.mxu0
    %5924 = vdwg.mxu0
    %5925 = vmatpush.bf16.msra.mxu0 %v4596
    %5926 = vmatpush.bf16.msra.mxu0 %v4588
    %5927 = vmatpush.bf16.msra.mxu0 %v4580
    %5928 = vmatpush.bf16.msra.mxu0 %v4572
    %5929 = vmatpush.bf16.msra.mxu0 %v4564
    %5930 = vmatpush.bf16.msra.mxu0 %v4556
    %5931 = vmatpush.bf16.msra.mxu0 %v4548
    %5932 = vmatpush.bf16.msra.mxu0 %v4540
    %5933 = vmatmul.bf16.gmra.mxu0 %v2912
    %v5934 = vpop.f32.mrf.mxu0
    %v5935 = vadd.f32 %v5922, %v5934
    %v5936 = vpop.f32.mrf.mxu0
    %5937 = vdwg.mxu0
    %5938 = vmatpush.bf16.msra.mxu0 %v4660
    %5939 = vmatpush.bf16.msra.mxu0 %v4652
    %5940 = vmatpush.bf16.msra.mxu0 %v4644
    %5941 = vmatpush.bf16.msra.mxu0 %v4636
    %5942 = vmatpush.bf16.msra.mxu0 %v4628
    %5943 = vmatpush.bf16.msra.mxu0 %v4620
    %5944 = vmatpush.bf16.msra.mxu0 %v4612
    %5945 = vmatpush.bf16.msra.mxu0 %v4604
    %5946 = vmatmul.bf16.gmra.mxu0 %v2913
    %v5947 = vpop.f32.mrf.mxu0
    %v5948 = vadd.f32 %v5935, %v5947
    %v5949 = vpop.f32.mrf.mxu0
    %5950 = vdwg.mxu0
    %5951 = vmatpush.bf16.msra.mxu0 %v4724
    %5952 = vmatpush.bf16.msra.mxu0 %v4716
    %5953 = vmatpush.bf16.msra.mxu0 %v4708
    %5954 = vmatpush.bf16.msra.mxu0 %v4700
    %5955 = vmatpush.bf16.msra.mxu0 %v4692
    %5956 = vmatpush.bf16.msra.mxu0 %v4684
    %5957 = vmatpush.bf16.msra.mxu0 %v4676
    %5958 = vmatpush.bf16.msra.mxu0 %v4668
    %5959 = vmatmul.bf16.gmra.mxu0 %v2914
    %v5960 = vpop.f32.mrf.mxu0
    %v5961 = vadd.f32 %v5948, %v5960
    %v5962 = vpop.f32.mrf.mxu0
    %5963 = vdwg.mxu0
    %5964 = vmatpush.bf16.msra.mxu0 %v4788
    %5965 = vmatpush.bf16.msra.mxu0 %v4780
    %5966 = vmatpush.bf16.msra.mxu0 %v4772
    %5967 = vmatpush.bf16.msra.mxu0 %v4764
    %5968 = vmatpush.bf16.msra.mxu0 %v4756
    %5969 = vmatpush.bf16.msra.mxu0 %v4748
    %5970 = vmatpush.bf16.msra.mxu0 %v4740
    %5971 = vmatpush.bf16.msra.mxu0 %v4732
    %5972 = vmatmul.bf16.gmra.mxu0 %v2915
    %v5973 = vpop.f32.mrf.mxu0
    %v5974 = vadd.f32 %v5961, %v5973
    %v5975 = vpop.f32.mrf.mxu0
    %5976 = vdwg.mxu0
    %5977 = vmatpush.bf16.msra.mxu0 %v4852
    %5978 = vmatpush.bf16.msra.mxu0 %v4844
    %5979 = vmatpush.bf16.msra.mxu0 %v4836
    %5980 = vmatpush.bf16.msra.mxu0 %v4828
    %5981 = vmatpush.bf16.msra.mxu0 %v4820
    %5982 = vmatpush.bf16.msra.mxu0 %v4812
    %5983 = vmatpush.bf16.msra.mxu0 %v4804
    %5984 = vmatpush.bf16.msra.mxu0 %v4796
    %5985 = vmatmul.bf16.gmra.mxu0 %v2916
    %v5986 = vpop.f32.mrf.mxu0
    %v5987 = vadd.f32 %v5974, %v5986
    %v5988 = vpop.f32.mrf.mxu0
    %5989 = vdwg.mxu0
    %5990 = vmatpush.bf16.msra.mxu0 %v4916
    %5991 = vmatpush.bf16.msra.mxu0 %v4908
    %5992 = vmatpush.bf16.msra.mxu0 %v4900
    %5993 = vmatpush.bf16.msra.mxu0 %v4892
    %5994 = vmatpush.bf16.msra.mxu0 %v4884
    %5995 = vmatpush.bf16.msra.mxu0 %v4876
    %5996 = vmatpush.bf16.msra.mxu0 %v4868
    %5997 = vmatpush.bf16.msra.mxu0 %v4860
    %5998 = vmatmul.bf16.gmra.mxu0 %v2917
    %v5999 = vpop.f32.mrf.mxu0
    %v6000 = vadd.f32 %v5987, %v5999
    %v6001 = vpop.f32.mrf.mxu0
    %6002 = vdwg.mxu0
    %6003 = vmatpush.bf16.msra.mxu0 %v4980
    %6004 = vmatpush.bf16.msra.mxu0 %v4972
    %6005 = vmatpush.bf16.msra.mxu0 %v4964
    %6006 = vmatpush.bf16.msra.mxu0 %v4956
    %6007 = vmatpush.bf16.msra.mxu0 %v4948
    %6008 = vmatpush.bf16.msra.mxu0 %v4940
    %6009 = vmatpush.bf16.msra.mxu0 %v4932
    %6010 = vmatpush.bf16.msra.mxu0 %v4924
    %6011 = vmatmul.bf16.gmra.mxu0 %v2918
    %v6012 = vpop.f32.mrf.mxu0
    %v6013 = vadd.f32 %v6000, %v6012
    %v6014 = vpop.f32.mrf.mxu0
    %6015 = vdwg.mxu0
    %6016 = vmatpush.bf16.msra.mxu0 %v4533
    %6017 = vmatpush.bf16.msra.mxu0 %v4525
    %6018 = vmatpush.bf16.msra.mxu0 %v4517
    %6019 = vmatpush.bf16.msra.mxu0 %v4509
    %6020 = vmatpush.bf16.msra.mxu0 %v4501
    %6021 = vmatpush.bf16.msra.mxu0 %v4493
    %6022 = vmatpush.bf16.msra.mxu0 %v4485
    %6023 = vmatpush.bf16.msra.mxu0 %v4477
    %6024 = vmatmul.bf16.gmra.mxu0 %v2911
    %v6025 = vpop.f32.mrf.mxu0
    %v6026 = vadd.f32 %v2925, %v6025
    %v6027 = vpop.f32.mrf.mxu0
    %6028 = vdwg.mxu0
    %6029 = vmatpush.bf16.msra.mxu0 %v4597
    %6030 = vmatpush.bf16.msra.mxu0 %v4589
    %6031 = vmatpush.bf16.msra.mxu0 %v4581
    %6032 = vmatpush.bf16.msra.mxu0 %v4573
    %6033 = vmatpush.bf16.msra.mxu0 %v4565
    %6034 = vmatpush.bf16.msra.mxu0 %v4557
    %6035 = vmatpush.bf16.msra.mxu0 %v4549
    %6036 = vmatpush.bf16.msra.mxu0 %v4541
    %6037 = vmatmul.bf16.gmra.mxu0 %v2912
    %v6038 = vpop.f32.mrf.mxu0
    %v6039 = vadd.f32 %v6026, %v6038
    %v6040 = vpop.f32.mrf.mxu0
    %6041 = vdwg.mxu0
    %6042 = vmatpush.bf16.msra.mxu0 %v4661
    %6043 = vmatpush.bf16.msra.mxu0 %v4653
    %6044 = vmatpush.bf16.msra.mxu0 %v4645
    %6045 = vmatpush.bf16.msra.mxu0 %v4637
    %6046 = vmatpush.bf16.msra.mxu0 %v4629
    %6047 = vmatpush.bf16.msra.mxu0 %v4621
    %6048 = vmatpush.bf16.msra.mxu0 %v4613
    %6049 = vmatpush.bf16.msra.mxu0 %v4605
    %6050 = vmatmul.bf16.gmra.mxu0 %v2913
    %v6051 = vpop.f32.mrf.mxu0
    %v6052 = vadd.f32 %v6039, %v6051
    %v6053 = vpop.f32.mrf.mxu0
    %6054 = vdwg.mxu0
    %6055 = vmatpush.bf16.msra.mxu0 %v4725
    %6056 = vmatpush.bf16.msra.mxu0 %v4717
    %6057 = vmatpush.bf16.msra.mxu0 %v4709
    %6058 = vmatpush.bf16.msra.mxu0 %v4701
    %6059 = vmatpush.bf16.msra.mxu0 %v4693
    %6060 = vmatpush.bf16.msra.mxu0 %v4685
    %6061 = vmatpush.bf16.msra.mxu0 %v4677
    %6062 = vmatpush.bf16.msra.mxu0 %v4669
    %6063 = vmatmul.bf16.gmra.mxu0 %v2914
    %v6064 = vpop.f32.mrf.mxu0
    %v6065 = vadd.f32 %v6052, %v6064
    %v6066 = vpop.f32.mrf.mxu0
    %6067 = vdwg.mxu0
    %6068 = vmatpush.bf16.msra.mxu0 %v4789
    %6069 = vmatpush.bf16.msra.mxu0 %v4781
    %6070 = vmatpush.bf16.msra.mxu0 %v4773
    %6071 = vmatpush.bf16.msra.mxu0 %v4765
    %6072 = vmatpush.bf16.msra.mxu0 %v4757
    %6073 = vmatpush.bf16.msra.mxu0 %v4749
    %6074 = vmatpush.bf16.msra.mxu0 %v4741
    %6075 = vmatpush.bf16.msra.mxu0 %v4733
    %6076 = vmatmul.bf16.gmra.mxu0 %v2915
    %v6077 = vpop.f32.mrf.mxu0
    %v6078 = vadd.f32 %v6065, %v6077
    %v6079 = vpop.f32.mrf.mxu0
    %6080 = vdwg.mxu0
    %6081 = vmatpush.bf16.msra.mxu0 %v4853
    %6082 = vmatpush.bf16.msra.mxu0 %v4845
    %6083 = vmatpush.bf16.msra.mxu0 %v4837
    %6084 = vmatpush.bf16.msra.mxu0 %v4829
    %6085 = vmatpush.bf16.msra.mxu0 %v4821
    %6086 = vmatpush.bf16.msra.mxu0 %v4813
    %6087 = vmatpush.bf16.msra.mxu0 %v4805
    %6088 = vmatpush.bf16.msra.mxu0 %v4797
    %6089 = vmatmul.bf16.gmra.mxu0 %v2916
    %v6090 = vpop.f32.mrf.mxu0
    %v6091 = vadd.f32 %v6078, %v6090
    %v6092 = vpop.f32.mrf.mxu0
    %6093 = vdwg.mxu0
    %6094 = vmatpush.bf16.msra.mxu0 %v4917
    %6095 = vmatpush.bf16.msra.mxu0 %v4909
    %6096 = vmatpush.bf16.msra.mxu0 %v4901
    %6097 = vmatpush.bf16.msra.mxu0 %v4893
    %6098 = vmatpush.bf16.msra.mxu0 %v4885
    %6099 = vmatpush.bf16.msra.mxu0 %v4877
    %6100 = vmatpush.bf16.msra.mxu0 %v4869
    %6101 = vmatpush.bf16.msra.mxu0 %v4861
    %6102 = vmatmul.bf16.gmra.mxu0 %v2917
    %v6103 = vpop.f32.mrf.mxu0
    %v6104 = vadd.f32 %v6091, %v6103
    %v6105 = vpop.f32.mrf.mxu0
    %6106 = vdwg.mxu0
    %6107 = vmatpush.bf16.msra.mxu0 %v4981
    %6108 = vmatpush.bf16.msra.mxu0 %v4973
    %6109 = vmatpush.bf16.msra.mxu0 %v4965
    %6110 = vmatpush.bf16.msra.mxu0 %v4957
    %6111 = vmatpush.bf16.msra.mxu0 %v4949
    %6112 = vmatpush.bf16.msra.mxu0 %v4941
    %6113 = vmatpush.bf16.msra.mxu0 %v4933
    %6114 = vmatpush.bf16.msra.mxu0 %v4925
    %6115 = vmatmul.bf16.gmra.mxu0 %v2918
    %v6116 = vpop.f32.mrf.mxu0
    %v6117 = vadd.f32 %v6104, %v6116
    %v6118 = vpop.f32.mrf.mxu0
    %6119 = vdwg.mxu0
    %6120 = vmatpush.bf16.msra.mxu0 %v4534
    %6121 = vmatpush.bf16.msra.mxu0 %v4526
    %6122 = vmatpush.bf16.msra.mxu0 %v4518
    %6123 = vmatpush.bf16.msra.mxu0 %v4510
    %6124 = vmatpush.bf16.msra.mxu0 %v4502
    %6125 = vmatpush.bf16.msra.mxu0 %v4494
    %6126 = vmatpush.bf16.msra.mxu0 %v4486
    %6127 = vmatpush.bf16.msra.mxu0 %v4478
    %6128 = vmatmul.bf16.gmra.mxu0 %v2911
    %v6129 = vpop.f32.mrf.mxu0
    %v6130 = vadd.f32 %v2926, %v6129
    %v6131 = vpop.f32.mrf.mxu0
    %6132 = vdwg.mxu0
    %6133 = vmatpush.bf16.msra.mxu0 %v4598
    %6134 = vmatpush.bf16.msra.mxu0 %v4590
    %6135 = vmatpush.bf16.msra.mxu0 %v4582
    %6136 = vmatpush.bf16.msra.mxu0 %v4574
    %6137 = vmatpush.bf16.msra.mxu0 %v4566
    %6138 = vmatpush.bf16.msra.mxu0 %v4558
    %6139 = vmatpush.bf16.msra.mxu0 %v4550
    %6140 = vmatpush.bf16.msra.mxu0 %v4542
    %6141 = vmatmul.bf16.gmra.mxu0 %v2912
    %v6142 = vpop.f32.mrf.mxu0
    %v6143 = vadd.f32 %v6130, %v6142
    %v6144 = vpop.f32.mrf.mxu0
    %6145 = vdwg.mxu0
    %6146 = vmatpush.bf16.msra.mxu0 %v4662
    %6147 = vmatpush.bf16.msra.mxu0 %v4654
    %6148 = vmatpush.bf16.msra.mxu0 %v4646
    %6149 = vmatpush.bf16.msra.mxu0 %v4638
    %6150 = vmatpush.bf16.msra.mxu0 %v4630
    %6151 = vmatpush.bf16.msra.mxu0 %v4622
    %6152 = vmatpush.bf16.msra.mxu0 %v4614
    %6153 = vmatpush.bf16.msra.mxu0 %v4606
    %6154 = vmatmul.bf16.gmra.mxu0 %v2913
    %v6155 = vpop.f32.mrf.mxu0
    %v6156 = vadd.f32 %v6143, %v6155
    %v6157 = vpop.f32.mrf.mxu0
    %6158 = vdwg.mxu0
    %6159 = vmatpush.bf16.msra.mxu0 %v4726
    %6160 = vmatpush.bf16.msra.mxu0 %v4718
    %6161 = vmatpush.bf16.msra.mxu0 %v4710
    %6162 = vmatpush.bf16.msra.mxu0 %v4702
    %6163 = vmatpush.bf16.msra.mxu0 %v4694
    %6164 = vmatpush.bf16.msra.mxu0 %v4686
    %6165 = vmatpush.bf16.msra.mxu0 %v4678
    %6166 = vmatpush.bf16.msra.mxu0 %v4670
    %6167 = vmatmul.bf16.gmra.mxu0 %v2914
    %v6168 = vpop.f32.mrf.mxu0
    %v6169 = vadd.f32 %v6156, %v6168
    %v6170 = vpop.f32.mrf.mxu0
    %6171 = vdwg.mxu0
    %6172 = vmatpush.bf16.msra.mxu0 %v4790
    %6173 = vmatpush.bf16.msra.mxu0 %v4782
    %6174 = vmatpush.bf16.msra.mxu0 %v4774
    %6175 = vmatpush.bf16.msra.mxu0 %v4766
    %6176 = vmatpush.bf16.msra.mxu0 %v4758
    %6177 = vmatpush.bf16.msra.mxu0 %v4750
    %6178 = vmatpush.bf16.msra.mxu0 %v4742
    %6179 = vmatpush.bf16.msra.mxu0 %v4734
    %6180 = vmatmul.bf16.gmra.mxu0 %v2915
    %v6181 = vpop.f32.mrf.mxu0
    %v6182 = vadd.f32 %v6169, %v6181
    %v6183 = vpop.f32.mrf.mxu0
    %6184 = vdwg.mxu0
    %6185 = vmatpush.bf16.msra.mxu0 %v4854
    %6186 = vmatpush.bf16.msra.mxu0 %v4846
    %6187 = vmatpush.bf16.msra.mxu0 %v4838
    %6188 = vmatpush.bf16.msra.mxu0 %v4830
    %6189 = vmatpush.bf16.msra.mxu0 %v4822
    %6190 = vmatpush.bf16.msra.mxu0 %v4814
    %6191 = vmatpush.bf16.msra.mxu0 %v4806
    %6192 = vmatpush.bf16.msra.mxu0 %v4798
    %6193 = vmatmul.bf16.gmra.mxu0 %v2916
    %v6194 = vpop.f32.mrf.mxu0
    %v6195 = vadd.f32 %v6182, %v6194
    %v6196 = vpop.f32.mrf.mxu0
    %6197 = vdwg.mxu0
    %6198 = vmatpush.bf16.msra.mxu0 %v4918
    %6199 = vmatpush.bf16.msra.mxu0 %v4910
    %6200 = vmatpush.bf16.msra.mxu0 %v4902
    %6201 = vmatpush.bf16.msra.mxu0 %v4894
    %6202 = vmatpush.bf16.msra.mxu0 %v4886
    %6203 = vmatpush.bf16.msra.mxu0 %v4878
    %6204 = vmatpush.bf16.msra.mxu0 %v4870
    %6205 = vmatpush.bf16.msra.mxu0 %v4862
    %6206 = vmatmul.bf16.gmra.mxu0 %v2917
    %v6207 = vpop.f32.mrf.mxu0
    %v6208 = vadd.f32 %v6195, %v6207
    %v6209 = vpop.f32.mrf.mxu0
    %6210 = vdwg.mxu0
    %6211 = vmatpush.bf16.msra.mxu0 %v4982
    %6212 = vmatpush.bf16.msra.mxu0 %v4974
    %6213 = vmatpush.bf16.msra.mxu0 %v4966
    %6214 = vmatpush.bf16.msra.mxu0 %v4958
    %6215 = vmatpush.bf16.msra.mxu0 %v4950
    %6216 = vmatpush.bf16.msra.mxu0 %v4942
    %6217 = vmatpush.bf16.msra.mxu0 %v4934
    %6218 = vmatpush.bf16.msra.mxu0 %v4926
    %6219 = vmatmul.bf16.gmra.mxu0 %v2918
    %v6220 = vpop.f32.mrf.mxu0
    %v6221 = vadd.f32 %v6208, %v6220
    %v6222 = vpop.f32.mrf.mxu0
    %6223 = vdwg.mxu0
    %6224 = vmatpush.bf16.msra.mxu0 %v4535
    %6225 = vmatpush.bf16.msra.mxu0 %v4527
    %6226 = vmatpush.bf16.msra.mxu0 %v4519
    %6227 = vmatpush.bf16.msra.mxu0 %v4511
    %6228 = vmatpush.bf16.msra.mxu0 %v4503
    %6229 = vmatpush.bf16.msra.mxu0 %v4495
    %6230 = vmatpush.bf16.msra.mxu0 %v4487
    %6231 = vmatpush.bf16.msra.mxu0 %v4479
    %6232 = vmatmul.bf16.gmra.mxu0 %v2911
    %v6233 = vpop.f32.mrf.mxu0
    %v6234 = vadd.f32 %v2927, %v6233
    %v6235 = vpop.f32.mrf.mxu0
    %6236 = vdwg.mxu0
    %6237 = vmatpush.bf16.msra.mxu0 %v4599
    %6238 = vmatpush.bf16.msra.mxu0 %v4591
    %6239 = vmatpush.bf16.msra.mxu0 %v4583
    %6240 = vmatpush.bf16.msra.mxu0 %v4575
    %6241 = vmatpush.bf16.msra.mxu0 %v4567
    %6242 = vmatpush.bf16.msra.mxu0 %v4559
    %6243 = vmatpush.bf16.msra.mxu0 %v4551
    %6244 = vmatpush.bf16.msra.mxu0 %v4543
    %6245 = vmatmul.bf16.gmra.mxu0 %v2912
    %v6246 = vpop.f32.mrf.mxu0
    %v6247 = vadd.f32 %v6234, %v6246
    %v6248 = vpop.f32.mrf.mxu0
    %6249 = vdwg.mxu0
    %6250 = vmatpush.bf16.msra.mxu0 %v4663
    %6251 = vmatpush.bf16.msra.mxu0 %v4655
    %6252 = vmatpush.bf16.msra.mxu0 %v4647
    %6253 = vmatpush.bf16.msra.mxu0 %v4639
    %6254 = vmatpush.bf16.msra.mxu0 %v4631
    %6255 = vmatpush.bf16.msra.mxu0 %v4623
    %6256 = vmatpush.bf16.msra.mxu0 %v4615
    %6257 = vmatpush.bf16.msra.mxu0 %v4607
    %6258 = vmatmul.bf16.gmra.mxu0 %v2913
    %v6259 = vpop.f32.mrf.mxu0
    %v6260 = vadd.f32 %v6247, %v6259
    %v6261 = vpop.f32.mrf.mxu0
    %6262 = vdwg.mxu0
    %6263 = vmatpush.bf16.msra.mxu0 %v4727
    %6264 = vmatpush.bf16.msra.mxu0 %v4719
    %6265 = vmatpush.bf16.msra.mxu0 %v4711
    %6266 = vmatpush.bf16.msra.mxu0 %v4703
    %6267 = vmatpush.bf16.msra.mxu0 %v4695
    %6268 = vmatpush.bf16.msra.mxu0 %v4687
    %6269 = vmatpush.bf16.msra.mxu0 %v4679
    %6270 = vmatpush.bf16.msra.mxu0 %v4671
    %6271 = vmatmul.bf16.gmra.mxu0 %v2914
    %v6272 = vpop.f32.mrf.mxu0
    %v6273 = vadd.f32 %v6260, %v6272
    %v6274 = vpop.f32.mrf.mxu0
    %6275 = vdwg.mxu0
    %6276 = vmatpush.bf16.msra.mxu0 %v4791
    %6277 = vmatpush.bf16.msra.mxu0 %v4783
    %6278 = vmatpush.bf16.msra.mxu0 %v4775
    %6279 = vmatpush.bf16.msra.mxu0 %v4767
    %6280 = vmatpush.bf16.msra.mxu0 %v4759
    %6281 = vmatpush.bf16.msra.mxu0 %v4751
    %6282 = vmatpush.bf16.msra.mxu0 %v4743
    %6283 = vmatpush.bf16.msra.mxu0 %v4735
    %6284 = vmatmul.bf16.gmra.mxu0 %v2915
    %v6285 = vpop.f32.mrf.mxu0
    %v6286 = vadd.f32 %v6273, %v6285
    %v6287 = vpop.f32.mrf.mxu0
    %6288 = vdwg.mxu0
    %6289 = vmatpush.bf16.msra.mxu0 %v4855
    %6290 = vmatpush.bf16.msra.mxu0 %v4847
    %6291 = vmatpush.bf16.msra.mxu0 %v4839
    %6292 = vmatpush.bf16.msra.mxu0 %v4831
    %6293 = vmatpush.bf16.msra.mxu0 %v4823
    %6294 = vmatpush.bf16.msra.mxu0 %v4815
    %6295 = vmatpush.bf16.msra.mxu0 %v4807
    %6296 = vmatpush.bf16.msra.mxu0 %v4799
    %6297 = vmatmul.bf16.gmra.mxu0 %v2916
    %v6298 = vpop.f32.mrf.mxu0
    %v6299 = vadd.f32 %v6286, %v6298
    %v6300 = vpop.f32.mrf.mxu0
    %6301 = vdwg.mxu0
    %6302 = vmatpush.bf16.msra.mxu0 %v4919
    %6303 = vmatpush.bf16.msra.mxu0 %v4911
    %6304 = vmatpush.bf16.msra.mxu0 %v4903
    %6305 = vmatpush.bf16.msra.mxu0 %v4895
    %6306 = vmatpush.bf16.msra.mxu0 %v4887
    %6307 = vmatpush.bf16.msra.mxu0 %v4879
    %6308 = vmatpush.bf16.msra.mxu0 %v4871
    %6309 = vmatpush.bf16.msra.mxu0 %v4863
    %6310 = vmatmul.bf16.gmra.mxu0 %v2917
    %v6311 = vpop.f32.mrf.mxu0
    %v6312 = vadd.f32 %v6299, %v6311
    %v6313 = vpop.f32.mrf.mxu0
    %6314 = vdwg.mxu0
    %6315 = vmatpush.bf16.msra.mxu0 %v4983
    %6316 = vmatpush.bf16.msra.mxu0 %v4975
    %6317 = vmatpush.bf16.msra.mxu0 %v4967
    %6318 = vmatpush.bf16.msra.mxu0 %v4959
    %6319 = vmatpush.bf16.msra.mxu0 %v4951
    %6320 = vmatpush.bf16.msra.mxu0 %v4943
    %6321 = vmatpush.bf16.msra.mxu0 %v4935
    %6322 = vmatpush.bf16.msra.mxu0 %v4927
    %6323 = vmatmul.bf16.gmra.mxu0 %v2918
    %v6324 = vpop.f32.mrf.mxu0
    %v6325 = vadd.f32 %v6312, %v6324
    %v6326 = vpop.f32.mrf.mxu0
    %6327 = vdwg.mxu0
    %v6328 = vmax.f32 %v5597, 0.0
    %v6329 = vmax.f32 %v5701, 0.0
    %v6330 = vmax.f32 %v5805, 0.0
    %v6331 = vmax.f32 %v5909, 0.0
    %v6332 = vmax.f32 %v6013, 0.0
    %v6333 = vmax.f32 %v6117, 0.0
    %v6334 = vmax.f32 %v6221, 0.0
    %v6335 = vmax.f32 %v6325, 0.0
    %s6336 = smul.u32 %s2394, 4
    %s6337 = sshll.u32 %s6336, 4
    %6338 = dma.done %s88, %s6337
    %v6339 = vld [vmem:[#allocation5] sm:$0xff]
    %v6340 = vld [vmem:[#allocation5 + $0x8] sm:$0xff]
    %v6341 = vld [vmem:[#allocation5 + $0x10] sm:$0xff]
    %v6342 = vld [vmem:[#allocation5 + $0x18] sm:$0xff]
    %v6343 = vld [vmem:[#allocation5 + $0x20] sm:$0xff]
    %v6344 = vld [vmem:[#allocation5 + $0x28] sm:$0xff]
    %v6345 = vld [vmem:[#allocation5 + $0x30] sm:$0xff]
    %v6346 = vld [vmem:[#allocation5 + $0x38] sm:$0xff]
    %v6347 = vld [vmem:[#allocation5 + $0x40] sm:$0xff]
    %v6348 = vld [vmem:[#allocation5 + $0x48] sm:$0xff]
    %v6349 = vld [vmem:[#allocation5 + $0x50] sm:$0xff]
    %v6350 = vld [vmem:[#allocation5 + $0x58] sm:$0xff]
    %v6351 = vld [vmem:[#allocation5 + $0x60] sm:$0xff]
    %v6352 = vld [vmem:[#allocation5 + $0x68] sm:$0xff]
    %v6353 = vld [vmem:[#allocation5 + $0x70] sm:$0xff]
    %v6354 = vld [vmem:[#allocation5 + $0x78] sm:$0xff]
    %v6355 = vld [vmem:[#allocation5 + $0x80] sm:$0xff]
    %v6356 = vld [vmem:[#allocation5 + $0x88] sm:$0xff]
    %v6357 = vld [vmem:[#allocation5 + $0x90] sm:$0xff]
    %v6358 = vld [vmem:[#allocation5 + $0x98] sm:$0xff]
    %v6359 = vld [vmem:[#allocation5 + $0xa0] sm:$0xff]
    %v6360 = vld [vmem:[#allocation5 + $0xa8] sm:$0xff]
    %v6361 = vld [vmem:[#allocation5 + $0xb0] sm:$0xff]
    %v6362 = vld [vmem:[#allocation5 + $0xb8] sm:$0xff]
    %v6363 = vld [vmem:[#allocation5 + $0xc0] sm:$0xff]
    %v6364 = vld [vmem:[#allocation5 + $0xc8] sm:$0xff]
    %v6365 = vld [vmem:[#allocation5 + $0xd0] sm:$0xff]
    %v6366 = vld [vmem:[#allocation5 + $0xd8] sm:$0xff]
    %v6367 = vld [vmem:[#allocation5 + $0xe0] sm:$0xff]
    %v6368 = vld [vmem:[#allocation5 + $0xe8] sm:$0xff]
    %v6369 = vld [vmem:[#allocation5 + $0xf0] sm:$0xff]
    %v6370 = vld [vmem:[#allocation5 + $0xf8] sm:$0xff]
    %v6371 = vld [vmem:[#allocation5 + $0x100] sm:$0xff]
    %v6372 = vld [vmem:[#allocation5 + $0x108] sm:$0xff]
    %v6373 = vld [vmem:[#allocation5 + $0x110] sm:$0xff]
    %v6374 = vld [vmem:[#allocation5 + $0x118] sm:$0xff]
    %v6375 = vld [vmem:[#allocation5 + $0x120] sm:$0xff]
    %v6376 = vld [vmem:[#allocation5 + $0x128] sm:$0xff]
    %v6377 = vld [vmem:[#allocation5 + $0x130] sm:$0xff]
    %v6378 = vld [vmem:[#allocation5 + $0x138] sm:$0xff]
    %v6379 = vld [vmem:[#allocation5 + $0x140] sm:$0xff]
    %v6380 = vld [vmem:[#allocation5 + $0x148] sm:$0xff]
    %v6381 = vld [vmem:[#allocation5 + $0x150] sm:$0xff]
    %v6382 = vld [vmem:[#allocation5 + $0x158] sm:$0xff]
    %v6383 = vld [vmem:[#allocation5 + $0x160] sm:$0xff]
    %v6384 = vld [vmem:[#allocation5 + $0x168] sm:$0xff]
    %v6385 = vld [vmem:[#allocation5 + $0x170] sm:$0xff]
    %v6386 = vld [vmem:[#allocation5 + $0x178] sm:$0xff]
    %v6387 = vld [vmem:[#allocation5 + $0x180] sm:$0xff]
    %v6388 = vld [vmem:[#allocation5 + $0x188] sm:$0xff]
    %v6389 = vld [vmem:[#allocation5 + $0x190] sm:$0xff]
    %v6390 = vld [vmem:[#allocation5 + $0x198] sm:$0xff]
    %v6391 = vld [vmem:[#allocation5 + $0x1a0] sm:$0xff]
    %v6392 = vld [vmem:[#allocation5 + $0x1a8] sm:$0xff]
    %v6393 = vld [vmem:[#allocation5 + $0x1b0] sm:$0xff]
    %v6394 = vld [vmem:[#allocation5 + $0x1b8] sm:$0xff]
    %v6395 = vld [vmem:[#allocation5 + $0x1c0] sm:$0xff]
    %v6396 = vld [vmem:[#allocation5 + $0x1c8] sm:$0xff]
    %v6397 = vld [vmem:[#allocation5 + $0x1d0] sm:$0xff]
    %v6398 = vld [vmem:[#allocation5 + $0x1d8] sm:$0xff]
    %v6399 = vld [vmem:[#allocation5 + $0x1e0] sm:$0xff]
    %v6400 = vld [vmem:[#allocation5 + $0x1e8] sm:$0xff]
    %v6401 = vld [vmem:[#allocation5 + $0x1f0] sm:$0xff]
    %v6402 = vld [vmem:[#allocation5 + $0x1f8] sm:$0xff]
    %v6403 = vld [vmem:[#allocation5 + $0x200] sm:$0xff]
    %v6404 = vld [vmem:[#allocation5 + $0x208] sm:$0xff]
    %v6405 = vld [vmem:[#allocation5 + $0x210] sm:$0xff]
    %v6406 = vld [vmem:[#allocation5 + $0x218] sm:$0xff]
    %v6407 = vld [vmem:[#allocation5 + $0x220] sm:$0xff]
    %v6408 = vld [vmem:[#allocation5 + $0x228] sm:$0xff]
    %v6409 = vld [vmem:[#allocation5 + $0x230] sm:$0xff]
    %v6410 = vld [vmem:[#allocation5 + $0x238] sm:$0xff]
    %v6411 = vld [vmem:[#allocation5 + $0x240] sm:$0xff]
    %v6412 = vld [vmem:[#allocation5 + $0x248] sm:$0xff]
    %v6413 = vld [vmem:[#allocation5 + $0x250] sm:$0xff]
    %v6414 = vld [vmem:[#allocation5 + $0x258] sm:$0xff]
    %v6415 = vld [vmem:[#allocation5 + $0x260] sm:$0xff]
    %v6416 = vld [vmem:[#allocation5 + $0x268] sm:$0xff]
    %v6417 = vld [vmem:[#allocation5 + $0x270] sm:$0xff]
    %v6418 = vld [vmem:[#allocation5 + $0x278] sm:$0xff]
    %v6419 = vld [vmem:[#allocation5 + $0x280] sm:$0xff]
    %v6420 = vld [vmem:[#allocation5 + $0x288] sm:$0xff]
    %v6421 = vld [vmem:[#allocation5 + $0x290] sm:$0xff]
    %v6422 = vld [vmem:[#allocation5 + $0x298] sm:$0xff]
    %v6423 = vld [vmem:[#allocation5 + $0x2a0] sm:$0xff]
    %v6424 = vld [vmem:[#allocation5 + $0x2a8] sm:$0xff]
    %v6425 = vld [vmem:[#allocation5 + $0x2b0] sm:$0xff]
    %v6426 = vld [vmem:[#allocation5 + $0x2b8] sm:$0xff]
    %v6427 = vld [vmem:[#allocation5 + $0x2c0] sm:$0xff]
    %v6428 = vld [vmem:[#allocation5 + $0x2c8] sm:$0xff]
    %v6429 = vld [vmem:[#allocation5 + $0x2d0] sm:$0xff]
    %v6430 = vld [vmem:[#allocation5 + $0x2d8] sm:$0xff]
    %v6431 = vld [vmem:[#allocation5 + $0x2e0] sm:$0xff]
    %v6432 = vld [vmem:[#allocation5 + $0x2e8] sm:$0xff]
    %v6433 = vld [vmem:[#allocation5 + $0x2f0] sm:$0xff]
    %v6434 = vld [vmem:[#allocation5 + $0x2f8] sm:$0xff]
    %v6435 = vld [vmem:[#allocation5 + $0x300] sm:$0xff]
    %v6436 = vld [vmem:[#allocation5 + $0x308] sm:$0xff]
    %v6437 = vld [vmem:[#allocation5 + $0x310] sm:$0xff]
    %v6438 = vld [vmem:[#allocation5 + $0x318] sm:$0xff]
    %v6439 = vld [vmem:[#allocation5 + $0x320] sm:$0xff]
    %v6440 = vld [vmem:[#allocation5 + $0x328] sm:$0xff]
    %v6441 = vld [vmem:[#allocation5 + $0x330] sm:$0xff]
    %v6442 = vld [vmem:[#allocation5 + $0x338] sm:$0xff]
    %v6443 = vld [vmem:[#allocation5 + $0x340] sm:$0xff]
    %v6444 = vld [vmem:[#allocation5 + $0x348] sm:$0xff]
    %v6445 = vld [vmem:[#allocation5 + $0x350] sm:$0xff]
    %v6446 = vld [vmem:[#allocation5 + $0x358] sm:$0xff]
    %v6447 = vld [vmem:[#allocation5 + $0x360] sm:$0xff]
    %v6448 = vld [vmem:[#allocation5 + $0x368] sm:$0xff]
    %v6449 = vld [vmem:[#allocation5 + $0x370] sm:$0xff]
    %v6450 = vld [vmem:[#allocation5 + $0x378] sm:$0xff]
    %v6451 = vld [vmem:[#allocation5 + $0x380] sm:$0xff]
    %v6452 = vld [vmem:[#allocation5 + $0x388] sm:$0xff]
    %v6453 = vld [vmem:[#allocation5 + $0x390] sm:$0xff]
    %v6454 = vld [vmem:[#allocation5 + $0x398] sm:$0xff]
    %v6455 = vld [vmem:[#allocation5 + $0x3a0] sm:$0xff]
    %v6456 = vld [vmem:[#allocation5 + $0x3a8] sm:$0xff]
    %v6457 = vld [vmem:[#allocation5 + $0x3b0] sm:$0xff]
    %v6458 = vld [vmem:[#allocation5 + $0x3b8] sm:$0xff]
    %v6459 = vld [vmem:[#allocation5 + $0x3c0] sm:$0xff]
    %v6460 = vld [vmem:[#allocation5 + $0x3c8] sm:$0xff]
    %v6461 = vld [vmem:[#allocation5 + $0x3d0] sm:$0xff]
    %v6462 = vld [vmem:[#allocation5 + $0x3d8] sm:$0xff]
    %v6463 = vld [vmem:[#allocation5 + $0x3e0] sm:$0xff]
    %v6464 = vld [vmem:[#allocation5 + $0x3e8] sm:$0xff]
    %v6465 = vld [vmem:[#allocation5 + $0x3f0] sm:$0xff]
    %v6466 = vld [vmem:[#allocation5 + $0x3f8] sm:$0xff]
    %v6467 = vld [vmem:[#allocation5 + $0x400] sm:$0xff]
    %v6468 = vld [vmem:[#allocation5 + $0x408] sm:$0xff]
    %v6469 = vld [vmem:[#allocation5 + $0x410] sm:$0xff]
    %v6470 = vld [vmem:[#allocation5 + $0x418] sm:$0xff]
    %v6471 = vld [vmem:[#allocation5 + $0x420] sm:$0xff]
    %v6472 = vld [vmem:[#allocation5 + $0x428] sm:$0xff]
    %v6473 = vld [vmem:[#allocation5 + $0x430] sm:$0xff]
    %v6474 = vld [vmem:[#allocation5 + $0x438] sm:$0xff]
    %v6475 = vld [vmem:[#allocation5 + $0x440] sm:$0xff]
    %v6476 = vld [vmem:[#allocation5 + $0x448] sm:$0xff]
    %v6477 = vld [vmem:[#allocation5 + $0x450] sm:$0xff]
    %v6478 = vld [vmem:[#allocation5 + $0x458] sm:$0xff]
    %v6479 = vld [vmem:[#allocation5 + $0x460] sm:$0xff]
    %v6480 = vld [vmem:[#allocation5 + $0x468] sm:$0xff]
    %v6481 = vld [vmem:[#allocation5 + $0x470] sm:$0xff]
    %v6482 = vld [vmem:[#allocation5 + $0x478] sm:$0xff]
    %v6483 = vld [vmem:[#allocation5 + $0x480] sm:$0xff]
    %v6484 = vld [vmem:[#allocation5 + $0x488] sm:$0xff]
    %v6485 = vld [vmem:[#allocation5 + $0x490] sm:$0xff]
    %v6486 = vld [vmem:[#allocation5 + $0x498] sm:$0xff]
    %v6487 = vld [vmem:[#allocation5 + $0x4a0] sm:$0xff]
    %v6488 = vld [vmem:[#allocation5 + $0x4a8] sm:$0xff]
    %v6489 = vld [vmem:[#allocation5 + $0x4b0] sm:$0xff]
    %v6490 = vld [vmem:[#allocation5 + $0x4b8] sm:$0xff]
    %v6491 = vld [vmem:[#allocation5 + $0x4c0] sm:$0xff]
    %v6492 = vld [vmem:[#allocation5 + $0x4c8] sm:$0xff]
    %v6493 = vld [vmem:[#allocation5 + $0x4d0] sm:$0xff]
    %v6494 = vld [vmem:[#allocation5 + $0x4d8] sm:$0xff]
    %v6495 = vld [vmem:[#allocation5 + $0x4e0] sm:$0xff]
    %v6496 = vld [vmem:[#allocation5 + $0x4e8] sm:$0xff]
    %v6497 = vld [vmem:[#allocation5 + $0x4f0] sm:$0xff]
    %v6498 = vld [vmem:[#allocation5 + $0x4f8] sm:$0xff]
    %v6499 = vld [vmem:[#allocation5 + $0x500] sm:$0xff]
    %v6500 = vld [vmem:[#allocation5 + $0x508] sm:$0xff]
    %v6501 = vld [vmem:[#allocation5 + $0x510] sm:$0xff]
    %v6502 = vld [vmem:[#allocation5 + $0x518] sm:$0xff]
    %v6503 = vld [vmem:[#allocation5 + $0x520] sm:$0xff]
    %v6504 = vld [vmem:[#allocation5 + $0x528] sm:$0xff]
    %v6505 = vld [vmem:[#allocation5 + $0x530] sm:$0xff]
    %v6506 = vld [vmem:[#allocation5 + $0x538] sm:$0xff]
    %v6507 = vld [vmem:[#allocation5 + $0x540] sm:$0xff]
    %v6508 = vld [vmem:[#allocation5 + $0x548] sm:$0xff]
    %v6509 = vld [vmem:[#allocation5 + $0x550] sm:$0xff]
    %v6510 = vld [vmem:[#allocation5 + $0x558] sm:$0xff]
    %v6511 = vld [vmem:[#allocation5 + $0x560] sm:$0xff]
    %v6512 = vld [vmem:[#allocation5 + $0x568] sm:$0xff]
    %v6513 = vld [vmem:[#allocation5 + $0x570] sm:$0xff]
    %v6514 = vld [vmem:[#allocation5 + $0x578] sm:$0xff]
    %v6515 = vld [vmem:[#allocation5 + $0x580] sm:$0xff]
    %v6516 = vld [vmem:[#allocation5 + $0x588] sm:$0xff]
    %v6517 = vld [vmem:[#allocation5 + $0x590] sm:$0xff]
    %v6518 = vld [vmem:[#allocation5 + $0x598] sm:$0xff]
    %v6519 = vld [vmem:[#allocation5 + $0x5a0] sm:$0xff]
    %v6520 = vld [vmem:[#allocation5 + $0x5a8] sm:$0xff]
    %v6521 = vld [vmem:[#allocation5 + $0x5b0] sm:$0xff]
    %v6522 = vld [vmem:[#allocation5 + $0x5b8] sm:$0xff]
    %v6523 = vld [vmem:[#allocation5 + $0x5c0] sm:$0xff]
    %v6524 = vld [vmem:[#allocation5 + $0x5c8] sm:$0xff]
    %v6525 = vld [vmem:[#allocation5 + $0x5d0] sm:$0xff]
    %v6526 = vld [vmem:[#allocation5 + $0x5d8] sm:$0xff]
    %v6527 = vld [vmem:[#allocation5 + $0x5e0] sm:$0xff]
    %v6528 = vld [vmem:[#allocation5 + $0x5e8] sm:$0xff]
    %v6529 = vld [vmem:[#allocation5 + $0x5f0] sm:$0xff]
    %v6530 = vld [vmem:[#allocation5 + $0x5f8] sm:$0xff]
    %v6531 = vld [vmem:[#allocation5 + $0x600] sm:$0xff]
    %v6532 = vld [vmem:[#allocation5 + $0x608] sm:$0xff]
    %v6533 = vld [vmem:[#allocation5 + $0x610] sm:$0xff]
    %v6534 = vld [vmem:[#allocation5 + $0x618] sm:$0xff]
    %v6535 = vld [vmem:[#allocation5 + $0x620] sm:$0xff]
    %v6536 = vld [vmem:[#allocation5 + $0x628] sm:$0xff]
    %v6537 = vld [vmem:[#allocation5 + $0x630] sm:$0xff]
    %v6538 = vld [vmem:[#allocation5 + $0x638] sm:$0xff]
    %v6539 = vld [vmem:[#allocation5 + $0x640] sm:$0xff]
    %v6540 = vld [vmem:[#allocation5 + $0x648] sm:$0xff]
    %v6541 = vld [vmem:[#allocation5 + $0x650] sm:$0xff]
    %v6542 = vld [vmem:[#allocation5 + $0x658] sm:$0xff]
    %v6543 = vld [vmem:[#allocation5 + $0x660] sm:$0xff]
    %v6544 = vld [vmem:[#allocation5 + $0x668] sm:$0xff]
    %v6545 = vld [vmem:[#allocation5 + $0x670] sm:$0xff]
    %v6546 = vld [vmem:[#allocation5 + $0x678] sm:$0xff]
    %v6547 = vld [vmem:[#allocation5 + $0x680] sm:$0xff]
    %v6548 = vld [vmem:[#allocation5 + $0x688] sm:$0xff]
    %v6549 = vld [vmem:[#allocation5 + $0x690] sm:$0xff]
    %v6550 = vld [vmem:[#allocation5 + $0x698] sm:$0xff]
    %v6551 = vld [vmem:[#allocation5 + $0x6a0] sm:$0xff]
    %v6552 = vld [vmem:[#allocation5 + $0x6a8] sm:$0xff]
    %v6553 = vld [vmem:[#allocation5 + $0x6b0] sm:$0xff]
    %v6554 = vld [vmem:[#allocation5 + $0x6b8] sm:$0xff]
    %v6555 = vld [vmem:[#allocation5 + $0x6c0] sm:$0xff]
    %v6556 = vld [vmem:[#allocation5 + $0x6c8] sm:$0xff]
    %v6557 = vld [vmem:[#allocation5 + $0x6d0] sm:$0xff]
    %v6558 = vld [vmem:[#allocation5 + $0x6d8] sm:$0xff]
    %v6559 = vld [vmem:[#allocation5 + $0x6e0] sm:$0xff]
    %v6560 = vld [vmem:[#allocation5 + $0x6e8] sm:$0xff]
    %v6561 = vld [vmem:[#allocation5 + $0x6f0] sm:$0xff]
    %v6562 = vld [vmem:[#allocation5 + $0x6f8] sm:$0xff]
    %v6563 = vld [vmem:[#allocation5 + $0x700] sm:$0xff]
    %v6564 = vld [vmem:[#allocation5 + $0x708] sm:$0xff]
    %v6565 = vld [vmem:[#allocation5 + $0x710] sm:$0xff]
    %v6566 = vld [vmem:[#allocation5 + $0x718] sm:$0xff]
    %v6567 = vld [vmem:[#allocation5 + $0x720] sm:$0xff]
    %v6568 = vld [vmem:[#allocation5 + $0x728] sm:$0xff]
    %v6569 = vld [vmem:[#allocation5 + $0x730] sm:$0xff]
    %v6570 = vld [vmem:[#allocation5 + $0x738] sm:$0xff]
    %v6571 = vld [vmem:[#allocation5 + $0x740] sm:$0xff]
    %v6572 = vld [vmem:[#allocation5 + $0x748] sm:$0xff]
    %v6573 = vld [vmem:[#allocation5 + $0x750] sm:$0xff]
    %v6574 = vld [vmem:[#allocation5 + $0x758] sm:$0xff]
    %v6575 = vld [vmem:[#allocation5 + $0x760] sm:$0xff]
    %v6576 = vld [vmem:[#allocation5 + $0x768] sm:$0xff]
    %v6577 = vld [vmem:[#allocation5 + $0x770] sm:$0xff]
    %v6578 = vld [vmem:[#allocation5 + $0x778] sm:$0xff]
    %v6579 = vld [vmem:[#allocation5 + $0x780] sm:$0xff]
    %v6580 = vld [vmem:[#allocation5 + $0x788] sm:$0xff]
    %v6581 = vld [vmem:[#allocation5 + $0x790] sm:$0xff]
    %v6582 = vld [vmem:[#allocation5 + $0x798] sm:$0xff]
    %v6583 = vld [vmem:[#allocation5 + $0x7a0] sm:$0xff]
    %v6584 = vld [vmem:[#allocation5 + $0x7a8] sm:$0xff]
    %v6585 = vld [vmem:[#allocation5 + $0x7b0] sm:$0xff]
    %v6586 = vld [vmem:[#allocation5 + $0x7b8] sm:$0xff]
    %v6587 = vld [vmem:[#allocation5 + $0x7c0] sm:$0xff]
    %v6588 = vld [vmem:[#allocation5 + $0x7c8] sm:$0xff]
    %v6589 = vld [vmem:[#allocation5 + $0x7d0] sm:$0xff]
    %v6590 = vld [vmem:[#allocation5 + $0x7d8] sm:$0xff]
    %v6591 = vld [vmem:[#allocation5 + $0x7e0] sm:$0xff]
    %v6592 = vld [vmem:[#allocation5 + $0x7e8] sm:$0xff]
    %v6593 = vld [vmem:[#allocation5 + $0x7f0] sm:$0xff]
    %v6594 = vld [vmem:[#allocation5 + $0x7f8] sm:$0xff]
    %v6595 = vld [vmem:[#allocation13 + $0x14] sm:$0xf]
    %v6596 = vpack.c.bf16 %v6328, %v6328
    %v6597 = vpack.c.bf16 %v6329, %v6329
    %v6598 = vpack.c.bf16 %v6330, %v6330
    %v6599 = vpack.c.bf16 %v6331, %v6331
    %v6600 = vpack.c.bf16 %v6332, %v6332
    %v6601 = vpack.c.bf16 %v6333, %v6333
    %v6602 = vpack.c.bf16 %v6334, %v6334
    %v6603 = vpack.c.bf16 %v6335, %v6335
    %v6605 = vperm.slane %v6595, 0
    %v6606 = vperm.slane %v6595, 1
    %v6607 = vperm.slane %v6595, 2
    %v6608 = vperm.slane %v6595, 3
    %v6869 = vunpack.c.l.b16 %v6339
    %v6870 = vunpack.c.h.b16 %v6339
    %v6871 = vunpack.c.l.b16 %v6340
    %v6872 = vunpack.c.h.b16 %v6340
    %v6873 = vunpack.c.l.b16 %v6341
    %v6874 = vunpack.c.h.b16 %v6341
    %v6875 = vunpack.c.l.b16 %v6342
    %v6876 = vunpack.c.h.b16 %v6342
    %v6877 = vunpack.c.l.b16 %v6343
    %v6878 = vunpack.c.h.b16 %v6343
    %v6879 = vunpack.c.l.b16 %v6344
    %v6880 = vunpack.c.h.b16 %v6344
    %v6881 = vunpack.c.l.b16 %v6345
    %v6882 = vunpack.c.h.b16 %v6345
    %v6883 = vunpack.c.l.b16 %v6346
    %v6884 = vunpack.c.h.b16 %v6346
    %v6885 = vunpack.c.l.b16 %v6347
    %v6886 = vunpack.c.h.b16 %v6347
    %v6887 = vunpack.c.l.b16 %v6348
    %v6888 = vunpack.c.h.b16 %v6348
    %v6889 = vunpack.c.l.b16 %v6349
    %v6890 = vunpack.c.h.b16 %v6349
    %v6891 = vunpack.c.l.b16 %v6350
    %v6892 = vunpack.c.h.b16 %v6350
    %v6893 = vunpack.c.l.b16 %v6351
    %v6894 = vunpack.c.h.b16 %v6351
    %v6895 = vunpack.c.l.b16 %v6352
    %v6896 = vunpack.c.h.b16 %v6352
    %v6897 = vunpack.c.l.b16 %v6353
    %v6898 = vunpack.c.h.b16 %v6353
    %v6899 = vunpack.c.l.b16 %v6354
    %v6900 = vunpack.c.h.b16 %v6354
    %v6901 = vunpack.c.l.b16 %v6355
    %v6902 = vunpack.c.h.b16 %v6355
    %v6903 = vunpack.c.l.b16 %v6356
    %v6904 = vunpack.c.h.b16 %v6356
    %v6905 = vunpack.c.l.b16 %v6357
    %v6906 = vunpack.c.h.b16 %v6357
    %v6907 = vunpack.c.l.b16 %v6358
    %v6908 = vunpack.c.h.b16 %v6358
    %v6909 = vunpack.c.l.b16 %v6359
    %v6910 = vunpack.c.h.b16 %v6359
    %v6911 = vunpack.c.l.b16 %v6360
    %v6912 = vunpack.c.h.b16 %v6360
    %v6913 = vunpack.c.l.b16 %v6361
    %v6914 = vunpack.c.h.b16 %v6361
    %v6915 = vunpack.c.l.b16 %v6362
    %v6916 = vunpack.c.h.b16 %v6362
    %v6917 = vunpack.c.l.b16 %v6363
    %v6918 = vunpack.c.h.b16 %v6363
    %v6919 = vunpack.c.l.b16 %v6364
    %v6920 = vunpack.c.h.b16 %v6364
    %v6921 = vunpack.c.l.b16 %v6365
    %v6922 = vunpack.c.h.b16 %v6365
    %v6923 = vunpack.c.l.b16 %v6366
    %v6924 = vunpack.c.h.b16 %v6366
    %v6925 = vunpack.c.l.b16 %v6367
    %v6926 = vunpack.c.h.b16 %v6367
    %v6927 = vunpack.c.l.b16 %v6368
    %v6928 = vunpack.c.h.b16 %v6368
    %v6929 = vunpack.c.l.b16 %v6369
    %v6930 = vunpack.c.h.b16 %v6369
    %v6931 = vunpack.c.l.b16 %v6370
    %v6932 = vunpack.c.h.b16 %v6370
    %v6933 = vunpack.c.l.b16 %v6371
    %v6934 = vunpack.c.h.b16 %v6371
    %v6935 = vunpack.c.l.b16 %v6372
    %v6936 = vunpack.c.h.b16 %v6372
    %v6937 = vunpack.c.l.b16 %v6373
    %v6938 = vunpack.c.h.b16 %v6373
    %v6939 = vunpack.c.l.b16 %v6374
    %v6940 = vunpack.c.h.b16 %v6374
    %v6941 = vunpack.c.l.b16 %v6375
    %v6942 = vunpack.c.h.b16 %v6375
    %v6943 = vunpack.c.l.b16 %v6376
    %v6944 = vunpack.c.h.b16 %v6376
    %v6945 = vunpack.c.l.b16 %v6377
    %v6946 = vunpack.c.h.b16 %v6377
    %v6947 = vunpack.c.l.b16 %v6378
    %v6948 = vunpack.c.h.b16 %v6378
    %v6949 = vunpack.c.l.b16 %v6379
    %v6950 = vunpack.c.h.b16 %v6379
    %v6951 = vunpack.c.l.b16 %v6380
    %v6952 = vunpack.c.h.b16 %v6380
    %v6953 = vunpack.c.l.b16 %v6381
    %v6954 = vunpack.c.h.b16 %v6381
    %v6955 = vunpack.c.l.b16 %v6382
    %v6956 = vunpack.c.h.b16 %v6382
    %v6957 = vunpack.c.l.b16 %v6383
    %v6958 = vunpack.c.h.b16 %v6383
    %v6959 = vunpack.c.l.b16 %v6384
    %v6960 = vunpack.c.h.b16 %v6384
    %v6961 = vunpack.c.l.b16 %v6385
    %v6962 = vunpack.c.h.b16 %v6385
    %v6963 = vunpack.c.l.b16 %v6386
    %v6964 = vunpack.c.h.b16 %v6386
    %v6965 = vunpack.c.l.b16 %v6387
    %v6966 = vunpack.c.h.b16 %v6387
    %v6967 = vunpack.c.l.b16 %v6388
    %v6968 = vunpack.c.h.b16 %v6388
    %v6969 = vunpack.c.l.b16 %v6389
    %v6970 = vunpack.c.h.b16 %v6389
    %v6971 = vunpack.c.l.b16 %v6390
    %v6972 = vunpack.c.h.b16 %v6390
    %v6973 = vunpack.c.l.b16 %v6391
    %v6974 = vunpack.c.h.b16 %v6391
    %v6975 = vunpack.c.l.b16 %v6392
    %v6976 = vunpack.c.h.b16 %v6392
    %v6977 = vunpack.c.l.b16 %v6393
    %v6978 = vunpack.c.h.b16 %v6393
    %v6979 = vunpack.c.l.b16 %v6394
    %v6980 = vunpack.c.h.b16 %v6394
    %v6981 = vunpack.c.l.b16 %v6395
    %v6982 = vunpack.c.h.b16 %v6395
    %v6983 = vunpack.c.l.b16 %v6396
    %v6984 = vunpack.c.h.b16 %v6396
    %v6985 = vunpack.c.l.b16 %v6397
    %v6986 = vunpack.c.h.b16 %v6397
    %v6987 = vunpack.c.l.b16 %v6398
    %v6988 = vunpack.c.h.b16 %v6398
    %v6989 = vunpack.c.l.b16 %v6399
    %v6990 = vunpack.c.h.b16 %v6399
    %v6991 = vunpack.c.l.b16 %v6400
    %v6992 = vunpack.c.h.b16 %v6400
    %v6993 = vunpack.c.l.b16 %v6401
    %v6994 = vunpack.c.h.b16 %v6401
    %v6995 = vunpack.c.l.b16 %v6402
    %v6996 = vunpack.c.h.b16 %v6402
    %v6997 = vunpack.c.l.b16 %v6403
    %v6998 = vunpack.c.h.b16 %v6403
    %v6999 = vunpack.c.l.b16 %v6404
    %v7000 = vunpack.c.h.b16 %v6404
    %v7001 = vunpack.c.l.b16 %v6405
    %v7002 = vunpack.c.h.b16 %v6405
    %v7003 = vunpack.c.l.b16 %v6406
    %v7004 = vunpack.c.h.b16 %v6406
    %v7005 = vunpack.c.l.b16 %v6407
    %v7006 = vunpack.c.h.b16 %v6407
    %v7007 = vunpack.c.l.b16 %v6408
    %v7008 = vunpack.c.h.b16 %v6408
    %v7009 = vunpack.c.l.b16 %v6409
    %v7010 = vunpack.c.h.b16 %v6409
    %v7011 = vunpack.c.l.b16 %v6410
    %v7012 = vunpack.c.h.b16 %v6410
    %v7013 = vunpack.c.l.b16 %v6411
    %v7014 = vunpack.c.h.b16 %v6411
    %v7015 = vunpack.c.l.b16 %v6412
    %v7016 = vunpack.c.h.b16 %v6412
    %v7017 = vunpack.c.l.b16 %v6413
    %v7018 = vunpack.c.h.b16 %v6413
    %v7019 = vunpack.c.l.b16 %v6414
    %v7020 = vunpack.c.h.b16 %v6414
    %v7021 = vunpack.c.l.b16 %v6415
    %v7022 = vunpack.c.h.b16 %v6415
    %v7023 = vunpack.c.l.b16 %v6416
    %v7024 = vunpack.c.h.b16 %v6416
    %v7025 = vunpack.c.l.b16 %v6417
    %v7026 = vunpack.c.h.b16 %v6417
    %v7027 = vunpack.c.l.b16 %v6418
    %v7028 = vunpack.c.h.b16 %v6418
    %v7029 = vunpack.c.l.b16 %v6419
    %v7030 = vunpack.c.h.b16 %v6419
    %v7031 = vunpack.c.l.b16 %v6420
    %v7032 = vunpack.c.h.b16 %v6420
    %v7033 = vunpack.c.l.b16 %v6421
    %v7034 = vunpack.c.h.b16 %v6421
    %v7035 = vunpack.c.l.b16 %v6422
    %v7036 = vunpack.c.h.b16 %v6422
    %v7037 = vunpack.c.l.b16 %v6423
    %v7038 = vunpack.c.h.b16 %v6423
    %v7039 = vunpack.c.l.b16 %v6424
    %v7040 = vunpack.c.h.b16 %v6424
    %v7041 = vunpack.c.l.b16 %v6425
    %v7042 = vunpack.c.h.b16 %v6425
    %v7043 = vunpack.c.l.b16 %v6426
    %v7044 = vunpack.c.h.b16 %v6426
    %v7045 = vunpack.c.l.b16 %v6427
    %v7046 = vunpack.c.h.b16 %v6427
    %v7047 = vunpack.c.l.b16 %v6428
    %v7048 = vunpack.c.h.b16 %v6428
    %v7049 = vunpack.c.l.b16 %v6429
    %v7050 = vunpack.c.h.b16 %v6429
    %v7051 = vunpack.c.l.b16 %v6430
    %v7052 = vunpack.c.h.b16 %v6430
    %v7053 = vunpack.c.l.b16 %v6431
    %v7054 = vunpack.c.h.b16 %v6431
    %v7055 = vunpack.c.l.b16 %v6432
    %v7056 = vunpack.c.h.b16 %v6432
    %v7057 = vunpack.c.l.b16 %v6433
    %v7058 = vunpack.c.h.b16 %v6433
    %v7059 = vunpack.c.l.b16 %v6434
    %v7060 = vunpack.c.h.b16 %v6434
    %v7061 = vunpack.c.l.b16 %v6435
    %v7062 = vunpack.c.h.b16 %v6435
    %v7063 = vunpack.c.l.b16 %v6436
    %v7064 = vunpack.c.h.b16 %v6436
    %v7065 = vunpack.c.l.b16 %v6437
    %v7066 = vunpack.c.h.b16 %v6437
    %v7067 = vunpack.c.l.b16 %v6438
    %v7068 = vunpack.c.h.b16 %v6438
    %v7069 = vunpack.c.l.b16 %v6439
    %v7070 = vunpack.c.h.b16 %v6439
    %v7071 = vunpack.c.l.b16 %v6440
    %v7072 = vunpack.c.h.b16 %v6440
    %v7073 = vunpack.c.l.b16 %v6441
    %v7074 = vunpack.c.h.b16 %v6441
    %v7075 = vunpack.c.l.b16 %v6442
    %v7076 = vunpack.c.h.b16 %v6442
    %v7077 = vunpack.c.l.b16 %v6443
    %v7078 = vunpack.c.h.b16 %v6443
    %v7079 = vunpack.c.l.b16 %v6444
    %v7080 = vunpack.c.h.b16 %v6444
    %v7081 = vunpack.c.l.b16 %v6445
    %v7082 = vunpack.c.h.b16 %v6445
    %v7083 = vunpack.c.l.b16 %v6446
    %v7084 = vunpack.c.h.b16 %v6446
    %v7085 = vunpack.c.l.b16 %v6447
    %v7086 = vunpack.c.h.b16 %v6447
    %v7087 = vunpack.c.l.b16 %v6448
    %v7088 = vunpack.c.h.b16 %v6448
    %v7089 = vunpack.c.l.b16 %v6449
    %v7090 = vunpack.c.h.b16 %v6449
    %v7091 = vunpack.c.l.b16 %v6450
    %v7092 = vunpack.c.h.b16 %v6450
    %v7093 = vunpack.c.l.b16 %v6451
    %v7094 = vunpack.c.h.b16 %v6451
    %v7095 = vunpack.c.l.b16 %v6452
    %v7096 = vunpack.c.h.b16 %v6452
    %v7097 = vunpack.c.l.b16 %v6453
    %v7098 = vunpack.c.h.b16 %v6453
    %v7099 = vunpack.c.l.b16 %v6454
    %v7100 = vunpack.c.h.b16 %v6454
    %v7101 = vunpack.c.l.b16 %v6455
    %v7102 = vunpack.c.h.b16 %v6455
    %v7103 = vunpack.c.l.b16 %v6456
    %v7104 = vunpack.c.h.b16 %v6456
    %v7105 = vunpack.c.l.b16 %v6457
    %v7106 = vunpack.c.h.b16 %v6457
    %v7107 = vunpack.c.l.b16 %v6458
    %v7108 = vunpack.c.h.b16 %v6458
    %v7109 = vunpack.c.l.b16 %v6459
    %v7110 = vunpack.c.h.b16 %v6459
    %v7111 = vunpack.c.l.b16 %v6460
    %v7112 = vunpack.c.h.b16 %v6460
    %v7113 = vunpack.c.l.b16 %v6461
    %v7114 = vunpack.c.h.b16 %v6461
    %v7115 = vunpack.c.l.b16 %v6462
    %v7116 = vunpack.c.h.b16 %v6462
    %v7117 = vunpack.c.l.b16 %v6463
    %v7118 = vunpack.c.h.b16 %v6463
    %v7119 = vunpack.c.l.b16 %v6464
    %v7120 = vunpack.c.h.b16 %v6464
    %v7121 = vunpack.c.l.b16 %v6465
    %v7122 = vunpack.c.h.b16 %v6465
    %v7123 = vunpack.c.l.b16 %v6466
    %v7124 = vunpack.c.h.b16 %v6466
    %v7125 = vunpack.c.l.b16 %v6467
    %v7126 = vunpack.c.h.b16 %v6467
    %v7127 = vunpack.c.l.b16 %v6468
    %v7128 = vunpack.c.h.b16 %v6468
    %v7129 = vunpack.c.l.b16 %v6469
    %v7130 = vunpack.c.h.b16 %v6469
    %v7131 = vunpack.c.l.b16 %v6470
    %v7132 = vunpack.c.h.b16 %v6470
    %v7133 = vunpack.c.l.b16 %v6471
    %v7134 = vunpack.c.h.b16 %v6471
    %v7135 = vunpack.c.l.b16 %v6472
    %v7136 = vunpack.c.h.b16 %v6472
    %v7137 = vunpack.c.l.b16 %v6473
    %v7138 = vunpack.c.h.b16 %v6473
    %v7139 = vunpack.c.l.b16 %v6474
    %v7140 = vunpack.c.h.b16 %v6474
    %v7141 = vunpack.c.l.b16 %v6475
    %v7142 = vunpack.c.h.b16 %v6475
    %v7143 = vunpack.c.l.b16 %v6476
    %v7144 = vunpack.c.h.b16 %v6476
    %v7145 = vunpack.c.l.b16 %v6477
    %v7146 = vunpack.c.h.b16 %v6477
    %v7147 = vunpack.c.l.b16 %v6478
    %v7148 = vunpack.c.h.b16 %v6478
    %v7149 = vunpack.c.l.b16 %v6479
    %v7150 = vunpack.c.h.b16 %v6479
    %v7151 = vunpack.c.l.b16 %v6480
    %v7152 = vunpack.c.h.b16 %v6480
    %v7153 = vunpack.c.l.b16 %v6481
    %v7154 = vunpack.c.h.b16 %v6481
    %v7155 = vunpack.c.l.b16 %v6482
    %v7156 = vunpack.c.h.b16 %v6482
    %v7157 = vunpack.c.l.b16 %v6483
    %v7158 = vunpack.c.h.b16 %v6483
    %v7159 = vunpack.c.l.b16 %v6484
    %v7160 = vunpack.c.h.b16 %v6484
    %v7161 = vunpack.c.l.b16 %v6485
    %v7162 = vunpack.c.h.b16 %v6485
    %v7163 = vunpack.c.l.b16 %v6486
    %v7164 = vunpack.c.h.b16 %v6486
    %v7165 = vunpack.c.l.b16 %v6487
    %v7166 = vunpack.c.h.b16 %v6487
    %v7167 = vunpack.c.l.b16 %v6488
    %v7168 = vunpack.c.h.b16 %v6488
    %v7169 = vunpack.c.l.b16 %v6489
    %v7170 = vunpack.c.h.b16 %v6489
    %v7171 = vunpack.c.l.b16 %v6490
    %v7172 = vunpack.c.h.b16 %v6490
    %v7173 = vunpack.c.l.b16 %v6491
    %v7174 = vunpack.c.h.b16 %v6491
    %v7175 = vunpack.c.l.b16 %v6492
    %v7176 = vunpack.c.h.b16 %v6492
    %v7177 = vunpack.c.l.b16 %v6493
    %v7178 = vunpack.c.h.b16 %v6493
    %v7179 = vunpack.c.l.b16 %v6494
    %v7180 = vunpack.c.h.b16 %v6494
    %v7181 = vunpack.c.l.b16 %v6495
    %v7182 = vunpack.c.h.b16 %v6495
    %v7183 = vunpack.c.l.b16 %v6496
    %v7184 = vunpack.c.h.b16 %v6496
    %v7185 = vunpack.c.l.b16 %v6497
    %v7186 = vunpack.c.h.b16 %v6497
    %v7187 = vunpack.c.l.b16 %v6498
    %v7188 = vunpack.c.h.b16 %v6498
    %v7189 = vunpack.c.l.b16 %v6499
    %v7190 = vunpack.c.h.b16 %v6499
    %v7191 = vunpack.c.l.b16 %v6500
    %v7192 = vunpack.c.h.b16 %v6500
    %v7193 = vunpack.c.l.b16 %v6501
    %v7194 = vunpack.c.h.b16 %v6501
    %v7195 = vunpack.c.l.b16 %v6502
    %v7196 = vunpack.c.h.b16 %v6502
    %v7197 = vunpack.c.l.b16 %v6503
    %v7198 = vunpack.c.h.b16 %v6503
    %v7199 = vunpack.c.l.b16 %v6504
    %v7200 = vunpack.c.h.b16 %v6504
    %v7201 = vunpack.c.l.b16 %v6505
    %v7202 = vunpack.c.h.b16 %v6505
    %v7203 = vunpack.c.l.b16 %v6506
    %v7204 = vunpack.c.h.b16 %v6506
    %v7205 = vunpack.c.l.b16 %v6507
    %v7206 = vunpack.c.h.b16 %v6507
    %v7207 = vunpack.c.l.b16 %v6508
    %v7208 = vunpack.c.h.b16 %v6508
    %v7209 = vunpack.c.l.b16 %v6509
    %v7210 = vunpack.c.h.b16 %v6509
    %v7211 = vunpack.c.l.b16 %v6510
    %v7212 = vunpack.c.h.b16 %v6510
    %v7213 = vunpack.c.l.b16 %v6511
    %v7214 = vunpack.c.h.b16 %v6511
    %v7215 = vunpack.c.l.b16 %v6512
    %v7216 = vunpack.c.h.b16 %v6512
    %v7217 = vunpack.c.l.b16 %v6513
    %v7218 = vunpack.c.h.b16 %v6513
    %v7219 = vunpack.c.l.b16 %v6514
    %v7220 = vunpack.c.h.b16 %v6514
    %v7221 = vunpack.c.l.b16 %v6515
    %v7222 = vunpack.c.h.b16 %v6515
    %v7223 = vunpack.c.l.b16 %v6516
    %v7224 = vunpack.c.h.b16 %v6516
    %v7225 = vunpack.c.l.b16 %v6517
    %v7226 = vunpack.c.h.b16 %v6517
    %v7227 = vunpack.c.l.b16 %v6518
    %v7228 = vunpack.c.h.b16 %v6518
    %v7229 = vunpack.c.l.b16 %v6519
    %v7230 = vunpack.c.h.b16 %v6519
    %v7231 = vunpack.c.l.b16 %v6520
    %v7232 = vunpack.c.h.b16 %v6520
    %v7233 = vunpack.c.l.b16 %v6521
    %v7234 = vunpack.c.h.b16 %v6521
    %v7235 = vunpack.c.l.b16 %v6522
    %v7236 = vunpack.c.h.b16 %v6522
    %v7237 = vunpack.c.l.b16 %v6523
    %v7238 = vunpack.c.h.b16 %v6523
    %v7239 = vunpack.c.l.b16 %v6524
    %v7240 = vunpack.c.h.b16 %v6524
    %v7241 = vunpack.c.l.b16 %v6525
    %v7242 = vunpack.c.h.b16 %v6525
    %v7243 = vunpack.c.l.b16 %v6526
    %v7244 = vunpack.c.h.b16 %v6526
    %v7245 = vunpack.c.l.b16 %v6527
    %v7246 = vunpack.c.h.b16 %v6527
    %v7247 = vunpack.c.l.b16 %v6528
    %v7248 = vunpack.c.h.b16 %v6528
    %v7249 = vunpack.c.l.b16 %v6529
    %v7250 = vunpack.c.h.b16 %v6529
    %v7251 = vunpack.c.l.b16 %v6530
    %v7252 = vunpack.c.h.b16 %v6530
    %v7253 = vunpack.c.l.b16 %v6531
    %v7254 = vunpack.c.h.b16 %v6531
    %v7255 = vunpack.c.l.b16 %v6532
    %v7256 = vunpack.c.h.b16 %v6532
    %v7257 = vunpack.c.l.b16 %v6533
    %v7258 = vunpack.c.h.b16 %v6533
    %v7259 = vunpack.c.l.b16 %v6534
    %v7260 = vunpack.c.h.b16 %v6534
    %v7261 = vunpack.c.l.b16 %v6535
    %v7262 = vunpack.c.h.b16 %v6535
    %v7263 = vunpack.c.l.b16 %v6536
    %v7264 = vunpack.c.h.b16 %v6536
    %v7265 = vunpack.c.l.b16 %v6537
    %v7266 = vunpack.c.h.b16 %v6537
    %v7267 = vunpack.c.l.b16 %v6538
    %v7268 = vunpack.c.h.b16 %v6538
    %v7269 = vunpack.c.l.b16 %v6539
    %v7270 = vunpack.c.h.b16 %v6539
    %v7271 = vunpack.c.l.b16 %v6540
    %v7272 = vunpack.c.h.b16 %v6540
    %v7273 = vunpack.c.l.b16 %v6541
    %v7274 = vunpack.c.h.b16 %v6541
    %v7275 = vunpack.c.l.b16 %v6542
    %v7276 = vunpack.c.h.b16 %v6542
    %v7277 = vunpack.c.l.b16 %v6543
    %v7278 = vunpack.c.h.b16 %v6543
    %v7279 = vunpack.c.l.b16 %v6544
    %v7280 = vunpack.c.h.b16 %v6544
    %v7281 = vunpack.c.l.b16 %v6545
    %v7282 = vunpack.c.h.b16 %v6545
    %v7283 = vunpack.c.l.b16 %v6546
    %v7284 = vunpack.c.h.b16 %v6546
    %v7285 = vunpack.c.l.b16 %v6547
    %v7286 = vunpack.c.h.b16 %v6547
    %v7287 = vunpack.c.l.b16 %v6548
    %v7288 = vunpack.c.h.b16 %v6548
    %v7289 = vunpack.c.l.b16 %v6549
    %v7290 = vunpack.c.h.b16 %v6549
    %v7291 = vunpack.c.l.b16 %v6550
    %v7292 = vunpack.c.h.b16 %v6550
    %v7293 = vunpack.c.l.b16 %v6551
    %v7294 = vunpack.c.h.b16 %v6551
    %v7295 = vunpack.c.l.b16 %v6552
    %v7296 = vunpack.c.h.b16 %v6552
    %v7297 = vunpack.c.l.b16 %v6553
    %v7298 = vunpack.c.h.b16 %v6553
    %v7299 = vunpack.c.l.b16 %v6554
    %v7300 = vunpack.c.h.b16 %v6554
    %v7301 = vunpack.c.l.b16 %v6555
    %v7302 = vunpack.c.h.b16 %v6555
    %v7303 = vunpack.c.l.b16 %v6556
    %v7304 = vunpack.c.h.b16 %v6556
    %v7305 = vunpack.c.l.b16 %v6557
    %v7306 = vunpack.c.h.b16 %v6557
    %v7307 = vunpack.c.l.b16 %v6558
    %v7308 = vunpack.c.h.b16 %v6558
    %v7309 = vunpack.c.l.b16 %v6559
    %v7310 = vunpack.c.h.b16 %v6559
    %v7311 = vunpack.c.l.b16 %v6560
    %v7312 = vunpack.c.h.b16 %v6560
    %v7313 = vunpack.c.l.b16 %v6561
    %v7314 = vunpack.c.h.b16 %v6561
    %v7315 = vunpack.c.l.b16 %v6562
    %v7316 = vunpack.c.h.b16 %v6562
    %v7317 = vunpack.c.l.b16 %v6563
    %v7318 = vunpack.c.h.b16 %v6563
    %v7319 = vunpack.c.l.b16 %v6564
    %v7320 = vunpack.c.h.b16 %v6564
    %v7321 = vunpack.c.l.b16 %v6565
    %v7322 = vunpack.c.h.b16 %v6565
    %v7323 = vunpack.c.l.b16 %v6566
    %v7324 = vunpack.c.h.b16 %v6566
    %v7325 = vunpack.c.l.b16 %v6567
    %v7326 = vunpack.c.h.b16 %v6567
    %v7327 = vunpack.c.l.b16 %v6568
    %v7328 = vunpack.c.h.b16 %v6568
    %v7329 = vunpack.c.l.b16 %v6569
    %v7330 = vunpack.c.h.b16 %v6569
    %v7331 = vunpack.c.l.b16 %v6570
    %v7332 = vunpack.c.h.b16 %v6570
    %v7333 = vunpack.c.l.b16 %v6571
    %v7334 = vunpack.c.h.b16 %v6571
    %v7335 = vunpack.c.l.b16 %v6572
    %v7336 = vunpack.c.h.b16 %v6572
    %v7337 = vunpack.c.l.b16 %v6573
    %v7338 = vunpack.c.h.b16 %v6573
    %v7339 = vunpack.c.l.b16 %v6574
    %v7340 = vunpack.c.h.b16 %v6574
    %v7341 = vunpack.c.l.b16 %v6575
    %v7342 = vunpack.c.h.b16 %v6575
    %v7343 = vunpack.c.l.b16 %v6576
    %v7344 = vunpack.c.h.b16 %v6576
    %v7345 = vunpack.c.l.b16 %v6577
    %v7346 = vunpack.c.h.b16 %v6577
    %v7347 = vunpack.c.l.b16 %v6578
    %v7348 = vunpack.c.h.b16 %v6578
    %v7349 = vunpack.c.l.b16 %v6579
    %v7350 = vunpack.c.h.b16 %v6579
    %v7351 = vunpack.c.l.b16 %v6580
    %v7352 = vunpack.c.h.b16 %v6580
    %v7353 = vunpack.c.l.b16 %v6581
    %v7354 = vunpack.c.h.b16 %v6581
    %v7355 = vunpack.c.l.b16 %v6582
    %v7356 = vunpack.c.h.b16 %v6582
    %v7357 = vunpack.c.l.b16 %v6583
    %v7358 = vunpack.c.h.b16 %v6583
    %v7359 = vunpack.c.l.b16 %v6584
    %v7360 = vunpack.c.h.b16 %v6584
    %v7361 = vunpack.c.l.b16 %v6585
    %v7362 = vunpack.c.h.b16 %v6585
    %v7363 = vunpack.c.l.b16 %v6586
    %v7364 = vunpack.c.h.b16 %v6586
    %v7365 = vunpack.c.l.b16 %v6587
    %v7366 = vunpack.c.h.b16 %v6587
    %v7367 = vunpack.c.l.b16 %v6588
    %v7368 = vunpack.c.h.b16 %v6588
    %v7369 = vunpack.c.l.b16 %v6589
    %v7370 = vunpack.c.h.b16 %v6589
    %v7371 = vunpack.c.l.b16 %v6590
    %v7372 = vunpack.c.h.b16 %v6590
    %v7373 = vunpack.c.l.b16 %v6591
    %v7374 = vunpack.c.h.b16 %v6591
    %v7375 = vunpack.c.l.b16 %v6592
    %v7376 = vunpack.c.h.b16 %v6592
    %v7377 = vunpack.c.l.b16 %v6593
    %v7378 = vunpack.c.h.b16 %v6593
    %v7379 = vunpack.c.l.b16 %v6594
    %v7380 = vunpack.c.h.b16 %v6594
    %v7381 = vpack.c.b16 %v6873, %v6869
    %v7382 = vpack.c.b16 %v6874, %v6870
    %v7383 = vpack.c.b16 %v6875, %v6871
    %v7384 = vpack.c.b16 %v6876, %v6872
    %v7385 = vpack.c.b16 %v6881, %v6877
    %v7386 = vpack.c.b16 %v6882, %v6878
    %v7387 = vpack.c.b16 %v6883, %v6879
    %v7388 = vpack.c.b16 %v6884, %v6880
    %v7389 = vpack.c.b16 %v6889, %v6885
    %v7390 = vpack.c.b16 %v6890, %v6886
    %v7391 = vpack.c.b16 %v6891, %v6887
    %v7392 = vpack.c.b16 %v6892, %v6888
    %v7393 = vpack.c.b16 %v6897, %v6893
    %v7394 = vpack.c.b16 %v6898, %v6894
    %v7395 = vpack.c.b16 %v6899, %v6895
    %v7396 = vpack.c.b16 %v6900, %v6896
    %v7397 = vpack.c.b16 %v6905, %v6901
    %v7398 = vpack.c.b16 %v6906, %v6902
    %v7399 = vpack.c.b16 %v6907, %v6903
    %v7400 = vpack.c.b16 %v6908, %v6904
    %v7401 = vpack.c.b16 %v6913, %v6909
    %v7402 = vpack.c.b16 %v6914, %v6910
    %v7403 = vpack.c.b16 %v6915, %v6911
    %v7404 = vpack.c.b16 %v6916, %v6912
    %v7405 = vpack.c.b16 %v6921, %v6917
    %v7406 = vpack.c.b16 %v6922, %v6918
    %v7407 = vpack.c.b16 %v6923, %v6919
    %v7408 = vpack.c.b16 %v6924, %v6920
    %v7409 = vpack.c.b16 %v6929, %v6925
    %v7410 = vpack.c.b16 %v6930, %v6926
    %v7411 = vpack.c.b16 %v6931, %v6927
    %v7412 = vpack.c.b16 %v6932, %v6928
    %v7413 = vpack.c.b16 %v6937, %v6933
    %v7414 = vpack.c.b16 %v6938, %v6934
    %v7415 = vpack.c.b16 %v6939, %v6935
    %v7416 = vpack.c.b16 %v6940, %v6936
    %v7417 = vpack.c.b16 %v6945, %v6941
    %v7418 = vpack.c.b16 %v6946, %v6942
    %v7419 = vpack.c.b16 %v6947, %v6943
    %v7420 = vpack.c.b16 %v6948, %v6944
    %v7421 = vpack.c.b16 %v6953, %v6949
    %v7422 = vpack.c.b16 %v6954, %v6950
    %v7423 = vpack.c.b16 %v6955, %v6951
    %v7424 = vpack.c.b16 %v6956, %v6952
    %v7425 = vpack.c.b16 %v6961, %v6957
    %v7426 = vpack.c.b16 %v6962, %v6958
    %v7427 = vpack.c.b16 %v6963, %v6959
    %v7428 = vpack.c.b16 %v6964, %v6960
    %v7429 = vpack.c.b16 %v6969, %v6965
    %v7430 = vpack.c.b16 %v6970, %v6966
    %v7431 = vpack.c.b16 %v6971, %v6967
    %v7432 = vpack.c.b16 %v6972, %v6968
    %v7433 = vpack.c.b16 %v6977, %v6973
    %v7434 = vpack.c.b16 %v6978, %v6974
    %v7435 = vpack.c.b16 %v6979, %v6975
    %v7436 = vpack.c.b16 %v6980, %v6976
    %v7437 = vpack.c.b16 %v6985, %v6981
    %v7438 = vpack.c.b16 %v6986, %v6982
    %v7439 = vpack.c.b16 %v6987, %v6983
    %v7440 = vpack.c.b16 %v6988, %v6984
    %v7441 = vpack.c.b16 %v6993, %v6989
    %v7442 = vpack.c.b16 %v6994, %v6990
    %v7443 = vpack.c.b16 %v6995, %v6991
    %v7444 = vpack.c.b16 %v6996, %v6992
    %v7445 = vpack.c.b16 %v7001, %v6997
    %v7446 = vpack.c.b16 %v7002, %v6998
    %v7447 = vpack.c.b16 %v7003, %v6999
    %v7448 = vpack.c.b16 %v7004, %v7000
    %v7449 = vpack.c.b16 %v7009, %v7005
    %v7450 = vpack.c.b16 %v7010, %v7006
    %v7451 = vpack.c.b16 %v7011, %v7007
    %v7452 = vpack.c.b16 %v7012, %v7008
    %v7453 = vpack.c.b16 %v7017, %v7013
    %v7454 = vpack.c.b16 %v7018, %v7014
    %v7455 = vpack.c.b16 %v7019, %v7015
    %v7456 = vpack.c.b16 %v7020, %v7016
    %v7457 = vpack.c.b16 %v7025, %v7021
    %v7458 = vpack.c.b16 %v7026, %v7022
    %v7459 = vpack.c.b16 %v7027, %v7023
    %v7460 = vpack.c.b16 %v7028, %v7024
    %v7461 = vpack.c.b16 %v7033, %v7029
    %v7462 = vpack.c.b16 %v7034, %v7030
    %v7463 = vpack.c.b16 %v7035, %v7031
    %v7464 = vpack.c.b16 %v7036, %v7032
    %v7465 = vpack.c.b16 %v7041, %v7037
    %v7466 = vpack.c.b16 %v7042, %v7038
    %v7467 = vpack.c.b16 %v7043, %v7039
    %v7468 = vpack.c.b16 %v7044, %v7040
    %v7469 = vpack.c.b16 %v7049, %v7045
    %v7470 = vpack.c.b16 %v7050, %v7046
    %v7471 = vpack.c.b16 %v7051, %v7047
    %v7472 = vpack.c.b16 %v7052, %v7048
    %v7473 = vpack.c.b16 %v7057, %v7053
    %v7474 = vpack.c.b16 %v7058, %v7054
    %v7475 = vpack.c.b16 %v7059, %v7055
    %v7476 = vpack.c.b16 %v7060, %v7056
    %v7477 = vpack.c.b16 %v7065, %v7061
    %v7478 = vpack.c.b16 %v7066, %v7062
    %v7479 = vpack.c.b16 %v7067, %v7063
    %v7480 = vpack.c.b16 %v7068, %v7064
    %v7481 = vpack.c.b16 %v7073, %v7069
    %v7482 = vpack.c.b16 %v7074, %v7070
    %v7483 = vpack.c.b16 %v7075, %v7071
    %v7484 = vpack.c.b16 %v7076, %v7072
    %v7485 = vpack.c.b16 %v7081, %v7077
    %v7486 = vpack.c.b16 %v7082, %v7078
    %v7487 = vpack.c.b16 %v7083, %v7079
    %v7488 = vpack.c.b16 %v7084, %v7080
    %v7489 = vpack.c.b16 %v7089, %v7085
    %v7490 = vpack.c.b16 %v7090, %v7086
    %v7491 = vpack.c.b16 %v7091, %v7087
    %v7492 = vpack.c.b16 %v7092, %v7088
    %v7493 = vpack.c.b16 %v7097, %v7093
    %v7494 = vpack.c.b16 %v7098, %v7094
    %v7495 = vpack.c.b16 %v7099, %v7095
    %v7496 = vpack.c.b16 %v7100, %v7096
    %v7497 = vpack.c.b16 %v7105, %v7101
    %v7498 = vpack.c.b16 %v7106, %v7102
    %v7499 = vpack.c.b16 %v7107, %v7103
    %v7500 = vpack.c.b16 %v7108, %v7104
    %v7501 = vpack.c.b16 %v7113, %v7109
    %v7502 = vpack.c.b16 %v7114, %v7110
    %v7503 = vpack.c.b16 %v7115, %v7111
    %v7504 = vpack.c.b16 %v7116, %v7112
    %v7505 = vpack.c.b16 %v7121, %v7117
    %v7506 = vpack.c.b16 %v7122, %v7118
    %v7507 = vpack.c.b16 %v7123, %v7119
    %v7508 = vpack.c.b16 %v7124, %v7120
    %v7509 = vpack.c.b16 %v7129, %v7125
    %v7510 = vpack.c.b16 %v7130, %v7126
    %v7511 = vpack.c.b16 %v7131, %v7127
    %v7512 = vpack.c.b16 %v7132, %v7128
    %v7513 = vpack.c.b16 %v7137, %v7133
    %v7514 = vpack.c.b16 %v7138, %v7134
    %v7515 = vpack.c.b16 %v7139, %v7135
    %v7516 = vpack.c.b16 %v7140, %v7136
    %v7517 = vpack.c.b16 %v7145, %v7141
    %v7518 = vpack.c.b16 %v7146, %v7142
    %v7519 = vpack.c.b16 %v7147, %v7143
    %v7520 = vpack.c.b16 %v7148, %v7144
    %v7521 = vpack.c.b16 %v7153, %v7149
    %v7522 = vpack.c.b16 %v7154, %v7150
    %v7523 = vpack.c.b16 %v7155, %v7151
    %v7524 = vpack.c.b16 %v7156, %v7152
    %v7525 = vpack.c.b16 %v7161, %v7157
    %v7526 = vpack.c.b16 %v7162, %v7158
    %v7527 = vpack.c.b16 %v7163, %v7159
    %v7528 = vpack.c.b16 %v7164, %v7160
    %v7529 = vpack.c.b16 %v7169, %v7165
    %v7530 = vpack.c.b16 %v7170, %v7166
    %v7531 = vpack.c.b16 %v7171, %v7167
    %v7532 = vpack.c.b16 %v7172, %v7168
    %v7533 = vpack.c.b16 %v7177, %v7173
    %v7534 = vpack.c.b16 %v7178, %v7174
    %v7535 = vpack.c.b16 %v7179, %v7175
    %v7536 = vpack.c.b16 %v7180, %v7176
    %v7537 = vpack.c.b16 %v7185, %v7181
    %v7538 = vpack.c.b16 %v7186, %v7182
    %v7539 = vpack.c.b16 %v7187, %v7183
    %v7540 = vpack.c.b16 %v7188, %v7184
    %v7541 = vpack.c.b16 %v7193, %v7189
    %v7542 = vpack.c.b16 %v7194, %v7190
    %v7543 = vpack.c.b16 %v7195, %v7191
    %v7544 = vpack.c.b16 %v7196, %v7192
    %v7545 = vpack.c.b16 %v7201, %v7197
    %v7546 = vpack.c.b16 %v7202, %v7198
    %v7547 = vpack.c.b16 %v7203, %v7199
    %v7548 = vpack.c.b16 %v7204, %v7200
    %v7549 = vpack.c.b16 %v7209, %v7205
    %v7550 = vpack.c.b16 %v7210, %v7206
    %v7551 = vpack.c.b16 %v7211, %v7207
    %v7552 = vpack.c.b16 %v7212, %v7208
    %v7553 = vpack.c.b16 %v7217, %v7213
    %v7554 = vpack.c.b16 %v7218, %v7214
    %v7555 = vpack.c.b16 %v7219, %v7215
    %v7556 = vpack.c.b16 %v7220, %v7216
    %v7557 = vpack.c.b16 %v7225, %v7221
    %v7558 = vpack.c.b16 %v7226, %v7222
    %v7559 = vpack.c.b16 %v7227, %v7223
    %v7560 = vpack.c.b16 %v7228, %v7224
    %v7561 = vpack.c.b16 %v7233, %v7229
    %v7562 = vpack.c.b16 %v7234, %v7230
    %v7563 = vpack.c.b16 %v7235, %v7231
    %v7564 = vpack.c.b16 %v7236, %v7232
    %v7565 = vpack.c.b16 %v7241, %v7237
    %v7566 = vpack.c.b16 %v7242, %v7238
    %v7567 = vpack.c.b16 %v7243, %v7239
    %v7568 = vpack.c.b16 %v7244, %v7240
    %v7569 = vpack.c.b16 %v7249, %v7245
    %v7570 = vpack.c.b16 %v7250, %v7246
    %v7571 = vpack.c.b16 %v7251, %v7247
    %v7572 = vpack.c.b16 %v7252, %v7248
    %v7573 = vpack.c.b16 %v7257, %v7253
    %v7574 = vpack.c.b16 %v7258, %v7254
    %v7575 = vpack.c.b16 %v7259, %v7255
    %v7576 = vpack.c.b16 %v7260, %v7256
    %v7577 = vpack.c.b16 %v7265, %v7261
    %v7578 = vpack.c.b16 %v7266, %v7262
    %v7579 = vpack.c.b16 %v7267, %v7263
    %v7580 = vpack.c.b16 %v7268, %v7264
    %v7581 = vpack.c.b16 %v7273, %v7269
    %v7582 = vpack.c.b16 %v7274, %v7270
    %v7583 = vpack.c.b16 %v7275, %v7271
    %v7584 = vpack.c.b16 %v7276, %v7272
    %v7585 = vpack.c.b16 %v7281, %v7277
    %v7586 = vpack.c.b16 %v7282, %v7278
    %v7587 = vpack.c.b16 %v7283, %v7279
    %v7588 = vpack.c.b16 %v7284, %v7280
    %v7589 = vpack.c.b16 %v7289, %v7285
    %v7590 = vpack.c.b16 %v7290, %v7286
    %v7591 = vpack.c.b16 %v7291, %v7287
    %v7592 = vpack.c.b16 %v7292, %v7288
    %v7593 = vpack.c.b16 %v7297, %v7293
    %v7594 = vpack.c.b16 %v7298, %v7294
    %v7595 = vpack.c.b16 %v7299, %v7295
    %v7596 = vpack.c.b16 %v7300, %v7296
    %v7597 = vpack.c.b16 %v7305, %v7301
    %v7598 = vpack.c.b16 %v7306, %v7302
    %v7599 = vpack.c.b16 %v7307, %v7303
    %v7600 = vpack.c.b16 %v7308, %v7304
    %v7601 = vpack.c.b16 %v7313, %v7309
    %v7602 = vpack.c.b16 %v7314, %v7310
    %v7603 = vpack.c.b16 %v7315, %v7311
    %v7604 = vpack.c.b16 %v7316, %v7312
    %v7605 = vpack.c.b16 %v7321, %v7317
    %v7606 = vpack.c.b16 %v7322, %v7318
    %v7607 = vpack.c.b16 %v7323, %v7319
    %v7608 = vpack.c.b16 %v7324, %v7320
    %v7609 = vpack.c.b16 %v7329, %v7325
    %v7610 = vpack.c.b16 %v7330, %v7326
    %v7611 = vpack.c.b16 %v7331, %v7327
    %v7612 = vpack.c.b16 %v7332, %v7328
    %v7613 = vpack.c.b16 %v7337, %v7333
    %v7614 = vpack.c.b16 %v7338, %v7334
    %v7615 = vpack.c.b16 %v7339, %v7335
    %v7616 = vpack.c.b16 %v7340, %v7336
    %v7617 = vpack.c.b16 %v7345, %v7341
    %v7618 = vpack.c.b16 %v7346, %v7342
    %v7619 = vpack.c.b16 %v7347, %v7343
    %v7620 = vpack.c.b16 %v7348, %v7344
    %v7621 = vpack.c.b16 %v7353, %v7349
    %v7622 = vpack.c.b16 %v7354, %v7350
    %v7623 = vpack.c.b16 %v7355, %v7351
    %v7624 = vpack.c.b16 %v7356, %v7352
    %v7625 = vpack.c.b16 %v7361, %v7357
    %v7626 = vpack.c.b16 %v7362, %v7358
    %v7627 = vpack.c.b16 %v7363, %v7359
    %v7628 = vpack.c.b16 %v7364, %v7360
    %v7629 = vpack.c.b16 %v7369, %v7365
    %v7630 = vpack.c.b16 %v7370, %v7366
    %v7631 = vpack.c.b16 %v7371, %v7367
    %v7632 = vpack.c.b16 %v7372, %v7368
    %v7633 = vpack.c.b16 %v7377, %v7373
    %v7634 = vpack.c.b16 %v7378, %v7374
    %v7635 = vpack.c.b16 %v7379, %v7375
    %v7636 = vpack.c.b16 %v7380, %v7376
    %7893 = vmatpush.bf16.msra.mxu0 %v7409
    %7894 = vmatpush.bf16.msra.mxu0 %v7405
    %7895 = vmatpush.bf16.msra.mxu0 %v7401
    %7896 = vmatpush.bf16.msra.mxu0 %v7397
    %7897 = vmatpush.bf16.msra.mxu0 %v7393
    %7898 = vmatpush.bf16.msra.mxu0 %v7389
    %7899 = vmatpush.bf16.msra.mxu0 %v7385
    %7900 = vmatpush.bf16.msra.mxu0 %v7381
    %7901 = vmatmul.bf16.gmra.mxu0 %v6596
    %v7902 = vpop.f32.mrf.mxu0
    %v7903 = vadd.f32 %v6605, %v7902
    %v7904 = vpop.f32.mrf.mxu0
    %7905 = vdwg.mxu0
    %7906 = vmatpush.bf16.msra.mxu0 %v7441
    %7907 = vmatpush.bf16.msra.mxu0 %v7437
    %7908 = vmatpush.bf16.msra.mxu0 %v7433
    %7909 = vmatpush.bf16.msra.mxu0 %v7429
    %7910 = vmatpush.bf16.msra.mxu0 %v7425
    %7911 = vmatpush.bf16.msra.mxu0 %v7421
    %7912 = vmatpush.bf16.msra.mxu0 %v7417
    %7913 = vmatpush.bf16.msra.mxu0 %v7413
    %7914 = vmatmul.bf16.gmra.mxu0 %v6597
    %v7915 = vpop.f32.mrf.mxu0
    %v7916 = vadd.f32 %v7903, %v7915
    %v7917 = vpop.f32.mrf.mxu0
    %7918 = vdwg.mxu0
    %7919 = vmatpush.bf16.msra.mxu0 %v7473
    %7920 = vmatpush.bf16.msra.mxu0 %v7469
    %7921 = vmatpush.bf16.msra.mxu0 %v7465
    %7922 = vmatpush.bf16.msra.mxu0 %v7461
    %7923 = vmatpush.bf16.msra.mxu0 %v7457
    %7924 = vmatpush.bf16.msra.mxu0 %v7453
    %7925 = vmatpush.bf16.msra.mxu0 %v7449
    %7926 = vmatpush.bf16.msra.mxu0 %v7445
    %7927 = vmatmul.bf16.gmra.mxu0 %v6598
    %v7928 = vpop.f32.mrf.mxu0
    %v7929 = vadd.f32 %v7916, %v7928
    %v7930 = vpop.f32.mrf.mxu0
    %7931 = vdwg.mxu0
    %7932 = vmatpush.bf16.msra.mxu0 %v7505
    %7933 = vmatpush.bf16.msra.mxu0 %v7501
    %7934 = vmatpush.bf16.msra.mxu0 %v7497
    %7935 = vmatpush.bf16.msra.mxu0 %v7493
    %7936 = vmatpush.bf16.msra.mxu0 %v7489
    %7937 = vmatpush.bf16.msra.mxu0 %v7485
    %7938 = vmatpush.bf16.msra.mxu0 %v7481
    %7939 = vmatpush.bf16.msra.mxu0 %v7477
    %7940 = vmatmul.bf16.gmra.mxu0 %v6599
    %v7941 = vpop.f32.mrf.mxu0
    %v7942 = vadd.f32 %v7929, %v7941
    %v7943 = vpop.f32.mrf.mxu0
    %7944 = vdwg.mxu0
    %7945 = vmatpush.bf16.msra.mxu0 %v7537
    %7946 = vmatpush.bf16.msra.mxu0 %v7533
    %7947 = vmatpush.bf16.msra.mxu0 %v7529
    %7948 = vmatpush.bf16.msra.mxu0 %v7525
    %7949 = vmatpush.bf16.msra.mxu0 %v7521
    %7950 = vmatpush.bf16.msra.mxu0 %v7517
    %7951 = vmatpush.bf16.msra.mxu0 %v7513
    %7952 = vmatpush.bf16.msra.mxu0 %v7509
    %7953 = vmatmul.bf16.gmra.mxu0 %v6600
    %v7954 = vpop.f32.mrf.mxu0
    %v7955 = vadd.f32 %v7942, %v7954
    %v7956 = vpop.f32.mrf.mxu0
    %7957 = vdwg.mxu0
    %7958 = vmatpush.bf16.msra.mxu0 %v7569
    %7959 = vmatpush.bf16.msra.mxu0 %v7565
    %7960 = vmatpush.bf16.msra.mxu0 %v7561
    %7961 = vmatpush.bf16.msra.mxu0 %v7557
    %7962 = vmatpush.bf16.msra.mxu0 %v7553
    %7963 = vmatpush.bf16.msra.mxu0 %v7549
    %7964 = vmatpush.bf16.msra.mxu0 %v7545
    %7965 = vmatpush.bf16.msra.mxu0 %v7541
    %7966 = vmatmul.bf16.gmra.mxu0 %v6601
    %v7967 = vpop.f32.mrf.mxu0
    %v7968 = vadd.f32 %v7955, %v7967
    %v7969 = vpop.f32.mrf.mxu0
    %7970 = vdwg.mxu0
    %7971 = vmatpush.bf16.msra.mxu0 %v7601
    %7972 = vmatpush.bf16.msra.mxu0 %v7597
    %7973 = vmatpush.bf16.msra.mxu0 %v7593
    %7974 = vmatpush.bf16.msra.mxu0 %v7589
    %7975 = vmatpush.bf16.msra.mxu0 %v7585
    %7976 = vmatpush.bf16.msra.mxu0 %v7581
    %7977 = vmatpush.bf16.msra.mxu0 %v7577
    %7978 = vmatpush.bf16.msra.mxu0 %v7573
    %7979 = vmatmul.bf16.gmra.mxu0 %v6602
    %v7980 = vpop.f32.mrf.mxu0
    %v7981 = vadd.f32 %v7968, %v7980
    %v7982 = vpop.f32.mrf.mxu0
    %7983 = vdwg.mxu0
    %7984 = vmatpush.bf16.msra.mxu0 %v7633
    %7985 = vmatpush.bf16.msra.mxu0 %v7629
    %7986 = vmatpush.bf16.msra.mxu0 %v7625
    %7987 = vmatpush.bf16.msra.mxu0 %v7621
    %7988 = vmatpush.bf16.msra.mxu0 %v7617
    %7989 = vmatpush.bf16.msra.mxu0 %v7613
    %7990 = vmatpush.bf16.msra.mxu0 %v7609
    %7991 = vmatpush.bf16.msra.mxu0 %v7605
    %7992 = vmatmul.bf16.gmra.mxu0 %v6603
    %v7993 = vpop.f32.mrf.mxu0
    %v7994 = vadd.f32 %v7981, %v7993
    %v7995 = vpop.f32.mrf.mxu0
    %7996 = vdwg.mxu0
    %7997 = vmatpush.bf16.msra.mxu0 %v7410
    %7998 = vmatpush.bf16.msra.mxu0 %v7406
    %7999 = vmatpush.bf16.msra.mxu0 %v7402
    %8000 = vmatpush.bf16.msra.mxu0 %v7398
    %8001 = vmatpush.bf16.msra.mxu0 %v7394
    %8002 = vmatpush.bf16.msra.mxu0 %v7390
    %8003 = vmatpush.bf16.msra.mxu0 %v7386
    %8004 = vmatpush.bf16.msra.mxu0 %v7382
    %8005 = vmatmul.bf16.gmra.mxu0 %v6596
    %v8006 = vpop.f32.mrf.mxu0
    %v8007 = vadd.f32 %v6606, %v8006
    %v8008 = vpop.f32.mrf.mxu0
    %8009 = vdwg.mxu0
    %8010 = vmatpush.bf16.msra.mxu0 %v7442
    %8011 = vmatpush.bf16.msra.mxu0 %v7438
    %8012 = vmatpush.bf16.msra.mxu0 %v7434
    %8013 = vmatpush.bf16.msra.mxu0 %v7430
    %8014 = vmatpush.bf16.msra.mxu0 %v7426
    %8015 = vmatpush.bf16.msra.mxu0 %v7422
    %8016 = vmatpush.bf16.msra.mxu0 %v7418
    %8017 = vmatpush.bf16.msra.mxu0 %v7414
    %8018 = vmatmul.bf16.gmra.mxu0 %v6597
    %v8019 = vpop.f32.mrf.mxu0
    %v8020 = vadd.f32 %v8007, %v8019
    %v8021 = vpop.f32.mrf.mxu0
    %8022 = vdwg.mxu0
    %8023 = vmatpush.bf16.msra.mxu0 %v7474
    %8024 = vmatpush.bf16.msra.mxu0 %v7470
    %8025 = vmatpush.bf16.msra.mxu0 %v7466
    %8026 = vmatpush.bf16.msra.mxu0 %v7462
    %8027 = vmatpush.bf16.msra.mxu0 %v7458
    %8028 = vmatpush.bf16.msra.mxu0 %v7454
    %8029 = vmatpush.bf16.msra.mxu0 %v7450
    %8030 = vmatpush.bf16.msra.mxu0 %v7446
    %8031 = vmatmul.bf16.gmra.mxu0 %v6598
    %v8032 = vpop.f32.mrf.mxu0
    %v8033 = vadd.f32 %v8020, %v8032
    %v8034 = vpop.f32.mrf.mxu0
    %8035 = vdwg.mxu0
    %8036 = vmatpush.bf16.msra.mxu0 %v7506
    %8037 = vmatpush.bf16.msra.mxu0 %v7502
    %8038 = vmatpush.bf16.msra.mxu0 %v7498
    %8039 = vmatpush.bf16.msra.mxu0 %v7494
    %8040 = vmatpush.bf16.msra.mxu0 %v7490
    %8041 = vmatpush.bf16.msra.mxu0 %v7486
    %8042 = vmatpush.bf16.msra.mxu0 %v7482
    %8043 = vmatpush.bf16.msra.mxu0 %v7478
    %8044 = vmatmul.bf16.gmra.mxu0 %v6599
    %v8045 = vpop.f32.mrf.mxu0
    %v8046 = vadd.f32 %v8033, %v8045
    %v8047 = vpop.f32.mrf.mxu0
    %8048 = vdwg.mxu0
    %8049 = vmatpush.bf16.msra.mxu0 %v7538
    %8050 = vmatpush.bf16.msra.mxu0 %v7534
    %8051 = vmatpush.bf16.msra.mxu0 %v7530
    %8052 = vmatpush.bf16.msra.mxu0 %v7526
    %8053 = vmatpush.bf16.msra.mxu0 %v7522
    %8054 = vmatpush.bf16.msra.mxu0 %v7518
    %8055 = vmatpush.bf16.msra.mxu0 %v7514
    %8056 = vmatpush.bf16.msra.mxu0 %v7510
    %8057 = vmatmul.bf16.gmra.mxu0 %v6600
    %v8058 = vpop.f32.mrf.mxu0
    %v8059 = vadd.f32 %v8046, %v8058
    %v8060 = vpop.f32.mrf.mxu0
    %8061 = vdwg.mxu0
    %8062 = vmatpush.bf16.msra.mxu0 %v7570
    %8063 = vmatpush.bf16.msra.mxu0 %v7566
    %8064 = vmatpush.bf16.msra.mxu0 %v7562
    %8065 = vmatpush.bf16.msra.mxu0 %v7558
    %8066 = vmatpush.bf16.msra.mxu0 %v7554
    %8067 = vmatpush.bf16.msra.mxu0 %v7550
    %8068 = vmatpush.bf16.msra.mxu0 %v7546
    %8069 = vmatpush.bf16.msra.mxu0 %v7542
    %8070 = vmatmul.bf16.gmra.mxu0 %v6601
    %v8071 = vpop.f32.mrf.mxu0
    %v8072 = vadd.f32 %v8059, %v8071
    %v8073 = vpop.f32.mrf.mxu0
    %8074 = vdwg.mxu0
    %8075 = vmatpush.bf16.msra.mxu0 %v7602
    %8076 = vmatpush.bf16.msra.mxu0 %v7598
    %8077 = vmatpush.bf16.msra.mxu0 %v7594
    %8078 = vmatpush.bf16.msra.mxu0 %v7590
    %8079 = vmatpush.bf16.msra.mxu0 %v7586
    %8080 = vmatpush.bf16.msra.mxu0 %v7582
    %8081 = vmatpush.bf16.msra.mxu0 %v7578
    %8082 = vmatpush.bf16.msra.mxu0 %v7574
    %8083 = vmatmul.bf16.gmra.mxu0 %v6602
    %v8084 = vpop.f32.mrf.mxu0
    %v8085 = vadd.f32 %v8072, %v8084
    %v8086 = vpop.f32.mrf.mxu0
    %8087 = vdwg.mxu0
    %8088 = vmatpush.bf16.msra.mxu0 %v7634
    %8089 = vmatpush.bf16.msra.mxu0 %v7630
    %8090 = vmatpush.bf16.msra.mxu0 %v7626
    %8091 = vmatpush.bf16.msra.mxu0 %v7622
    %8092 = vmatpush.bf16.msra.mxu0 %v7618
    %8093 = vmatpush.bf16.msra.mxu0 %v7614
    %8094 = vmatpush.bf16.msra.mxu0 %v7610
    %8095 = vmatpush.bf16.msra.mxu0 %v7606
    %8096 = vmatmul.bf16.gmra.mxu0 %v6603
    %v8097 = vpop.f32.mrf.mxu0
    %v8098 = vadd.f32 %v8085, %v8097
    %v8099 = vpop.f32.mrf.mxu0
    %8100 = vdwg.mxu0
    %8101 = vmatpush.bf16.msra.mxu0 %v7411
    %8102 = vmatpush.bf16.msra.mxu0 %v7407
    %8103 = vmatpush.bf16.msra.mxu0 %v7403
    %8104 = vmatpush.bf16.msra.mxu0 %v7399
    %8105 = vmatpush.bf16.msra.mxu0 %v7395
    %8106 = vmatpush.bf16.msra.mxu0 %v7391
    %8107 = vmatpush.bf16.msra.mxu0 %v7387
    %8108 = vmatpush.bf16.msra.mxu0 %v7383
    %8109 = vmatmul.bf16.gmra.mxu0 %v6596
    %v8110 = vpop.f32.mrf.mxu0
    %v8111 = vadd.f32 %v6607, %v8110
    %v8112 = vpop.f32.mrf.mxu0
    %8113 = vdwg.mxu0
    %8114 = vmatpush.bf16.msra.mxu0 %v7443
    %8115 = vmatpush.bf16.msra.mxu0 %v7439
    %8116 = vmatpush.bf16.msra.mxu0 %v7435
    %8117 = vmatpush.bf16.msra.mxu0 %v7431
    %8118 = vmatpush.bf16.msra.mxu0 %v7427
    %8119 = vmatpush.bf16.msra.mxu0 %v7423
    %8120 = vmatpush.bf16.msra.mxu0 %v7419
    %8121 = vmatpush.bf16.msra.mxu0 %v7415
    %8122 = vmatmul.bf16.gmra.mxu0 %v6597
    %v8123 = vpop.f32.mrf.mxu0
    %v8124 = vadd.f32 %v8111, %v8123
    %v8125 = vpop.f32.mrf.mxu0
    %8126 = vdwg.mxu0
    %8127 = vmatpush.bf16.msra.mxu0 %v7475
    %8128 = vmatpush.bf16.msra.mxu0 %v7471
    %8129 = vmatpush.bf16.msra.mxu0 %v7467
    %8130 = vmatpush.bf16.msra.mxu0 %v7463
    %8131 = vmatpush.bf16.msra.mxu0 %v7459
    %8132 = vmatpush.bf16.msra.mxu0 %v7455
    %8133 = vmatpush.bf16.msra.mxu0 %v7451
    %8134 = vmatpush.bf16.msra.mxu0 %v7447
    %8135 = vmatmul.bf16.gmra.mxu0 %v6598
    %v8136 = vpop.f32.mrf.mxu0
    %v8137 = vadd.f32 %v8124, %v8136
    %v8138 = vpop.f32.mrf.mxu0
    %8139 = vdwg.mxu0
    %8140 = vmatpush.bf16.msra.mxu0 %v7507
    %8141 = vmatpush.bf16.msra.mxu0 %v7503
    %8142 = vmatpush.bf16.msra.mxu0 %v7499
    %8143 = vmatpush.bf16.msra.mxu0 %v7495
    %8144 = vmatpush.bf16.msra.mxu0 %v7491
    %8145 = vmatpush.bf16.msra.mxu0 %v7487
    %8146 = vmatpush.bf16.msra.mxu0 %v7483
    %8147 = vmatpush.bf16.msra.mxu0 %v7479
    %8148 = vmatmul.bf16.gmra.mxu0 %v6599
    %v8149 = vpop.f32.mrf.mxu0
    %v8150 = vadd.f32 %v8137, %v8149
    %v8151 = vpop.f32.mrf.mxu0
    %8152 = vdwg.mxu0
    %8153 = vmatpush.bf16.msra.mxu0 %v7539
    %8154 = vmatpush.bf16.msra.mxu0 %v7535
    %8155 = vmatpush.bf16.msra.mxu0 %v7531
    %8156 = vmatpush.bf16.msra.mxu0 %v7527
    %8157 = vmatpush.bf16.msra.mxu0 %v7523
    %8158 = vmatpush.bf16.msra.mxu0 %v7519
    %8159 = vmatpush.bf16.msra.mxu0 %v7515
    %8160 = vmatpush.bf16.msra.mxu0 %v7511
    %8161 = vmatmul.bf16.gmra.mxu0 %v6600
    %v8162 = vpop.f32.mrf.mxu0
    %v8163 = vadd.f32 %v8150, %v8162
    %v8164 = vpop.f32.mrf.mxu0
    %8165 = vdwg.mxu0
    %8166 = vmatpush.bf16.msra.mxu0 %v7571
    %8167 = vmatpush.bf16.msra.mxu0 %v7567
    %8168 = vmatpush.bf16.msra.mxu0 %v7563
    %8169 = vmatpush.bf16.msra.mxu0 %v7559
    %8170 = vmatpush.bf16.msra.mxu0 %v7555
    %8171 = vmatpush.bf16.msra.mxu0 %v7551
    %8172 = vmatpush.bf16.msra.mxu0 %v7547
    %8173 = vmatpush.bf16.msra.mxu0 %v7543
    %8174 = vmatmul.bf16.gmra.mxu0 %v6601
    %v8175 = vpop.f32.mrf.mxu0
    %v8176 = vadd.f32 %v8163, %v8175
    %v8177 = vpop.f32.mrf.mxu0
    %8178 = vdwg.mxu0
    %8179 = vmatpush.bf16.msra.mxu0 %v7603
    %8180 = vmatpush.bf16.msra.mxu0 %v7599
    %8181 = vmatpush.bf16.msra.mxu0 %v7595
    %8182 = vmatpush.bf16.msra.mxu0 %v7591
    %8183 = vmatpush.bf16.msra.mxu0 %v7587
    %8184 = vmatpush.bf16.msra.mxu0 %v7583
    %8185 = vmatpush.bf16.msra.mxu0 %v7579
    %8186 = vmatpush.bf16.msra.mxu0 %v7575
    %8187 = vmatmul.bf16.gmra.mxu0 %v6602
    %v8188 = vpop.f32.mrf.mxu0
    %v8189 = vadd.f32 %v8176, %v8188
    %v8190 = vpop.f32.mrf.mxu0
    %8191 = vdwg.mxu0
    %8192 = vmatpush.bf16.msra.mxu0 %v7635
    %8193 = vmatpush.bf16.msra.mxu0 %v7631
    %8194 = vmatpush.bf16.msra.mxu0 %v7627
    %8195 = vmatpush.bf16.msra.mxu0 %v7623
    %8196 = vmatpush.bf16.msra.mxu0 %v7619
    %8197 = vmatpush.bf16.msra.mxu0 %v7615
    %8198 = vmatpush.bf16.msra.mxu0 %v7611
    %8199 = vmatpush.bf16.msra.mxu0 %v7607
    %8200 = vmatmul.bf16.gmra.mxu0 %v6603
    %v8201 = vpop.f32.mrf.mxu0
    %v8202 = vadd.f32 %v8189, %v8201
    %v8203 = vpop.f32.mrf.mxu0
    %8204 = vdwg.mxu0
    %8205 = vmatpush.bf16.msra.mxu0 %v7412
    %8206 = vmatpush.bf16.msra.mxu0 %v7408
    %8207 = vmatpush.bf16.msra.mxu0 %v7404
    %8208 = vmatpush.bf16.msra.mxu0 %v7400
    %8209 = vmatpush.bf16.msra.mxu0 %v7396
    %8210 = vmatpush.bf16.msra.mxu0 %v7392
    %8211 = vmatpush.bf16.msra.mxu0 %v7388
    %8212 = vmatpush.bf16.msra.mxu0 %v7384
    %8213 = vmatmul.bf16.gmra.mxu0 %v6596
    %v8214 = vpop.f32.mrf.mxu0
    %v8215 = vadd.f32 %v6608, %v8214
    %v8216 = vpop.f32.mrf.mxu0
    %8217 = vdwg.mxu0
    %8218 = vmatpush.bf16.msra.mxu0 %v7444
    %8219 = vmatpush.bf16.msra.mxu0 %v7440
    %8220 = vmatpush.bf16.msra.mxu0 %v7436
    %8221 = vmatpush.bf16.msra.mxu0 %v7432
    %8222 = vmatpush.bf16.msra.mxu0 %v7428
    %8223 = vmatpush.bf16.msra.mxu0 %v7424
    %8224 = vmatpush.bf16.msra.mxu0 %v7420
    %8225 = vmatpush.bf16.msra.mxu0 %v7416
    %8226 = vmatmul.bf16.gmra.mxu0 %v6597
    %v8227 = vpop.f32.mrf.mxu0
    %v8228 = vadd.f32 %v8215, %v8227
    %v8229 = vpop.f32.mrf.mxu0
    %8230 = vdwg.mxu0
    %8231 = vmatpush.bf16.msra.mxu0 %v7476
    %8232 = vmatpush.bf16.msra.mxu0 %v7472
    %8233 = vmatpush.bf16.msra.mxu0 %v7468
    %8234 = vmatpush.bf16.msra.mxu0 %v7464
    %8235 = vmatpush.bf16.msra.mxu0 %v7460
    %8236 = vmatpush.bf16.msra.mxu0 %v7456
    %8237 = vmatpush.bf16.msra.mxu0 %v7452
    %8238 = vmatpush.bf16.msra.mxu0 %v7448
    %8239 = vmatmul.bf16.gmra.mxu0 %v6598
    %v8240 = vpop.f32.mrf.mxu0
    %v8241 = vadd.f32 %v8228, %v8240
    %v8242 = vpop.f32.mrf.mxu0
    %8243 = vdwg.mxu0
    %8244 = vmatpush.bf16.msra.mxu0 %v7508
    %8245 = vmatpush.bf16.msra.mxu0 %v7504
    %8246 = vmatpush.bf16.msra.mxu0 %v7500
    %8247 = vmatpush.bf16.msra.mxu0 %v7496
    %8248 = vmatpush.bf16.msra.mxu0 %v7492
    %8249 = vmatpush.bf16.msra.mxu0 %v7488
    %8250 = vmatpush.bf16.msra.mxu0 %v7484
    %8251 = vmatpush.bf16.msra.mxu0 %v7480
    %8252 = vmatmul.bf16.gmra.mxu0 %v6599
    %v8253 = vpop.f32.mrf.mxu0
    %v8254 = vadd.f32 %v8241, %v8253
    %v8255 = vpop.f32.mrf.mxu0
    %8256 = vdwg.mxu0
    %8257 = vmatpush.bf16.msra.mxu0 %v7540
    %8258 = vmatpush.bf16.msra.mxu0 %v7536
    %8259 = vmatpush.bf16.msra.mxu0 %v7532
    %8260 = vmatpush.bf16.msra.mxu0 %v7528
    %8261 = vmatpush.bf16.msra.mxu0 %v7524
    %8262 = vmatpush.bf16.msra.mxu0 %v7520
    %8263 = vmatpush.bf16.msra.mxu0 %v7516
    %8264 = vmatpush.bf16.msra.mxu0 %v7512
    %8265 = vmatmul.bf16.gmra.mxu0 %v6600
    %v8266 = vpop.f32.mrf.mxu0
    %v8267 = vadd.f32 %v8254, %v8266
    %v8268 = vpop.f32.mrf.mxu0
    %8269 = vdwg.mxu0
    %8270 = vmatpush.bf16.msra.mxu0 %v7572
    %8271 = vmatpush.bf16.msra.mxu0 %v7568
    %8272 = vmatpush.bf16.msra.mxu0 %v7564
    %8273 = vmatpush.bf16.msra.mxu0 %v7560
    %8274 = vmatpush.bf16.msra.mxu0 %v7556
    %8275 = vmatpush.bf16.msra.mxu0 %v7552
    %8276 = vmatpush.bf16.msra.mxu0 %v7548
    %8277 = vmatpush.bf16.msra.mxu0 %v7544
    %8278 = vmatmul.bf16.gmra.mxu0 %v6601
    %v8279 = vpop.f32.mrf.mxu0
    %v8280 = vadd.f32 %v8267, %v8279
    %v8281 = vpop.f32.mrf.mxu0
    %8282 = vdwg.mxu0
    %8283 = vmatpush.bf16.msra.mxu0 %v7604
    %8284 = vmatpush.bf16.msra.mxu0 %v7600
    %8285 = vmatpush.bf16.msra.mxu0 %v7596
    %8286 = vmatpush.bf16.msra.mxu0 %v7592
    %8287 = vmatpush.bf16.msra.mxu0 %v7588
    %8288 = vmatpush.bf16.msra.mxu0 %v7584
    %8289 = vmatpush.bf16.msra.mxu0 %v7580
    %8290 = vmatpush.bf16.msra.mxu0 %v7576
    %8291 = vmatmul.bf16.gmra.mxu0 %v6602
    %v8292 = vpop.f32.mrf.mxu0
    %v8293 = vadd.f32 %v8280, %v8292
    %v8294 = vpop.f32.mrf.mxu0
    %8295 = vdwg.mxu0
    %8296 = vmatpush.bf16.msra.mxu0 %v7636
    %8297 = vmatpush.bf16.msra.mxu0 %v7632
    %8298 = vmatpush.bf16.msra.mxu0 %v7628
    %8299 = vmatpush.bf16.msra.mxu0 %v7624
    %8300 = vmatpush.bf16.msra.mxu0 %v7620
    %8301 = vmatpush.bf16.msra.mxu0 %v7616
    %8302 = vmatpush.bf16.msra.mxu0 %v7612
    %8303 = vmatpush.bf16.msra.mxu0 %v7608
    %8304 = vmatmul.bf16.gmra.mxu0 %v6603
    %v8305 = vpop.f32.mrf.mxu0
    %v8306 = vadd.f32 %v8293, %v8305
    %v8307 = vpop.f32.mrf.mxu0
    %8308 = vdwg.mxu0
    %v8309 = vmax.f32 %v7994, 0.0
    %v8310 = vmax.f32 %v8098, 0.0
    %v8311 = vmax.f32 %v8202, 0.0
    %v8312 = vmax.f32 %v8306, 0.0
    %s8313 = smul.u32 %s408, 2
    %s8314 = sshll.u32 %s8313, 4
    %8315 = dma.done %s102, %s8314
    %v8316 = vld [vmem:[#allocation6] sm:$0xff]
    %v8317 = vld [vmem:[#allocation6 + $0x8] sm:$0xff]
    %v8318 = vld [vmem:[#allocation6 + $0x10] sm:$0xff]
    %v8319 = vld [vmem:[#allocation6 + $0x18] sm:$0xff]
    %v8320 = vld [vmem:[#allocation6 + $0x20] sm:$0xff]
    %v8321 = vld [vmem:[#allocation6 + $0x28] sm:$0xff]
    %v8322 = vld [vmem:[#allocation6 + $0x30] sm:$0xff]
    %v8323 = vld [vmem:[#allocation6 + $0x38] sm:$0xff]
    %v8324 = vld [vmem:[#allocation6 + $0x40] sm:$0xff]
    %v8325 = vld [vmem:[#allocation6 + $0x48] sm:$0xff]
    %v8326 = vld [vmem:[#allocation6 + $0x50] sm:$0xff]
    %v8327 = vld [vmem:[#allocation6 + $0x58] sm:$0xff]
    %v8328 = vld [vmem:[#allocation6 + $0x60] sm:$0xff]
    %v8329 = vld [vmem:[#allocation6 + $0x68] sm:$0xff]
    %v8330 = vld [vmem:[#allocation6 + $0x70] sm:$0xff]
    %v8331 = vld [vmem:[#allocation6 + $0x78] sm:$0xff]
    %v8332 = vld [vmem:[#allocation6 + $0x80] sm:$0xff]
    %v8333 = vld [vmem:[#allocation6 + $0x88] sm:$0xff]
    %v8334 = vld [vmem:[#allocation6 + $0x90] sm:$0xff]
    %v8335 = vld [vmem:[#allocation6 + $0x98] sm:$0xff]
    %v8336 = vld [vmem:[#allocation6 + $0xa0] sm:$0xff]
    %v8337 = vld [vmem:[#allocation6 + $0xa8] sm:$0xff]
    %v8338 = vld [vmem:[#allocation6 + $0xb0] sm:$0xff]
    %v8339 = vld [vmem:[#allocation6 + $0xb8] sm:$0xff]
    %v8340 = vld [vmem:[#allocation6 + $0xc0] sm:$0xff]
    %v8341 = vld [vmem:[#allocation6 + $0xc8] sm:$0xff]
    %v8342 = vld [vmem:[#allocation6 + $0xd0] sm:$0xff]
    %v8343 = vld [vmem:[#allocation6 + $0xd8] sm:$0xff]
    %v8344 = vld [vmem:[#allocation6 + $0xe0] sm:$0xff]
    %v8345 = vld [vmem:[#allocation6 + $0xe8] sm:$0xff]
    %v8346 = vld [vmem:[#allocation6 + $0xf0] sm:$0xff]
    %v8347 = vld [vmem:[#allocation6 + $0xf8] sm:$0xff]
    %v8348 = vld [vmem:[#allocation6 + $0x100] sm:$0xff]
    %v8349 = vld [vmem:[#allocation6 + $0x108] sm:$0xff]
    %v8350 = vld [vmem:[#allocation6 + $0x110] sm:$0xff]
    %v8351 = vld [vmem:[#allocation6 + $0x118] sm:$0xff]
    %v8352 = vld [vmem:[#allocation6 + $0x120] sm:$0xff]
    %v8353 = vld [vmem:[#allocation6 + $0x128] sm:$0xff]
    %v8354 = vld [vmem:[#allocation6 + $0x130] sm:$0xff]
    %v8355 = vld [vmem:[#allocation6 + $0x138] sm:$0xff]
    %v8356 = vld [vmem:[#allocation6 + $0x140] sm:$0xff]
    %v8357 = vld [vmem:[#allocation6 + $0x148] sm:$0xff]
    %v8358 = vld [vmem:[#allocation6 + $0x150] sm:$0xff]
    %v8359 = vld [vmem:[#allocation6 + $0x158] sm:$0xff]
    %v8360 = vld [vmem:[#allocation6 + $0x160] sm:$0xff]
    %v8361 = vld [vmem:[#allocation6 + $0x168] sm:$0xff]
    %v8362 = vld [vmem:[#allocation6 + $0x170] sm:$0xff]
    %v8363 = vld [vmem:[#allocation6 + $0x178] sm:$0xff]
    %v8364 = vld [vmem:[#allocation6 + $0x180] sm:$0xff]
    %v8365 = vld [vmem:[#allocation6 + $0x188] sm:$0xff]
    %v8366 = vld [vmem:[#allocation6 + $0x190] sm:$0xff]
    %v8367 = vld [vmem:[#allocation6 + $0x198] sm:$0xff]
    %v8368 = vld [vmem:[#allocation6 + $0x1a0] sm:$0xff]
    %v8369 = vld [vmem:[#allocation6 + $0x1a8] sm:$0xff]
    %v8370 = vld [vmem:[#allocation6 + $0x1b0] sm:$0xff]
    %v8371 = vld [vmem:[#allocation6 + $0x1b8] sm:$0xff]
    %v8372 = vld [vmem:[#allocation6 + $0x1c0] sm:$0xff]
    %v8373 = vld [vmem:[#allocation6 + $0x1c8] sm:$0xff]
    %v8374 = vld [vmem:[#allocation6 + $0x1d0] sm:$0xff]
    %v8375 = vld [vmem:[#allocation6 + $0x1d8] sm:$0xff]
    %v8376 = vld [vmem:[#allocation6 + $0x1e0] sm:$0xff]
    %v8377 = vld [vmem:[#allocation6 + $0x1e8] sm:$0xff]
    %v8378 = vld [vmem:[#allocation6 + $0x1f0] sm:$0xff]
    %v8379 = vld [vmem:[#allocation6 + $0x1f8] sm:$0xff]
    %v8380 = vld [vmem:[#allocation13 + $0x18] sm:$0x3]
    %v8381 = vpack.c.bf16 %v8309, %v8309
    %v8382 = vpack.c.bf16 %v8310, %v8310
    %v8383 = vpack.c.bf16 %v8311, %v8311
    %v8384 = vpack.c.bf16 %v8312, %v8312
    %v8386 = vperm.slane %v8380, 0
    %v8387 = vperm.slane %v8380, 1
    %v8454 = vunpack.c.l.b16 %v8316
    %v8455 = vunpack.c.h.b16 %v8316
    %v8456 = vunpack.c.l.b16 %v8317
    %v8457 = vunpack.c.h.b16 %v8317
    %v8458 = vunpack.c.l.b16 %v8318
    %v8459 = vunpack.c.h.b16 %v8318
    %v8460 = vunpack.c.l.b16 %v8319
    %v8461 = vunpack.c.h.b16 %v8319
    %v8462 = vunpack.c.l.b16 %v8320
    %v8463 = vunpack.c.h.b16 %v8320
    %v8464 = vunpack.c.l.b16 %v8321
    %v8465 = vunpack.c.h.b16 %v8321
    %v8466 = vunpack.c.l.b16 %v8322
    %v8467 = vunpack.c.h.b16 %v8322
    %v8468 = vunpack.c.l.b16 %v8323
    %v8469 = vunpack.c.h.b16 %v8323
    %v8470 = vunpack.c.l.b16 %v8324
    %v8471 = vunpack.c.h.b16 %v8324
    %v8472 = vunpack.c.l.b16 %v8325
    %v8473 = vunpack.c.h.b16 %v8325
    %v8474 = vunpack.c.l.b16 %v8326
    %v8475 = vunpack.c.h.b16 %v8326
    %v8476 = vunpack.c.l.b16 %v8327
    %v8477 = vunpack.c.h.b16 %v8327
    %v8478 = vunpack.c.l.b16 %v8328
    %v8479 = vunpack.c.h.b16 %v8328
    %v8480 = vunpack.c.l.b16 %v8329
    %v8481 = vunpack.c.h.b16 %v8329
    %v8482 = vunpack.c.l.b16 %v8330
    %v8483 = vunpack.c.h.b16 %v8330
    %v8484 = vunpack.c.l.b16 %v8331
    %v8485 = vunpack.c.h.b16 %v8331
    %v8486 = vunpack.c.l.b16 %v8332
    %v8487 = vunpack.c.h.b16 %v8332
    %v8488 = vunpack.c.l.b16 %v8333
    %v8489 = vunpack.c.h.b16 %v8333
    %v8490 = vunpack.c.l.b16 %v8334
    %v8491 = vunpack.c.h.b16 %v8334
    %v8492 = vunpack.c.l.b16 %v8335
    %v8493 = vunpack.c.h.b16 %v8335
    %v8494 = vunpack.c.l.b16 %v8336
    %v8495 = vunpack.c.h.b16 %v8336
    %v8496 = vunpack.c.l.b16 %v8337
    %v8497 = vunpack.c.h.b16 %v8337
    %v8498 = vunpack.c.l.b16 %v8338
    %v8499 = vunpack.c.h.b16 %v8338
    %v8500 = vunpack.c.l.b16 %v8339
    %v8501 = vunpack.c.h.b16 %v8339
    %v8502 = vunpack.c.l.b16 %v8340
    %v8503 = vunpack.c.h.b16 %v8340
    %v8504 = vunpack.c.l.b16 %v8341
    %v8505 = vunpack.c.h.b16 %v8341
    %v8506 = vunpack.c.l.b16 %v8342
    %v8507 = vunpack.c.h.b16 %v8342
    %v8508 = vunpack.c.l.b16 %v8343
    %v8509 = vunpack.c.h.b16 %v8343
    %v8510 = vunpack.c.l.b16 %v8344
    %v8511 = vunpack.c.h.b16 %v8344
    %v8512 = vunpack.c.l.b16 %v8345
    %v8513 = vunpack.c.h.b16 %v8345
    %v8514 = vunpack.c.l.b16 %v8346
    %v8515 = vunpack.c.h.b16 %v8346
    %v8516 = vunpack.c.l.b16 %v8347
    %v8517 = vunpack.c.h.b16 %v8347
    %v8518 = vunpack.c.l.b16 %v8348
    %v8519 = vunpack.c.h.b16 %v8348
    %v8520 = vunpack.c.l.b16 %v8349
    %v8521 = vunpack.c.h.b16 %v8349
    %v8522 = vunpack.c.l.b16 %v8350
    %v8523 = vunpack.c.h.b16 %v8350
    %v8524 = vunpack.c.l.b16 %v8351
    %v8525 = vunpack.c.h.b16 %v8351
    %v8526 = vunpack.c.l.b16 %v8352
    %v8527 = vunpack.c.h.b16 %v8352
    %v8528 = vunpack.c.l.b16 %v8353
    %v8529 = vunpack.c.h.b16 %v8353
    %v8530 = vunpack.c.l.b16 %v8354
    %v8531 = vunpack.c.h.b16 %v8354
    %v8532 = vunpack.c.l.b16 %v8355
    %v8533 = vunpack.c.h.b16 %v8355
    %v8534 = vunpack.c.l.b16 %v8356
    %v8535 = vunpack.c.h.b16 %v8356
    %v8536 = vunpack.c.l.b16 %v8357
    %v8537 = vunpack.c.h.b16 %v8357
    %v8538 = vunpack.c.l.b16 %v8358
    %v8539 = vunpack.c.h.b16 %v8358
    %v8540 = vunpack.c.l.b16 %v8359
    %v8541 = vunpack.c.h.b16 %v8359
    %v8542 = vunpack.c.l.b16 %v8360
    %v8543 = vunpack.c.h.b16 %v8360
    %v8544 = vunpack.c.l.b16 %v8361
    %v8545 = vunpack.c.h.b16 %v8361
    %v8546 = vunpack.c.l.b16 %v8362
    %v8547 = vunpack.c.h.b16 %v8362
    %v8548 = vunpack.c.l.b16 %v8363
    %v8549 = vunpack.c.h.b16 %v8363
    %v8550 = vunpack.c.l.b16 %v8364
    %v8551 = vunpack.c.h.b16 %v8364
    %v8552 = vunpack.c.l.b16 %v8365
    %v8553 = vunpack.c.h.b16 %v8365
    %v8554 = vunpack.c.l.b16 %v8366
    %v8555 = vunpack.c.h.b16 %v8366
    %v8556 = vunpack.c.l.b16 %v8367
    %v8557 = vunpack.c.h.b16 %v8367
    %v8558 = vunpack.c.l.b16 %v8368
    %v8559 = vunpack.c.h.b16 %v8368
    %v8560 = vunpack.c.l.b16 %v8369
    %v8561 = vunpack.c.h.b16 %v8369
    %v8562 = vunpack.c.l.b16 %v8370
    %v8563 = vunpack.c.h.b16 %v8370
    %v8564 = vunpack.c.l.b16 %v8371
    %v8565 = vunpack.c.h.b16 %v8371
    %v8566 = vunpack.c.l.b16 %v8372
    %v8567 = vunpack.c.h.b16 %v8372
    %v8568 = vunpack.c.l.b16 %v8373
    %v8569 = vunpack.c.h.b16 %v8373
    %v8570 = vunpack.c.l.b16 %v8374
    %v8571 = vunpack.c.h.b16 %v8374
    %v8572 = vunpack.c.l.b16 %v8375
    %v8573 = vunpack.c.h.b16 %v8375
    %v8574 = vunpack.c.l.b16 %v8376
    %v8575 = vunpack.c.h.b16 %v8376
    %v8576 = vunpack.c.l.b16 %v8377
    %v8577 = vunpack.c.h.b16 %v8377
    %v8578 = vunpack.c.l.b16 %v8378
    %v8579 = vunpack.c.h.b16 %v8378
    %v8580 = vunpack.c.l.b16 %v8379
    %v8581 = vunpack.c.h.b16 %v8379
    %v8582 = vpack.c.b16 %v8456, %v8454
    %v8583 = vpack.c.b16 %v8457, %v8455
    %v8584 = vpack.c.b16 %v8460, %v8458
    %v8585 = vpack.c.b16 %v8461, %v8459
    %v8586 = vpack.c.b16 %v8464, %v8462
    %v8587 = vpack.c.b16 %v8465, %v8463
    %v8588 = vpack.c.b16 %v8468, %v8466
    %v8589 = vpack.c.b16 %v8469, %v8467
    %v8590 = vpack.c.b16 %v8472, %v8470
    %v8591 = vpack.c.b16 %v8473, %v8471
    %v8592 = vpack.c.b16 %v8476, %v8474
    %v8593 = vpack.c.b16 %v8477, %v8475
    %v8594 = vpack.c.b16 %v8480, %v8478
    %v8595 = vpack.c.b16 %v8481, %v8479
    %v8596 = vpack.c.b16 %v8484, %v8482
    %v8597 = vpack.c.b16 %v8485, %v8483
    %v8598 = vpack.c.b16 %v8488, %v8486
    %v8599 = vpack.c.b16 %v8489, %v8487
    %v8600 = vpack.c.b16 %v8492, %v8490
    %v8601 = vpack.c.b16 %v8493, %v8491
    %v8602 = vpack.c.b16 %v8496, %v8494
    %v8603 = vpack.c.b16 %v8497, %v8495
    %v8604 = vpack.c.b16 %v8500, %v8498
    %v8605 = vpack.c.b16 %v8501, %v8499
    %v8606 = vpack.c.b16 %v8504, %v8502
    %v8607 = vpack.c.b16 %v8505, %v8503
    %v8608 = vpack.c.b16 %v8508, %v8506
    %v8609 = vpack.c.b16 %v8509, %v8507
    %v8610 = vpack.c.b16 %v8512, %v8510
    %v8611 = vpack.c.b16 %v8513, %v8511
    %v8612 = vpack.c.b16 %v8516, %v8514
    %v8613 = vpack.c.b16 %v8517, %v8515
    %v8614 = vpack.c.b16 %v8520, %v8518
    %v8615 = vpack.c.b16 %v8521, %v8519
    %v8616 = vpack.c.b16 %v8524, %v8522
    %v8617 = vpack.c.b16 %v8525, %v8523
    %v8618 = vpack.c.b16 %v8528, %v8526
    %v8619 = vpack.c.b16 %v8529, %v8527
    %v8620 = vpack.c.b16 %v8532, %v8530
    %v8621 = vpack.c.b16 %v8533, %v8531
    %v8622 = vpack.c.b16 %v8536, %v8534
    %v8623 = vpack.c.b16 %v8537, %v8535
    %v8624 = vpack.c.b16 %v8540, %v8538
    %v8625 = vpack.c.b16 %v8541, %v8539
    %v8626 = vpack.c.b16 %v8544, %v8542
    %v8627 = vpack.c.b16 %v8545, %v8543
    %v8628 = vpack.c.b16 %v8548, %v8546
    %v8629 = vpack.c.b16 %v8549, %v8547
    %v8630 = vpack.c.b16 %v8552, %v8550
    %v8631 = vpack.c.b16 %v8553, %v8551
    %v8632 = vpack.c.b16 %v8556, %v8554
    %v8633 = vpack.c.b16 %v8557, %v8555
    %v8634 = vpack.c.b16 %v8560, %v8558
    %v8635 = vpack.c.b16 %v8561, %v8559
    %v8636 = vpack.c.b16 %v8564, %v8562
    %v8637 = vpack.c.b16 %v8565, %v8563
    %v8638 = vpack.c.b16 %v8568, %v8566
    %v8639 = vpack.c.b16 %v8569, %v8567
    %v8640 = vpack.c.b16 %v8572, %v8570
    %v8641 = vpack.c.b16 %v8573, %v8571
    %v8642 = vpack.c.b16 %v8576, %v8574
    %v8643 = vpack.c.b16 %v8577, %v8575
    %v8644 = vpack.c.b16 %v8580, %v8578
    %v8645 = vpack.c.b16 %v8581, %v8579
    %8710 = vmatpush.bf16.msra.mxu0 %v8596
    %8711 = vmatpush.bf16.msra.mxu0 %v8594
    %8712 = vmatpush.bf16.msra.mxu0 %v8592
    %8713 = vmatpush.bf16.msra.mxu0 %v8590
    %8714 = vmatpush.bf16.msra.mxu0 %v8588
    %8715 = vmatpush.bf16.msra.mxu0 %v8586
    %8716 = vmatpush.bf16.msra.mxu0 %v8584
    %8717 = vmatpush.bf16.msra.mxu0 %v8582
    %8718 = vmatmul.bf16.gmra.mxu0 %v8381
    %v8719 = vpop.f32.mrf.mxu0
    %v8720 = vadd.f32 %v8386, %v8719
    %v8721 = vpop.f32.mrf.mxu0
    %8722 = vdwg.mxu0
    %8723 = vmatpush.bf16.msra.mxu0 %v8612
    %8724 = vmatpush.bf16.msra.mxu0 %v8610
    %8725 = vmatpush.bf16.msra.mxu0 %v8608
    %8726 = vmatpush.bf16.msra.mxu0 %v8606
    %8727 = vmatpush.bf16.msra.mxu0 %v8604
    %8728 = vmatpush.bf16.msra.mxu0 %v8602
    %8729 = vmatpush.bf16.msra.mxu0 %v8600
    %8730 = vmatpush.bf16.msra.mxu0 %v8598
    %8731 = vmatmul.bf16.gmra.mxu0 %v8382
    %v8732 = vpop.f32.mrf.mxu0
    %v8733 = vadd.f32 %v8720, %v8732
    %v8734 = vpop.f32.mrf.mxu0
    %8735 = vdwg.mxu0
    %8736 = vmatpush.bf16.msra.mxu0 %v8628
    %8737 = vmatpush.bf16.msra.mxu0 %v8626
    %8738 = vmatpush.bf16.msra.mxu0 %v8624
    %8739 = vmatpush.bf16.msra.mxu0 %v8622
    %8740 = vmatpush.bf16.msra.mxu0 %v8620
    %8741 = vmatpush.bf16.msra.mxu0 %v8618
    %8742 = vmatpush.bf16.msra.mxu0 %v8616
    %8743 = vmatpush.bf16.msra.mxu0 %v8614
    %8744 = vmatmul.bf16.gmra.mxu0 %v8383
    %v8745 = vpop.f32.mrf.mxu0
    %v8746 = vadd.f32 %v8733, %v8745
    %v8747 = vpop.f32.mrf.mxu0
    %8748 = vdwg.mxu0
    %8749 = vmatpush.bf16.msra.mxu0 %v8644
    %8750 = vmatpush.bf16.msra.mxu0 %v8642
    %8751 = vmatpush.bf16.msra.mxu0 %v8640
    %8752 = vmatpush.bf16.msra.mxu0 %v8638
    %8753 = vmatpush.bf16.msra.mxu0 %v8636
    %8754 = vmatpush.bf16.msra.mxu0 %v8634
    %8755 = vmatpush.bf16.msra.mxu0 %v8632
    %8756 = vmatpush.bf16.msra.mxu0 %v8630
    %8757 = vmatmul.bf16.gmra.mxu0 %v8384
    %v8758 = vpop.f32.mrf.mxu0
    %v8759 = vadd.f32 %v8746, %v8758
    %v8760 = vpop.f32.mrf.mxu0
    %8761 = vdwg.mxu0
    %8762 = vmatpush.bf16.msra.mxu0 %v8597
    %8763 = vmatpush.bf16.msra.mxu0 %v8595
    %8764 = vmatpush.bf16.msra.mxu0 %v8593
    %8765 = vmatpush.bf16.msra.mxu0 %v8591
    %8766 = vmatpush.bf16.msra.mxu0 %v8589
    %8767 = vmatpush.bf16.msra.mxu0 %v8587
    %8768 = vmatpush.bf16.msra.mxu0 %v8585
    %8769 = vmatpush.bf16.msra.mxu0 %v8583
    %8770 = vmatmul.bf16.gmra.mxu0 %v8381
    %v8771 = vpop.f32.mrf.mxu0
    %v8772 = vadd.f32 %v8387, %v8771
    %v8773 = vpop.f32.mrf.mxu0
    %8774 = vdwg.mxu0
    %8775 = vmatpush.bf16.msra.mxu0 %v8613
    %8776 = vmatpush.bf16.msra.mxu0 %v8611
    %8777 = vmatpush.bf16.msra.mxu0 %v8609
    %8778 = vmatpush.bf16.msra.mxu0 %v8607
    %8779 = vmatpush.bf16.msra.mxu0 %v8605
    %8780 = vmatpush.bf16.msra.mxu0 %v8603
    %8781 = vmatpush.bf16.msra.mxu0 %v8601
    %8782 = vmatpush.bf16.msra.mxu0 %v8599
    %8783 = vmatmul.bf16.gmra.mxu0 %v8382
    %v8784 = vpop.f32.mrf.mxu0
    %v8785 = vadd.f32 %v8772, %v8784
    %v8786 = vpop.f32.mrf.mxu0
    %8787 = vdwg.mxu0
    %8788 = vmatpush.bf16.msra.mxu0 %v8629
    %8789 = vmatpush.bf16.msra.mxu0 %v8627
    %8790 = vmatpush.bf16.msra.mxu0 %v8625
    %8791 = vmatpush.bf16.msra.mxu0 %v8623
    %8792 = vmatpush.bf16.msra.mxu0 %v8621
    %8793 = vmatpush.bf16.msra.mxu0 %v8619
    %8794 = vmatpush.bf16.msra.mxu0 %v8617
    %8795 = vmatpush.bf16.msra.mxu0 %v8615
    %8796 = vmatmul.bf16.gmra.mxu0 %v8383
    %v8797 = vpop.f32.mrf.mxu0
    %v8798 = vadd.f32 %v8785, %v8797
    %v8799 = vpop.f32.mrf.mxu0
    %8800 = vdwg.mxu0
    %8801 = vmatpush.bf16.msra.mxu0 %v8645
    %8802 = vmatpush.bf16.msra.mxu0 %v8643
    %8803 = vmatpush.bf16.msra.mxu0 %v8641
    %8804 = vmatpush.bf16.msra.mxu0 %v8639
    %8805 = vmatpush.bf16.msra.mxu0 %v8637
    %8806 = vmatpush.bf16.msra.mxu0 %v8635
    %8807 = vmatpush.bf16.msra.mxu0 %v8633
    %8808 = vmatpush.bf16.msra.mxu0 %v8631
    %8809 = vmatmul.bf16.gmra.mxu0 %v8384
    %v8810 = vpop.f32.mrf.mxu0
    %v8811 = vadd.f32 %v8798, %v8810
    %v8812 = vpop.f32.mrf.mxu0
    %8813 = vdwg.mxu0
    %v8814 = vmax.f32 %v8759, 0.0
    %v8815 = vmax.f32 %v8811, 0.0
    %s8816 = smul.u32 4, 32
    %s8817 = smul.u32 %s8816, 1
    %s8818 = sshll.u32 %s8817, 4
    %8819 = dma.done %s116, %s8818
    %v8820 = vld [vmem:[#allocation7] sm:$0xf]
    %v8821 = vld [vmem:[#allocation7 + $0x4] sm:$0xf]
    %v8822 = vld [vmem:[#allocation7 + $0x8] sm:$0xf]
    %v8823 = vld [vmem:[#allocation7 + $0xc] sm:$0xf]
    %v8824 = vld [vmem:[#allocation7 + $0x10] sm:$0xf]
    %v8825 = vld [vmem:[#allocation7 + $0x14] sm:$0xf]
    %v8826 = vld [vmem:[#allocation7 + $0x18] sm:$0xf]
    %v8827 = vld [vmem:[#allocation7 + $0x1c] sm:$0xf]
    %v8828 = vld [vmem:[#allocation7 + $0x20] sm:$0xf]
    %v8829 = vld [vmem:[#allocation7 + $0x24] sm:$0xf]
    %v8830 = vld [vmem:[#allocation7 + $0x28] sm:$0xf]
    %v8831 = vld [vmem:[#allocation7 + $0x2c] sm:$0xf]
    %v8832 = vld [vmem:[#allocation7 + $0x30] sm:$0xf]
    %v8833 = vld [vmem:[#allocation7 + $0x34] sm:$0xf]
    %v8834 = vld [vmem:[#allocation7 + $0x38] sm:$0xf]
    %v8835 = vld [vmem:[#allocation7 + $0x3c] sm:$0xf]
    %v8836 = vld [vmem:[#allocation7 + $0x40] sm:$0xf]
    %v8837 = vld [vmem:[#allocation7 + $0x44] sm:$0xf]
    %v8838 = vld [vmem:[#allocation7 + $0x48] sm:$0xf]
    %v8839 = vld [vmem:[#allocation7 + $0x4c] sm:$0xf]
    %v8840 = vld [vmem:[#allocation7 + $0x50] sm:$0xf]
    %v8841 = vld [vmem:[#allocation7 + $0x54] sm:$0xf]
    %v8842 = vld [vmem:[#allocation7 + $0x58] sm:$0xf]
    %v8843 = vld [vmem:[#allocation7 + $0x5c] sm:$0xf]
    %v8844 = vld [vmem:[#allocation7 + $0x60] sm:$0xf]
    %v8845 = vld [vmem:[#allocation7 + $0x64] sm:$0xf]
    %v8846 = vld [vmem:[#allocation7 + $0x68] sm:$0xf]
    %v8847 = vld [vmem:[#allocation7 + $0x6c] sm:$0xf]
    %v8848 = vld [vmem:[#allocation7 + $0x70] sm:$0xf]
    %v8849 = vld [vmem:[#allocation7 + $0x74] sm:$0xf]
    %v8850 = vld [vmem:[#allocation7 + $0x78] sm:$0xf]
    %v8851 = vld [vmem:[#allocation7 + $0x7c] sm:$0xf]
    %v8852 = vld [vmem:[#allocation13 + $0x1a] sm:$0x1]
    %v8853 = vpack.c.bf16 %v8814, %v8814
    %v8854 = vpack.c.bf16 %v8815, %v8815
    %v8856 = vperm.slane %v8852, 0
    %v8890 = vunpack.c.l.b16 %v8820
    %v8891 = vunpack.c.l.b16 %v8821
    %v8892 = vunpack.c.l.b16 %v8822
    %v8893 = vunpack.c.l.b16 %v8823
    %v8894 = vunpack.c.l.b16 %v8824
    %v8895 = vunpack.c.l.b16 %v8825
    %v8896 = vunpack.c.l.b16 %v8826
    %v8897 = vunpack.c.l.b16 %v8827
    %v8898 = vunpack.c.l.b16 %v8828
    %v8899 = vunpack.c.l.b16 %v8829
    %v8900 = vunpack.c.l.b16 %v8830
    %v8901 = vunpack.c.l.b16 %v8831
    %v8902 = vunpack.c.l.b16 %v8832
    %v8903 = vunpack.c.l.b16 %v8833
    %v8904 = vunpack.c.l.b16 %v8834
    %v8905 = vunpack.c.l.b16 %v8835
    %v8906 = vunpack.c.l.b16 %v8836
    %v8907 = vunpack.c.l.b16 %v8837
    %v8908 = vunpack.c.l.b16 %v8838
    %v8909 = vunpack.c.l.b16 %v8839
    %v8910 = vunpack.c.l.b16 %v8840
    %v8911 = vunpack.c.l.b16 %v8841
    %v8912 = vunpack.c.l.b16 %v8842
    %v8913 = vunpack.c.l.b16 %v8843
    %v8914 = vunpack.c.l.b16 %v8844
    %v8915 = vunpack.c.l.b16 %v8845
    %v8916 = vunpack.c.l.b16 %v8846
    %v8917 = vunpack.c.l.b16 %v8847
    %v8918 = vunpack.c.l.b16 %v8848
    %v8919 = vunpack.c.l.b16 %v8849
    %v8920 = vunpack.c.l.b16 %v8850
    %v8921 = vunpack.c.l.b16 %v8851
    %v8922 = vpack.c.b16 %v8891, %v8890
    %v8923 = vpack.c.b16 %v8893, %v8892
    %v8924 = vpack.c.b16 %v8895, %v8894
    %v8925 = vpack.c.b16 %v8897, %v8896
    %v8926 = vpack.c.b16 %v8899, %v8898
    %v8927 = vpack.c.b16 %v8901, %v8900
    %v8928 = vpack.c.b16 %v8903, %v8902
    %v8929 = vpack.c.b16 %v8905, %v8904
    %v8930 = vpack.c.b16 %v8907, %v8906
    %v8931 = vpack.c.b16 %v8909, %v8908
    %v8932 = vpack.c.b16 %v8911, %v8910
    %v8933 = vpack.c.b16 %v8913, %v8912
    %v8934 = vpack.c.b16 %v8915, %v8914
    %v8935 = vpack.c.b16 %v8917, %v8916
    %v8936 = vpack.c.b16 %v8919, %v8918
    %v8937 = vpack.c.b16 %v8921, %v8920
    %8954 = vmatpush.bf16.msra.mxu0 %v8929
    %8955 = vmatpush.bf16.msra.mxu0 %v8928
    %8956 = vmatpush.bf16.msra.mxu0 %v8927
    %8957 = vmatpush.bf16.msra.mxu0 %v8926
    %8958 = vmatpush.bf16.msra.mxu0 %v8925
    %8959 = vmatpush.bf16.msra.mxu0 %v8924
    %8960 = vmatpush.bf16.msra.mxu0 %v8923
    %8961 = vmatpush.bf16.msra.mxu0 %v8922
    %8962 = vmatmul.bf16.gmra.mxu0 %v8853
    %v8963 = vpop.f32.mrf.mxu0
    %v8964 = vadd.f32 %v8856, %v8963
    %v8965 = vpop.f32.mrf.mxu0
    %8966 = vdwg.mxu0
    %8967 = vmatpush.bf16.msra.mxu0 %v8937
    %8968 = vmatpush.bf16.msra.mxu0 %v8936
    %8969 = vmatpush.bf16.msra.mxu0 %v8935
    %8970 = vmatpush.bf16.msra.mxu0 %v8934
    %8971 = vmatpush.bf16.msra.mxu0 %v8933
    %8972 = vmatpush.bf16.msra.mxu0 %v8932
    %8973 = vmatpush.bf16.msra.mxu0 %v8931
    %8974 = vmatpush.bf16.msra.mxu0 %v8930
    %8975 = vmatmul.bf16.gmra.mxu0 %v8854
    %v8976 = vpop.f32.mrf.mxu0
    %v8977 = vadd.f32 %v8964, %v8976
    %v8978 = vpop.f32.mrf.mxu0
    %8979 = vdwg.mxu0
    %v8980 = vmax.f32 %v8977, 0.0
    %s8981 = smul.u32 %s145, 1
    %s8982 = sshll.u32 %s8981, 4
    %8983 = dma.done %s130, %s8982
    %v8984 = vld [vmem:[#allocation8] sm:$0xf]
    %v8985 = vld [vmem:[#allocation8 + $0x4] sm:$0xf]
    %v8986 = vld [vmem:[#allocation8 + $0x8] sm:$0xf]
    %v8987 = vld [vmem:[#allocation8 + $0xc] sm:$0xf]
    %v8988 = vld [vmem:[#allocation8 + $0x10] sm:$0xf]
    %v8989 = vld [vmem:[#allocation8 + $0x14] sm:$0xf]
    %v8990 = vld [vmem:[#allocation8 + $0x18] sm:$0xf]
    %v8991 = vld [vmem:[#allocation8 + $0x1c] sm:$0xf]
    %v8992 = vld [vmem:[#allocation8 + $0x20] sm:$0xf]
    %v8993 = vld [vmem:[#allocation8 + $0x24] sm:$0xf]
    %v8994 = vld [vmem:[#allocation8 + $0x28] sm:$0xf]
    %v8995 = vld [vmem:[#allocation8 + $0x2c] sm:$0xf]
    %v8996 = vld [vmem:[#allocation8 + $0x30] sm:$0xf]
    %v8997 = vld [vmem:[#allocation8 + $0x34] sm:$0xf]
    %v8998 = vld [vmem:[#allocation8 + $0x38] sm:$0xf]
    %v8999 = vld [vmem:[#allocation8 + $0x3c] sm:$0xf]
    %v9000 = vld [vmem:[#allocation13 + $0x1b] sm:$0x1]
    %v9001 = vpack.c.bf16 %v8980, %v8980
    %v9003 = vperm.slane %v9000, 0
    %v9021 = vunpack.c.l.b16 %v8984
    %v9022 = vunpack.c.l.b16 %v8985
    %v9023 = vunpack.c.l.b16 %v8986
    %v9024 = vunpack.c.l.b16 %v8987
    %v9025 = vunpack.c.l.b16 %v8988
    %v9026 = vunpack.c.l.b16 %v8989
    %v9027 = vunpack.c.l.b16 %v8990
    %v9028 = vunpack.c.l.b16 %v8991
    %v9029 = vunpack.c.l.b16 %v8992
    %v9030 = vunpack.c.l.b16 %v8993
    %v9031 = vunpack.c.l.b16 %v8994
    %v9032 = vunpack.c.l.b16 %v8995
    %v9033 = vunpack.c.l.b16 %v8996
    %v9034 = vunpack.c.l.b16 %v8997
    %v9035 = vunpack.c.l.b16 %v8998
    %v9036 = vunpack.c.l.b16 %v8999
    %v9037 = vpack.c.b16 %v9022, %v9021
    %v9038 = vpack.c.b16 %v9024, %v9023
    %v9039 = vpack.c.b16 %v9026, %v9025
    %v9040 = vpack.c.b16 %v9028, %v9027
    %v9041 = vpack.c.b16 %v9030, %v9029
    %v9042 = vpack.c.b16 %v9032, %v9031
    %v9043 = vpack.c.b16 %v9034, %v9033
    %v9044 = vpack.c.b16 %v9036, %v9035
    %9053 = vmatpush.bf16.msra.mxu0 %v9044
    %9054 = vmatpush.bf16.msra.mxu0 %v9043
    %9055 = vmatpush.bf16.msra.mxu0 %v9042
    %9056 = vmatpush.bf16.msra.mxu0 %v9041
    %9057 = vmatpush.bf16.msra.mxu0 %v9040
    %9058 = vmatpush.bf16.msra.mxu0 %v9039
    %9059 = vmatpush.bf16.msra.mxu0 %v9038
    %9060 = vmatpush.bf16.msra.mxu0 %v9037
    %9061 = vmatmul.bf16.gmra.mxu0 %v9001
    %v9062 = vpop.f32.mrf.mxu0
    %v9063 = vadd.f32 %v9003, %v9062
    %v9064 = vpop.f32.mrf.mxu0
    %9065 = vdwg.mxu0
    %9066 = vst [vmem:[#allocation15] sm:$0xff] %v9063
    // Predicated region
    $region46: #{tpu_custom_call.1} parent=1 // pred_check
      _
    $region47: #{tpu_custom_call.1} parent=1 // pred_check_branch
      %9068 = sbr.rel (0) target = $region49
    $region48: #{tpu_custom_call.1} parent=1 // pred_region
      %9070 = vsyncadd [#allocation12], 0
      %s9072 = sshll.u32 [#allocation15], 4
      %s9073 = int_to_ptr.vmem [resolvable:$true] %s9072
      %s9074 = sshll.u32 %s9, 4
      %s9075 = int_to_ptr.hbm [resolvable:$true] %s9074
      %9077 = dma.vmem_to_hbm [thread:$0]  %s9073, 128, %s9075, [#allocation12]
    $region49: #{tpu_custom_call.1} parent=1 // pred_fallthru
      _
    // Predicated region
    $region50: #{tpu_custom_call.1} parent=1 // pred_check
      _
    $region51: #{tpu_custom_call.1} parent=1 // pred_check_branch
      %9079 = sbr.rel (0) target = $region53
    $region52: #{tpu_custom_call.1} parent=1 // pred_region
      %9081 = dma.done [#allocation12], 128
    $region53: #{tpu_custom_call.1} parent=1 // pred_fallthru
      _
    %9082 = vsyncpa [#allocation11], 1
    %9083 = vsyncpa [#allocation14], 1
    %9084 = vsyncpa [#allocation12], 1
  %9085 = vsyncmov [#allocation9]
  %s9086 = vpop.sfrf %9085
  %p9087 = scmp.eq.s32.totalorder %s9086, 0
  %p9088 = pneg %p9087
  %9090 = shalt.err (%p9088)
  %s9091 = scalar_lea.sflag [#allocation9], 1
  %9092 = vsyncmov %s9091
  %s9093 = vpop.sfrf %9092
  %p9094 = scmp.eq.s32.totalorder %s9093, 0
  %p9095 = pneg %p9094
  %9097 = shalt.err (%p9095)
  %s9098 = scalar_lea.sflag [#allocation9], 2
  %9099 = vsyncmov %s9098
  %s9100 = vpop.sfrf %9099
  %p9101 = scmp.eq.s32.totalorder %s9100, 0
  %p9102 = pneg %p9101
  %9104 = shalt.err (%p9102)
  %s9105 = scalar_lea.sflag [#allocation9], 3
  %9106 = vsyncmov %s9105
  %s9107 = vpop.sfrf %9106
  %p9108 = scmp.eq.s32.totalorder %s9107, 0
  %p9109 = pneg %p9108
  %9111 = shalt.err (%p9109)
  %s9112 = scalar_lea.sflag [#allocation9], 4
  %9113 = vsyncmov %s9112
  %s9114 = vpop.sfrf %9113
  %p9115 = scmp.eq.s32.totalorder %s9114, 0
  %p9116 = pneg %p9115
  %9118 = shalt.err (%p9116)
  %s9119 = scalar_lea.sflag [#allocation9], 5
  %9120 = vsyncmov %s9119
  %s9121 = vpop.sfrf %9120
  %p9122 = scmp.eq.s32.totalorder %s9121, 0
  %p9123 = pneg %p9122
  %9125 = shalt.err (%p9123)
  %s9126 = scalar_lea.sflag [#allocation9], 6
  %9127 = vsyncmov %s9126
  %s9128 = vpop.sfrf %9127
  %p9129 = scmp.eq.s32.totalorder %s9128, 0
  %p9130 = pneg %p9129
  %9132 = shalt.err (%p9130)

</llo_original>
